<compile_context>
chip_gen: v6e
topology: v6e:2x2x1
jax: 0.10.0
libtpu: 0.0.40
codegen_flags: <defaults>
</compile_context>

<pallas_src>
import jax
import jax.numpy as jnp
from jax import lax
from jax.experimental import pallas as pl
from jax.experimental.pallas import tpu as pltpu

K = 4          # ConvTranspose2d kernel_size
EPS = 1e-5     # BatchNorm2d eps


def _round_up(x, m):
    return (x + m - 1) // m * m


def _conv_rows(x_ref, w_ref, L, Wp):
    """Transposed conv for one image as 16 shifted row-slice matmuls.

    x_ref : (1, R_in, C) f32   flattened zero-padded NHWC image rows
    w_ref : (K*K, C, Op) f32   spatially-flipped kernel, one (C, Op) slab per tap
    Returns y : (L, Op) f32 with L = Ho*Wp rows; rows whose column index (mod Wp)
    is >= Wo wrap across image rows and are garbage (caller masks them).
    """
    Op = w_ref.shape[-1]
    acc = jnp.zeros((L, Op), jnp.float32)
    for kh in range(K):
        for kw in range(K):
            # Contiguous row window of the flattened padded image (static offset).
            xs = x_ref[0, pl.ds(kh * Wp + kw, L), :]              # (L, C)
            acc = acc + jnp.dot(xs, w_ref[kh * K + kw],
                                preferred_element_type=jnp.float32)
    return acc


def firstconvt2d(img, wt, bias, gamma, beta):
    """Forward pass of FirstconvT2D (training-mode BatchNorm semantics).

    img  : (N, C, H, W) float32 (PyTorch NCHW)
    wt   : (C, O, K, K) float32 (nn.ConvTranspose2d weight layout)
    bias : (O,)  gamma: (O,)  beta: (O,)
    returns (N, O, H+K-1, W+K-1) float32
    """
    del bias  # exactly cancelled by the batch-mean subtraction of training-mode BN

    N, C, H, W = img.shape
    O = wt.shape[1]
    Ho, Wo = H + K - 1, W + K - 1
    Hp, Wp = H + 2 * (K - 1), W + 2 * (K - 1)
    L = Ho * Wp                 # rows computed per image (incl. K-1 junk cols per row)
    R_in = (Hp + 1) * Wp        # +1 zero row so the last taps never run past the end
    Op = _round_up(O, 128)      # lane-dense output channels
    M_real = N * Ho * Wo        # true per-channel element count for BN statistics

    # --- glue (plain XLA): NCHW->NHWC, zero-pad, flatten rows, pack weights -------
    # Pre-round operands to bf16 values but keep f32 storage (exact MXU products on
    # every generation; no packed-dtype unaligned slices in the kernel).
    xq = img.astype(jnp.bfloat16).astype(jnp.float32)
    x = jnp.transpose(xq, (0, 2, 3, 1))                                    # NHWC
    xp = jnp.pad(x, ((0, 0), (K - 1, K), (K - 1, K - 1), (0, 0)))          # (N,Hp+1,Wp,C)
    xflat = xp.reshape(N, R_in, C)

    # ConvTranspose == full-padded correlation with the spatially flipped kernel.
    wq = wt.astype(jnp.bfloat16).astype(jnp.float32)
    wk = jnp.transpose(wq[:, :, ::-1, ::-1], (2, 3, 0, 1)).reshape(K * K, C, O)
    wk = jnp.pad(wk, ((0, 0), (0, 0), (0, Op - O)))                        # (K*K,C,Op)

    # Rows r with (r mod Wp) >= Wo mix columns across image-row boundaries -> mask.
    mask = (jnp.arange(L) % Wp < Wo).astype(jnp.float32).reshape(L, 1)

    g_p = jnp.pad(gamma.astype(jnp.float32), (0, Op - O))
    b_p = jnp.pad(beta.astype(jnp.float32), (0, Op - O))

    parallel = pltpu.CompilerParams(dimension_semantics=("parallel",))

    # --- pass 1: conv + per-image channel sum / sum-of-squares (XLU reductions) ---
    def _stats_kernel(x_ref, w_ref, m_ref, stats_ref):
        y = _conv_rows(x_ref, w_ref, L, Wp) * m_ref[...]       # mask wrap-around rows
        s = jnp.sum(y, axis=0, keepdims=True)                  # (1, Op)
        ss = jnp.sum(y * y, axis=0, keepdims=True)             # (1, Op)
        stats_ref[0] = jnp.concatenate([s, ss], axis=0)        # (2, Op)

    stats = pl.pallas_call(
        _stats_kernel,
        out_shape=jax.ShapeDtypeStruct((N, 2, Op), jnp.float32),
        grid=(N,),
        in_specs=[
            pl.BlockSpec((1, R_in, C), lambda n: (n, 0, 0)),
            pl.BlockSpec((K * K, C, Op), lambda n: (0, 0, 0)),
            pl.BlockSpec((L, 1), lambda n: (0, 0)),
        ],
        out_specs=pl.BlockSpec((1, 2, Op), lambda n: (n, 0, 0)),
        compiler_params=parallel,
    )(xflat, wk, mask)

    # Tiny epilogue: fold per-image partial stats into per-channel scale/shift.
    tot = jnp.sum(stats, axis=0)                                # (2, Op)
    mean = tot[0] / M_real
    var = jnp.maximum(tot[1] / M_real - mean * mean, 0.0)       # clamp cancellation
    inv = lax.rsqrt(var + EPS)
    scale = (g_p * inv).reshape(1, Op)
    shift = (b_p - mean * g_p * inv).reshape(1, Op)

    # --- pass 2: recompute conv (re-reads only the tiny C-wide input), BN + ReLU ---
    def _bn_relu_kernel(x_ref, w_ref, m_ref, scale_ref, shift_ref, o_ref):
        y = _conv_rows(x_ref, w_ref, L, Wp)
        out = jnp.maximum(y * scale_ref[...] + shift_ref[...], 0.0)
        o_ref[0] = out * m_ref[...]                             # wrap rows exactly 0

    out3 = pl.pallas_call(
        _bn_relu_kernel,
        out_shape=jax.ShapeDtypeStruct((N, L, Op), jnp.float32),
        grid=(N,),
        in_specs=[
            pl.BlockSpec((1, R_in, C), lambda n: (n, 0, 0)),
            pl.BlockSpec((K * K, C, Op), lambda n: (0, 0, 0)),
            pl.BlockSpec((L, 1), lambda n: (0, 0)),
            pl.BlockSpec((1, Op), lambda n: (0, 0)),
            pl.BlockSpec((1, Op), lambda n: (0, 0)),
        ],
        out_specs=pl.BlockSpec((1, L, Op), lambda n: (n, 0, 0)),
        compiler_params=parallel,
    )(xflat, wk, mask, scale, shift)

    # Drop padded lanes/columns first so the NCHW transpose only moves real data.
    out = out3.reshape(N, Ho, Wp, Op)[:, :, :Wo, :O]
    return jnp.transpose(out, (0, 3, 1, 2))                     # PyTorch-facing NCHW


def _reference(img, wt, bias, gamma, beta):
    """Pure-JAX reference of the PyTorch forward (independent of the Pallas path).

    Matmul operands are quantized to bf16 values (f32 compute) to mirror the kernel's
    operand policy; the conv bias IS applied here, demonstrating that dropping it in
    the kernel under batch-stat BN is exact (to tolerance).
    """
    O = wt.shape[1]
    xq = img.astype(jnp.bfloat16).astype(jnp.float32)
    wq = wt.astype(jnp.bfloat16).astype(jnp.float32)
    w_conv = jnp.transpose(wq[:, :, ::-1, ::-1], (1, 0, 2, 3))              # (O,C,K,K)
    y = lax.conv_general_dilated(
        xq, w_conv, window_strides=(1, 1),
        padding=[(K - 1, K - 1), (K - 1, K - 1)],
        dimension_numbers=('NCHW', 'OIHW', 'NCHW'),
        precision=lax.Precision.HIGHEST)
    y = y + bias.reshape(1, O, 1, 1)
    mean = jnp.mean(y, axis=(0, 2, 3), keepdims=True)
    var = jnp.mean((y - mean) ** 2, axis=(0, 2, 3), keepdims=True)
    yhat = (y - mean) * lax.rsqrt(var + EPS)
    return jnp.maximum(yhat * gamma.reshape(1, O, 1, 1) + beta.reshape(1, O, 1, 1), 0.0)


if __name__ == "__main__":
    # Small deterministic setup: batch=2, channel=4, spatial=16, out_feat=8.
    N, C, H, W, O = 2, 4, 16, 16, 8
    key = jax.random.PRNGKey(0)
    k_x, k_w, k_b, k_g, k_be = jax.random.split(key, 5)

    x = jax.random.normal(k_x, (N, C, H, W), dtype=jnp.float32)
    fan_in = C * K * K
    bound = 1.0 / jnp.sqrt(fan_in)
    wt = jax.random.uniform(k_w, (C, O, K, K), jnp.float32, -bound, bound)  # ConvT weight
    bias = jax.random.uniform(k_b, (O,), jnp.float32, -bound, bound)        # ConvT bias
    gamma = jax.random.uniform(k_g, (O,), jnp.float32, 0.5, 1.5)            # BN weight
    beta = 0.1 * jax.random.normal(k_be, (O,), dtype=jnp.float32)           # BN bias

    out = jax.block_until_ready(firstconvt2d(x, wt, bias, gamma, beta))
    ref = jax.block_until_ready(_reference(x, wt, bias, gamma, beta))

    assert out.shape == (N, O, H + K - 1, W + K - 1), out.shape
    err = float(jnp.max(jnp.abs(out - ref)))
    assert jnp.allclose(out, ref, atol=2e-3, rtol=2e-3), err
    print("KERNEL_OK")
</pallas_src>

<mosaic_0001>
module attributes {stable_mosaic.version = 11 : i64} {
  func.func @_stats_kernel(%arg0: i32, %arg1: memref<1x506x4xf32, #tpu.memory_space<vmem>>, %arg2: memref<16x4x128xf32, #tpu.memory_space<vmem>>, %arg3: memref<418x1xf32, #tpu.memory_space<vmem>>, %arg4: memref<1x2x128xf32, #tpu.memory_space<vmem>>) attributes {dimension_semantics = [#tpu.dimension_semantics<parallel>], iteration_bounds = array<i64: 2>, scalar_prefetch = 0 : i64, scratch_operands = 0 : i64, tpu.core_type = #tpu.core_type<tc>, window_params = [{transform_indices = @transform_0, window_bounds = array<i64: 1, 506, 4>}, {pipeline_mode = #tpu.pipeline_mode<synchronous>, transform_indices = @transform_1, window_bounds = array<i64: 16, 4, 128>}, {pipeline_mode = #tpu.pipeline_mode<synchronous>, transform_indices = @transform_2, window_bounds = array<i64: 418, 1>}, {transform_indices = @transform_3, window_bounds = array<i64: 1, 2, 128>}]} {
    %cst = arith.constant 0.000000e+00 : f32
    %0 = vector.broadcast %cst : f32 to vector<418x128xf32>
    %c0 = arith.constant 0 : index
    %c0_0 = arith.constant 0 : index
    %c0_1 = arith.constant 0 : index
    %1 = vector.load %arg1[%c0, %c0_0, %c0_1] : memref<1x506x4xf32, #tpu.memory_space<vmem>>, vector<1x418x4xf32>
    %2 = vector.shape_cast %1 : vector<1x418x4xf32> to vector<418x4xf32>
    %c0_2 = arith.constant 0 : index
    %c0_3 = arith.constant 0 : index
    %c0_4 = arith.constant 0 : index
    %3 = vector.load %arg2[%c0_2, %c0_3, %c0_4] : memref<16x4x128xf32, #tpu.memory_space<vmem>>, vector<1x4x128xf32>
    %4 = vector.shape_cast %3 : vector<1x4x128xf32> to vector<4x128xf32>
    %cst_5 = arith.constant dense<0.000000e+00> : vector<418x128xf32>
    %5 = tpu.matmul %2, %4, %cst_5 {dimension_numbers = #tpu.dot_dimension_numbers<[1], [0], [0], [1], [0, 0, 1, 1], [], []>} : vector<418x4xf32>, vector<4x128xf32>, vector<418x128xf32> -> vector<418x128xf32>
    %6 = arith.addf %0, %5 : vector<418x128xf32>
    %c0_6 = arith.constant 0 : index
    %c1 = arith.constant 1 : index
    %c0_7 = arith.constant 0 : index
    %7 = vector.load %arg1[%c0_6, %c1, %c0_7] : memref<1x506x4xf32, #tpu.memory_space<vmem>>, vector<1x418x4xf32>
    %8 = vector.shape_cast %7 : vector<1x418x4xf32> to vector<418x4xf32>
    %c1_8 = arith.constant 1 : index
    %c0_9 = arith.constant 0 : index
    %c0_10 = arith.constant 0 : index
    %9 = vector.load %arg2[%c1_8, %c0_9, %c0_10] : memref<16x4x128xf32, #tpu.memory_space<vmem>>, vector<1x4x128xf32>
    %10 = vector.shape_cast %9 : vector<1x4x128xf32> to vector<4x128xf32>
    %cst_11 = arith.constant dense<0.000000e+00> : vector<418x128xf32>
    %11 = tpu.matmul %8, %10, %cst_11 {dimension_numbers = #tpu.dot_dimension_numbers<[1], [0], [0], [1], [0, 0, 1, 1], [], []>} : vector<418x4xf32>, vector<4x128xf32>, vector<418x128xf32> -> vector<418x128xf32>
    %12 = arith.addf %6, %11 : vector<418x128xf32>
    %c0_12 = arith.constant 0 : index
    %c2 = arith.constant 2 : index
    %c0_13 = arith.constant 0 : index
    %13 = vector.load %arg1[%c0_12, %c2, %c0_13] : memref<1x506x4xf32, #tpu.memory_space<vmem>>, vector<1x418x4xf32>
    %14 = vector.shape_cast %13 : vector<1x418x4xf32> to vector<418x4xf32>
    %c2_14 = arith.constant 2 : index
    %c0_15 = arith.constant 0 : index
    %c0_16 = arith.constant 0 : index
    %15 = vector.load %arg2[%c2_14, %c0_15, %c0_16] : memref<16x4x128xf32, #tpu.memory_space<vmem>>, vector<1x4x128xf32>
    %16 = vector.shape_cast %15 : vector<1x4x128xf32> to vector<4x128xf32>
    %cst_17 = arith.constant dense<0.000000e+00> : vector<418x128xf32>
    %17 = tpu.matmul %14, %16, %cst_17 {dimension_numbers = #tpu.dot_dimension_numbers<[1], [0], [0], [1], [0, 0, 1, 1], [], []>} : vector<418x4xf32>, vector<4x128xf32>, vector<418x128xf32> -> vector<418x128xf32>
    %18 = arith.addf %12, %17 : vector<418x128xf32>
    %c0_18 = arith.constant 0 : index
    %c3 = arith.constant 3 : index
    %c0_19 = arith.constant 0 : index
    %19 = vector.load %arg1[%c0_18, %c3, %c0_19] : memref<1x506x4xf32, #tpu.memory_space<vmem>>, vector<1x418x4xf32>
    %20 = vector.shape_cast %19 : vector<1x418x4xf32> to vector<418x4xf32>
    %c3_20 = arith.constant 3 : index
    %c0_21 = arith.constant 0 : index
    %c0_22 = arith.constant 0 : index
    %21 = vector.load %arg2[%c3_20, %c0_21, %c0_22] : memref<16x4x128xf32, #tpu.memory_space<vmem>>, vector<1x4x128xf32>
    %22 = vector.shape_cast %21 : vector<1x4x128xf32> to vector<4x128xf32>
    %cst_23 = arith.constant dense<0.000000e+00> : vector<418x128xf32>
    %23 = tpu.matmul %20, %22, %cst_23 {dimension_numbers = #tpu.dot_dimension_numbers<[1], [0], [0], [1], [0, 0, 1, 1], [], []>} : vector<418x4xf32>, vector<4x128xf32>, vector<418x128xf32> -> vector<418x128xf32>
    %24 = arith.addf %18, %23 : vector<418x128xf32>
    %c0_24 = arith.constant 0 : index
    %c22 = arith.constant 22 : index
    %c0_25 = arith.constant 0 : index
    %25 = vector.load %arg1[%c0_24, %c22, %c0_25] : memref<1x506x4xf32, #tpu.memory_space<vmem>>, vector<1x418x4xf32>
    %26 = vector.shape_cast %25 : vector<1x418x4xf32> to vector<418x4xf32>
    %c4 = arith.constant 4 : index
    %c0_26 = arith.constant 0 : index
    %c0_27 = arith.constant 0 : index
    %27 = vector.load %arg2[%c4, %c0_26, %c0_27] : memref<16x4x128xf32, #tpu.memory_space<vmem>>, vector<1x4x128xf32>
    %28 = vector.shape_cast %27 : vector<1x4x128xf32> to vector<4x128xf32>
    %cst_28 = arith.constant dense<0.000000e+00> : vector<418x128xf32>
    %29 = tpu.matmul %26, %28, %cst_28 {dimension_numbers = #tpu.dot_dimension_numbers<[1], [0], [0], [1], [0, 0, 1, 1], [], []>} : vector<418x4xf32>, vector<4x128xf32>, vector<418x128xf32> -> vector<418x128xf32>
    %30 = arith.addf %24, %29 : vector<418x128xf32>
    %c0_29 = arith.constant 0 : index
    %c23 = arith.constant 23 : index
    %c0_30 = arith.constant 0 : index
    %31 = vector.load %arg1[%c0_29, %c23, %c0_30] : memref<1x506x4xf32, #tpu.memory_space<vmem>>, vector<1x418x4xf32>
    %32 = vector.shape_cast %31 : vector<1x418x4xf32> to vector<418x4xf32>
    %c5 = arith.constant 5 : index
    %c0_31 = arith.constant 0 : index
    %c0_32 = arith.constant 0 : index
    %33 = vector.load %arg2[%c5, %c0_31, %c0_32] : memref<16x4x128xf32, #tpu.memory_space<vmem>>, vector<1x4x128xf32>
    %34 = vector.shape_cast %33 : vector<1x4x128xf32> to vector<4x128xf32>
    %cst_33 = arith.constant dense<0.000000e+00> : vector<418x128xf32>
    %35 = tpu.matmul %32, %34, %cst_33 {dimension_numbers = #tpu.dot_dimension_numbers<[1], [0], [0], [1], [0, 0, 1, 1], [], []>} : vector<418x4xf32>, vector<4x128xf32>, vector<418x128xf32> -> vector<418x128xf32>
    %36 = arith.addf %30, %35 : vector<418x128xf32>
    %c0_34 = arith.constant 0 : index
    %c24 = arith.constant 24 : index
    %c0_35 = arith.constant 0 : index
    %37 = vector.load %arg1[%c0_34, %c24, %c0_35] : memref<1x506x4xf32, #tpu.memory_space<vmem>>, vector<1x418x4xf32>
    %38 = vector.shape_cast %37 : vector<1x418x4xf32> to vector<418x4xf32>
    %c6 = arith.constant 6 : index
    %c0_36 = arith.constant 0 : index
    %c0_37 = arith.constant 0 : index
    %39 = vector.load %arg2[%c6, %c0_36, %c0_37] : memref<16x4x128xf32, #tpu.memory_space<vmem>>, vector<1x4x128xf32>
    %40 = vector.shape_cast %39 : vector<1x4x128xf32> to vector<4x128xf32>
    %cst_38 = arith.constant dense<0.000000e+00> : vector<418x128xf32>
    %41 = tpu.matmul %38, %40, %cst_38 {dimension_numbers = #tpu.dot_dimension_numbers<[1], [0], [0], [1], [0, 0, 1, 1], [], []>} : vector<418x4xf32>, vector<4x128xf32>, vector<418x128xf32> -> vector<418x128xf32>
    %42 = arith.addf %36, %41 : vector<418x128xf32>
    %c0_39 = arith.constant 0 : index
    %c25 = arith.constant 25 : index
    %c0_40 = arith.constant 0 : index
    %43 = vector.load %arg1[%c0_39, %c25, %c0_40] : memref<1x506x4xf32, #tpu.memory_space<vmem>>, vector<1x418x4xf32>
    %44 = vector.shape_cast %43 : vector<1x418x4xf32> to vector<418x4xf32>
    %c7 = arith.constant 7 : index
    %c0_41 = arith.constant 0 : index
    %c0_42 = arith.constant 0 : index
    %45 = vector.load %arg2[%c7, %c0_41, %c0_42] : memref<16x4x128xf32, #tpu.memory_space<vmem>>, vector<1x4x128xf32>
    %46 = vector.shape_cast %45 : vector<1x4x128xf32> to vector<4x128xf32>
    %cst_43 = arith.constant dense<0.000000e+00> : vector<418x128xf32>
    %47 = tpu.matmul %44, %46, %cst_43 {dimension_numbers = #tpu.dot_dimension_numbers<[1], [0], [0], [1], [0, 0, 1, 1], [], []>} : vector<418x4xf32>, vector<4x128xf32>, vector<418x128xf32> -> vector<418x128xf32>
    %48 = arith.addf %42, %47 : vector<418x128xf32>
    %c0_44 = arith.constant 0 : index
    %c44 = arith.constant 44 : index
    %c0_45 = arith.constant 0 : index
    %49 = vector.load %arg1[%c0_44, %c44, %c0_45] : memref<1x506x4xf32, #tpu.memory_space<vmem>>, vector<1x418x4xf32>
    %50 = vector.shape_cast %49 : vector<1x418x4xf32> to vector<418x4xf32>
    %c8 = arith.constant 8 : index
    %c0_46 = arith.constant 0 : index
    %c0_47 = arith.constant 0 : index
    %51 = vector.load %arg2[%c8, %c0_46, %c0_47] : memref<16x4x128xf32, #tpu.memory_space<vmem>>, vector<1x4x128xf32>
    %52 = vector.shape_cast %51 : vector<1x4x128xf32> to vector<4x128xf32>
    %cst_48 = arith.constant dense<0.000000e+00> : vector<418x128xf32>
    %53 = tpu.matmul %50, %52, %cst_48 {dimension_numbers = #tpu.dot_dimension_numbers<[1], [0], [0], [1], [0, 0, 1, 1], [], []>} : vector<418x4xf32>, vector<4x128xf32>, vector<418x128xf32> -> vector<418x128xf32>
    %54 = arith.addf %48, %53 : vector<418x128xf32>
    %c0_49 = arith.constant 0 : index
    %c45 = arith.constant 45 : index
    %c0_50 = arith.constant 0 : index
    %55 = vector.load %arg1[%c0_49, %c45, %c0_50] : memref<1x506x4xf32, #tpu.memory_space<vmem>>, vector<1x418x4xf32>
    %56 = vector.shape_cast %55 : vector<1x418x4xf32> to vector<418x4xf32>
    %c9 = arith.constant 9 : index
    %c0_51 = arith.constant 0 : index
    %c0_52 = arith.constant 0 : index
    %57 = vector.load %arg2[%c9, %c0_51, %c0_52] : memref<16x4x128xf32, #tpu.memory_space<vmem>>, vector<1x4x128xf32>
    %58 = vector.shape_cast %57 : vector<1x4x128xf32> to vector<4x128xf32>
    %cst_53 = arith.constant dense<0.000000e+00> : vector<418x128xf32>
    %59 = tpu.matmul %56, %58, %cst_53 {dimension_numbers = #tpu.dot_dimension_numbers<[1], [0], [0], [1], [0, 0, 1, 1], [], []>} : vector<418x4xf32>, vector<4x128xf32>, vector<418x128xf32> -> vector<418x128xf32>
    %60 = arith.addf %54, %59 : vector<418x128xf32>
    %c0_54 = arith.constant 0 : index
    %c46 = arith.constant 46 : index
    %c0_55 = arith.constant 0 : index
    %61 = vector.load %arg1[%c0_54, %c46, %c0_55] : memref<1x506x4xf32, #tpu.memory_space<vmem>>, vector<1x418x4xf32>
    %62 = vector.shape_cast %61 : vector<1x418x4xf32> to vector<418x4xf32>
    %c10 = arith.constant 10 : index
    %c0_56 = arith.constant 0 : index
    %c0_57 = arith.constant 0 : index
    %63 = vector.load %arg2[%c10, %c0_56, %c0_57] : memref<16x4x128xf32, #tpu.memory_space<vmem>>, vector<1x4x128xf32>
    %64 = vector.shape_cast %63 : vector<1x4x128xf32> to vector<4x128xf32>
    %cst_58 = arith.constant dense<0.000000e+00> : vector<418x128xf32>
    %65 = tpu.matmul %62, %64, %cst_58 {dimension_numbers = #tpu.dot_dimension_numbers<[1], [0], [0], [1], [0, 0, 1, 1], [], []>} : vector<418x4xf32>, vector<4x128xf32>, vector<418x128xf32> -> vector<418x128xf32>
    %66 = arith.addf %60, %65 : vector<418x128xf32>
    %c0_59 = arith.constant 0 : index
    %c47 = arith.constant 47 : index
    %c0_60 = arith.constant 0 : index
    %67 = vector.load %arg1[%c0_59, %c47, %c0_60] : memref<1x506x4xf32, #tpu.memory_space<vmem>>, vector<1x418x4xf32>
    %68 = vector.shape_cast %67 : vector<1x418x4xf32> to vector<418x4xf32>
    %c11 = arith.constant 11 : index
    %c0_61 = arith.constant 0 : index
    %c0_62 = arith.constant 0 : index
    %69 = vector.load %arg2[%c11, %c0_61, %c0_62] : memref<16x4x128xf32, #tpu.memory_space<vmem>>, vector<1x4x128xf32>
    %70 = vector.shape_cast %69 : vector<1x4x128xf32> to vector<4x128xf32>
    %cst_63 = arith.constant dense<0.000000e+00> : vector<418x128xf32>
    %71 = tpu.matmul %68, %70, %cst_63 {dimension_numbers = #tpu.dot_dimension_numbers<[1], [0], [0], [1], [0, 0, 1, 1], [], []>} : vector<418x4xf32>, vector<4x128xf32>, vector<418x128xf32> -> vector<418x128xf32>
    %72 = arith.addf %66, %71 : vector<418x128xf32>
    %c0_64 = arith.constant 0 : index
    %c66 = arith.constant 66 : index
    %c0_65 = arith.constant 0 : index
    %73 = vector.load %arg1[%c0_64, %c66, %c0_65] : memref<1x506x4xf32, #tpu.memory_space<vmem>>, vector<1x418x4xf32>
    %74 = vector.shape_cast %73 : vector<1x418x4xf32> to vector<418x4xf32>
    %c12 = arith.constant 12 : index
    %c0_66 = arith.constant 0 : index
    %c0_67 = arith.constant 0 : index
    %75 = vector.load %arg2[%c12, %c0_66, %c0_67] : memref<16x4x128xf32, #tpu.memory_space<vmem>>, vector<1x4x128xf32>
    %76 = vector.shape_cast %75 : vector<1x4x128xf32> to vector<4x128xf32>
    %cst_68 = arith.constant dense<0.000000e+00> : vector<418x128xf32>
    %77 = tpu.matmul %74, %76, %cst_68 {dimension_numbers = #tpu.dot_dimension_numbers<[1], [0], [0], [1], [0, 0, 1, 1], [], []>} : vector<418x4xf32>, vector<4x128xf32>, vector<418x128xf32> -> vector<418x128xf32>
    %78 = arith.addf %72, %77 : vector<418x128xf32>
    %c0_69 = arith.constant 0 : index
    %c67 = arith.constant 67 : index
    %c0_70 = arith.constant 0 : index
    %79 = vector.load %arg1[%c0_69, %c67, %c0_70] : memref<1x506x4xf32, #tpu.memory_space<vmem>>, vector<1x418x4xf32>
    %80 = vector.shape_cast %79 : vector<1x418x4xf32> to vector<418x4xf32>
    %c13 = arith.constant 13 : index
    %c0_71 = arith.constant 0 : index
    %c0_72 = arith.constant 0 : index
    %81 = vector.load %arg2[%c13, %c0_71, %c0_72] : memref<16x4x128xf32, #tpu.memory_space<vmem>>, vector<1x4x128xf32>
    %82 = vector.shape_cast %81 : vector<1x4x128xf32> to vector<4x128xf32>
    %cst_73 = arith.constant dense<0.000000e+00> : vector<418x128xf32>
    %83 = tpu.matmul %80, %82, %cst_73 {dimension_numbers = #tpu.dot_dimension_numbers<[1], [0], [0], [1], [0, 0, 1, 1], [], []>} : vector<418x4xf32>, vector<4x128xf32>, vector<418x128xf32> -> vector<418x128xf32>
    %84 = arith.addf %78, %83 : vector<418x128xf32>
    %c0_74 = arith.constant 0 : index
    %c68 = arith.constant 68 : index
    %c0_75 = arith.constant 0 : index
    %85 = vector.load %arg1[%c0_74, %c68, %c0_75] : memref<1x506x4xf32, #tpu.memory_space<vmem>>, vector<1x418x4xf32>
    %86 = vector.shape_cast %85 : vector<1x418x4xf32> to vector<418x4xf32>
    %c14 = arith.constant 14 : index
    %c0_76 = arith.constant 0 : index
    %c0_77 = arith.constant 0 : index
    %87 = vector.load %arg2[%c14, %c0_76, %c0_77] : memref<16x4x128xf32, #tpu.memory_space<vmem>>, vector<1x4x128xf32>
    %88 = vector.shape_cast %87 : vector<1x4x128xf32> to vector<4x128xf32>
    %cst_78 = arith.constant dense<0.000000e+00> : vector<418x128xf32>
    %89 = tpu.matmul %86, %88, %cst_78 {dimension_numbers = #tpu.dot_dimension_numbers<[1], [0], [0], [1], [0, 0, 1, 1], [], []>} : vector<418x4xf32>, vector<4x128xf32>, vector<418x128xf32> -> vector<418x128xf32>
    %90 = arith.addf %84, %89 : vector<418x128xf32>
    %c0_79 = arith.constant 0 : index
    %c69 = arith.constant 69 : index
    %c0_80 = arith.constant 0 : index
    %91 = vector.load %arg1[%c0_79, %c69, %c0_80] : memref<1x506x4xf32, #tpu.memory_space<vmem>>, vector<1x418x4xf32>
    %92 = vector.shape_cast %91 : vector<1x418x4xf32> to vector<418x4xf32>
    %c15 = arith.constant 15 : index
    %c0_81 = arith.constant 0 : index
    %c0_82 = arith.constant 0 : index
    %93 = vector.load %arg2[%c15, %c0_81, %c0_82] : memref<16x4x128xf32, #tpu.memory_space<vmem>>, vector<1x4x128xf32>
    %94 = vector.shape_cast %93 : vector<1x4x128xf32> to vector<4x128xf32>
    %cst_83 = arith.constant dense<0.000000e+00> : vector<418x128xf32>
    %95 = tpu.matmul %92, %94, %cst_83 {dimension_numbers = #tpu.dot_dimension_numbers<[1], [0], [0], [1], [0, 0, 1, 1], [], []>} : vector<418x4xf32>, vector<4x128xf32>, vector<418x128xf32> -> vector<418x128xf32>
    %96 = arith.addf %90, %95 : vector<418x128xf32>
    %c0_84 = arith.constant 0 : index
    %c0_85 = arith.constant 0 : index
    %97 = vector.load %arg3[%c0_84, %c0_85] : memref<418x1xf32, #tpu.memory_space<vmem>>, vector<418x1xf32>
    %98 = vector.broadcast %97 : vector<418x1xf32> to vector<418x128xf32>
    %99 = arith.mulf %96, %98 : vector<418x128xf32>
    %cst_86 = arith.constant dense<0.000000e+00> : vector<128xf32>
    %100 = vector.multi_reduction <add>, %99, %cst_86 [0] : vector<418x128xf32> to vector<128xf32>
    %101 = vector.shape_cast %100 : vector<128xf32> to vector<1x128xf32>
    %102 = arith.mulf %99, %99 : vector<418x128xf32>
    %cst_87 = arith.constant dense<0.000000e+00> : vector<128xf32>
    %103 = vector.multi_reduction <add>, %102, %cst_87 [0] : vector<418x128xf32> to vector<128xf32>
    %104 = vector.shape_cast %103 : vector<128xf32> to vector<1x128xf32>
    %105 = tpu.concatenate %101, %104 in 0 : vector<1x128xf32>, vector<1x128xf32> -> vector<2x128xf32>
    %c0_88 = arith.constant 0 : index
    %c0_89 = arith.constant 0 : index
    %c0_90 = arith.constant 0 : index
    %106 = vector.load %arg4[%c0_88, %c0_89, %c0_90] : memref<1x2x128xf32, #tpu.memory_space<vmem>>, vector<1x2x128xf32>
    %107 = vector.shape_cast %106 : vector<1x2x128xf32> to vector<2x128xf32>
    %108 = vector.shape_cast %105 : vector<2x128xf32> to vector<1x2x128xf32>
    tpu.vector_store %arg4[%c0_88, %c0_89, %c0_90], %108 {strides = array<i32>} : memref<1x2x128xf32, #tpu.memory_space<vmem>>, vector<1x2x128xf32>,
    return
  }
  func.func @transform_0(%arg0: i32) -> (i32, i32, i32) {
    %c0_i32 = arith.constant 0 : i32
    %c0_i32_0 = arith.constant 0 : i32
    %c0_i32_1 = arith.constant 0 : i32
    return %arg0, %c0_i32, %c0_i32_0 : i32, i32, i32
  }
  func.func @transform_1(%arg0: i32) -> (i32, i32, i32) {
    %c0_i32 = arith.constant 0 : i32
    %c0_i32_0 = arith.constant 0 : i32
    %c0_i32_1 = arith.constant 0 : i32
    %c0_i32_2 = arith.constant 0 : i32
    return %c0_i32, %c0_i32_0, %c0_i32_1 : i32, i32, i32
  }
  func.func @transform_2(%arg0: i32) -> (i32, i32) {
    %c0_i32 = arith.constant 0 : i32
    %c0_i32_0 = arith.constant 0 : i32
    %c0_i32_1 = arith.constant 0 : i32
    return %c0_i32, %c0_i32_0 : i32, i32
  }
  func.func @transform_3(%arg0: i32) -> (i32, i32, i32) {
    %c0_i32 = arith.constant 0 : i32
    %c0_i32_0 = arith.constant 0 : i32
    %c0_i32_1 = arith.constant 0 : i32
    return %arg0, %c0_i32, %c0_i32_0 : i32, i32, i32
  }
}

</mosaic_0001>

<llo_original>
// kernel: tpu_custom_call.1
$region0: #{tpu_custom_call.1}
  #allocation0 [shape = 'u32[]', space=smem, size = 0x4, offset = 0x4, fixed_abs, tag = 'smem constant byte address 0x4 - core index']
  #allocation1 [shape = 'u32[144,128]{1,0:T(1,128)}', space=vmem, size = 0x12000, scoped, tag = 'internal scratch']
  %s0 = inlined_call_operand.vmem [shape: f32[2,506,4], index: 0, kind: input, shape index: {}]
  %s1 = inlined_call_operand.vmem [shape: f32[16,4,128], index: 1, kind: input, shape index: {}]
  %s2 = inlined_call_operand.vmem [shape: f32[418,1], index: 2, kind: input, shape index: {}]
  %s3 = inlined_call_operand.hbm [shape: f32[2,2,128], index: 3, kind: output, shape index: {}]
  %s4 = sld [smem:[#allocation0]]
  $region45: #{tpu_custom_call.1} parent=0
    _
  %s6 = ssub.s32 1, %s4
  %s7 = scalar_select 0, %s6, %s4
  $region1: #{tpu_custom_call.1} parent=0
    #allocation2 [shape = 'u8[2048]{0}', space=vmem, size = 0x800, scoped, tag = 'output window, operand 0']
    #allocation3 [shape = 's32[2]{0}', space=sflag, size = 0x8, scoped, tag = 'scoped memory for tpu_custom_call.1']
    %8 = vsyncpa [#allocation3], 0
    %s9 = scalar_lea.sflag [#allocation3], 1
    %10 = vsyncpa %s9, 0
    loop: start=0, step=1, limit=4
    $region2: #{tpu_custom_call.1} parent=1 // loop_pre_header
      _
    $region3: #{tpu_custom_call.1} parent=1 // loop_header
      %s12 = sphi 0, %s16
      %p13 = scmp.ge.s32.totalorder %s12, 4
      %s22 = sphi 0, %s24
      %s25 = sphi 0, %s22
      %s26 = sphi 0, %s25
      %s42 = sphi 0, %s26
      %s46 = sphi 0, %s46
      %s48 = sphi 0, %s46
      %s49 = sphi 0, %s48
      %s63 = sphi 0, %s49
      %s67 = sphi 0, %s67
      %s69 = sphi 0, %s67
      %s70 = sphi 0, %s69
      %s84 = sphi 0, %s70
      %s90 = sphi 0, %s92
      %s93 = sphi 0, %s90
      %s94 = sphi 0, %s93
      %s110 = sphi 0, %s94
    $region4: #{tpu_custom_call.1} parent=1 // loop_header_branch
      %15 = sbr.rel (%p13) target = $region8
    $region5: #{tpu_custom_call.1} parent=1 // loop_body
      %s17 = ssub.s32 %s12, 1
      %s18 = ssub.s32 %s12, 2
      %s19 = sadd.s32 %s12, 1
      %s20 = ssub.s32 %s12, %s19
      %p21 = scmp.eq.s32.totalorder %s20, 0
      %s23 = sadd.s32 %s22, 1
      %s24 = scalar_select %p21, %s22, %s23
      %p27 = pneg %p21
      %p28 = scmp.eq.s32.totalorder %s12, 1
      %p29 = por %p27, %p28
      %p30 = scmp.ne.s32.totalorder %s22, %s25
      %p31 = scmp.eq.s32.totalorder %s12, 0
      %p32 = por %p30, %p31
      %p33 = scmp.ne.s32.totalorder %s22, %s25
      %p34 = scmp.eq.s32.totalorder %s17, 1
      %p35 = por %p33, %p34
      %p36 = scmp.ne.s32.totalorder %s25, %s26
      %p37 = scmp.eq.s32.totalorder %s17, 0
      %p38 = por %p36, %p37
      %p39 = scmp.ne.s32.totalorder %s25, %s26
      %p40 = scmp.eq.s32.totalorder %s18, 1
      %p41 = por %p39, %p40
      %p43 = scmp.ne.s32.totalorder %s26, %s42
      %p44 = scmp.eq.s32.totalorder %s18, 0
      %p45 = por %p43, %p44
      %s47 = sadd.s32 %s46, 1
      %p50 = scmp.eq.s32.totalorder %s12, 1
      %p51 = scmp.ne.s32.totalorder %s46, %s48
      %p52 = scmp.eq.s32.totalorder %s12, 0
      %p53 = por %p51, %p52
      %p54 = scmp.ne.s32.totalorder %s46, %s48
      %p55 = scmp.eq.s32.totalorder %s17, 1
      %p56 = por %p54, %p55
      %p57 = scmp.ne.s32.totalorder %s48, %s49
      %p58 = scmp.eq.s32.totalorder %s17, 0
      %p59 = por %p57, %p58
      %p60 = scmp.ne.s32.totalorder %s48, %s49
      %p61 = scmp.eq.s32.totalorder %s18, 1
      %p62 = por %p60, %p61
      %p64 = scmp.ne.s32.totalorder %s49, %s63
      %p65 = scmp.eq.s32.totalorder %s18, 0
      %p66 = por %p64, %p65
      %s68 = sadd.s32 %s67, 1
      %p71 = scmp.eq.s32.totalorder %s12, 1
      %p72 = scmp.ne.s32.totalorder %s67, %s69
      %p73 = scmp.eq.s32.totalorder %s12, 0
      %p74 = por %p72, %p73
      %p75 = scmp.ne.s32.totalorder %s67, %s69
      %p76 = scmp.eq.s32.totalorder %s17, 1
      %p77 = por %p75, %p76
      %p78 = scmp.ne.s32.totalorder %s69, %s70
      %p79 = scmp.eq.s32.totalorder %s17, 0
      %p80 = por %p78, %p79
      %p81 = scmp.ne.s32.totalorder %s69, %s70
      %p82 = scmp.eq.s32.totalorder %s18, 1
      %p83 = por %p81, %p82
      %p85 = scmp.ne.s32.totalorder %s70, %s84
      %p86 = scmp.eq.s32.totalorder %s18, 0
      %p87 = por %p85, %p86
      %s88 = ssub.s32 %s12, %s19
      %p89 = scmp.eq.s32.totalorder %s88, 0
      %s91 = sadd.s32 %s90, 1
      %s92 = scalar_select %p89, %s90, %s91
      %p95 = pneg %p89
      %p96 = scmp.eq.s32.totalorder %s12, 1
      %p97 = por %p95, %p96
      %p98 = scmp.ne.s32.totalorder %s90, %s93
      %p99 = scmp.eq.s32.totalorder %s12, 0
      %p100 = por %p98, %p99
      %p101 = scmp.ne.s32.totalorder %s90, %s93
      %p102 = scmp.eq.s32.totalorder %s17, 1
      %p103 = por %p101, %p102
      %p104 = scmp.ne.s32.totalorder %s93, %s94
      %p105 = scmp.eq.s32.totalorder %s17, 0
      %p106 = por %p104, %p105
      %p107 = scmp.ne.s32.totalorder %s93, %s94
      %p108 = scmp.eq.s32.totalorder %s18, 1
      %p109 = por %p107, %p108
      %p111 = scmp.ne.s32.totalorder %s94, %s110
      %p112 = scmp.eq.s32.totalorder %s18, 0
      %p113 = por %p111, %p112
      %p114 = scmp.le.s32.totalorder 1, %s12
      %p115 = scmp.lt.s32.totalorder %s12, 3
      %p116 = pnand %p114, %p115
      %p117 = pneg %p116
      // Predicated region
      $region9: #{tpu_custom_call.1} parent=5 // pred_check
        _
      $region10: #{tpu_custom_call.1} parent=5 // pred_check_branch
        %119 = sbr.rel (%p116) target = $region12
      $region11: #{tpu_custom_call.1} parent=5 // pred_region
        %s120 = ssub.s32 %s12, 1
        // Predicated region
        $region13: #{tpu_custom_call.1} parent=11 // pred_check
          %p121 = pneg %p59
        $region14: #{tpu_custom_call.1} parent=11 // pred_check_branch
          %123 = sbr.rel (%p121) target = $region16
        $region15: #{tpu_custom_call.1} parent=11 // pred_region
          _
        $region16: #{tpu_custom_call.1} parent=11 // pred_fallthru
          _
        // Predicated region
        $region17: #{tpu_custom_call.1} parent=11 // pred_check
          %p124 = pneg %p80
        $region18: #{tpu_custom_call.1} parent=11 // pred_check_branch
          %126 = sbr.rel (%p124) target = $region20
        $region19: #{tpu_custom_call.1} parent=11 // pred_region
          _
        $region20: #{tpu_custom_call.1} parent=11 // pred_fallthru
          _
      $region12: #{tpu_custom_call.1} parent=5 // pred_fallthru
        _
      %p127 = scmp.lt.s32.totalorder %s12, 2
      // Predicated region
      $region21: #{tpu_custom_call.1} parent=5 // pred_check
        %p128 = pneg %p127
      $region22: #{tpu_custom_call.1} parent=5 // pred_check_branch
        %130 = sbr.rel (%p128) target = $region24
      $region23: #{tpu_custom_call.1} parent=5 // pred_region
        // Predicated region
        $region25: #{tpu_custom_call.1} parent=23 // pred_check
          %p131 = pneg %p32
        $region26: #{tpu_custom_call.1} parent=23 // pred_check_branch
          %133 = sbr.rel (%p131) target = $region28
        $region27: #{tpu_custom_call.1} parent=23 // pred_region
          %p134 = scmp.lt.s32.totalorder %s12, 1
          %s135 = scalar_select %p134, %s12, 1
          %s136 = smul.addr %s135, 64
          %s137 = smul.addr %s136, 8
          %s138 = scalar_lea.vmem %s0, %s137
        $region28: #{tpu_custom_call.1} parent=23 // pred_fallthru
          _
      $region24: #{tpu_custom_call.1} parent=5 // pred_fallthru
        _
      %p139 = scmp.le.s32.totalorder 1, %s12
      %p140 = scmp.lt.s32.totalorder %s12, 3
      %p141 = pnand %p139, %p140
      %p142 = pneg %p141
      // Predicated region
      $region29: #{tpu_custom_call.1} parent=5 // pred_check
        _
      $region30: #{tpu_custom_call.1} parent=5 // pred_check_branch
        %144 = sbr.rel (%p141) target = $region32
      $region31: #{tpu_custom_call.1} parent=5 // pred_region
        %s145 = ssub.s32 %s12, 1
        %p146 = scmp.lt.s32.totalorder %s17, 1
        %s147 = scalar_select %p146, %s17, 1
        %s148 = smul.addr %s147, 64
        %s149 = smul.addr %s148, 8
        %s150 = scalar_lea.vmem %s0, %s149
        %p151 = pneg %p38
        %p152 = pneg %p35
        %p153 = pneg %p59
        %p154 = pneg %p56
        %p155 = pneg %p80
        %p156 = pneg %p77
        %p157 = pneg %p106
        %p158 = pneg %p103
        %s159 = sand.u32 %s93, 1
        %s160 = scalar_lea.sflag [#allocation3], %s159
        %s161 = sand.u32 %s93, 1
        %s162 = smul.addr %s161, 2
        %s163 = scalar_lea.vmem [#allocation2], %s162
        %p164 = scmp.lt.s32.totalorder %s17, 1
        %s165 = scalar_select %p164, %s17, 1
        %s166 = smul.addr %s165, 64
        %s167 = smul.addr %s166, 8
        %s168 = scalar_lea.vmem %s0, %s167
        %v169 = vld [vmem:[%s168] sm:$0xff]
        %v170 = vld [vmem:[%s168 + $0x8] sm:$0xff]
        %v171 = vld [vmem:[%s168 + $0x10] sm:$0xff]
        %v172 = vld [vmem:[%s168 + $0x18] sm:$0xff]
        %v173 = vld [vmem:[%s168 + $0x20] sm:$0xff]
        %v174 = vld [vmem:[%s168 + $0x28] sm:$0xff]
        %v175 = vld [vmem:[%s168 + $0x30] sm:$0xff]
        %v176 = vld [vmem:[%s168 + $0x38] sm:$0xff]
        %v177 = vld [vmem:[%s168 + $0x40] sm:$0xff]
        %v178 = vld [vmem:[%s168 + $0x48] sm:$0xff]
        %v179 = vld [vmem:[%s168 + $0x50] sm:$0xff]
        %v180 = vld [vmem:[%s168 + $0x58] sm:$0xff]
        %v181 = vld [vmem:[%s168 + $0x60] sm:$0xff]
        %v182 = vld [vmem:[%s168 + $0x68] sm:$0xff]
        %v183 = vld [vmem:[%s168 + $0x70] sm:$0xff]
        %v184 = vld [vmem:[%s168 + $0x78] sm:$0xff]
        %v185 = vld [vmem:[%s168 + $0x80] sm:$0xff]
        %v186 = vld [vmem:[%s168 + $0x88] sm:$0xff]
        %v187 = vld [vmem:[%s168 + $0x90] sm:$0xff]
        %v188 = vld [vmem:[%s168 + $0x98] sm:$0xff]
        %v189 = vld [vmem:[%s168 + $0xa0] sm:$0xff]
        %v190 = vld [vmem:[%s168 + $0xa8] sm:$0xff]
        %v191 = vld [vmem:[%s168 + $0xb0] sm:$0xff]
        %v192 = vld [vmem:[%s168 + $0xb8] sm:$0xff]
        %v193 = vld [vmem:[%s168 + $0xc0] sm:$0xff]
        %v194 = vld [vmem:[%s168 + $0xc8] sm:$0xff]
        %v195 = vld [vmem:[%s168 + $0xd0] sm:$0xff]
        %v196 = vld [vmem:[%s168 + $0xd8] sm:$0xff]
        %v197 = vld [vmem:[%s168 + $0xe0] sm:$0xff]
        %v198 = vld [vmem:[%s168 + $0xe8] sm:$0xff]
        %v199 = vld [vmem:[%s168 + $0xf0] sm:$0xff]
        %v200 = vld [vmem:[%s168 + $0xf8] sm:$0xff]
        %v201 = vld [vmem:[%s168 + $0x100] sm:$0xff]
        %v202 = vld [vmem:[%s168 + $0x108] sm:$0xff]
        %v203 = vld [vmem:[%s168 + $0x110] sm:$0xff]
        %v204 = vld [vmem:[%s168 + $0x118] sm:$0xff]
        %v205 = vld [vmem:[%s168 + $0x120] sm:$0xff]
        %v206 = vld [vmem:[%s168 + $0x128] sm:$0xff]
        %v207 = vld [vmem:[%s168 + $0x130] sm:$0xff]
        %v208 = vld [vmem:[%s168 + $0x138] sm:$0xff]
        %v209 = vld [vmem:[%s168 + $0x140] sm:$0xff]
        %v210 = vld [vmem:[%s168 + $0x148] sm:$0xff]
        %v211 = vld [vmem:[%s168 + $0x150] sm:$0xff]
        %v212 = vld [vmem:[%s168 + $0x158] sm:$0xff]
        %v213 = vld [vmem:[%s168 + $0x160] sm:$0xff]
        %v214 = vld [vmem:[%s168 + $0x168] sm:$0xff]
        %v215 = vld [vmem:[%s168 + $0x170] sm:$0xff]
        %v216 = vld [vmem:[%s168 + $0x178] sm:$0xff]
        %v217 = vld [vmem:[%s168 + $0x180] sm:$0xff]
        %v218 = vld [vmem:[%s168 + $0x188] sm:$0xff]
        %v219 = vld [vmem:[%s168 + $0x190] sm:$0xff]
        %v220 = vld [vmem:[%s168 + $0x198] sm:$0xff]
        %v221 = vld [vmem:[%s168 + $0x1a0] sm:$0x3]
        %v222 = vld [vmem:[%s1] sm:$0xf]
        %v223 = vld [vmem:[%s168 + $0x1] sm:$0xff]
        %v224 = vld [vmem:[%s168 + $0x9] sm:$0xff]
        %v225 = vld [vmem:[%s168 + $0x11] sm:$0xff]
        %v226 = vld [vmem:[%s168 + $0x19] sm:$0xff]
        %v227 = vld [vmem:[%s168 + $0x21] sm:$0xff]
        %v228 = vld [vmem:[%s168 + $0x29] sm:$0xff]
        %v229 = vld [vmem:[%s168 + $0x31] sm:$0xff]
        %v230 = vld [vmem:[%s168 + $0x39] sm:$0xff]
        %v231 = vld [vmem:[%s168 + $0x41] sm:$0xff]
        %v232 = vld [vmem:[%s168 + $0x49] sm:$0xff]
        %v233 = vld [vmem:[%s168 + $0x51] sm:$0xff]
        %v234 = vld [vmem:[%s168 + $0x59] sm:$0xff]
        %v235 = vld [vmem:[%s168 + $0x61] sm:$0xff]
        %v236 = vld [vmem:[%s168 + $0x69] sm:$0xff]
        %v237 = vld [vmem:[%s168 + $0x71] sm:$0xff]
        %v238 = vld [vmem:[%s168 + $0x79] sm:$0xff]
        %v239 = vld [vmem:[%s168 + $0x81] sm:$0xff]
        %v240 = vld [vmem:[%s168 + $0x89] sm:$0xff]
        %v241 = vld [vmem:[%s168 + $0x91] sm:$0xff]
        %v242 = vld [vmem:[%s168 + $0x99] sm:$0xff]
        %v243 = vld [vmem:[%s168 + $0xa1] sm:$0xff]
        %v244 = vld [vmem:[%s168 + $0xa9] sm:$0xff]
        %v245 = vld [vmem:[%s168 + $0xb1] sm:$0xff]
        %v246 = vld [vmem:[%s168 + $0xb9] sm:$0xff]
        %v247 = vld [vmem:[%s168 + $0xc1] sm:$0xff]
        %v248 = vld [vmem:[%s168 + $0xc9] sm:$0xff]
        %v249 = vld [vmem:[%s168 + $0xd1] sm:$0xff]
        %v250 = vld [vmem:[%s168 + $0xd9] sm:$0xff]
        %v251 = vld [vmem:[%s168 + $0xe1] sm:$0xff]
        %v252 = vld [vmem:[%s168 + $0xe9] sm:$0xff]
        %v253 = vld [vmem:[%s168 + $0xf1] sm:$0xff]
        %v254 = vld [vmem:[%s168 + $0xf9] sm:$0xff]
        %v255 = vld [vmem:[%s168 + $0x101] sm:$0xff]
        %v256 = vld [vmem:[%s168 + $0x109] sm:$0xff]
        %v257 = vld [vmem:[%s168 + $0x111] sm:$0xff]
        %v258 = vld [vmem:[%s168 + $0x119] sm:$0xff]
        %v259 = vld [vmem:[%s168 + $0x121] sm:$0xff]
        %v260 = vld [vmem:[%s168 + $0x129] sm:$0xff]
        %v261 = vld [vmem:[%s168 + $0x131] sm:$0xff]
        %v262 = vld [vmem:[%s168 + $0x139] sm:$0xff]
        %v263 = vld [vmem:[%s168 + $0x141] sm:$0xff]
        %v264 = vld [vmem:[%s168 + $0x149] sm:$0xff]
        %v265 = vld [vmem:[%s168 + $0x151] sm:$0xff]
        %v266 = vld [vmem:[%s168 + $0x159] sm:$0xff]
        %v267 = vld [vmem:[%s168 + $0x161] sm:$0xff]
        %v268 = vld [vmem:[%s168 + $0x169] sm:$0xff]
        %v269 = vld [vmem:[%s168 + $0x171] sm:$0xff]
        %v270 = vld [vmem:[%s168 + $0x179] sm:$0xff]
        %v271 = vld [vmem:[%s168 + $0x181] sm:$0xff]
        %v272 = vld [vmem:[%s168 + $0x189] sm:$0xff]
        %v273 = vld [vmem:[%s168 + $0x191] sm:$0xff]
        %v274 = vld [vmem:[%s168 + $0x199] sm:$0xff]
        %v275 = vld [vmem:[%s168 + $0x1a1] sm:$0x3]
        %s276 = scalar_lea.vmem %s1, 4
        %v277 = vld [vmem:[%s276] sm:$0xf]
        %vm278 = vcmask 31744
        %v280 = vsel %vm278, %v223, 0
        %v283 = vsel %vm278, %v224, 0
        %v286 = vsel %vm278, %v225, 0
        %v289 = vsel %vm278, %v226, 0
        %v292 = vsel %vm278, %v227, 0
        %v295 = vsel %vm278, %v228, 0
        %v298 = vsel %vm278, %v229, 0
        %v301 = vsel %vm278, %v230, 0
        %v304 = vsel %vm278, %v231, 0
        %v307 = vsel %vm278, %v232, 0
        %v310 = vsel %vm278, %v233, 0
        %v313 = vsel %vm278, %v234, 0
        %v316 = vsel %vm278, %v235, 0
        %v319 = vsel %vm278, %v236, 0
        %v322 = vsel %vm278, %v237, 0
        %v325 = vsel %vm278, %v238, 0
        %v328 = vsel %vm278, %v239, 0
        %v331 = vsel %vm278, %v240, 0
        %v334 = vsel %vm278, %v241, 0
        %v337 = vsel %vm278, %v242, 0
        %v340 = vsel %vm278, %v243, 0
        %v343 = vsel %vm278, %v244, 0
        %v346 = vsel %vm278, %v245, 0
        %v349 = vsel %vm278, %v246, 0
        %v352 = vsel %vm278, %v247, 0
        %v355 = vsel %vm278, %v248, 0
        %v358 = vsel %vm278, %v249, 0
        %v361 = vsel %vm278, %v250, 0
        %v364 = vsel %vm278, %v251, 0
        %v367 = vsel %vm278, %v252, 0
        %v370 = vsel %vm278, %v253, 0
        %v373 = vsel %vm278, %v254, 0
        %v376 = vsel %vm278, %v255, 0
        %v379 = vsel %vm278, %v256, 0
        %v382 = vsel %vm278, %v257, 0
        %v385 = vsel %vm278, %v258, 0
        %v388 = vsel %vm278, %v259, 0
        %v391 = vsel %vm278, %v260, 0
        %v394 = vsel %vm278, %v261, 0
        %v397 = vsel %vm278, %v262, 0
        %v400 = vsel %vm278, %v263, 0
        %v403 = vsel %vm278, %v264, 0
        %v406 = vsel %vm278, %v265, 0
        %v409 = vsel %vm278, %v266, 0
        %v412 = vsel %vm278, %v267, 0
        %v415 = vsel %vm278, %v268, 0
        %v418 = vsel %vm278, %v269, 0
        %v421 = vsel %vm278, %v270, 0
        %v424 = vsel %vm278, %v271, 0
        %v427 = vsel %vm278, %v272, 0
        %v430 = vsel %vm278, %v273, 0
        %v433 = vsel %vm278, %v274, 0
        %v436 = vsel %vm278, %v275, 0
        %vm438 = vcmask 1043456
        %v440 = vsel %vm438, %v277, 0
        %442 = vmatprep.subr.mxu0 0.0
        %443 = vmatpush1.msra.mxu0 0.0
        %444 = vmatprep.subr.mxu0 0.0
        %445 = vmatpush1.msra.mxu0 0.0
        %446 = vmatprep.subr.mxu0 0.0
        %447 = vmatpush1.msra.mxu0 0.0
        %448 = vmatprep.subr.mxu0 0.0
        %449 = vmatpush1.msra.mxu0 0.0
        %450 = vmatprep.subr.mxu0 0.0
        %451 = vmatpush1.msra.mxu0 0.0
        %452 = vmatprep.subr.mxu0 0.0
        %453 = vmatpush1.msra.mxu0 0.0
        %454 = vmatprep.subr.mxu0 0.0
        %455 = vmatpush1.msra.mxu0 0.0
        %456 = vmatprep.subr.mxu0 0.0
        %457 = vmatpush1.msra.mxu0 0.0
        %458 = vmatprep.subr.mxu0 0.0
        %459 = vmatpush1.msra.mxu0 0.0
        %460 = vmatprep.subr.mxu0 0.0
        %461 = vmatpush1.msra.mxu0 0.0
        %462 = vmatprep.subr.mxu0 0.0
        %463 = vmatpush1.msra.mxu0 0.0
        %464 = vmatprep.subr.mxu0 0.0
        %465 = vmatpush1.msra.mxu0 0.0
        %466 = vmatprep.subr.mxu0 0.0
        %467 = vmatpush1.msra.mxu0 0.0
        %468 = vmatprep.subr.mxu0 0.0
        %469 = vmatpush1.msra.mxu0 0.0
        %470 = vmatprep.subr.mxu0 0.0
        %471 = vmatpush1.msra.mxu0 0.0
        %472 = vmatprep.subr.mxu0 0.0
        %473 = vmatpush1.msra.mxu0 %v440
        %474 = vmatprep.subr.mxu0 0.0
        %475 = vmatpush2.msra.mxu0 0.0
        %476 = vmatprep.subr.mxu0 0.0
        %477 = vmatpush2.msra.mxu0 0.0
        %478 = vmatprep.subr.mxu0 0.0
        %479 = vmatpush2.msra.mxu0 0.0
        %480 = vmatprep.subr.mxu0 0.0
        %481 = vmatpush2.msra.mxu0 0.0
        %482 = vmatprep.subr.mxu0 0.0
        %483 = vmatpush2.msra.mxu0 0.0
        %484 = vmatprep.subr.mxu0 0.0
        %485 = vmatpush2.msra.mxu0 0.0
        %486 = vmatprep.subr.mxu0 0.0
        %487 = vmatpush2.msra.mxu0 0.0
        %488 = vmatprep.subr.mxu0 0.0
        %489 = vmatpush2.msra.mxu0 0.0
        %490 = vmatprep.subr.mxu0 0.0
        %491 = vmatpush2.msra.mxu0 0.0
        %492 = vmatprep.subr.mxu0 0.0
        %493 = vmatpush2.msra.mxu0 0.0
        %494 = vmatprep.subr.mxu0 0.0
        %495 = vmatpush2.msra.mxu0 0.0
        %496 = vmatprep.subr.mxu0 0.0
        %497 = vmatpush2.msra.mxu0 0.0
        %498 = vmatprep.subr.mxu0 0.0
        %499 = vmatpush2.msra.mxu0 0.0
        %500 = vmatprep.subr.mxu0 0.0
        %501 = vmatpush2.msra.mxu0 0.0
        %502 = vmatprep.subr.mxu0 0.0
        %503 = vmatpush2.msra.mxu0 0.0
        %504 = vmatprep.subr.mxu0 0.0
        %505 = vmatpush2.msra.mxu0 0.0
        %506 = vmatprep.mubr.f32.mxu0 0.0
        %507 = vmatmul.mubr.f32.gmra.mxu0 %v280
        %v508 = vpop.f32.mrf.mxu0
        %v509 = vadd.f32 0.0, %v508
        %v510 = vpop.f32.mrf.mxu0
        %511 = vmatprep.mubr.f32.mxu0 0.0
        %512 = vmatmul.mubr.f32.gmra.mxu0 %v283
        %v513 = vpop.f32.mrf.mxu0
        %v514 = vadd.f32 0.0, %v513
        %v515 = vpop.f32.mrf.mxu0
        %516 = vmatprep.mubr.f32.mxu0 0.0
        %517 = vmatmul.mubr.f32.gmra.mxu0 %v286
        %v518 = vpop.f32.mrf.mxu0
        %v519 = vadd.f32 0.0, %v518
        %v520 = vpop.f32.mrf.mxu0
        %521 = vmatprep.mubr.f32.mxu0 0.0
        %522 = vmatmul.mubr.f32.gmra.mxu0 %v289
        %v523 = vpop.f32.mrf.mxu0
        %v524 = vadd.f32 0.0, %v523
        %v525 = vpop.f32.mrf.mxu0
        %526 = vmatprep.mubr.f32.mxu0 0.0
        %527 = vmatmul.mubr.f32.gmra.mxu0 %v292
        %v528 = vpop.f32.mrf.mxu0
        %v529 = vadd.f32 0.0, %v528
        %v530 = vpop.f32.mrf.mxu0
        %531 = vmatprep.mubr.f32.mxu0 0.0
        %532 = vmatmul.mubr.f32.gmra.mxu0 %v295
        %v533 = vpop.f32.mrf.mxu0
        %v534 = vadd.f32 0.0, %v533
        %v535 = vpop.f32.mrf.mxu0
        %536 = vmatprep.mubr.f32.mxu0 0.0
        %537 = vmatmul.mubr.f32.gmra.mxu0 %v298
        %v538 = vpop.f32.mrf.mxu0
        %v539 = vadd.f32 0.0, %v538
        %v540 = vpop.f32.mrf.mxu0
        %541 = vmatprep.mubr.f32.mxu0 0.0
        %542 = vmatmul.mubr.f32.gmra.mxu0 %v301
        %v543 = vpop.f32.mrf.mxu0
        %v544 = vadd.f32 0.0, %v543
        %v545 = vpop.f32.mrf.mxu0
        %546 = vmatprep.mubr.f32.mxu0 0.0
        %547 = vmatmul.mubr.f32.gmra.mxu0 %v304
        %v548 = vpop.f32.mrf.mxu0
        %v549 = vadd.f32 0.0, %v548
        %v550 = vpop.f32.mrf.mxu0
        %551 = vmatprep.mubr.f32.mxu0 0.0
        %552 = vmatmul.mubr.f32.gmra.mxu0 %v307
        %v553 = vpop.f32.mrf.mxu0
        %v554 = vadd.f32 0.0, %v553
        %v555 = vpop.f32.mrf.mxu0
        %556 = vmatprep.mubr.f32.mxu0 0.0
        %557 = vmatmul.mubr.f32.gmra.mxu0 %v310
        %v558 = vpop.f32.mrf.mxu0
        %v559 = vadd.f32 0.0, %v558
        %v560 = vpop.f32.mrf.mxu0
        %561 = vmatprep.mubr.f32.mxu0 0.0
        %562 = vmatmul.mubr.f32.gmra.mxu0 %v313
        %v563 = vpop.f32.mrf.mxu0
        %v564 = vadd.f32 0.0, %v563
        %v565 = vpop.f32.mrf.mxu0
        %566 = vmatprep.mubr.f32.mxu0 0.0
        %567 = vmatmul.mubr.f32.gmra.mxu0 %v316
        %v568 = vpop.f32.mrf.mxu0
        %v569 = vadd.f32 0.0, %v568
        %v570 = vpop.f32.mrf.mxu0
        %571 = vmatprep.mubr.f32.mxu0 0.0
        %572 = vmatmul.mubr.f32.gmra.mxu0 %v319
        %v573 = vpop.f32.mrf.mxu0
        %v574 = vadd.f32 0.0, %v573
        %v575 = vpop.f32.mrf.mxu0
        %576 = vmatprep.mubr.f32.mxu0 0.0
        %577 = vmatmul.mubr.f32.gmra.mxu0 %v322
        %v578 = vpop.f32.mrf.mxu0
        %v579 = vadd.f32 0.0, %v578
        %v580 = vpop.f32.mrf.mxu0
        %581 = vmatprep.mubr.f32.mxu0 0.0
        %582 = vmatmul.mubr.f32.gmra.mxu0 %v325
        %v583 = vpop.f32.mrf.mxu0
        %v584 = vadd.f32 0.0, %v583
        %v585 = vpop.f32.mrf.mxu0
        %586 = vmatprep.mubr.f32.mxu0 0.0
        %587 = vmatmul.mubr.f32.gmra.mxu0 %v328
        %v588 = vpop.f32.mrf.mxu0
        %v589 = vadd.f32 0.0, %v588
        %v590 = vpop.f32.mrf.mxu0
        %591 = vmatprep.mubr.f32.mxu0 0.0
        %592 = vmatmul.mubr.f32.gmra.mxu0 %v331
        %v593 = vpop.f32.mrf.mxu0
        %v594 = vadd.f32 0.0, %v593
        %v595 = vpop.f32.mrf.mxu0
        %596 = vmatprep.mubr.f32.mxu0 0.0
        %597 = vmatmul.mubr.f32.gmra.mxu0 %v334
        %v598 = vpop.f32.mrf.mxu0
        %v599 = vadd.f32 0.0, %v598
        %v600 = vpop.f32.mrf.mxu0
        %601 = vmatprep.mubr.f32.mxu0 0.0
        %602 = vmatmul.mubr.f32.gmra.mxu0 %v337
        %v603 = vpop.f32.mrf.mxu0
        %v604 = vadd.f32 0.0, %v603
        %v605 = vpop.f32.mrf.mxu0
        %606 = vmatprep.mubr.f32.mxu0 0.0
        %607 = vmatmul.mubr.f32.gmra.mxu0 %v340
        %v608 = vpop.f32.mrf.mxu0
        %v609 = vadd.f32 0.0, %v608
        %v610 = vpop.f32.mrf.mxu0
        %611 = vmatprep.mubr.f32.mxu0 0.0
        %612 = vmatmul.mubr.f32.gmra.mxu0 %v343
        %v613 = vpop.f32.mrf.mxu0
        %v614 = vadd.f32 0.0, %v613
        %v615 = vpop.f32.mrf.mxu0
        %616 = vmatprep.mubr.f32.mxu0 0.0
        %617 = vmatmul.mubr.f32.gmra.mxu0 %v346
        %v618 = vpop.f32.mrf.mxu0
        %v619 = vadd.f32 0.0, %v618
        %v620 = vpop.f32.mrf.mxu0
        %621 = vmatprep.mubr.f32.mxu0 0.0
        %622 = vmatmul.mubr.f32.gmra.mxu0 %v349
        %v623 = vpop.f32.mrf.mxu0
        %v624 = vadd.f32 0.0, %v623
        %v625 = vpop.f32.mrf.mxu0
        %626 = vmatprep.mubr.f32.mxu0 0.0
        %627 = vmatmul.mubr.f32.gmra.mxu0 %v352
        %v628 = vpop.f32.mrf.mxu0
        %v629 = vadd.f32 0.0, %v628
        %v630 = vpop.f32.mrf.mxu0
        %631 = vmatprep.mubr.f32.mxu0 0.0
        %632 = vmatmul.mubr.f32.gmra.mxu0 %v355
        %v633 = vpop.f32.mrf.mxu0
        %v634 = vadd.f32 0.0, %v633
        %v635 = vpop.f32.mrf.mxu0
        %636 = vmatprep.mubr.f32.mxu0 0.0
        %637 = vmatmul.mubr.f32.gmra.mxu0 %v358
        %v638 = vpop.f32.mrf.mxu0
        %v639 = vadd.f32 0.0, %v638
        %v640 = vpop.f32.mrf.mxu0
        %641 = vmatprep.mubr.f32.mxu0 0.0
        %642 = vmatmul.mubr.f32.gmra.mxu0 %v361
        %v643 = vpop.f32.mrf.mxu0
        %v644 = vadd.f32 0.0, %v643
        %v645 = vpop.f32.mrf.mxu0
        %646 = vmatprep.mubr.f32.mxu0 0.0
        %647 = vmatmul.mubr.f32.gmra.mxu0 %v364
        %v648 = vpop.f32.mrf.mxu0
        %v649 = vadd.f32 0.0, %v648
        %v650 = vpop.f32.mrf.mxu0
        %651 = vmatprep.mubr.f32.mxu0 0.0
        %652 = vmatmul.mubr.f32.gmra.mxu0 %v367
        %v653 = vpop.f32.mrf.mxu0
        %v654 = vadd.f32 0.0, %v653
        %v655 = vpop.f32.mrf.mxu0
        %656 = vmatprep.mubr.f32.mxu0 0.0
        %657 = vmatmul.mubr.f32.gmra.mxu0 %v370
        %v658 = vpop.f32.mrf.mxu0
        %v659 = vadd.f32 0.0, %v658
        %v660 = vpop.f32.mrf.mxu0
        %661 = vmatprep.mubr.f32.mxu0 0.0
        %662 = vmatmul.mubr.f32.gmra.mxu0 %v373
        %v663 = vpop.f32.mrf.mxu0
        %v664 = vadd.f32 0.0, %v663
        %v665 = vpop.f32.mrf.mxu0
        %666 = vmatprep.mubr.f32.mxu0 0.0
        %667 = vmatmul.mubr.f32.gmra.mxu0 %v376
        %v668 = vpop.f32.mrf.mxu0
        %v669 = vadd.f32 0.0, %v668
        %v670 = vpop.f32.mrf.mxu0
        %671 = vmatprep.mubr.f32.mxu0 0.0
        %672 = vmatmul.mubr.f32.gmra.mxu0 %v379
        %v673 = vpop.f32.mrf.mxu0
        %v674 = vadd.f32 0.0, %v673
        %v675 = vpop.f32.mrf.mxu0
        %676 = vmatprep.mubr.f32.mxu0 0.0
        %677 = vmatmul.mubr.f32.gmra.mxu0 %v382
        %v678 = vpop.f32.mrf.mxu0
        %v679 = vadd.f32 0.0, %v678
        %v680 = vpop.f32.mrf.mxu0
        %681 = vmatprep.mubr.f32.mxu0 0.0
        %682 = vmatmul.mubr.f32.gmra.mxu0 %v385
        %v683 = vpop.f32.mrf.mxu0
        %v684 = vadd.f32 0.0, %v683
        %v685 = vpop.f32.mrf.mxu0
        %686 = vmatprep.mubr.f32.mxu0 0.0
        %687 = vmatmul.mubr.f32.gmra.mxu0 %v388
        %v688 = vpop.f32.mrf.mxu0
        %v689 = vadd.f32 0.0, %v688
        %v690 = vpop.f32.mrf.mxu0
        %691 = vmatprep.mubr.f32.mxu0 0.0
        %692 = vmatmul.mubr.f32.gmra.mxu0 %v391
        %v693 = vpop.f32.mrf.mxu0
        %v694 = vadd.f32 0.0, %v693
        %v695 = vpop.f32.mrf.mxu0
        %696 = vmatprep.mubr.f32.mxu0 0.0
        %697 = vmatmul.mubr.f32.gmra.mxu0 %v394
        %v698 = vpop.f32.mrf.mxu0
        %v699 = vadd.f32 0.0, %v698
        %v700 = vpop.f32.mrf.mxu0
        %701 = vmatprep.mubr.f32.mxu0 0.0
        %702 = vmatmul.mubr.f32.gmra.mxu0 %v397
        %v703 = vpop.f32.mrf.mxu0
        %v704 = vadd.f32 0.0, %v703
        %v705 = vpop.f32.mrf.mxu0
        %706 = vmatprep.mubr.f32.mxu0 0.0
        %707 = vmatmul.mubr.f32.gmra.mxu0 %v400
        %v708 = vpop.f32.mrf.mxu0
        %v709 = vadd.f32 0.0, %v708
        %v710 = vpop.f32.mrf.mxu0
        %711 = vmatprep.mubr.f32.mxu0 0.0
        %712 = vmatmul.mubr.f32.gmra.mxu0 %v403
        %v713 = vpop.f32.mrf.mxu0
        %v714 = vadd.f32 0.0, %v713
        %v715 = vpop.f32.mrf.mxu0
        %716 = vmatprep.mubr.f32.mxu0 0.0
        %717 = vmatmul.mubr.f32.gmra.mxu0 %v406
        %v718 = vpop.f32.mrf.mxu0
        %v719 = vadd.f32 0.0, %v718
        %v720 = vpop.f32.mrf.mxu0
        %721 = vmatprep.mubr.f32.mxu0 0.0
        %722 = vmatmul.mubr.f32.gmra.mxu0 %v409
        %v723 = vpop.f32.mrf.mxu0
        %v724 = vadd.f32 0.0, %v723
        %v725 = vpop.f32.mrf.mxu0
        %726 = vmatprep.mubr.f32.mxu0 0.0
        %727 = vmatmul.mubr.f32.gmra.mxu0 %v412
        %v728 = vpop.f32.mrf.mxu0
        %v729 = vadd.f32 0.0, %v728
        %v730 = vpop.f32.mrf.mxu0
        %731 = vmatprep.mubr.f32.mxu0 0.0
        %732 = vmatmul.mubr.f32.gmra.mxu0 %v415
        %v733 = vpop.f32.mrf.mxu0
        %v734 = vadd.f32 0.0, %v733
        %v735 = vpop.f32.mrf.mxu0
        %736 = vmatprep.mubr.f32.mxu0 0.0
        %737 = vmatmul.mubr.f32.gmra.mxu0 %v418
        %v738 = vpop.f32.mrf.mxu0
        %v739 = vadd.f32 0.0, %v738
        %v740 = vpop.f32.mrf.mxu0
        %741 = vmatprep.mubr.f32.mxu0 0.0
        %742 = vmatmul.mubr.f32.gmra.mxu0 %v421
        %v743 = vpop.f32.mrf.mxu0
        %v744 = vadd.f32 0.0, %v743
        %v745 = vpop.f32.mrf.mxu0
        %746 = vmatprep.mubr.f32.mxu0 0.0
        %747 = vmatmul.mubr.f32.gmra.mxu0 %v424
        %v748 = vpop.f32.mrf.mxu0
        %v749 = vadd.f32 0.0, %v748
        %v750 = vpop.f32.mrf.mxu0
        %751 = vmatprep.mubr.f32.mxu0 0.0
        %752 = vmatmul.mubr.f32.gmra.mxu0 %v427
        %v753 = vpop.f32.mrf.mxu0
        %v754 = vadd.f32 0.0, %v753
        %v755 = vpop.f32.mrf.mxu0
        %756 = vmatprep.mubr.f32.mxu0 0.0
        %757 = vmatmul.mubr.f32.gmra.mxu0 %v430
        %v758 = vpop.f32.mrf.mxu0
        %v759 = vadd.f32 0.0, %v758
        %v760 = vpop.f32.mrf.mxu0
        %761 = vmatprep.mubr.f32.mxu0 0.0
        %762 = vmatmul.mubr.f32.gmra.mxu0 %v433
        %v763 = vpop.f32.mrf.mxu0
        %v764 = vadd.f32 0.0, %v763
        %v765 = vpop.f32.mrf.mxu0
        %766 = vmatprep.mubr.f32.mxu0 0.0
        %767 = vmatmul.mubr.f32.gmra.mxu0 %v436
        %v768 = vpop.f32.mrf.mxu0
        %v769 = vadd.f32 0.0, %v768
        %v770 = vpop.f32.mrf.mxu0
        %771 = vdwg.mxu0
        %v773 = vsel %vm278, %v169, 0
        %v776 = vsel %vm278, %v170, 0
        %v779 = vsel %vm278, %v171, 0
        %v782 = vsel %vm278, %v172, 0
        %v785 = vsel %vm278, %v173, 0
        %v788 = vsel %vm278, %v174, 0
        %v791 = vsel %vm278, %v175, 0
        %v794 = vsel %vm278, %v176, 0
        %v797 = vsel %vm278, %v177, 0
        %v800 = vsel %vm278, %v178, 0
        %v803 = vsel %vm278, %v179, 0
        %v806 = vsel %vm278, %v180, 0
        %v809 = vsel %vm278, %v181, 0
        %v812 = vsel %vm278, %v182, 0
        %v815 = vsel %vm278, %v183, 0
        %v818 = vsel %vm278, %v184, 0
        %v821 = vsel %vm278, %v185, 0
        %v824 = vsel %vm278, %v186, 0
        %v827 = vsel %vm278, %v187, 0
        %v830 = vsel %vm278, %v188, 0
        %v833 = vsel %vm278, %v189, 0
        %v836 = vsel %vm278, %v190, 0
        %v839 = vsel %vm278, %v191, 0
        %v842 = vsel %vm278, %v192, 0
        %v845 = vsel %vm278, %v193, 0
        %v848 = vsel %vm278, %v194, 0
        %v851 = vsel %vm278, %v195, 0
        %v854 = vsel %vm278, %v196, 0
        %v857 = vsel %vm278, %v197, 0
        %v860 = vsel %vm278, %v198, 0
        %v863 = vsel %vm278, %v199, 0
        %v866 = vsel %vm278, %v200, 0
        %v869 = vsel %vm278, %v201, 0
        %v872 = vsel %vm278, %v202, 0
        %v875 = vsel %vm278, %v203, 0
        %v878 = vsel %vm278, %v204, 0
        %v881 = vsel %vm278, %v205, 0
        %v884 = vsel %vm278, %v206, 0
        %v887 = vsel %vm278, %v207, 0
        %v890 = vsel %vm278, %v208, 0
        %v893 = vsel %vm278, %v209, 0
        %v896 = vsel %vm278, %v210, 0
        %v899 = vsel %vm278, %v211, 0
        %v902 = vsel %vm278, %v212, 0
        %v905 = vsel %vm278, %v213, 0
        %v908 = vsel %vm278, %v214, 0
        %v911 = vsel %vm278, %v215, 0
        %v914 = vsel %vm278, %v216, 0
        %v917 = vsel %vm278, %v217, 0
        %v920 = vsel %vm278, %v218, 0
        %v923 = vsel %vm278, %v219, 0
        %v926 = vsel %vm278, %v220, 0
        %v929 = vsel %vm278, %v221, 0
        %v932 = vsel %vm438, %v222, 0
        %934 = vmatprep.subr.mxu0 0.0
        %935 = vmatpush1.msra.mxu0 0.0
        %936 = vmatprep.subr.mxu0 0.0
        %937 = vmatpush1.msra.mxu0 0.0
        %938 = vmatprep.subr.mxu0 0.0
        %939 = vmatpush1.msra.mxu0 0.0
        %940 = vmatprep.subr.mxu0 0.0
        %941 = vmatpush1.msra.mxu0 0.0
        %942 = vmatprep.subr.mxu0 0.0
        %943 = vmatpush1.msra.mxu0 0.0
        %944 = vmatprep.subr.mxu0 0.0
        %945 = vmatpush1.msra.mxu0 0.0
        %946 = vmatprep.subr.mxu0 0.0
        %947 = vmatpush1.msra.mxu0 0.0
        %948 = vmatprep.subr.mxu0 0.0
        %949 = vmatpush1.msra.mxu0 0.0
        %950 = vmatprep.subr.mxu0 0.0
        %951 = vmatpush1.msra.mxu0 0.0
        %952 = vmatprep.subr.mxu0 0.0
        %953 = vmatpush1.msra.mxu0 0.0
        %954 = vmatprep.subr.mxu0 0.0
        %955 = vmatpush1.msra.mxu0 0.0
        %956 = vmatprep.subr.mxu0 0.0
        %957 = vmatpush1.msra.mxu0 0.0
        %958 = vmatprep.subr.mxu0 0.0
        %959 = vmatpush1.msra.mxu0 0.0
        %960 = vmatprep.subr.mxu0 0.0
        %961 = vmatpush1.msra.mxu0 0.0
        %962 = vmatprep.subr.mxu0 0.0
        %963 = vmatpush1.msra.mxu0 0.0
        %964 = vmatprep.subr.mxu0 0.0
        %965 = vmatpush1.msra.mxu0 %v932
        %966 = vmatprep.subr.mxu0 0.0
        %967 = vmatpush2.msra.mxu0 0.0
        %968 = vmatprep.subr.mxu0 0.0
        %969 = vmatpush2.msra.mxu0 0.0
        %970 = vmatprep.subr.mxu0 0.0
        %971 = vmatpush2.msra.mxu0 0.0
        %972 = vmatprep.subr.mxu0 0.0
        %973 = vmatpush2.msra.mxu0 0.0
        %974 = vmatprep.subr.mxu0 0.0
        %975 = vmatpush2.msra.mxu0 0.0
        %976 = vmatprep.subr.mxu0 0.0
        %977 = vmatpush2.msra.mxu0 0.0
        %978 = vmatprep.subr.mxu0 0.0
        %979 = vmatpush2.msra.mxu0 0.0
        %980 = vmatprep.subr.mxu0 0.0
        %981 = vmatpush2.msra.mxu0 0.0
        %982 = vmatprep.subr.mxu0 0.0
        %983 = vmatpush2.msra.mxu0 0.0
        %984 = vmatprep.subr.mxu0 0.0
        %985 = vmatpush2.msra.mxu0 0.0
        %986 = vmatprep.subr.mxu0 0.0
        %987 = vmatpush2.msra.mxu0 0.0
        %988 = vmatprep.subr.mxu0 0.0
        %989 = vmatpush2.msra.mxu0 0.0
        %990 = vmatprep.subr.mxu0 0.0
        %991 = vmatpush2.msra.mxu0 0.0
        %992 = vmatprep.subr.mxu0 0.0
        %993 = vmatpush2.msra.mxu0 0.0
        %994 = vmatprep.subr.mxu0 0.0
        %995 = vmatpush2.msra.mxu0 0.0
        %996 = vmatprep.subr.mxu0 0.0
        %997 = vmatpush2.msra.mxu0 0.0
        %998 = vmatprep.mubr.f32.mxu0 0.0
        %999 = vmatmul.mubr.f32.gmra.mxu0 %v773
        %v1000 = vpop.f32.mrf.mxu0
        %v1001 = vadd.f32 %v509, %v1000
        %v1002 = vpop.f32.mrf.mxu0
        %1003 = vmatprep.mubr.f32.mxu0 0.0
        %1004 = vmatmul.mubr.f32.gmra.mxu0 %v776
        %v1005 = vpop.f32.mrf.mxu0
        %v1006 = vadd.f32 %v514, %v1005
        %v1007 = vpop.f32.mrf.mxu0
        %1008 = vmatprep.mubr.f32.mxu0 0.0
        %1009 = vmatmul.mubr.f32.gmra.mxu0 %v779
        %v1010 = vpop.f32.mrf.mxu0
        %v1011 = vadd.f32 %v519, %v1010
        %v1012 = vpop.f32.mrf.mxu0
        %1013 = vmatprep.mubr.f32.mxu0 0.0
        %1014 = vmatmul.mubr.f32.gmra.mxu0 %v782
        %v1015 = vpop.f32.mrf.mxu0
        %v1016 = vadd.f32 %v524, %v1015
        %v1017 = vpop.f32.mrf.mxu0
        %1018 = vmatprep.mubr.f32.mxu0 0.0
        %1019 = vmatmul.mubr.f32.gmra.mxu0 %v785
        %v1020 = vpop.f32.mrf.mxu0
        %v1021 = vadd.f32 %v529, %v1020
        %v1022 = vpop.f32.mrf.mxu0
        %1023 = vmatprep.mubr.f32.mxu0 0.0
        %1024 = vmatmul.mubr.f32.gmra.mxu0 %v788
        %v1025 = vpop.f32.mrf.mxu0
        %v1026 = vadd.f32 %v534, %v1025
        %v1027 = vpop.f32.mrf.mxu0
        %1028 = vmatprep.mubr.f32.mxu0 0.0
        %1029 = vmatmul.mubr.f32.gmra.mxu0 %v791
        %v1030 = vpop.f32.mrf.mxu0
        %v1031 = vadd.f32 %v539, %v1030
        %v1032 = vpop.f32.mrf.mxu0
        %1033 = vmatprep.mubr.f32.mxu0 0.0
        %1034 = vmatmul.mubr.f32.gmra.mxu0 %v794
        %v1035 = vpop.f32.mrf.mxu0
        %v1036 = vadd.f32 %v544, %v1035
        %v1037 = vpop.f32.mrf.mxu0
        %1038 = vmatprep.mubr.f32.mxu0 0.0
        %1039 = vmatmul.mubr.f32.gmra.mxu0 %v797
        %v1040 = vpop.f32.mrf.mxu0
        %v1041 = vadd.f32 %v549, %v1040
        %v1042 = vpop.f32.mrf.mxu0
        %1043 = vmatprep.mubr.f32.mxu0 0.0
        %1044 = vmatmul.mubr.f32.gmra.mxu0 %v800
        %v1045 = vpop.f32.mrf.mxu0
        %v1046 = vadd.f32 %v554, %v1045
        %v1047 = vpop.f32.mrf.mxu0
        %1048 = vmatprep.mubr.f32.mxu0 0.0
        %1049 = vmatmul.mubr.f32.gmra.mxu0 %v803
        %v1050 = vpop.f32.mrf.mxu0
        %v1051 = vadd.f32 %v559, %v1050
        %v1052 = vpop.f32.mrf.mxu0
        %1053 = vmatprep.mubr.f32.mxu0 0.0
        %1054 = vmatmul.mubr.f32.gmra.mxu0 %v806
        %v1055 = vpop.f32.mrf.mxu0
        %v1056 = vadd.f32 %v564, %v1055
        %v1057 = vpop.f32.mrf.mxu0
        %1058 = vmatprep.mubr.f32.mxu0 0.0
        %1059 = vmatmul.mubr.f32.gmra.mxu0 %v809
        %v1060 = vpop.f32.mrf.mxu0
        %v1061 = vadd.f32 %v569, %v1060
        %v1062 = vpop.f32.mrf.mxu0
        %1063 = vmatprep.mubr.f32.mxu0 0.0
        %1064 = vmatmul.mubr.f32.gmra.mxu0 %v812
        %v1065 = vpop.f32.mrf.mxu0
        %v1066 = vadd.f32 %v574, %v1065
        %v1067 = vpop.f32.mrf.mxu0
        %1068 = vmatprep.mubr.f32.mxu0 0.0
        %1069 = vmatmul.mubr.f32.gmra.mxu0 %v815
        %v1070 = vpop.f32.mrf.mxu0
        %v1071 = vadd.f32 %v579, %v1070
        %v1072 = vpop.f32.mrf.mxu0
        %1073 = vmatprep.mubr.f32.mxu0 0.0
        %1074 = vmatmul.mubr.f32.gmra.mxu0 %v818
        %v1075 = vpop.f32.mrf.mxu0
        %v1076 = vadd.f32 %v584, %v1075
        %v1077 = vpop.f32.mrf.mxu0
        %1078 = vmatprep.mubr.f32.mxu0 0.0
        %1079 = vmatmul.mubr.f32.gmra.mxu0 %v821
        %v1080 = vpop.f32.mrf.mxu0
        %v1081 = vadd.f32 %v589, %v1080
        %v1082 = vpop.f32.mrf.mxu0
        %1083 = vmatprep.mubr.f32.mxu0 0.0
        %1084 = vmatmul.mubr.f32.gmra.mxu0 %v824
        %v1085 = vpop.f32.mrf.mxu0
        %v1086 = vadd.f32 %v594, %v1085
        %v1087 = vpop.f32.mrf.mxu0
        %1088 = vmatprep.mubr.f32.mxu0 0.0
        %1089 = vmatmul.mubr.f32.gmra.mxu0 %v827
        %v1090 = vpop.f32.mrf.mxu0
        %v1091 = vadd.f32 %v599, %v1090
        %v1092 = vpop.f32.mrf.mxu0
        %1093 = vmatprep.mubr.f32.mxu0 0.0
        %1094 = vmatmul.mubr.f32.gmra.mxu0 %v830
        %v1095 = vpop.f32.mrf.mxu0
        %v1096 = vadd.f32 %v604, %v1095
        %v1097 = vpop.f32.mrf.mxu0
        %1098 = vmatprep.mubr.f32.mxu0 0.0
        %1099 = vmatmul.mubr.f32.gmra.mxu0 %v833
        %v1100 = vpop.f32.mrf.mxu0
        %v1101 = vadd.f32 %v609, %v1100
        %v1102 = vpop.f32.mrf.mxu0
        %1103 = vmatprep.mubr.f32.mxu0 0.0
        %1104 = vmatmul.mubr.f32.gmra.mxu0 %v836
        %v1105 = vpop.f32.mrf.mxu0
        %v1106 = vadd.f32 %v614, %v1105
        %v1107 = vpop.f32.mrf.mxu0
        %1108 = vmatprep.mubr.f32.mxu0 0.0
        %1109 = vmatmul.mubr.f32.gmra.mxu0 %v839
        %v1110 = vpop.f32.mrf.mxu0
        %v1111 = vadd.f32 %v619, %v1110
        %v1112 = vpop.f32.mrf.mxu0
        %1113 = vmatprep.mubr.f32.mxu0 0.0
        %1114 = vmatmul.mubr.f32.gmra.mxu0 %v842
        %v1115 = vpop.f32.mrf.mxu0
        %v1116 = vadd.f32 %v624, %v1115
        %v1117 = vpop.f32.mrf.mxu0
        %1118 = vmatprep.mubr.f32.mxu0 0.0
        %1119 = vmatmul.mubr.f32.gmra.mxu0 %v845
        %v1120 = vpop.f32.mrf.mxu0
        %v1121 = vadd.f32 %v629, %v1120
        %v1122 = vpop.f32.mrf.mxu0
        %1123 = vmatprep.mubr.f32.mxu0 0.0
        %1124 = vmatmul.mubr.f32.gmra.mxu0 %v848
        %v1125 = vpop.f32.mrf.mxu0
        %v1126 = vadd.f32 %v634, %v1125
        %v1127 = vpop.f32.mrf.mxu0
        %1128 = vmatprep.mubr.f32.mxu0 0.0
        %1129 = vmatmul.mubr.f32.gmra.mxu0 %v851
        %v1130 = vpop.f32.mrf.mxu0
        %v1131 = vadd.f32 %v639, %v1130
        %v1132 = vpop.f32.mrf.mxu0
        %1133 = vmatprep.mubr.f32.mxu0 0.0
        %1134 = vmatmul.mubr.f32.gmra.mxu0 %v854
        %v1135 = vpop.f32.mrf.mxu0
        %v1136 = vadd.f32 %v644, %v1135
        %v1137 = vpop.f32.mrf.mxu0
        %1138 = vmatprep.mubr.f32.mxu0 0.0
        %1139 = vmatmul.mubr.f32.gmra.mxu0 %v857
        %v1140 = vpop.f32.mrf.mxu0
        %v1141 = vadd.f32 %v649, %v1140
        %v1142 = vpop.f32.mrf.mxu0
        %1143 = vmatprep.mubr.f32.mxu0 0.0
        %1144 = vmatmul.mubr.f32.gmra.mxu0 %v860
        %v1145 = vpop.f32.mrf.mxu0
        %v1146 = vadd.f32 %v654, %v1145
        %v1147 = vpop.f32.mrf.mxu0
        %1148 = vmatprep.mubr.f32.mxu0 0.0
        %1149 = vmatmul.mubr.f32.gmra.mxu0 %v863
        %v1150 = vpop.f32.mrf.mxu0
        %v1151 = vadd.f32 %v659, %v1150
        %v1152 = vpop.f32.mrf.mxu0
        %1153 = vmatprep.mubr.f32.mxu0 0.0
        %1154 = vmatmul.mubr.f32.gmra.mxu0 %v866
        %v1155 = vpop.f32.mrf.mxu0
        %v1156 = vadd.f32 %v664, %v1155
        %v1157 = vpop.f32.mrf.mxu0
        %1158 = vmatprep.mubr.f32.mxu0 0.0
        %1159 = vmatmul.mubr.f32.gmra.mxu0 %v869
        %v1160 = vpop.f32.mrf.mxu0
        %v1161 = vadd.f32 %v669, %v1160
        %v1162 = vpop.f32.mrf.mxu0
        %1163 = vmatprep.mubr.f32.mxu0 0.0
        %1164 = vmatmul.mubr.f32.gmra.mxu0 %v872
        %v1165 = vpop.f32.mrf.mxu0
        %v1166 = vadd.f32 %v674, %v1165
        %v1167 = vpop.f32.mrf.mxu0
        %1168 = vmatprep.mubr.f32.mxu0 0.0
        %1169 = vmatmul.mubr.f32.gmra.mxu0 %v875
        %v1170 = vpop.f32.mrf.mxu0
        %v1171 = vadd.f32 %v679, %v1170
        %v1172 = vpop.f32.mrf.mxu0
        %1173 = vmatprep.mubr.f32.mxu0 0.0
        %1174 = vmatmul.mubr.f32.gmra.mxu0 %v878
        %v1175 = vpop.f32.mrf.mxu0
        %v1176 = vadd.f32 %v684, %v1175
        %v1177 = vpop.f32.mrf.mxu0
        %1178 = vmatprep.mubr.f32.mxu0 0.0
        %1179 = vmatmul.mubr.f32.gmra.mxu0 %v881
        %v1180 = vpop.f32.mrf.mxu0
        %v1181 = vadd.f32 %v689, %v1180
        %v1182 = vpop.f32.mrf.mxu0
        %1183 = vmatprep.mubr.f32.mxu0 0.0
        %1184 = vmatmul.mubr.f32.gmra.mxu0 %v884
        %v1185 = vpop.f32.mrf.mxu0
        %v1186 = vadd.f32 %v694, %v1185
        %v1187 = vpop.f32.mrf.mxu0
        %1188 = vmatprep.mubr.f32.mxu0 0.0
        %1189 = vmatmul.mubr.f32.gmra.mxu0 %v887
        %v1190 = vpop.f32.mrf.mxu0
        %v1191 = vadd.f32 %v699, %v1190
        %v1192 = vpop.f32.mrf.mxu0
        %1193 = vmatprep.mubr.f32.mxu0 0.0
        %1194 = vmatmul.mubr.f32.gmra.mxu0 %v890
        %v1195 = vpop.f32.mrf.mxu0
        %v1196 = vadd.f32 %v704, %v1195
        %v1197 = vpop.f32.mrf.mxu0
        %1198 = vmatprep.mubr.f32.mxu0 0.0
        %1199 = vmatmul.mubr.f32.gmra.mxu0 %v893
        %v1200 = vpop.f32.mrf.mxu0
        %v1201 = vadd.f32 %v709, %v1200
        %v1202 = vpop.f32.mrf.mxu0
        %1203 = vmatprep.mubr.f32.mxu0 0.0
        %1204 = vmatmul.mubr.f32.gmra.mxu0 %v896
        %v1205 = vpop.f32.mrf.mxu0
        %v1206 = vadd.f32 %v714, %v1205
        %v1207 = vpop.f32.mrf.mxu0
        %1208 = vmatprep.mubr.f32.mxu0 0.0
        %1209 = vmatmul.mubr.f32.gmra.mxu0 %v899
        %v1210 = vpop.f32.mrf.mxu0
        %v1211 = vadd.f32 %v719, %v1210
        %v1212 = vpop.f32.mrf.mxu0
        %1213 = vmatprep.mubr.f32.mxu0 0.0
        %1214 = vmatmul.mubr.f32.gmra.mxu0 %v902
        %v1215 = vpop.f32.mrf.mxu0
        %v1216 = vadd.f32 %v724, %v1215
        %v1217 = vpop.f32.mrf.mxu0
        %1218 = vmatprep.mubr.f32.mxu0 0.0
        %1219 = vmatmul.mubr.f32.gmra.mxu0 %v905
        %v1220 = vpop.f32.mrf.mxu0
        %v1221 = vadd.f32 %v729, %v1220
        %v1222 = vpop.f32.mrf.mxu0
        %1223 = vmatprep.mubr.f32.mxu0 0.0
        %1224 = vmatmul.mubr.f32.gmra.mxu0 %v908
        %v1225 = vpop.f32.mrf.mxu0
        %v1226 = vadd.f32 %v734, %v1225
        %v1227 = vpop.f32.mrf.mxu0
        %1228 = vmatprep.mubr.f32.mxu0 0.0
        %1229 = vmatmul.mubr.f32.gmra.mxu0 %v911
        %v1230 = vpop.f32.mrf.mxu0
        %v1231 = vadd.f32 %v739, %v1230
        %v1232 = vpop.f32.mrf.mxu0
        %1233 = vmatprep.mubr.f32.mxu0 0.0
        %1234 = vmatmul.mubr.f32.gmra.mxu0 %v914
        %v1235 = vpop.f32.mrf.mxu0
        %v1236 = vadd.f32 %v744, %v1235
        %v1237 = vpop.f32.mrf.mxu0
        %1238 = vmatprep.mubr.f32.mxu0 0.0
        %1239 = vmatmul.mubr.f32.gmra.mxu0 %v917
        %v1240 = vpop.f32.mrf.mxu0
        %v1241 = vadd.f32 %v749, %v1240
        %v1242 = vpop.f32.mrf.mxu0
        %1243 = vmatprep.mubr.f32.mxu0 0.0
        %1244 = vmatmul.mubr.f32.gmra.mxu0 %v920
        %v1245 = vpop.f32.mrf.mxu0
        %v1246 = vadd.f32 %v754, %v1245
        %v1247 = vpop.f32.mrf.mxu0
        %1248 = vmatprep.mubr.f32.mxu0 0.0
        %1249 = vmatmul.mubr.f32.gmra.mxu0 %v923
        %v1250 = vpop.f32.mrf.mxu0
        %v1251 = vadd.f32 %v759, %v1250
        %v1252 = vpop.f32.mrf.mxu0
        %1253 = vmatprep.mubr.f32.mxu0 0.0
        %1254 = vmatmul.mubr.f32.gmra.mxu0 %v926
        %v1255 = vpop.f32.mrf.mxu0
        %v1256 = vadd.f32 %v764, %v1255
        %v1257 = vpop.f32.mrf.mxu0
        %1258 = vmatprep.mubr.f32.mxu0 0.0
        %1259 = vmatmul.mubr.f32.gmra.mxu0 %v929
        %v1260 = vpop.f32.mrf.mxu0
        %v1261 = vadd.f32 %v769, %v1260
        %v1262 = vpop.f32.mrf.mxu0
        %1263 = vdwg.mxu0
        %v1264 = vld [vmem:[%s168 + $0x2] sm:$0xff]
        %v1265 = vld [vmem:[%s168 + $0xa] sm:$0xff]
        %v1266 = vld [vmem:[%s168 + $0x12] sm:$0xff]
        %v1267 = vld [vmem:[%s168 + $0x1a] sm:$0xff]
        %v1268 = vld [vmem:[%s168 + $0x22] sm:$0xff]
        %v1269 = vld [vmem:[%s168 + $0x2a] sm:$0xff]
        %v1270 = vld [vmem:[%s168 + $0x32] sm:$0xff]
        %v1271 = vld [vmem:[%s168 + $0x3a] sm:$0xff]
        %v1272 = vld [vmem:[%s168 + $0x42] sm:$0xff]
        %v1273 = vld [vmem:[%s168 + $0x4a] sm:$0xff]
        %v1274 = vld [vmem:[%s168 + $0x52] sm:$0xff]
        %v1275 = vld [vmem:[%s168 + $0x5a] sm:$0xff]
        %v1276 = vld [vmem:[%s168 + $0x62] sm:$0xff]
        %v1277 = vld [vmem:[%s168 + $0x6a] sm:$0xff]
        %v1278 = vld [vmem:[%s168 + $0x72] sm:$0xff]
        %v1279 = vld [vmem:[%s168 + $0x7a] sm:$0xff]
        %v1280 = vld [vmem:[%s168 + $0x82] sm:$0xff]
        %v1281 = vld [vmem:[%s168 + $0x8a] sm:$0xff]
        %v1282 = vld [vmem:[%s168 + $0x92] sm:$0xff]
        %v1283 = vld [vmem:[%s168 + $0x9a] sm:$0xff]
        %v1284 = vld [vmem:[%s168 + $0xa2] sm:$0xff]
        %v1285 = vld [vmem:[%s168 + $0xaa] sm:$0xff]
        %v1286 = vld [vmem:[%s168 + $0xb2] sm:$0xff]
        %v1287 = vld [vmem:[%s168 + $0xba] sm:$0xff]
        %v1288 = vld [vmem:[%s168 + $0xc2] sm:$0xff]
        %v1289 = vld [vmem:[%s168 + $0xca] sm:$0xff]
        %v1290 = vld [vmem:[%s168 + $0xd2] sm:$0xff]
        %v1291 = vld [vmem:[%s168 + $0xda] sm:$0xff]
        %v1292 = vld [vmem:[%s168 + $0xe2] sm:$0xff]
        %v1293 = vld [vmem:[%s168 + $0xea] sm:$0xff]
        %v1294 = vld [vmem:[%s168 + $0xf2] sm:$0xff]
        %v1295 = vld [vmem:[%s168 + $0xfa] sm:$0xff]
        %v1296 = vld [vmem:[%s168 + $0x102] sm:$0xff]
        %v1297 = vld [vmem:[%s168 + $0x10a] sm:$0xff]
        %v1298 = vld [vmem:[%s168 + $0x112] sm:$0xff]
        %v1299 = vld [vmem:[%s168 + $0x11a] sm:$0xff]
        %v1300 = vld [vmem:[%s168 + $0x122] sm:$0xff]
        %v1301 = vld [vmem:[%s168 + $0x12a] sm:$0xff]
        %v1302 = vld [vmem:[%s168 + $0x132] sm:$0xff]
        %v1303 = vld [vmem:[%s168 + $0x13a] sm:$0xff]
        %v1304 = vld [vmem:[%s168 + $0x142] sm:$0xff]
        %v1305 = vld [vmem:[%s168 + $0x14a] sm:$0xff]
        %v1306 = vld [vmem:[%s168 + $0x152] sm:$0xff]
        %v1307 = vld [vmem:[%s168 + $0x15a] sm:$0xff]
        %v1308 = vld [vmem:[%s168 + $0x162] sm:$0xff]
        %v1309 = vld [vmem:[%s168 + $0x16a] sm:$0xff]
        %v1310 = vld [vmem:[%s168 + $0x172] sm:$0xff]
        %v1311 = vld [vmem:[%s168 + $0x17a] sm:$0xff]
        %v1312 = vld [vmem:[%s168 + $0x182] sm:$0xff]
        %v1313 = vld [vmem:[%s168 + $0x18a] sm:$0xff]
        %v1314 = vld [vmem:[%s168 + $0x192] sm:$0xff]
        %v1315 = vld [vmem:[%s168 + $0x19a] sm:$0xff]
        %v1316 = vld [vmem:[%s168 + $0x1a2] sm:$0x3]
        %s1317 = scalar_lea.vmem %s1, 8
        %v1318 = vld [vmem:[%s1317] sm:$0xf]
        %v1320 = vsel %vm278, %v1264, 0
        %v1323 = vsel %vm278, %v1265, 0
        %v1326 = vsel %vm278, %v1266, 0
        %v1329 = vsel %vm278, %v1267, 0
        %v1332 = vsel %vm278, %v1268, 0
        %v1335 = vsel %vm278, %v1269, 0
        %v1338 = vsel %vm278, %v1270, 0
        %v1341 = vsel %vm278, %v1271, 0
        %v1344 = vsel %vm278, %v1272, 0
        %v1347 = vsel %vm278, %v1273, 0
        %v1350 = vsel %vm278, %v1274, 0
        %v1353 = vsel %vm278, %v1275, 0
        %v1356 = vsel %vm278, %v1276, 0
        %v1359 = vsel %vm278, %v1277, 0
        %v1362 = vsel %vm278, %v1278, 0
        %v1365 = vsel %vm278, %v1279, 0
        %v1368 = vsel %vm278, %v1280, 0
        %v1371 = vsel %vm278, %v1281, 0
        %v1374 = vsel %vm278, %v1282, 0
        %v1377 = vsel %vm278, %v1283, 0
        %v1380 = vsel %vm278, %v1284, 0
        %v1383 = vsel %vm278, %v1285, 0
        %v1386 = vsel %vm278, %v1286, 0
        %v1389 = vsel %vm278, %v1287, 0
        %v1392 = vsel %vm278, %v1288, 0
        %v1395 = vsel %vm278, %v1289, 0
        %v1398 = vsel %vm278, %v1290, 0
        %v1401 = vsel %vm278, %v1291, 0
        %v1404 = vsel %vm278, %v1292, 0
        %v1407 = vsel %vm278, %v1293, 0
        %v1410 = vsel %vm278, %v1294, 0
        %v1413 = vsel %vm278, %v1295, 0
        %v1416 = vsel %vm278, %v1296, 0
        %v1419 = vsel %vm278, %v1297, 0
        %v1422 = vsel %vm278, %v1298, 0
        %v1425 = vsel %vm278, %v1299, 0
        %v1428 = vsel %vm278, %v1300, 0
        %v1431 = vsel %vm278, %v1301, 0
        %v1434 = vsel %vm278, %v1302, 0
        %v1437 = vsel %vm278, %v1303, 0
        %v1440 = vsel %vm278, %v1304, 0
        %v1443 = vsel %vm278, %v1305, 0
        %v1446 = vsel %vm278, %v1306, 0
        %v1449 = vsel %vm278, %v1307, 0
        %v1452 = vsel %vm278, %v1308, 0
        %v1455 = vsel %vm278, %v1309, 0
        %v1458 = vsel %vm278, %v1310, 0
        %v1461 = vsel %vm278, %v1311, 0
        %v1464 = vsel %vm278, %v1312, 0
        %v1467 = vsel %vm278, %v1313, 0
        %v1470 = vsel %vm278, %v1314, 0
        %v1473 = vsel %vm278, %v1315, 0
        %v1476 = vsel %vm278, %v1316, 0
        %v1479 = vsel %vm438, %v1318, 0
        %1481 = vmatprep.subr.mxu0 0.0
        %1482 = vmatpush1.msra.mxu0 0.0
        %1483 = vmatprep.subr.mxu0 0.0
        %1484 = vmatpush1.msra.mxu0 0.0
        %1485 = vmatprep.subr.mxu0 0.0
        %1486 = vmatpush1.msra.mxu0 0.0
        %1487 = vmatprep.subr.mxu0 0.0
        %1488 = vmatpush1.msra.mxu0 0.0
        %1489 = vmatprep.subr.mxu0 0.0
        %1490 = vmatpush1.msra.mxu0 0.0
        %1491 = vmatprep.subr.mxu0 0.0
        %1492 = vmatpush1.msra.mxu0 0.0
        %1493 = vmatprep.subr.mxu0 0.0
        %1494 = vmatpush1.msra.mxu0 0.0
        %1495 = vmatprep.subr.mxu0 0.0
        %1496 = vmatpush1.msra.mxu0 0.0
        %1497 = vmatprep.subr.mxu0 0.0
        %1498 = vmatpush1.msra.mxu0 0.0
        %1499 = vmatprep.subr.mxu0 0.0
        %1500 = vmatpush1.msra.mxu0 0.0
        %1501 = vmatprep.subr.mxu0 0.0
        %1502 = vmatpush1.msra.mxu0 0.0
        %1503 = vmatprep.subr.mxu0 0.0
        %1504 = vmatpush1.msra.mxu0 0.0
        %1505 = vmatprep.subr.mxu0 0.0
        %1506 = vmatpush1.msra.mxu0 0.0
        %1507 = vmatprep.subr.mxu0 0.0
        %1508 = vmatpush1.msra.mxu0 0.0
        %1509 = vmatprep.subr.mxu0 0.0
        %1510 = vmatpush1.msra.mxu0 0.0
        %1511 = vmatprep.subr.mxu0 0.0
        %1512 = vmatpush1.msra.mxu0 %v1479
        %1513 = vmatprep.subr.mxu0 0.0
        %1514 = vmatpush2.msra.mxu0 0.0
        %1515 = vmatprep.subr.mxu0 0.0
        %1516 = vmatpush2.msra.mxu0 0.0
        %1517 = vmatprep.subr.mxu0 0.0
        %1518 = vmatpush2.msra.mxu0 0.0
        %1519 = vmatprep.subr.mxu0 0.0
        %1520 = vmatpush2.msra.mxu0 0.0
        %1521 = vmatprep.subr.mxu0 0.0
        %1522 = vmatpush2.msra.mxu0 0.0
        %1523 = vmatprep.subr.mxu0 0.0
        %1524 = vmatpush2.msra.mxu0 0.0
        %1525 = vmatprep.subr.mxu0 0.0
        %1526 = vmatpush2.msra.mxu0 0.0
        %1527 = vmatprep.subr.mxu0 0.0
        %1528 = vmatpush2.msra.mxu0 0.0
        %1529 = vmatprep.subr.mxu0 0.0
        %1530 = vmatpush2.msra.mxu0 0.0
        %1531 = vmatprep.subr.mxu0 0.0
        %1532 = vmatpush2.msra.mxu0 0.0
        %1533 = vmatprep.subr.mxu0 0.0
        %1534 = vmatpush2.msra.mxu0 0.0
        %1535 = vmatprep.subr.mxu0 0.0
        %1536 = vmatpush2.msra.mxu0 0.0
        %1537 = vmatprep.subr.mxu0 0.0
        %1538 = vmatpush2.msra.mxu0 0.0
        %1539 = vmatprep.subr.mxu0 0.0
        %1540 = vmatpush2.msra.mxu0 0.0
        %1541 = vmatprep.subr.mxu0 0.0
        %1542 = vmatpush2.msra.mxu0 0.0
        %1543 = vmatprep.subr.mxu0 0.0
        %1544 = vmatpush2.msra.mxu0 0.0
        %1545 = vmatprep.mubr.f32.mxu0 0.0
        %1546 = vmatmul.mubr.f32.gmra.mxu0 %v1320
        %v1547 = vpop.f32.mrf.mxu0
        %v1548 = vadd.f32 0.0, %v1547
        %v1549 = vpop.f32.mrf.mxu0
        %1550 = vmatprep.mubr.f32.mxu0 0.0
        %1551 = vmatmul.mubr.f32.gmra.mxu0 %v1323
        %v1552 = vpop.f32.mrf.mxu0
        %v1553 = vadd.f32 0.0, %v1552
        %v1554 = vpop.f32.mrf.mxu0
        %1555 = vmatprep.mubr.f32.mxu0 0.0
        %1556 = vmatmul.mubr.f32.gmra.mxu0 %v1326
        %v1557 = vpop.f32.mrf.mxu0
        %v1558 = vadd.f32 0.0, %v1557
        %v1559 = vpop.f32.mrf.mxu0
        %1560 = vmatprep.mubr.f32.mxu0 0.0
        %1561 = vmatmul.mubr.f32.gmra.mxu0 %v1329
        %v1562 = vpop.f32.mrf.mxu0
        %v1563 = vadd.f32 0.0, %v1562
        %v1564 = vpop.f32.mrf.mxu0
        %1565 = vmatprep.mubr.f32.mxu0 0.0
        %1566 = vmatmul.mubr.f32.gmra.mxu0 %v1332
        %v1567 = vpop.f32.mrf.mxu0
        %v1568 = vadd.f32 0.0, %v1567
        %v1569 = vpop.f32.mrf.mxu0
        %1570 = vmatprep.mubr.f32.mxu0 0.0
        %1571 = vmatmul.mubr.f32.gmra.mxu0 %v1335
        %v1572 = vpop.f32.mrf.mxu0
        %v1573 = vadd.f32 0.0, %v1572
        %v1574 = vpop.f32.mrf.mxu0
        %1575 = vmatprep.mubr.f32.mxu0 0.0
        %1576 = vmatmul.mubr.f32.gmra.mxu0 %v1338
        %v1577 = vpop.f32.mrf.mxu0
        %v1578 = vadd.f32 0.0, %v1577
        %v1579 = vpop.f32.mrf.mxu0
        %1580 = vmatprep.mubr.f32.mxu0 0.0
        %1581 = vmatmul.mubr.f32.gmra.mxu0 %v1341
        %v1582 = vpop.f32.mrf.mxu0
        %v1583 = vadd.f32 0.0, %v1582
        %v1584 = vpop.f32.mrf.mxu0
        %1585 = vmatprep.mubr.f32.mxu0 0.0
        %1586 = vmatmul.mubr.f32.gmra.mxu0 %v1344
        %v1587 = vpop.f32.mrf.mxu0
        %v1588 = vadd.f32 0.0, %v1587
        %v1589 = vpop.f32.mrf.mxu0
        %1590 = vmatprep.mubr.f32.mxu0 0.0
        %1591 = vmatmul.mubr.f32.gmra.mxu0 %v1347
        %v1592 = vpop.f32.mrf.mxu0
        %v1593 = vadd.f32 0.0, %v1592
        %v1594 = vpop.f32.mrf.mxu0
        %1595 = vmatprep.mubr.f32.mxu0 0.0
        %1596 = vmatmul.mubr.f32.gmra.mxu0 %v1350
        %v1597 = vpop.f32.mrf.mxu0
        %v1598 = vadd.f32 0.0, %v1597
        %v1599 = vpop.f32.mrf.mxu0
        %1600 = vmatprep.mubr.f32.mxu0 0.0
        %1601 = vmatmul.mubr.f32.gmra.mxu0 %v1353
        %v1602 = vpop.f32.mrf.mxu0
        %v1603 = vadd.f32 0.0, %v1602
        %v1604 = vpop.f32.mrf.mxu0
        %1605 = vmatprep.mubr.f32.mxu0 0.0
        %1606 = vmatmul.mubr.f32.gmra.mxu0 %v1356
        %v1607 = vpop.f32.mrf.mxu0
        %v1608 = vadd.f32 0.0, %v1607
        %v1609 = vpop.f32.mrf.mxu0
        %1610 = vmatprep.mubr.f32.mxu0 0.0
        %1611 = vmatmul.mubr.f32.gmra.mxu0 %v1359
        %v1612 = vpop.f32.mrf.mxu0
        %v1613 = vadd.f32 0.0, %v1612
        %v1614 = vpop.f32.mrf.mxu0
        %1615 = vmatprep.mubr.f32.mxu0 0.0
        %1616 = vmatmul.mubr.f32.gmra.mxu0 %v1362
        %v1617 = vpop.f32.mrf.mxu0
        %v1618 = vadd.f32 0.0, %v1617
        %v1619 = vpop.f32.mrf.mxu0
        %1620 = vmatprep.mubr.f32.mxu0 0.0
        %1621 = vmatmul.mubr.f32.gmra.mxu0 %v1365
        %v1622 = vpop.f32.mrf.mxu0
        %v1623 = vadd.f32 0.0, %v1622
        %v1624 = vpop.f32.mrf.mxu0
        %1625 = vmatprep.mubr.f32.mxu0 0.0
        %1626 = vmatmul.mubr.f32.gmra.mxu0 %v1368
        %v1627 = vpop.f32.mrf.mxu0
        %v1628 = vadd.f32 0.0, %v1627
        %v1629 = vpop.f32.mrf.mxu0
        %1630 = vmatprep.mubr.f32.mxu0 0.0
        %1631 = vmatmul.mubr.f32.gmra.mxu0 %v1371
        %v1632 = vpop.f32.mrf.mxu0
        %v1633 = vadd.f32 0.0, %v1632
        %v1634 = vpop.f32.mrf.mxu0
        %1635 = vmatprep.mubr.f32.mxu0 0.0
        %1636 = vmatmul.mubr.f32.gmra.mxu0 %v1374
        %v1637 = vpop.f32.mrf.mxu0
        %v1638 = vadd.f32 0.0, %v1637
        %v1639 = vpop.f32.mrf.mxu0
        %1640 = vmatprep.mubr.f32.mxu0 0.0
        %1641 = vmatmul.mubr.f32.gmra.mxu0 %v1377
        %v1642 = vpop.f32.mrf.mxu0
        %v1643 = vadd.f32 0.0, %v1642
        %v1644 = vpop.f32.mrf.mxu0
        %1645 = vmatprep.mubr.f32.mxu0 0.0
        %1646 = vmatmul.mubr.f32.gmra.mxu0 %v1380
        %v1647 = vpop.f32.mrf.mxu0
        %v1648 = vadd.f32 0.0, %v1647
        %v1649 = vpop.f32.mrf.mxu0
        %1650 = vmatprep.mubr.f32.mxu0 0.0
        %1651 = vmatmul.mubr.f32.gmra.mxu0 %v1383
        %v1652 = vpop.f32.mrf.mxu0
        %v1653 = vadd.f32 0.0, %v1652
        %v1654 = vpop.f32.mrf.mxu0
        %1655 = vmatprep.mubr.f32.mxu0 0.0
        %1656 = vmatmul.mubr.f32.gmra.mxu0 %v1386
        %v1657 = vpop.f32.mrf.mxu0
        %v1658 = vadd.f32 0.0, %v1657
        %v1659 = vpop.f32.mrf.mxu0
        %1660 = vmatprep.mubr.f32.mxu0 0.0
        %1661 = vmatmul.mubr.f32.gmra.mxu0 %v1389
        %v1662 = vpop.f32.mrf.mxu0
        %v1663 = vadd.f32 0.0, %v1662
        %v1664 = vpop.f32.mrf.mxu0
        %1665 = vmatprep.mubr.f32.mxu0 0.0
        %1666 = vmatmul.mubr.f32.gmra.mxu0 %v1392
        %v1667 = vpop.f32.mrf.mxu0
        %v1668 = vadd.f32 0.0, %v1667
        %v1669 = vpop.f32.mrf.mxu0
        %1670 = vmatprep.mubr.f32.mxu0 0.0
        %1671 = vmatmul.mubr.f32.gmra.mxu0 %v1395
        %v1672 = vpop.f32.mrf.mxu0
        %v1673 = vadd.f32 0.0, %v1672
        %v1674 = vpop.f32.mrf.mxu0
        %1675 = vmatprep.mubr.f32.mxu0 0.0
        %1676 = vmatmul.mubr.f32.gmra.mxu0 %v1398
        %v1677 = vpop.f32.mrf.mxu0
        %v1678 = vadd.f32 0.0, %v1677
        %v1679 = vpop.f32.mrf.mxu0
        %1680 = vmatprep.mubr.f32.mxu0 0.0
        %1681 = vmatmul.mubr.f32.gmra.mxu0 %v1401
        %v1682 = vpop.f32.mrf.mxu0
        %v1683 = vadd.f32 0.0, %v1682
        %v1684 = vpop.f32.mrf.mxu0
        %1685 = vmatprep.mubr.f32.mxu0 0.0
        %1686 = vmatmul.mubr.f32.gmra.mxu0 %v1404
        %v1687 = vpop.f32.mrf.mxu0
        %v1688 = vadd.f32 0.0, %v1687
        %v1689 = vpop.f32.mrf.mxu0
        %1690 = vmatprep.mubr.f32.mxu0 0.0
        %1691 = vmatmul.mubr.f32.gmra.mxu0 %v1407
        %v1692 = vpop.f32.mrf.mxu0
        %v1693 = vadd.f32 0.0, %v1692
        %v1694 = vpop.f32.mrf.mxu0
        %1695 = vmatprep.mubr.f32.mxu0 0.0
        %1696 = vmatmul.mubr.f32.gmra.mxu0 %v1410
        %v1697 = vpop.f32.mrf.mxu0
        %v1698 = vadd.f32 0.0, %v1697
        %v1699 = vpop.f32.mrf.mxu0
        %1700 = vmatprep.mubr.f32.mxu0 0.0
        %1701 = vmatmul.mubr.f32.gmra.mxu0 %v1413
        %v1702 = vpop.f32.mrf.mxu0
        %v1703 = vadd.f32 0.0, %v1702
        %v1704 = vpop.f32.mrf.mxu0
        %1705 = vmatprep.mubr.f32.mxu0 0.0
        %1706 = vmatmul.mubr.f32.gmra.mxu0 %v1416
        %v1707 = vpop.f32.mrf.mxu0
        %v1708 = vadd.f32 0.0, %v1707
        %v1709 = vpop.f32.mrf.mxu0
        %1710 = vmatprep.mubr.f32.mxu0 0.0
        %1711 = vmatmul.mubr.f32.gmra.mxu0 %v1419
        %v1712 = vpop.f32.mrf.mxu0
        %v1713 = vadd.f32 0.0, %v1712
        %v1714 = vpop.f32.mrf.mxu0
        %1715 = vmatprep.mubr.f32.mxu0 0.0
        %1716 = vmatmul.mubr.f32.gmra.mxu0 %v1422
        %v1717 = vpop.f32.mrf.mxu0
        %v1718 = vadd.f32 0.0, %v1717
        %v1719 = vpop.f32.mrf.mxu0
        %1720 = vmatprep.mubr.f32.mxu0 0.0
        %1721 = vmatmul.mubr.f32.gmra.mxu0 %v1425
        %v1722 = vpop.f32.mrf.mxu0
        %v1723 = vadd.f32 0.0, %v1722
        %v1724 = vpop.f32.mrf.mxu0
        %1725 = vmatprep.mubr.f32.mxu0 0.0
        %1726 = vmatmul.mubr.f32.gmra.mxu0 %v1428
        %v1727 = vpop.f32.mrf.mxu0
        %v1728 = vadd.f32 0.0, %v1727
        %v1729 = vpop.f32.mrf.mxu0
        %1730 = vmatprep.mubr.f32.mxu0 0.0
        %1731 = vmatmul.mubr.f32.gmra.mxu0 %v1431
        %v1732 = vpop.f32.mrf.mxu0
        %v1733 = vadd.f32 0.0, %v1732
        %v1734 = vpop.f32.mrf.mxu0
        %1735 = vmatprep.mubr.f32.mxu0 0.0
        %1736 = vmatmul.mubr.f32.gmra.mxu0 %v1434
        %v1737 = vpop.f32.mrf.mxu0
        %v1738 = vadd.f32 0.0, %v1737
        %v1739 = vpop.f32.mrf.mxu0
        %1740 = vmatprep.mubr.f32.mxu0 0.0
        %1741 = vmatmul.mubr.f32.gmra.mxu0 %v1437
        %v1742 = vpop.f32.mrf.mxu0
        %v1743 = vadd.f32 0.0, %v1742
        %v1744 = vpop.f32.mrf.mxu0
        %1745 = vmatprep.mubr.f32.mxu0 0.0
        %1746 = vmatmul.mubr.f32.gmra.mxu0 %v1440
        %v1747 = vpop.f32.mrf.mxu0
        %v1748 = vadd.f32 0.0, %v1747
        %v1749 = vpop.f32.mrf.mxu0
        %1750 = vmatprep.mubr.f32.mxu0 0.0
        %1751 = vmatmul.mubr.f32.gmra.mxu0 %v1443
        %v1752 = vpop.f32.mrf.mxu0
        %v1753 = vadd.f32 0.0, %v1752
        %v1754 = vpop.f32.mrf.mxu0
        %1755 = vmatprep.mubr.f32.mxu0 0.0
        %1756 = vmatmul.mubr.f32.gmra.mxu0 %v1446
        %v1757 = vpop.f32.mrf.mxu0
        %v1758 = vadd.f32 0.0, %v1757
        %v1759 = vpop.f32.mrf.mxu0
        %1760 = vmatprep.mubr.f32.mxu0 0.0
        %1761 = vmatmul.mubr.f32.gmra.mxu0 %v1449
        %v1762 = vpop.f32.mrf.mxu0
        %v1763 = vadd.f32 0.0, %v1762
        %v1764 = vpop.f32.mrf.mxu0
        %1765 = vmatprep.mubr.f32.mxu0 0.0
        %1766 = vmatmul.mubr.f32.gmra.mxu0 %v1452
        %v1767 = vpop.f32.mrf.mxu0
        %v1768 = vadd.f32 0.0, %v1767
        %v1769 = vpop.f32.mrf.mxu0
        %1770 = vmatprep.mubr.f32.mxu0 0.0
        %1771 = vmatmul.mubr.f32.gmra.mxu0 %v1455
        %v1772 = vpop.f32.mrf.mxu0
        %v1773 = vadd.f32 0.0, %v1772
        %v1774 = vpop.f32.mrf.mxu0
        %1775 = vmatprep.mubr.f32.mxu0 0.0
        %1776 = vmatmul.mubr.f32.gmra.mxu0 %v1458
        %v1777 = vpop.f32.mrf.mxu0
        %v1778 = vadd.f32 0.0, %v1777
        %v1779 = vpop.f32.mrf.mxu0
        %1780 = vmatprep.mubr.f32.mxu0 0.0
        %1781 = vmatmul.mubr.f32.gmra.mxu0 %v1461
        %v1782 = vpop.f32.mrf.mxu0
        %v1783 = vadd.f32 0.0, %v1782
        %v1784 = vpop.f32.mrf.mxu0
        %1785 = vmatprep.mubr.f32.mxu0 0.0
        %1786 = vmatmul.mubr.f32.gmra.mxu0 %v1464
        %v1787 = vpop.f32.mrf.mxu0
        %v1788 = vadd.f32 0.0, %v1787
        %v1789 = vpop.f32.mrf.mxu0
        %1790 = vmatprep.mubr.f32.mxu0 0.0
        %1791 = vmatmul.mubr.f32.gmra.mxu0 %v1467
        %v1792 = vpop.f32.mrf.mxu0
        %v1793 = vadd.f32 0.0, %v1792
        %v1794 = vpop.f32.mrf.mxu0
        %1795 = vmatprep.mubr.f32.mxu0 0.0
        %1796 = vmatmul.mubr.f32.gmra.mxu0 %v1470
        %v1797 = vpop.f32.mrf.mxu0
        %v1798 = vadd.f32 0.0, %v1797
        %v1799 = vpop.f32.mrf.mxu0
        %1800 = vmatprep.mubr.f32.mxu0 0.0
        %1801 = vmatmul.mubr.f32.gmra.mxu0 %v1473
        %v1802 = vpop.f32.mrf.mxu0
        %v1803 = vadd.f32 0.0, %v1802
        %v1804 = vpop.f32.mrf.mxu0
        %1805 = vmatprep.mubr.f32.mxu0 0.0
        %1806 = vmatmul.mubr.f32.gmra.mxu0 %v1476
        %v1807 = vpop.f32.mrf.mxu0
        %v1808 = vadd.f32 0.0, %v1807
        %v1809 = vpop.f32.mrf.mxu0
        %1810 = vdwg.mxu0
        %v1811 = vadd.f32 %v1001, %v1548
        %v1812 = vadd.f32 %v1006, %v1553
        %v1813 = vadd.f32 %v1011, %v1558
        %v1814 = vadd.f32 %v1016, %v1563
        %v1815 = vadd.f32 %v1021, %v1568
        %v1816 = vadd.f32 %v1026, %v1573
        %v1817 = vadd.f32 %v1031, %v1578
        %v1818 = vadd.f32 %v1036, %v1583
        %v1819 = vadd.f32 %v1041, %v1588
        %v1820 = vadd.f32 %v1046, %v1593
        %v1821 = vadd.f32 %v1051, %v1598
        %v1822 = vadd.f32 %v1056, %v1603
        %v1823 = vadd.f32 %v1061, %v1608
        %v1824 = vadd.f32 %v1066, %v1613
        %v1825 = vadd.f32 %v1071, %v1618
        %v1826 = vadd.f32 %v1076, %v1623
        %v1827 = vadd.f32 %v1081, %v1628
        %v1828 = vadd.f32 %v1086, %v1633
        %v1829 = vadd.f32 %v1091, %v1638
        %v1830 = vadd.f32 %v1096, %v1643
        %v1831 = vadd.f32 %v1101, %v1648
        %v1832 = vadd.f32 %v1106, %v1653
        %v1833 = vadd.f32 %v1111, %v1658
        %v1834 = vadd.f32 %v1116, %v1663
        %v1835 = vadd.f32 %v1121, %v1668
        %v1836 = vadd.f32 %v1126, %v1673
        %v1837 = vadd.f32 %v1131, %v1678
        %v1838 = vadd.f32 %v1136, %v1683
        %v1839 = vadd.f32 %v1141, %v1688
        %v1840 = vadd.f32 %v1146, %v1693
        %v1841 = vadd.f32 %v1151, %v1698
        %v1842 = vadd.f32 %v1156, %v1703
        %v1843 = vadd.f32 %v1161, %v1708
        %v1844 = vadd.f32 %v1166, %v1713
        %v1845 = vadd.f32 %v1171, %v1718
        %v1846 = vadd.f32 %v1176, %v1723
        %v1847 = vadd.f32 %v1181, %v1728
        %v1848 = vadd.f32 %v1186, %v1733
        %v1849 = vadd.f32 %v1191, %v1738
        %v1850 = vadd.f32 %v1196, %v1743
        %v1851 = vadd.f32 %v1201, %v1748
        %v1852 = vadd.f32 %v1206, %v1753
        %v1853 = vadd.f32 %v1211, %v1758
        %v1854 = vadd.f32 %v1216, %v1763
        %v1855 = vadd.f32 %v1221, %v1768
        %v1856 = vadd.f32 %v1226, %v1773
        %v1857 = vadd.f32 %v1231, %v1778
        %v1858 = vadd.f32 %v1236, %v1783
        %v1859 = vadd.f32 %v1241, %v1788
        %v1860 = vadd.f32 %v1246, %v1793
        %v1861 = vadd.f32 %v1251, %v1798
        %v1862 = vadd.f32 %v1256, %v1803
        %v1863 = vadd.f32 %v1261, %v1808
        %v1864 = vld [vmem:[%s168 + $0x3] sm:$0xff]
        %v1865 = vld [vmem:[%s168 + $0xb] sm:$0xff]
        %v1866 = vld [vmem:[%s168 + $0x13] sm:$0xff]
        %v1867 = vld [vmem:[%s168 + $0x1b] sm:$0xff]
        %v1868 = vld [vmem:[%s168 + $0x23] sm:$0xff]
        %v1869 = vld [vmem:[%s168 + $0x2b] sm:$0xff]
        %v1870 = vld [vmem:[%s168 + $0x33] sm:$0xff]
        %v1871 = vld [vmem:[%s168 + $0x3b] sm:$0xff]
        %v1872 = vld [vmem:[%s168 + $0x43] sm:$0xff]
        %v1873 = vld [vmem:[%s168 + $0x4b] sm:$0xff]
        %v1874 = vld [vmem:[%s168 + $0x53] sm:$0xff]
        %v1875 = vld [vmem:[%s168 + $0x5b] sm:$0xff]
        %v1876 = vld [vmem:[%s168 + $0x63] sm:$0xff]
        %v1877 = vld [vmem:[%s168 + $0x6b] sm:$0xff]
        %v1878 = vld [vmem:[%s168 + $0x73] sm:$0xff]
        %v1879 = vld [vmem:[%s168 + $0x7b] sm:$0xff]
        %v1880 = vld [vmem:[%s168 + $0x83] sm:$0xff]
        %v1881 = vld [vmem:[%s168 + $0x8b] sm:$0xff]
        %v1882 = vld [vmem:[%s168 + $0x93] sm:$0xff]
        %v1883 = vld [vmem:[%s168 + $0x9b] sm:$0xff]
        %v1884 = vld [vmem:[%s168 + $0xa3] sm:$0xff]
        %v1885 = vld [vmem:[%s168 + $0xab] sm:$0xff]
        %v1886 = vld [vmem:[%s168 + $0xb3] sm:$0xff]
        %v1887 = vld [vmem:[%s168 + $0xbb] sm:$0xff]
        %v1888 = vld [vmem:[%s168 + $0xc3] sm:$0xff]
        %v1889 = vld [vmem:[%s168 + $0xcb] sm:$0xff]
        %v1890 = vld [vmem:[%s168 + $0xd3] sm:$0xff]
        %v1891 = vld [vmem:[%s168 + $0xdb] sm:$0xff]
        %v1892 = vld [vmem:[%s168 + $0xe3] sm:$0xff]
        %v1893 = vld [vmem:[%s168 + $0xeb] sm:$0xff]
        %v1894 = vld [vmem:[%s168 + $0xf3] sm:$0xff]
        %v1895 = vld [vmem:[%s168 + $0xfb] sm:$0xff]
        %v1896 = vld [vmem:[%s168 + $0x103] sm:$0xff]
        %v1897 = vld [vmem:[%s168 + $0x10b] sm:$0xff]
        %v1898 = vld [vmem:[%s168 + $0x113] sm:$0xff]
        %v1899 = vld [vmem:[%s168 + $0x11b] sm:$0xff]
        %v1900 = vld [vmem:[%s168 + $0x123] sm:$0xff]
        %v1901 = vld [vmem:[%s168 + $0x12b] sm:$0xff]
        %v1902 = vld [vmem:[%s168 + $0x133] sm:$0xff]
        %v1903 = vld [vmem:[%s168 + $0x13b] sm:$0xff]
        %v1904 = vld [vmem:[%s168 + $0x143] sm:$0xff]
        %v1905 = vld [vmem:[%s168 + $0x14b] sm:$0xff]
        %v1906 = vld [vmem:[%s168 + $0x153] sm:$0xff]
        %v1907 = vld [vmem:[%s168 + $0x15b] sm:$0xff]
        %v1908 = vld [vmem:[%s168 + $0x163] sm:$0xff]
        %v1909 = vld [vmem:[%s168 + $0x16b] sm:$0xff]
        %v1910 = vld [vmem:[%s168 + $0x173] sm:$0xff]
        %v1911 = vld [vmem:[%s168 + $0x17b] sm:$0xff]
        %v1912 = vld [vmem:[%s168 + $0x183] sm:$0xff]
        %v1913 = vld [vmem:[%s168 + $0x18b] sm:$0xff]
        %v1914 = vld [vmem:[%s168 + $0x193] sm:$0xff]
        %v1915 = vld [vmem:[%s168 + $0x19b] sm:$0xff]
        %v1916 = vld [vmem:[%s168 + $0x1a3] sm:$0x3]
        %s1917 = scalar_lea.vmem %s1, 12
        %v1918 = vld [vmem:[%s1917] sm:$0xf]
        %v1920 = vsel %vm278, %v1864, 0
        %v1923 = vsel %vm278, %v1865, 0
        %v1926 = vsel %vm278, %v1866, 0
        %v1929 = vsel %vm278, %v1867, 0
        %v1932 = vsel %vm278, %v1868, 0
        %v1935 = vsel %vm278, %v1869, 0
        %v1938 = vsel %vm278, %v1870, 0
        %v1941 = vsel %vm278, %v1871, 0
        %v1944 = vsel %vm278, %v1872, 0
        %v1947 = vsel %vm278, %v1873, 0
        %v1950 = vsel %vm278, %v1874, 0
        %v1953 = vsel %vm278, %v1875, 0
        %v1956 = vsel %vm278, %v1876, 0
        %v1959 = vsel %vm278, %v1877, 0
        %v1962 = vsel %vm278, %v1878, 0
        %v1965 = vsel %vm278, %v1879, 0
        %v1968 = vsel %vm278, %v1880, 0
        %v1971 = vsel %vm278, %v1881, 0
        %v1974 = vsel %vm278, %v1882, 0
        %v1977 = vsel %vm278, %v1883, 0
        %v1980 = vsel %vm278, %v1884, 0
        %v1983 = vsel %vm278, %v1885, 0
        %v1986 = vsel %vm278, %v1886, 0
        %v1989 = vsel %vm278, %v1887, 0
        %v1992 = vsel %vm278, %v1888, 0
        %v1995 = vsel %vm278, %v1889, 0
        %v1998 = vsel %vm278, %v1890, 0
        %v2001 = vsel %vm278, %v1891, 0
        %v2004 = vsel %vm278, %v1892, 0
        %v2007 = vsel %vm278, %v1893, 0
        %v2010 = vsel %vm278, %v1894, 0
        %v2013 = vsel %vm278, %v1895, 0
        %v2016 = vsel %vm278, %v1896, 0
        %v2019 = vsel %vm278, %v1897, 0
        %v2022 = vsel %vm278, %v1898, 0
        %v2025 = vsel %vm278, %v1899, 0
        %v2028 = vsel %vm278, %v1900, 0
        %v2031 = vsel %vm278, %v1901, 0
        %v2034 = vsel %vm278, %v1902, 0
        %v2037 = vsel %vm278, %v1903, 0
        %v2040 = vsel %vm278, %v1904, 0
        %v2043 = vsel %vm278, %v1905, 0
        %v2046 = vsel %vm278, %v1906, 0
        %v2049 = vsel %vm278, %v1907, 0
        %v2052 = vsel %vm278, %v1908, 0
        %v2055 = vsel %vm278, %v1909, 0
        %v2058 = vsel %vm278, %v1910, 0
        %v2061 = vsel %vm278, %v1911, 0
        %v2064 = vsel %vm278, %v1912, 0
        %v2067 = vsel %vm278, %v1913, 0
        %v2070 = vsel %vm278, %v1914, 0
        %v2073 = vsel %vm278, %v1915, 0
        %v2076 = vsel %vm278, %v1916, 0
        %v2079 = vsel %vm438, %v1918, 0
        %2081 = vmatprep.subr.mxu0 0.0
        %2082 = vmatpush1.msra.mxu0 0.0
        %2083 = vmatprep.subr.mxu0 0.0
        %2084 = vmatpush1.msra.mxu0 0.0
        %2085 = vmatprep.subr.mxu0 0.0
        %2086 = vmatpush1.msra.mxu0 0.0
        %2087 = vmatprep.subr.mxu0 0.0
        %2088 = vmatpush1.msra.mxu0 0.0
        %2089 = vmatprep.subr.mxu0 0.0
        %2090 = vmatpush1.msra.mxu0 0.0
        %2091 = vmatprep.subr.mxu0 0.0
        %2092 = vmatpush1.msra.mxu0 0.0
        %2093 = vmatprep.subr.mxu0 0.0
        %2094 = vmatpush1.msra.mxu0 0.0
        %2095 = vmatprep.subr.mxu0 0.0
        %2096 = vmatpush1.msra.mxu0 0.0
        %2097 = vmatprep.subr.mxu0 0.0
        %2098 = vmatpush1.msra.mxu0 0.0
        %2099 = vmatprep.subr.mxu0 0.0
        %2100 = vmatpush1.msra.mxu0 0.0
        %2101 = vmatprep.subr.mxu0 0.0
        %2102 = vmatpush1.msra.mxu0 0.0
        %2103 = vmatprep.subr.mxu0 0.0
        %2104 = vmatpush1.msra.mxu0 0.0
        %2105 = vmatprep.subr.mxu0 0.0
        %2106 = vmatpush1.msra.mxu0 0.0
        %2107 = vmatprep.subr.mxu0 0.0
        %2108 = vmatpush1.msra.mxu0 0.0
        %2109 = vmatprep.subr.mxu0 0.0
        %2110 = vmatpush1.msra.mxu0 0.0
        %2111 = vmatprep.subr.mxu0 0.0
        %2112 = vmatpush1.msra.mxu0 %v2079
        %2113 = vmatprep.subr.mxu0 0.0
        %2114 = vmatpush2.msra.mxu0 0.0
        %2115 = vmatprep.subr.mxu0 0.0
        %2116 = vmatpush2.msra.mxu0 0.0
        %2117 = vmatprep.subr.mxu0 0.0
        %2118 = vmatpush2.msra.mxu0 0.0
        %2119 = vmatprep.subr.mxu0 0.0
        %2120 = vmatpush2.msra.mxu0 0.0
        %2121 = vmatprep.subr.mxu0 0.0
        %2122 = vmatpush2.msra.mxu0 0.0
        %2123 = vmatprep.subr.mxu0 0.0
        %2124 = vmatpush2.msra.mxu0 0.0
        %2125 = vmatprep.subr.mxu0 0.0
        %2126 = vmatpush2.msra.mxu0 0.0
        %2127 = vmatprep.subr.mxu0 0.0
        %2128 = vmatpush2.msra.mxu0 0.0
        %2129 = vmatprep.subr.mxu0 0.0
        %2130 = vmatpush2.msra.mxu0 0.0
        %2131 = vmatprep.subr.mxu0 0.0
        %2132 = vmatpush2.msra.mxu0 0.0
        %2133 = vmatprep.subr.mxu0 0.0
        %2134 = vmatpush2.msra.mxu0 0.0
        %2135 = vmatprep.subr.mxu0 0.0
        %2136 = vmatpush2.msra.mxu0 0.0
        %2137 = vmatprep.subr.mxu0 0.0
        %2138 = vmatpush2.msra.mxu0 0.0
        %2139 = vmatprep.subr.mxu0 0.0
        %2140 = vmatpush2.msra.mxu0 0.0
        %2141 = vmatprep.subr.mxu0 0.0
        %2142 = vmatpush2.msra.mxu0 0.0
        %2143 = vmatprep.subr.mxu0 0.0
        %2144 = vmatpush2.msra.mxu0 0.0
        %2145 = vmatprep.mubr.f32.mxu0 0.0
        %2146 = vmatmul.mubr.f32.gmra.mxu0 %v1920
        %v2147 = vpop.f32.mrf.mxu0
        %v2148 = vadd.f32 0.0, %v2147
        %v2149 = vpop.f32.mrf.mxu0
        %2150 = vmatprep.mubr.f32.mxu0 0.0
        %2151 = vmatmul.mubr.f32.gmra.mxu0 %v1923
        %v2152 = vpop.f32.mrf.mxu0
        %v2153 = vadd.f32 0.0, %v2152
        %v2154 = vpop.f32.mrf.mxu0
        %2155 = vmatprep.mubr.f32.mxu0 0.0
        %2156 = vmatmul.mubr.f32.gmra.mxu0 %v1926
        %v2157 = vpop.f32.mrf.mxu0
        %v2158 = vadd.f32 0.0, %v2157
        %v2159 = vpop.f32.mrf.mxu0
        %2160 = vmatprep.mubr.f32.mxu0 0.0
        %2161 = vmatmul.mubr.f32.gmra.mxu0 %v1929
        %v2162 = vpop.f32.mrf.mxu0
        %v2163 = vadd.f32 0.0, %v2162
        %v2164 = vpop.f32.mrf.mxu0
        %2165 = vmatprep.mubr.f32.mxu0 0.0
        %2166 = vmatmul.mubr.f32.gmra.mxu0 %v1932
        %v2167 = vpop.f32.mrf.mxu0
        %v2168 = vadd.f32 0.0, %v2167
        %v2169 = vpop.f32.mrf.mxu0
        %2170 = vmatprep.mubr.f32.mxu0 0.0
        %2171 = vmatmul.mubr.f32.gmra.mxu0 %v1935
        %v2172 = vpop.f32.mrf.mxu0
        %v2173 = vadd.f32 0.0, %v2172
        %v2174 = vpop.f32.mrf.mxu0
        %2175 = vmatprep.mubr.f32.mxu0 0.0
        %2176 = vmatmul.mubr.f32.gmra.mxu0 %v1938
        %v2177 = vpop.f32.mrf.mxu0
        %v2178 = vadd.f32 0.0, %v2177
        %v2179 = vpop.f32.mrf.mxu0
        %2180 = vmatprep.mubr.f32.mxu0 0.0
        %2181 = vmatmul.mubr.f32.gmra.mxu0 %v1941
        %v2182 = vpop.f32.mrf.mxu0
        %v2183 = vadd.f32 0.0, %v2182
        %v2184 = vpop.f32.mrf.mxu0
        %2185 = vmatprep.mubr.f32.mxu0 0.0
        %2186 = vmatmul.mubr.f32.gmra.mxu0 %v1944
        %v2187 = vpop.f32.mrf.mxu0
        %v2188 = vadd.f32 0.0, %v2187
        %v2189 = vpop.f32.mrf.mxu0
        %2190 = vmatprep.mubr.f32.mxu0 0.0
        %2191 = vmatmul.mubr.f32.gmra.mxu0 %v1947
        %v2192 = vpop.f32.mrf.mxu0
        %v2193 = vadd.f32 0.0, %v2192
        %v2194 = vpop.f32.mrf.mxu0
        %2195 = vmatprep.mubr.f32.mxu0 0.0
        %2196 = vmatmul.mubr.f32.gmra.mxu0 %v1950
        %v2197 = vpop.f32.mrf.mxu0
        %v2198 = vadd.f32 0.0, %v2197
        %v2199 = vpop.f32.mrf.mxu0
        %2200 = vmatprep.mubr.f32.mxu0 0.0
        %2201 = vmatmul.mubr.f32.gmra.mxu0 %v1953
        %v2202 = vpop.f32.mrf.mxu0
        %v2203 = vadd.f32 0.0, %v2202
        %v2204 = vpop.f32.mrf.mxu0
        %2205 = vmatprep.mubr.f32.mxu0 0.0
        %2206 = vmatmul.mubr.f32.gmra.mxu0 %v1956
        %v2207 = vpop.f32.mrf.mxu0
        %v2208 = vadd.f32 0.0, %v2207
        %v2209 = vpop.f32.mrf.mxu0
        %2210 = vmatprep.mubr.f32.mxu0 0.0
        %2211 = vmatmul.mubr.f32.gmra.mxu0 %v1959
        %v2212 = vpop.f32.mrf.mxu0
        %v2213 = vadd.f32 0.0, %v2212
        %v2214 = vpop.f32.mrf.mxu0
        %2215 = vmatprep.mubr.f32.mxu0 0.0
        %2216 = vmatmul.mubr.f32.gmra.mxu0 %v1962
        %v2217 = vpop.f32.mrf.mxu0
        %v2218 = vadd.f32 0.0, %v2217
        %v2219 = vpop.f32.mrf.mxu0
        %2220 = vmatprep.mubr.f32.mxu0 0.0
        %2221 = vmatmul.mubr.f32.gmra.mxu0 %v1965
        %v2222 = vpop.f32.mrf.mxu0
        %v2223 = vadd.f32 0.0, %v2222
        %v2224 = vpop.f32.mrf.mxu0
        %2225 = vmatprep.mubr.f32.mxu0 0.0
        %2226 = vmatmul.mubr.f32.gmra.mxu0 %v1968
        %v2227 = vpop.f32.mrf.mxu0
        %v2228 = vadd.f32 0.0, %v2227
        %v2229 = vpop.f32.mrf.mxu0
        %2230 = vmatprep.mubr.f32.mxu0 0.0
        %2231 = vmatmul.mubr.f32.gmra.mxu0 %v1971
        %v2232 = vpop.f32.mrf.mxu0
        %v2233 = vadd.f32 0.0, %v2232
        %v2234 = vpop.f32.mrf.mxu0
        %2235 = vmatprep.mubr.f32.mxu0 0.0
        %2236 = vmatmul.mubr.f32.gmra.mxu0 %v1974
        %v2237 = vpop.f32.mrf.mxu0
        %v2238 = vadd.f32 0.0, %v2237
        %v2239 = vpop.f32.mrf.mxu0
        %2240 = vmatprep.mubr.f32.mxu0 0.0
        %2241 = vmatmul.mubr.f32.gmra.mxu0 %v1977
        %v2242 = vpop.f32.mrf.mxu0
        %v2243 = vadd.f32 0.0, %v2242
        %v2244 = vpop.f32.mrf.mxu0
        %2245 = vmatprep.mubr.f32.mxu0 0.0
        %2246 = vmatmul.mubr.f32.gmra.mxu0 %v1980
        %v2247 = vpop.f32.mrf.mxu0
        %v2248 = vadd.f32 0.0, %v2247
        %v2249 = vpop.f32.mrf.mxu0
        %2250 = vmatprep.mubr.f32.mxu0 0.0
        %2251 = vmatmul.mubr.f32.gmra.mxu0 %v1983
        %v2252 = vpop.f32.mrf.mxu0
        %v2253 = vadd.f32 0.0, %v2252
        %v2254 = vpop.f32.mrf.mxu0
        %2255 = vmatprep.mubr.f32.mxu0 0.0
        %2256 = vmatmul.mubr.f32.gmra.mxu0 %v1986
        %v2257 = vpop.f32.mrf.mxu0
        %v2258 = vadd.f32 0.0, %v2257
        %v2259 = vpop.f32.mrf.mxu0
        %2260 = vmatprep.mubr.f32.mxu0 0.0
        %2261 = vmatmul.mubr.f32.gmra.mxu0 %v1989
        %v2262 = vpop.f32.mrf.mxu0
        %v2263 = vadd.f32 0.0, %v2262
        %v2264 = vpop.f32.mrf.mxu0
        %2265 = vmatprep.mubr.f32.mxu0 0.0
        %2266 = vmatmul.mubr.f32.gmra.mxu0 %v1992
        %v2267 = vpop.f32.mrf.mxu0
        %v2268 = vadd.f32 0.0, %v2267
        %v2269 = vpop.f32.mrf.mxu0
        %2270 = vmatprep.mubr.f32.mxu0 0.0
        %2271 = vmatmul.mubr.f32.gmra.mxu0 %v1995
        %v2272 = vpop.f32.mrf.mxu0
        %v2273 = vadd.f32 0.0, %v2272
        %v2274 = vpop.f32.mrf.mxu0
        %2275 = vmatprep.mubr.f32.mxu0 0.0
        %2276 = vmatmul.mubr.f32.gmra.mxu0 %v1998
        %v2277 = vpop.f32.mrf.mxu0
        %v2278 = vadd.f32 0.0, %v2277
        %v2279 = vpop.f32.mrf.mxu0
        %2280 = vmatprep.mubr.f32.mxu0 0.0
        %2281 = vmatmul.mubr.f32.gmra.mxu0 %v2001
        %v2282 = vpop.f32.mrf.mxu0
        %v2283 = vadd.f32 0.0, %v2282
        %v2284 = vpop.f32.mrf.mxu0
        %2285 = vmatprep.mubr.f32.mxu0 0.0
        %2286 = vmatmul.mubr.f32.gmra.mxu0 %v2004
        %v2287 = vpop.f32.mrf.mxu0
        %v2288 = vadd.f32 0.0, %v2287
        %v2289 = vpop.f32.mrf.mxu0
        %2290 = vmatprep.mubr.f32.mxu0 0.0
        %2291 = vmatmul.mubr.f32.gmra.mxu0 %v2007
        %v2292 = vpop.f32.mrf.mxu0
        %v2293 = vadd.f32 0.0, %v2292
        %v2294 = vpop.f32.mrf.mxu0
        %2295 = vmatprep.mubr.f32.mxu0 0.0
        %2296 = vmatmul.mubr.f32.gmra.mxu0 %v2010
        %v2297 = vpop.f32.mrf.mxu0
        %v2298 = vadd.f32 0.0, %v2297
        %v2299 = vpop.f32.mrf.mxu0
        %2300 = vmatprep.mubr.f32.mxu0 0.0
        %2301 = vmatmul.mubr.f32.gmra.mxu0 %v2013
        %v2302 = vpop.f32.mrf.mxu0
        %v2303 = vadd.f32 0.0, %v2302
        %v2304 = vpop.f32.mrf.mxu0
        %2305 = vmatprep.mubr.f32.mxu0 0.0
        %2306 = vmatmul.mubr.f32.gmra.mxu0 %v2016
        %v2307 = vpop.f32.mrf.mxu0
        %v2308 = vadd.f32 0.0, %v2307
        %v2309 = vpop.f32.mrf.mxu0
        %2310 = vmatprep.mubr.f32.mxu0 0.0
        %2311 = vmatmul.mubr.f32.gmra.mxu0 %v2019
        %v2312 = vpop.f32.mrf.mxu0
        %v2313 = vadd.f32 0.0, %v2312
        %v2314 = vpop.f32.mrf.mxu0
        %2315 = vmatprep.mubr.f32.mxu0 0.0
        %2316 = vmatmul.mubr.f32.gmra.mxu0 %v2022
        %v2317 = vpop.f32.mrf.mxu0
        %v2318 = vadd.f32 0.0, %v2317
        %v2319 = vpop.f32.mrf.mxu0
        %2320 = vmatprep.mubr.f32.mxu0 0.0
        %2321 = vmatmul.mubr.f32.gmra.mxu0 %v2025
        %v2322 = vpop.f32.mrf.mxu0
        %v2323 = vadd.f32 0.0, %v2322
        %v2324 = vpop.f32.mrf.mxu0
        %2325 = vmatprep.mubr.f32.mxu0 0.0
        %2326 = vmatmul.mubr.f32.gmra.mxu0 %v2028
        %v2327 = vpop.f32.mrf.mxu0
        %v2328 = vadd.f32 0.0, %v2327
        %v2329 = vpop.f32.mrf.mxu0
        %2330 = vmatprep.mubr.f32.mxu0 0.0
        %2331 = vmatmul.mubr.f32.gmra.mxu0 %v2031
        %v2332 = vpop.f32.mrf.mxu0
        %v2333 = vadd.f32 0.0, %v2332
        %v2334 = vpop.f32.mrf.mxu0
        %2335 = vmatprep.mubr.f32.mxu0 0.0
        %2336 = vmatmul.mubr.f32.gmra.mxu0 %v2034
        %v2337 = vpop.f32.mrf.mxu0
        %v2338 = vadd.f32 0.0, %v2337
        %v2339 = vpop.f32.mrf.mxu0
        %2340 = vmatprep.mubr.f32.mxu0 0.0
        %2341 = vmatmul.mubr.f32.gmra.mxu0 %v2037
        %v2342 = vpop.f32.mrf.mxu0
        %v2343 = vadd.f32 0.0, %v2342
        %v2344 = vpop.f32.mrf.mxu0
        %2345 = vmatprep.mubr.f32.mxu0 0.0
        %2346 = vmatmul.mubr.f32.gmra.mxu0 %v2040
        %v2347 = vpop.f32.mrf.mxu0
        %v2348 = vadd.f32 0.0, %v2347
        %v2349 = vpop.f32.mrf.mxu0
        %2350 = vmatprep.mubr.f32.mxu0 0.0
        %2351 = vmatmul.mubr.f32.gmra.mxu0 %v2043
        %v2352 = vpop.f32.mrf.mxu0
        %v2353 = vadd.f32 0.0, %v2352
        %v2354 = vpop.f32.mrf.mxu0
        %2355 = vmatprep.mubr.f32.mxu0 0.0
        %2356 = vmatmul.mubr.f32.gmra.mxu0 %v2046
        %v2357 = vpop.f32.mrf.mxu0
        %v2358 = vadd.f32 0.0, %v2357
        %v2359 = vpop.f32.mrf.mxu0
        %2360 = vmatprep.mubr.f32.mxu0 0.0
        %2361 = vmatmul.mubr.f32.gmra.mxu0 %v2049
        %v2362 = vpop.f32.mrf.mxu0
        %v2363 = vadd.f32 0.0, %v2362
        %v2364 = vpop.f32.mrf.mxu0
        %2365 = vmatprep.mubr.f32.mxu0 0.0
        %2366 = vmatmul.mubr.f32.gmra.mxu0 %v2052
        %v2367 = vpop.f32.mrf.mxu0
        %v2368 = vadd.f32 0.0, %v2367
        %v2369 = vpop.f32.mrf.mxu0
        %2370 = vmatprep.mubr.f32.mxu0 0.0
        %2371 = vmatmul.mubr.f32.gmra.mxu0 %v2055
        %v2372 = vpop.f32.mrf.mxu0
        %v2373 = vadd.f32 0.0, %v2372
        %v2374 = vpop.f32.mrf.mxu0
        %2375 = vmatprep.mubr.f32.mxu0 0.0
        %2376 = vmatmul.mubr.f32.gmra.mxu0 %v2058
        %v2377 = vpop.f32.mrf.mxu0
        %v2378 = vadd.f32 0.0, %v2377
        %v2379 = vpop.f32.mrf.mxu0
        %2380 = vmatprep.mubr.f32.mxu0 0.0
        %2381 = vmatmul.mubr.f32.gmra.mxu0 %v2061
        %v2382 = vpop.f32.mrf.mxu0
        %v2383 = vadd.f32 0.0, %v2382
        %v2384 = vpop.f32.mrf.mxu0
        %2385 = vmatprep.mubr.f32.mxu0 0.0
        %2386 = vmatmul.mubr.f32.gmra.mxu0 %v2064
        %v2387 = vpop.f32.mrf.mxu0
        %v2388 = vadd.f32 0.0, %v2387
        %v2389 = vpop.f32.mrf.mxu0
        %2390 = vmatprep.mubr.f32.mxu0 0.0
        %2391 = vmatmul.mubr.f32.gmra.mxu0 %v2067
        %v2392 = vpop.f32.mrf.mxu0
        %v2393 = vadd.f32 0.0, %v2392
        %v2394 = vpop.f32.mrf.mxu0
        %2395 = vmatprep.mubr.f32.mxu0 0.0
        %2396 = vmatmul.mubr.f32.gmra.mxu0 %v2070
        %v2397 = vpop.f32.mrf.mxu0
        %v2398 = vadd.f32 0.0, %v2397
        %v2399 = vpop.f32.mrf.mxu0
        %2400 = vmatprep.mubr.f32.mxu0 0.0
        %2401 = vmatmul.mubr.f32.gmra.mxu0 %v2073
        %v2402 = vpop.f32.mrf.mxu0
        %v2403 = vadd.f32 0.0, %v2402
        %v2404 = vpop.f32.mrf.mxu0
        %2405 = vmatprep.mubr.f32.mxu0 0.0
        %2406 = vmatmul.mubr.f32.gmra.mxu0 %v2076
        %v2407 = vpop.f32.mrf.mxu0
        %v2408 = vadd.f32 0.0, %v2407
        %v2409 = vpop.f32.mrf.mxu0
        %2410 = vdwg.mxu0
        %v2411 = vadd.f32 %v1811, %v2148
        %v2412 = vadd.f32 %v1812, %v2153
        %v2413 = vadd.f32 %v1813, %v2158
        %v2414 = vadd.f32 %v1814, %v2163
        %v2415 = vadd.f32 %v1815, %v2168
        %v2416 = vadd.f32 %v1816, %v2173
        %v2417 = vadd.f32 %v1817, %v2178
        %v2418 = vadd.f32 %v1818, %v2183
        %v2419 = vadd.f32 %v1819, %v2188
        %v2420 = vadd.f32 %v1820, %v2193
        %v2421 = vadd.f32 %v1821, %v2198
        %v2422 = vadd.f32 %v1822, %v2203
        %v2423 = vadd.f32 %v1823, %v2208
        %v2424 = vadd.f32 %v1824, %v2213
        %v2425 = vadd.f32 %v1825, %v2218
        %v2426 = vadd.f32 %v1826, %v2223
        %v2427 = vadd.f32 %v1827, %v2228
        %v2428 = vadd.f32 %v1828, %v2233
        %v2429 = vadd.f32 %v1829, %v2238
        %v2430 = vadd.f32 %v1830, %v2243
        %v2431 = vadd.f32 %v1831, %v2248
        %v2432 = vadd.f32 %v1832, %v2253
        %v2433 = vadd.f32 %v1833, %v2258
        %v2434 = vadd.f32 %v1834, %v2263
        %v2435 = vadd.f32 %v1835, %v2268
        %v2436 = vadd.f32 %v1836, %v2273
        %v2437 = vadd.f32 %v1837, %v2278
        %v2438 = vadd.f32 %v1838, %v2283
        %v2439 = vadd.f32 %v1839, %v2288
        %v2440 = vadd.f32 %v1840, %v2293
        %v2441 = vadd.f32 %v1841, %v2298
        %v2442 = vadd.f32 %v1842, %v2303
        %v2443 = vadd.f32 %v1843, %v2308
        %v2444 = vadd.f32 %v1844, %v2313
        %v2445 = vadd.f32 %v1845, %v2318
        %v2446 = vadd.f32 %v1846, %v2323
        %v2447 = vadd.f32 %v1847, %v2328
        %v2448 = vadd.f32 %v1848, %v2333
        %v2449 = vadd.f32 %v1849, %v2338
        %v2450 = vadd.f32 %v1850, %v2343
        %v2451 = vadd.f32 %v1851, %v2348
        %v2452 = vadd.f32 %v1852, %v2353
        %v2453 = vadd.f32 %v1853, %v2358
        %v2454 = vadd.f32 %v1854, %v2363
        %v2455 = vadd.f32 %v1855, %v2368
        %v2456 = vadd.f32 %v1856, %v2373
        %v2457 = vadd.f32 %v1857, %v2378
        %v2458 = vadd.f32 %v1858, %v2383
        %v2459 = vadd.f32 %v1859, %v2388
        %v2460 = vadd.f32 %v1860, %v2393
        %v2461 = vadd.f32 %v1861, %v2398
        %v2462 = vadd.f32 %v1862, %v2403
        %v2463 = vadd.f32 %v1863, %v2408
        %v2464 = vld [vmem:[%s168 + $0x16] sm:$0xff]
        %v2465 = vld [vmem:[%s168 + $0x1e] sm:$0xff]
        %v2466 = vld [vmem:[%s168 + $0x26] sm:$0xff]
        %v2467 = vld [vmem:[%s168 + $0x2e] sm:$0xff]
        %v2468 = vld [vmem:[%s168 + $0x36] sm:$0xff]
        %v2469 = vld [vmem:[%s168 + $0x3e] sm:$0xff]
        %v2470 = vld [vmem:[%s168 + $0x46] sm:$0xff]
        %v2471 = vld [vmem:[%s168 + $0x4e] sm:$0xff]
        %v2472 = vld [vmem:[%s168 + $0x56] sm:$0xff]
        %v2473 = vld [vmem:[%s168 + $0x5e] sm:$0xff]
        %v2474 = vld [vmem:[%s168 + $0x66] sm:$0xff]
        %v2475 = vld [vmem:[%s168 + $0x6e] sm:$0xff]
        %v2476 = vld [vmem:[%s168 + $0x76] sm:$0xff]
        %v2477 = vld [vmem:[%s168 + $0x7e] sm:$0xff]
        %v2478 = vld [vmem:[%s168 + $0x86] sm:$0xff]
        %v2479 = vld [vmem:[%s168 + $0x8e] sm:$0xff]
        %v2480 = vld [vmem:[%s168 + $0x96] sm:$0xff]
        %v2481 = vld [vmem:[%s168 + $0x9e] sm:$0xff]
        %v2482 = vld [vmem:[%s168 + $0xa6] sm:$0xff]
        %v2483 = vld [vmem:[%s168 + $0xae] sm:$0xff]
        %v2484 = vld [vmem:[%s168 + $0xb6] sm:$0xff]
        %v2485 = vld [vmem:[%s168 + $0xbe] sm:$0xff]
        %v2486 = vld [vmem:[%s168 + $0xc6] sm:$0xff]
        %v2487 = vld [vmem:[%s168 + $0xce] sm:$0xff]
        %v2488 = vld [vmem:[%s168 + $0xd6] sm:$0xff]
        %v2489 = vld [vmem:[%s168 + $0xde] sm:$0xff]
        %v2490 = vld [vmem:[%s168 + $0xe6] sm:$0xff]
        %v2491 = vld [vmem:[%s168 + $0xee] sm:$0xff]
        %v2492 = vld [vmem:[%s168 + $0xf6] sm:$0xff]
        %v2493 = vld [vmem:[%s168 + $0xfe] sm:$0xff]
        %v2494 = vld [vmem:[%s168 + $0x106] sm:$0xff]
        %v2495 = vld [vmem:[%s168 + $0x10e] sm:$0xff]
        %v2496 = vld [vmem:[%s168 + $0x116] sm:$0xff]
        %v2497 = vld [vmem:[%s168 + $0x11e] sm:$0xff]
        %v2498 = vld [vmem:[%s168 + $0x126] sm:$0xff]
        %v2499 = vld [vmem:[%s168 + $0x12e] sm:$0xff]
        %v2500 = vld [vmem:[%s168 + $0x136] sm:$0xff]
        %v2501 = vld [vmem:[%s168 + $0x13e] sm:$0xff]
        %v2502 = vld [vmem:[%s168 + $0x146] sm:$0xff]
        %v2503 = vld [vmem:[%s168 + $0x14e] sm:$0xff]
        %v2504 = vld [vmem:[%s168 + $0x156] sm:$0xff]
        %v2505 = vld [vmem:[%s168 + $0x15e] sm:$0xff]
        %v2506 = vld [vmem:[%s168 + $0x166] sm:$0xff]
        %v2507 = vld [vmem:[%s168 + $0x16e] sm:$0xff]
        %v2508 = vld [vmem:[%s168 + $0x176] sm:$0xff]
        %v2509 = vld [vmem:[%s168 + $0x17e] sm:$0xff]
        %v2510 = vld [vmem:[%s168 + $0x186] sm:$0xff]
        %v2511 = vld [vmem:[%s168 + $0x18e] sm:$0xff]
        %v2512 = vld [vmem:[%s168 + $0x196] sm:$0xff]
        %v2513 = vld [vmem:[%s168 + $0x19e] sm:$0xff]
        %v2514 = vld [vmem:[%s168 + $0x1a6] sm:$0xff]
        %v2515 = vld [vmem:[%s168 + $0x1ae] sm:$0xff]
        %v2516 = vld [vmem:[%s168 + $0x1b6] sm:$0x3]
        %s2517 = scalar_lea.vmem %s1, 16
        %v2518 = vld [vmem:[%s2517] sm:$0xf]
        %v2520 = vsel %vm278, %v2464, 0
        %v2523 = vsel %vm278, %v2465, 0
        %v2526 = vsel %vm278, %v2466, 0
        %v2529 = vsel %vm278, %v2467, 0
        %v2532 = vsel %vm278, %v2468, 0
        %v2535 = vsel %vm278, %v2469, 0
        %v2538 = vsel %vm278, %v2470, 0
        %v2541 = vsel %vm278, %v2471, 0
        %v2544 = vsel %vm278, %v2472, 0
        %v2547 = vsel %vm278, %v2473, 0
        %v2550 = vsel %vm278, %v2474, 0
        %v2553 = vsel %vm278, %v2475, 0
        %v2556 = vsel %vm278, %v2476, 0
        %v2559 = vsel %vm278, %v2477, 0
        %v2562 = vsel %vm278, %v2478, 0
        %v2565 = vsel %vm278, %v2479, 0
        %v2568 = vsel %vm278, %v2480, 0
        %v2571 = vsel %vm278, %v2481, 0
        %v2574 = vsel %vm278, %v2482, 0
        %v2577 = vsel %vm278, %v2483, 0
        %v2580 = vsel %vm278, %v2484, 0
        %v2583 = vsel %vm278, %v2485, 0
        %v2586 = vsel %vm278, %v2486, 0
        %v2589 = vsel %vm278, %v2487, 0
        %v2592 = vsel %vm278, %v2488, 0
        %v2595 = vsel %vm278, %v2489, 0
        %v2598 = vsel %vm278, %v2490, 0
        %v2601 = vsel %vm278, %v2491, 0
        %v2604 = vsel %vm278, %v2492, 0
        %v2607 = vsel %vm278, %v2493, 0
        %v2610 = vsel %vm278, %v2494, 0
        %v2613 = vsel %vm278, %v2495, 0
        %v2616 = vsel %vm278, %v2496, 0
        %v2619 = vsel %vm278, %v2497, 0
        %v2622 = vsel %vm278, %v2498, 0
        %v2625 = vsel %vm278, %v2499, 0
        %v2628 = vsel %vm278, %v2500, 0
        %v2631 = vsel %vm278, %v2501, 0
        %v2634 = vsel %vm278, %v2502, 0
        %v2637 = vsel %vm278, %v2503, 0
        %v2640 = vsel %vm278, %v2504, 0
        %v2643 = vsel %vm278, %v2505, 0
        %v2646 = vsel %vm278, %v2506, 0
        %v2649 = vsel %vm278, %v2507, 0
        %v2652 = vsel %vm278, %v2508, 0
        %v2655 = vsel %vm278, %v2509, 0
        %v2658 = vsel %vm278, %v2510, 0
        %v2661 = vsel %vm278, %v2511, 0
        %v2664 = vsel %vm278, %v2512, 0
        %v2667 = vsel %vm278, %v2513, 0
        %v2670 = vsel %vm278, %v2514, 0
        %v2673 = vsel %vm278, %v2515, 0
        %v2676 = vsel %vm278, %v2516, 0
        %v2679 = vsel %vm438, %v2518, 0
        %2681 = vmatprep.subr.mxu0 0.0
        %2682 = vmatpush1.msra.mxu0 0.0
        %2683 = vmatprep.subr.mxu0 0.0
        %2684 = vmatpush1.msra.mxu0 0.0
        %2685 = vmatprep.subr.mxu0 0.0
        %2686 = vmatpush1.msra.mxu0 0.0
        %2687 = vmatprep.subr.mxu0 0.0
        %2688 = vmatpush1.msra.mxu0 0.0
        %2689 = vmatprep.subr.mxu0 0.0
        %2690 = vmatpush1.msra.mxu0 0.0
        %2691 = vmatprep.subr.mxu0 0.0
        %2692 = vmatpush1.msra.mxu0 0.0
        %2693 = vmatprep.subr.mxu0 0.0
        %2694 = vmatpush1.msra.mxu0 0.0
        %2695 = vmatprep.subr.mxu0 0.0
        %2696 = vmatpush1.msra.mxu0 0.0
        %2697 = vmatprep.subr.mxu0 0.0
        %2698 = vmatpush1.msra.mxu0 0.0
        %2699 = vmatprep.subr.mxu0 0.0
        %2700 = vmatpush1.msra.mxu0 0.0
        %2701 = vmatprep.subr.mxu0 0.0
        %2702 = vmatpush1.msra.mxu0 0.0
        %2703 = vmatprep.subr.mxu0 0.0
        %2704 = vmatpush1.msra.mxu0 0.0
        %2705 = vmatprep.subr.mxu0 0.0
        %2706 = vmatpush1.msra.mxu0 0.0
        %2707 = vmatprep.subr.mxu0 0.0
        %2708 = vmatpush1.msra.mxu0 0.0
        %2709 = vmatprep.subr.mxu0 0.0
        %2710 = vmatpush1.msra.mxu0 0.0
        %2711 = vmatprep.subr.mxu0 0.0
        %2712 = vmatpush1.msra.mxu0 %v2679
        %2713 = vmatprep.subr.mxu0 0.0
        %2714 = vmatpush2.msra.mxu0 0.0
        %2715 = vmatprep.subr.mxu0 0.0
        %2716 = vmatpush2.msra.mxu0 0.0
        %2717 = vmatprep.subr.mxu0 0.0
        %2718 = vmatpush2.msra.mxu0 0.0
        %2719 = vmatprep.subr.mxu0 0.0
        %2720 = vmatpush2.msra.mxu0 0.0
        %2721 = vmatprep.subr.mxu0 0.0
        %2722 = vmatpush2.msra.mxu0 0.0
        %2723 = vmatprep.subr.mxu0 0.0
        %2724 = vmatpush2.msra.mxu0 0.0
        %2725 = vmatprep.subr.mxu0 0.0
        %2726 = vmatpush2.msra.mxu0 0.0
        %2727 = vmatprep.subr.mxu0 0.0
        %2728 = vmatpush2.msra.mxu0 0.0
        %2729 = vmatprep.subr.mxu0 0.0
        %2730 = vmatpush2.msra.mxu0 0.0
        %2731 = vmatprep.subr.mxu0 0.0
        %2732 = vmatpush2.msra.mxu0 0.0
        %2733 = vmatprep.subr.mxu0 0.0
        %2734 = vmatpush2.msra.mxu0 0.0
        %2735 = vmatprep.subr.mxu0 0.0
        %2736 = vmatpush2.msra.mxu0 0.0
        %2737 = vmatprep.subr.mxu0 0.0
        %2738 = vmatpush2.msra.mxu0 0.0
        %2739 = vmatprep.subr.mxu0 0.0
        %2740 = vmatpush2.msra.mxu0 0.0
        %2741 = vmatprep.subr.mxu0 0.0
        %2742 = vmatpush2.msra.mxu0 0.0
        %2743 = vmatprep.subr.mxu0 0.0
        %2744 = vmatpush2.msra.mxu0 0.0
        %2745 = vmatprep.mubr.f32.mxu0 0.0
        %2746 = vmatmul.mubr.f32.gmra.mxu0 %v2520
        %v2747 = vpop.f32.mrf.mxu0
        %v2748 = vadd.f32 0.0, %v2747
        %v2749 = vpop.f32.mrf.mxu0
        %2750 = vmatprep.mubr.f32.mxu0 0.0
        %2751 = vmatmul.mubr.f32.gmra.mxu0 %v2523
        %v2752 = vpop.f32.mrf.mxu0
        %v2753 = vadd.f32 0.0, %v2752
        %v2754 = vpop.f32.mrf.mxu0
        %2755 = vmatprep.mubr.f32.mxu0 0.0
        %2756 = vmatmul.mubr.f32.gmra.mxu0 %v2526
        %v2757 = vpop.f32.mrf.mxu0
        %v2758 = vadd.f32 0.0, %v2757
        %v2759 = vpop.f32.mrf.mxu0
        %2760 = vmatprep.mubr.f32.mxu0 0.0
        %2761 = vmatmul.mubr.f32.gmra.mxu0 %v2529
        %v2762 = vpop.f32.mrf.mxu0
        %v2763 = vadd.f32 0.0, %v2762
        %v2764 = vpop.f32.mrf.mxu0
        %2765 = vmatprep.mubr.f32.mxu0 0.0
        %2766 = vmatmul.mubr.f32.gmra.mxu0 %v2532
        %v2767 = vpop.f32.mrf.mxu0
        %v2768 = vadd.f32 0.0, %v2767
        %v2769 = vpop.f32.mrf.mxu0
        %2770 = vmatprep.mubr.f32.mxu0 0.0
        %2771 = vmatmul.mubr.f32.gmra.mxu0 %v2535
        %v2772 = vpop.f32.mrf.mxu0
        %v2773 = vadd.f32 0.0, %v2772
        %v2774 = vpop.f32.mrf.mxu0
        %2775 = vmatprep.mubr.f32.mxu0 0.0
        %2776 = vmatmul.mubr.f32.gmra.mxu0 %v2538
        %v2777 = vpop.f32.mrf.mxu0
        %v2778 = vadd.f32 0.0, %v2777
        %v2779 = vpop.f32.mrf.mxu0
        %2780 = vmatprep.mubr.f32.mxu0 0.0
        %2781 = vmatmul.mubr.f32.gmra.mxu0 %v2541
        %v2782 = vpop.f32.mrf.mxu0
        %v2783 = vadd.f32 0.0, %v2782
        %v2784 = vpop.f32.mrf.mxu0
        %2785 = vmatprep.mubr.f32.mxu0 0.0
        %2786 = vmatmul.mubr.f32.gmra.mxu0 %v2544
        %v2787 = vpop.f32.mrf.mxu0
        %v2788 = vadd.f32 0.0, %v2787
        %v2789 = vpop.f32.mrf.mxu0
        %2790 = vmatprep.mubr.f32.mxu0 0.0
        %2791 = vmatmul.mubr.f32.gmra.mxu0 %v2547
        %v2792 = vpop.f32.mrf.mxu0
        %v2793 = vadd.f32 0.0, %v2792
        %v2794 = vpop.f32.mrf.mxu0
        %2795 = vmatprep.mubr.f32.mxu0 0.0
        %2796 = vmatmul.mubr.f32.gmra.mxu0 %v2550
        %v2797 = vpop.f32.mrf.mxu0
        %v2798 = vadd.f32 0.0, %v2797
        %v2799 = vpop.f32.mrf.mxu0
        %2800 = vmatprep.mubr.f32.mxu0 0.0
        %2801 = vmatmul.mubr.f32.gmra.mxu0 %v2553
        %v2802 = vpop.f32.mrf.mxu0
        %v2803 = vadd.f32 0.0, %v2802
        %v2804 = vpop.f32.mrf.mxu0
        %2805 = vmatprep.mubr.f32.mxu0 0.0
        %2806 = vmatmul.mubr.f32.gmra.mxu0 %v2556
        %v2807 = vpop.f32.mrf.mxu0
        %v2808 = vadd.f32 0.0, %v2807
        %v2809 = vpop.f32.mrf.mxu0
        %2810 = vmatprep.mubr.f32.mxu0 0.0
        %2811 = vmatmul.mubr.f32.gmra.mxu0 %v2559
        %v2812 = vpop.f32.mrf.mxu0
        %v2813 = vadd.f32 0.0, %v2812
        %v2814 = vpop.f32.mrf.mxu0
        %2815 = vmatprep.mubr.f32.mxu0 0.0
        %2816 = vmatmul.mubr.f32.gmra.mxu0 %v2562
        %v2817 = vpop.f32.mrf.mxu0
        %v2818 = vadd.f32 0.0, %v2817
        %v2819 = vpop.f32.mrf.mxu0
        %2820 = vmatprep.mubr.f32.mxu0 0.0
        %2821 = vmatmul.mubr.f32.gmra.mxu0 %v2565
        %v2822 = vpop.f32.mrf.mxu0
        %v2823 = vadd.f32 0.0, %v2822
        %v2824 = vpop.f32.mrf.mxu0
        %2825 = vmatprep.mubr.f32.mxu0 0.0
        %2826 = vmatmul.mubr.f32.gmra.mxu0 %v2568
        %v2827 = vpop.f32.mrf.mxu0
        %v2828 = vadd.f32 0.0, %v2827
        %v2829 = vpop.f32.mrf.mxu0
        %2830 = vmatprep.mubr.f32.mxu0 0.0
        %2831 = vmatmul.mubr.f32.gmra.mxu0 %v2571
        %v2832 = vpop.f32.mrf.mxu0
        %v2833 = vadd.f32 0.0, %v2832
        %v2834 = vpop.f32.mrf.mxu0
        %2835 = vmatprep.mubr.f32.mxu0 0.0
        %2836 = vmatmul.mubr.f32.gmra.mxu0 %v2574
        %v2837 = vpop.f32.mrf.mxu0
        %v2838 = vadd.f32 0.0, %v2837
        %v2839 = vpop.f32.mrf.mxu0
        %2840 = vmatprep.mubr.f32.mxu0 0.0
        %2841 = vmatmul.mubr.f32.gmra.mxu0 %v2577
        %v2842 = vpop.f32.mrf.mxu0
        %v2843 = vadd.f32 0.0, %v2842
        %v2844 = vpop.f32.mrf.mxu0
        %2845 = vmatprep.mubr.f32.mxu0 0.0
        %2846 = vmatmul.mubr.f32.gmra.mxu0 %v2580
        %v2847 = vpop.f32.mrf.mxu0
        %v2848 = vadd.f32 0.0, %v2847
        %v2849 = vpop.f32.mrf.mxu0
        %2850 = vmatprep.mubr.f32.mxu0 0.0
        %2851 = vmatmul.mubr.f32.gmra.mxu0 %v2583
        %v2852 = vpop.f32.mrf.mxu0
        %v2853 = vadd.f32 0.0, %v2852
        %v2854 = vpop.f32.mrf.mxu0
        %2855 = vmatprep.mubr.f32.mxu0 0.0
        %2856 = vmatmul.mubr.f32.gmra.mxu0 %v2586
        %v2857 = vpop.f32.mrf.mxu0
        %v2858 = vadd.f32 0.0, %v2857
        %v2859 = vpop.f32.mrf.mxu0
        %2860 = vmatprep.mubr.f32.mxu0 0.0
        %2861 = vmatmul.mubr.f32.gmra.mxu0 %v2589
        %v2862 = vpop.f32.mrf.mxu0
        %v2863 = vadd.f32 0.0, %v2862
        %v2864 = vpop.f32.mrf.mxu0
        %2865 = vmatprep.mubr.f32.mxu0 0.0
        %2866 = vmatmul.mubr.f32.gmra.mxu0 %v2592
        %v2867 = vpop.f32.mrf.mxu0
        %v2868 = vadd.f32 0.0, %v2867
        %v2869 = vpop.f32.mrf.mxu0
        %2870 = vmatprep.mubr.f32.mxu0 0.0
        %2871 = vmatmul.mubr.f32.gmra.mxu0 %v2595
        %v2872 = vpop.f32.mrf.mxu0
        %v2873 = vadd.f32 0.0, %v2872
        %v2874 = vpop.f32.mrf.mxu0
        %2875 = vmatprep.mubr.f32.mxu0 0.0
        %2876 = vmatmul.mubr.f32.gmra.mxu0 %v2598
        %v2877 = vpop.f32.mrf.mxu0
        %v2878 = vadd.f32 0.0, %v2877
        %v2879 = vpop.f32.mrf.mxu0
        %2880 = vmatprep.mubr.f32.mxu0 0.0
        %2881 = vmatmul.mubr.f32.gmra.mxu0 %v2601
        %v2882 = vpop.f32.mrf.mxu0
        %v2883 = vadd.f32 0.0, %v2882
        %v2884 = vpop.f32.mrf.mxu0
        %2885 = vmatprep.mubr.f32.mxu0 0.0
        %2886 = vmatmul.mubr.f32.gmra.mxu0 %v2604
        %v2887 = vpop.f32.mrf.mxu0
        %v2888 = vadd.f32 0.0, %v2887
        %v2889 = vpop.f32.mrf.mxu0
        %2890 = vmatprep.mubr.f32.mxu0 0.0
        %2891 = vmatmul.mubr.f32.gmra.mxu0 %v2607
        %v2892 = vpop.f32.mrf.mxu0
        %v2893 = vadd.f32 0.0, %v2892
        %v2894 = vpop.f32.mrf.mxu0
        %2895 = vmatprep.mubr.f32.mxu0 0.0
        %2896 = vmatmul.mubr.f32.gmra.mxu0 %v2610
        %v2897 = vpop.f32.mrf.mxu0
        %v2898 = vadd.f32 0.0, %v2897
        %v2899 = vpop.f32.mrf.mxu0
        %2900 = vmatprep.mubr.f32.mxu0 0.0
        %2901 = vmatmul.mubr.f32.gmra.mxu0 %v2613
        %v2902 = vpop.f32.mrf.mxu0
        %v2903 = vadd.f32 0.0, %v2902
        %v2904 = vpop.f32.mrf.mxu0
        %2905 = vmatprep.mubr.f32.mxu0 0.0
        %2906 = vmatmul.mubr.f32.gmra.mxu0 %v2616
        %v2907 = vpop.f32.mrf.mxu0
        %v2908 = vadd.f32 0.0, %v2907
        %v2909 = vpop.f32.mrf.mxu0
        %2910 = vmatprep.mubr.f32.mxu0 0.0
        %2911 = vmatmul.mubr.f32.gmra.mxu0 %v2619
        %v2912 = vpop.f32.mrf.mxu0
        %v2913 = vadd.f32 0.0, %v2912
        %v2914 = vpop.f32.mrf.mxu0
        %2915 = vmatprep.mubr.f32.mxu0 0.0
        %2916 = vmatmul.mubr.f32.gmra.mxu0 %v2622
        %v2917 = vpop.f32.mrf.mxu0
        %v2918 = vadd.f32 0.0, %v2917
        %v2919 = vpop.f32.mrf.mxu0
        %2920 = vmatprep.mubr.f32.mxu0 0.0
        %2921 = vmatmul.mubr.f32.gmra.mxu0 %v2625
        %v2922 = vpop.f32.mrf.mxu0
        %v2923 = vadd.f32 0.0, %v2922
        %v2924 = vpop.f32.mrf.mxu0
        %2925 = vmatprep.mubr.f32.mxu0 0.0
        %2926 = vmatmul.mubr.f32.gmra.mxu0 %v2628
        %v2927 = vpop.f32.mrf.mxu0
        %v2928 = vadd.f32 0.0, %v2927
        %v2929 = vpop.f32.mrf.mxu0
        %2930 = vmatprep.mubr.f32.mxu0 0.0
        %2931 = vmatmul.mubr.f32.gmra.mxu0 %v2631
        %v2932 = vpop.f32.mrf.mxu0
        %v2933 = vadd.f32 0.0, %v2932
        %v2934 = vpop.f32.mrf.mxu0
        %2935 = vmatprep.mubr.f32.mxu0 0.0
        %2936 = vmatmul.mubr.f32.gmra.mxu0 %v2634
        %v2937 = vpop.f32.mrf.mxu0
        %v2938 = vadd.f32 0.0, %v2937
        %v2939 = vpop.f32.mrf.mxu0
        %2940 = vmatprep.mubr.f32.mxu0 0.0
        %2941 = vmatmul.mubr.f32.gmra.mxu0 %v2637
        %v2942 = vpop.f32.mrf.mxu0
        %v2943 = vadd.f32 0.0, %v2942
        %v2944 = vpop.f32.mrf.mxu0
        %2945 = vmatprep.mubr.f32.mxu0 0.0
        %2946 = vmatmul.mubr.f32.gmra.mxu0 %v2640
        %v2947 = vpop.f32.mrf.mxu0
        %v2948 = vadd.f32 0.0, %v2947
        %v2949 = vpop.f32.mrf.mxu0
        %2950 = vmatprep.mubr.f32.mxu0 0.0
        %2951 = vmatmul.mubr.f32.gmra.mxu0 %v2643
        %v2952 = vpop.f32.mrf.mxu0
        %v2953 = vadd.f32 0.0, %v2952
        %v2954 = vpop.f32.mrf.mxu0
        %2955 = vmatprep.mubr.f32.mxu0 0.0
        %2956 = vmatmul.mubr.f32.gmra.mxu0 %v2646
        %v2957 = vpop.f32.mrf.mxu0
        %v2958 = vadd.f32 0.0, %v2957
        %v2959 = vpop.f32.mrf.mxu0
        %2960 = vmatprep.mubr.f32.mxu0 0.0
        %2961 = vmatmul.mubr.f32.gmra.mxu0 %v2649
        %v2962 = vpop.f32.mrf.mxu0
        %v2963 = vadd.f32 0.0, %v2962
        %v2964 = vpop.f32.mrf.mxu0
        %2965 = vmatprep.mubr.f32.mxu0 0.0
        %2966 = vmatmul.mubr.f32.gmra.mxu0 %v2652
        %v2967 = vpop.f32.mrf.mxu0
        %v2968 = vadd.f32 0.0, %v2967
        %v2969 = vpop.f32.mrf.mxu0
        %2970 = vmatprep.mubr.f32.mxu0 0.0
        %2971 = vmatmul.mubr.f32.gmra.mxu0 %v2655
        %v2972 = vpop.f32.mrf.mxu0
        %v2973 = vadd.f32 0.0, %v2972
        %v2974 = vpop.f32.mrf.mxu0
        %2975 = vmatprep.mubr.f32.mxu0 0.0
        %2976 = vmatmul.mubr.f32.gmra.mxu0 %v2658
        %v2977 = vpop.f32.mrf.mxu0
        %v2978 = vadd.f32 0.0, %v2977
        %v2979 = vpop.f32.mrf.mxu0
        %2980 = vmatprep.mubr.f32.mxu0 0.0
        %2981 = vmatmul.mubr.f32.gmra.mxu0 %v2661
        %v2982 = vpop.f32.mrf.mxu0
        %v2983 = vadd.f32 0.0, %v2982
        %v2984 = vpop.f32.mrf.mxu0
        %2985 = vmatprep.mubr.f32.mxu0 0.0
        %2986 = vmatmul.mubr.f32.gmra.mxu0 %v2664
        %v2987 = vpop.f32.mrf.mxu0
        %v2988 = vadd.f32 0.0, %v2987
        %v2989 = vpop.f32.mrf.mxu0
        %2990 = vmatprep.mubr.f32.mxu0 0.0
        %2991 = vmatmul.mubr.f32.gmra.mxu0 %v2667
        %v2992 = vpop.f32.mrf.mxu0
        %v2993 = vadd.f32 0.0, %v2992
        %v2994 = vpop.f32.mrf.mxu0
        %2995 = vmatprep.mubr.f32.mxu0 0.0
        %2996 = vmatmul.mubr.f32.gmra.mxu0 %v2670
        %v2997 = vpop.f32.mrf.mxu0
        %v2998 = vadd.f32 0.0, %v2997
        %v2999 = vpop.f32.mrf.mxu0
        %3000 = vmatprep.mubr.f32.mxu0 0.0
        %3001 = vmatmul.mubr.f32.gmra.mxu0 %v2673
        %v3002 = vpop.f32.mrf.mxu0
        %v3003 = vadd.f32 0.0, %v3002
        %v3004 = vpop.f32.mrf.mxu0
        %3005 = vmatprep.mubr.f32.mxu0 0.0
        %3006 = vmatmul.mubr.f32.gmra.mxu0 %v2676
        %v3007 = vpop.f32.mrf.mxu0
        %v3008 = vadd.f32 0.0, %v3007
        %v3009 = vpop.f32.mrf.mxu0
        %3010 = vdwg.mxu0
        %v3011 = vadd.f32 %v2411, %v2748
        %v3012 = vadd.f32 %v2412, %v2753
        %v3013 = vadd.f32 %v2413, %v2758
        %v3014 = vadd.f32 %v2414, %v2763
        %v3015 = vadd.f32 %v2415, %v2768
        %v3016 = vadd.f32 %v2416, %v2773
        %v3017 = vadd.f32 %v2417, %v2778
        %v3018 = vadd.f32 %v2418, %v2783
        %v3019 = vadd.f32 %v2419, %v2788
        %v3020 = vadd.f32 %v2420, %v2793
        %v3021 = vadd.f32 %v2421, %v2798
        %v3022 = vadd.f32 %v2422, %v2803
        %v3023 = vadd.f32 %v2423, %v2808
        %v3024 = vadd.f32 %v2424, %v2813
        %v3025 = vadd.f32 %v2425, %v2818
        %v3026 = vadd.f32 %v2426, %v2823
        %v3027 = vadd.f32 %v2427, %v2828
        %v3028 = vadd.f32 %v2428, %v2833
        %v3029 = vadd.f32 %v2429, %v2838
        %v3030 = vadd.f32 %v2430, %v2843
        %v3031 = vadd.f32 %v2431, %v2848
        %v3032 = vadd.f32 %v2432, %v2853
        %v3033 = vadd.f32 %v2433, %v2858
        %v3034 = vadd.f32 %v2434, %v2863
        %v3035 = vadd.f32 %v2435, %v2868
        %v3036 = vadd.f32 %v2436, %v2873
        %v3037 = vadd.f32 %v2437, %v2878
        %v3038 = vadd.f32 %v2438, %v2883
        %v3039 = vadd.f32 %v2439, %v2888
        %v3040 = vadd.f32 %v2440, %v2893
        %v3041 = vadd.f32 %v2441, %v2898
        %v3042 = vadd.f32 %v2442, %v2903
        %v3043 = vadd.f32 %v2443, %v2908
        %v3044 = vadd.f32 %v2444, %v2913
        %v3045 = vadd.f32 %v2445, %v2918
        %v3046 = vadd.f32 %v2446, %v2923
        %v3047 = vadd.f32 %v2447, %v2928
        %v3048 = vadd.f32 %v2448, %v2933
        %v3049 = vadd.f32 %v2449, %v2938
        %v3050 = vadd.f32 %v2450, %v2943
        %v3051 = vadd.f32 %v2451, %v2948
        %v3052 = vadd.f32 %v2452, %v2953
        %v3053 = vadd.f32 %v2453, %v2958
        %v3054 = vadd.f32 %v2454, %v2963
        %v3055 = vadd.f32 %v2455, %v2968
        %v3056 = vadd.f32 %v2456, %v2973
        %v3057 = vadd.f32 %v2457, %v2978
        %v3058 = vadd.f32 %v2458, %v2983
        %v3059 = vadd.f32 %v2459, %v2988
        %v3060 = vadd.f32 %v2460, %v2993
        %v3061 = vadd.f32 %v2461, %v2998
        %v3062 = vadd.f32 %v2462, %v3003
        %v3063 = vadd.f32 %v2463, %v3008
        %v3064 = vld [vmem:[%s168 + $0x17] sm:$0xff]
        %v3065 = vld [vmem:[%s168 + $0x1f] sm:$0xff]
        %v3066 = vld [vmem:[%s168 + $0x27] sm:$0xff]
        %v3067 = vld [vmem:[%s168 + $0x2f] sm:$0xff]
        %v3068 = vld [vmem:[%s168 + $0x37] sm:$0xff]
        %v3069 = vld [vmem:[%s168 + $0x3f] sm:$0xff]
        %v3070 = vld [vmem:[%s168 + $0x47] sm:$0xff]
        %v3071 = vld [vmem:[%s168 + $0x4f] sm:$0xff]
        %v3072 = vld [vmem:[%s168 + $0x57] sm:$0xff]
        %v3073 = vld [vmem:[%s168 + $0x5f] sm:$0xff]
        %v3074 = vld [vmem:[%s168 + $0x67] sm:$0xff]
        %v3075 = vld [vmem:[%s168 + $0x6f] sm:$0xff]
        %v3076 = vld [vmem:[%s168 + $0x77] sm:$0xff]
        %v3077 = vld [vmem:[%s168 + $0x7f] sm:$0xff]
        %v3078 = vld [vmem:[%s168 + $0x87] sm:$0xff]
        %v3079 = vld [vmem:[%s168 + $0x8f] sm:$0xff]
        %v3080 = vld [vmem:[%s168 + $0x97] sm:$0xff]
        %v3081 = vld [vmem:[%s168 + $0x9f] sm:$0xff]
        %v3082 = vld [vmem:[%s168 + $0xa7] sm:$0xff]
        %v3083 = vld [vmem:[%s168 + $0xaf] sm:$0xff]
        %v3084 = vld [vmem:[%s168 + $0xb7] sm:$0xff]
        %v3085 = vld [vmem:[%s168 + $0xbf] sm:$0xff]
        %v3086 = vld [vmem:[%s168 + $0xc7] sm:$0xff]
        %v3087 = vld [vmem:[%s168 + $0xcf] sm:$0xff]
        %v3088 = vld [vmem:[%s168 + $0xd7] sm:$0xff]
        %v3089 = vld [vmem:[%s168 + $0xdf] sm:$0xff]
        %v3090 = vld [vmem:[%s168 + $0xe7] sm:$0xff]
        %v3091 = vld [vmem:[%s168 + $0xef] sm:$0xff]
        %v3092 = vld [vmem:[%s168 + $0xf7] sm:$0xff]
        %v3093 = vld [vmem:[%s168 + $0xff] sm:$0xff]
        %v3094 = vld [vmem:[%s168 + $0x107] sm:$0xff]
        %v3095 = vld [vmem:[%s168 + $0x10f] sm:$0xff]
        %v3096 = vld [vmem:[%s168 + $0x117] sm:$0xff]
        %v3097 = vld [vmem:[%s168 + $0x11f] sm:$0xff]
        %v3098 = vld [vmem:[%s168 + $0x127] sm:$0xff]
        %v3099 = vld [vmem:[%s168 + $0x12f] sm:$0xff]
        %v3100 = vld [vmem:[%s168 + $0x137] sm:$0xff]
        %v3101 = vld [vmem:[%s168 + $0x13f] sm:$0xff]
        %v3102 = vld [vmem:[%s168 + $0x147] sm:$0xff]
        %v3103 = vld [vmem:[%s168 + $0x14f] sm:$0xff]
        %v3104 = vld [vmem:[%s168 + $0x157] sm:$0xff]
        %v3105 = vld [vmem:[%s168 + $0x15f] sm:$0xff]
        %v3106 = vld [vmem:[%s168 + $0x167] sm:$0xff]
        %v3107 = vld [vmem:[%s168 + $0x16f] sm:$0xff]
        %v3108 = vld [vmem:[%s168 + $0x177] sm:$0xff]
        %v3109 = vld [vmem:[%s168 + $0x17f] sm:$0xff]
        %v3110 = vld [vmem:[%s168 + $0x187] sm:$0xff]
        %v3111 = vld [vmem:[%s168 + $0x18f] sm:$0xff]
        %v3112 = vld [vmem:[%s168 + $0x197] sm:$0xff]
        %v3113 = vld [vmem:[%s168 + $0x19f] sm:$0xff]
        %v3114 = vld [vmem:[%s168 + $0x1a7] sm:$0xff]
        %v3115 = vld [vmem:[%s168 + $0x1af] sm:$0xff]
        %v3116 = vld [vmem:[%s168 + $0x1b7] sm:$0x3]
        %s3117 = scalar_lea.vmem %s1, 20
        %v3118 = vld [vmem:[%s3117] sm:$0xf]
        %v3120 = vsel %vm278, %v3064, 0
        %v3123 = vsel %vm278, %v3065, 0
        %v3126 = vsel %vm278, %v3066, 0
        %v3129 = vsel %vm278, %v3067, 0
        %v3132 = vsel %vm278, %v3068, 0
        %v3135 = vsel %vm278, %v3069, 0
        %v3138 = vsel %vm278, %v3070, 0
        %v3141 = vsel %vm278, %v3071, 0
        %v3144 = vsel %vm278, %v3072, 0
        %v3147 = vsel %vm278, %v3073, 0
        %v3150 = vsel %vm278, %v3074, 0
        %v3153 = vsel %vm278, %v3075, 0
        %v3156 = vsel %vm278, %v3076, 0
        %v3159 = vsel %vm278, %v3077, 0
        %v3162 = vsel %vm278, %v3078, 0
        %v3165 = vsel %vm278, %v3079, 0
        %v3168 = vsel %vm278, %v3080, 0
        %v3171 = vsel %vm278, %v3081, 0
        %v3174 = vsel %vm278, %v3082, 0
        %v3177 = vsel %vm278, %v3083, 0
        %v3180 = vsel %vm278, %v3084, 0
        %v3183 = vsel %vm278, %v3085, 0
        %v3186 = vsel %vm278, %v3086, 0
        %v3189 = vsel %vm278, %v3087, 0
        %v3192 = vsel %vm278, %v3088, 0
        %v3195 = vsel %vm278, %v3089, 0
        %v3198 = vsel %vm278, %v3090, 0
        %v3201 = vsel %vm278, %v3091, 0
        %v3204 = vsel %vm278, %v3092, 0
        %v3207 = vsel %vm278, %v3093, 0
        %v3210 = vsel %vm278, %v3094, 0
        %v3213 = vsel %vm278, %v3095, 0
        %v3216 = vsel %vm278, %v3096, 0
        %v3219 = vsel %vm278, %v3097, 0
        %v3222 = vsel %vm278, %v3098, 0
        %v3225 = vsel %vm278, %v3099, 0
        %v3228 = vsel %vm278, %v3100, 0
        %v3231 = vsel %vm278, %v3101, 0
        %v3234 = vsel %vm278, %v3102, 0
        %v3237 = vsel %vm278, %v3103, 0
        %v3240 = vsel %vm278, %v3104, 0
        %v3243 = vsel %vm278, %v3105, 0
        %v3246 = vsel %vm278, %v3106, 0
        %v3249 = vsel %vm278, %v3107, 0
        %v3252 = vsel %vm278, %v3108, 0
        %v3255 = vsel %vm278, %v3109, 0
        %v3258 = vsel %vm278, %v3110, 0
        %v3261 = vsel %vm278, %v3111, 0
        %v3264 = vsel %vm278, %v3112, 0
        %v3267 = vsel %vm278, %v3113, 0
        %v3270 = vsel %vm278, %v3114, 0
        %v3273 = vsel %vm278, %v3115, 0
        %v3276 = vsel %vm278, %v3116, 0
        %v3279 = vsel %vm438, %v3118, 0
        %3281 = vmatprep.subr.mxu0 0.0
        %3282 = vmatpush1.msra.mxu0 0.0
        %3283 = vmatprep.subr.mxu0 0.0
        %3284 = vmatpush1.msra.mxu0 0.0
        %3285 = vmatprep.subr.mxu0 0.0
        %3286 = vmatpush1.msra.mxu0 0.0
        %3287 = vmatprep.subr.mxu0 0.0
        %3288 = vmatpush1.msra.mxu0 0.0
        %3289 = vmatprep.subr.mxu0 0.0
        %3290 = vmatpush1.msra.mxu0 0.0
        %3291 = vmatprep.subr.mxu0 0.0
        %3292 = vmatpush1.msra.mxu0 0.0
        %3293 = vmatprep.subr.mxu0 0.0
        %3294 = vmatpush1.msra.mxu0 0.0
        %3295 = vmatprep.subr.mxu0 0.0
        %3296 = vmatpush1.msra.mxu0 0.0
        %3297 = vmatprep.subr.mxu0 0.0
        %3298 = vmatpush1.msra.mxu0 0.0
        %3299 = vmatprep.subr.mxu0 0.0
        %3300 = vmatpush1.msra.mxu0 0.0
        %3301 = vmatprep.subr.mxu0 0.0
        %3302 = vmatpush1.msra.mxu0 0.0
        %3303 = vmatprep.subr.mxu0 0.0
        %3304 = vmatpush1.msra.mxu0 0.0
        %3305 = vmatprep.subr.mxu0 0.0
        %3306 = vmatpush1.msra.mxu0 0.0
        %3307 = vmatprep.subr.mxu0 0.0
        %3308 = vmatpush1.msra.mxu0 0.0
        %3309 = vmatprep.subr.mxu0 0.0
        %3310 = vmatpush1.msra.mxu0 0.0
        %3311 = vmatprep.subr.mxu0 0.0
        %3312 = vmatpush1.msra.mxu0 %v3279
        %3313 = vmatprep.subr.mxu0 0.0
        %3314 = vmatpush2.msra.mxu0 0.0
        %3315 = vmatprep.subr.mxu0 0.0
        %3316 = vmatpush2.msra.mxu0 0.0
        %3317 = vmatprep.subr.mxu0 0.0
        %3318 = vmatpush2.msra.mxu0 0.0
        %3319 = vmatprep.subr.mxu0 0.0
        %3320 = vmatpush2.msra.mxu0 0.0
        %3321 = vmatprep.subr.mxu0 0.0
        %3322 = vmatpush2.msra.mxu0 0.0
        %3323 = vmatprep.subr.mxu0 0.0
        %3324 = vmatpush2.msra.mxu0 0.0
        %3325 = vmatprep.subr.mxu0 0.0
        %3326 = vmatpush2.msra.mxu0 0.0
        %3327 = vmatprep.subr.mxu0 0.0
        %3328 = vmatpush2.msra.mxu0 0.0
        %3329 = vmatprep.subr.mxu0 0.0
        %3330 = vmatpush2.msra.mxu0 0.0
        %3331 = vmatprep.subr.mxu0 0.0
        %3332 = vmatpush2.msra.mxu0 0.0
        %3333 = vmatprep.subr.mxu0 0.0
        %3334 = vmatpush2.msra.mxu0 0.0
        %3335 = vmatprep.subr.mxu0 0.0
        %3336 = vmatpush2.msra.mxu0 0.0
        %3337 = vmatprep.subr.mxu0 0.0
        %3338 = vmatpush2.msra.mxu0 0.0
        %3339 = vmatprep.subr.mxu0 0.0
        %3340 = vmatpush2.msra.mxu0 0.0
        %3341 = vmatprep.subr.mxu0 0.0
        %3342 = vmatpush2.msra.mxu0 0.0
        %3343 = vmatprep.subr.mxu0 0.0
        %3344 = vmatpush2.msra.mxu0 0.0
        %3345 = vmatprep.mubr.f32.mxu0 0.0
        %3346 = vmatmul.mubr.f32.gmra.mxu0 %v3120
        %v3347 = vpop.f32.mrf.mxu0
        %v3348 = vadd.f32 0.0, %v3347
        %v3349 = vpop.f32.mrf.mxu0
        %3350 = vmatprep.mubr.f32.mxu0 0.0
        %3351 = vmatmul.mubr.f32.gmra.mxu0 %v3123
        %v3352 = vpop.f32.mrf.mxu0
        %v3353 = vadd.f32 0.0, %v3352
        %v3354 = vpop.f32.mrf.mxu0
        %3355 = vmatprep.mubr.f32.mxu0 0.0
        %3356 = vmatmul.mubr.f32.gmra.mxu0 %v3126
        %v3357 = vpop.f32.mrf.mxu0
        %v3358 = vadd.f32 0.0, %v3357
        %v3359 = vpop.f32.mrf.mxu0
        %3360 = vmatprep.mubr.f32.mxu0 0.0
        %3361 = vmatmul.mubr.f32.gmra.mxu0 %v3129
        %v3362 = vpop.f32.mrf.mxu0
        %v3363 = vadd.f32 0.0, %v3362
        %v3364 = vpop.f32.mrf.mxu0
        %3365 = vmatprep.mubr.f32.mxu0 0.0
        %3366 = vmatmul.mubr.f32.gmra.mxu0 %v3132
        %v3367 = vpop.f32.mrf.mxu0
        %v3368 = vadd.f32 0.0, %v3367
        %v3369 = vpop.f32.mrf.mxu0
        %3370 = vmatprep.mubr.f32.mxu0 0.0
        %3371 = vmatmul.mubr.f32.gmra.mxu0 %v3135
        %v3372 = vpop.f32.mrf.mxu0
        %v3373 = vadd.f32 0.0, %v3372
        %v3374 = vpop.f32.mrf.mxu0
        %3375 = vmatprep.mubr.f32.mxu0 0.0
        %3376 = vmatmul.mubr.f32.gmra.mxu0 %v3138
        %v3377 = vpop.f32.mrf.mxu0
        %v3378 = vadd.f32 0.0, %v3377
        %v3379 = vpop.f32.mrf.mxu0
        %3380 = vmatprep.mubr.f32.mxu0 0.0
        %3381 = vmatmul.mubr.f32.gmra.mxu0 %v3141
        %v3382 = vpop.f32.mrf.mxu0
        %v3383 = vadd.f32 0.0, %v3382
        %v3384 = vpop.f32.mrf.mxu0
        %3385 = vmatprep.mubr.f32.mxu0 0.0
        %3386 = vmatmul.mubr.f32.gmra.mxu0 %v3144
        %v3387 = vpop.f32.mrf.mxu0
        %v3388 = vadd.f32 0.0, %v3387
        %v3389 = vpop.f32.mrf.mxu0
        %3390 = vmatprep.mubr.f32.mxu0 0.0
        %3391 = vmatmul.mubr.f32.gmra.mxu0 %v3147
        %v3392 = vpop.f32.mrf.mxu0
        %v3393 = vadd.f32 0.0, %v3392
        %v3394 = vpop.f32.mrf.mxu0
        %3395 = vmatprep.mubr.f32.mxu0 0.0
        %3396 = vmatmul.mubr.f32.gmra.mxu0 %v3150
        %v3397 = vpop.f32.mrf.mxu0
        %v3398 = vadd.f32 0.0, %v3397
        %v3399 = vpop.f32.mrf.mxu0
        %3400 = vmatprep.mubr.f32.mxu0 0.0
        %3401 = vmatmul.mubr.f32.gmra.mxu0 %v3153
        %v3402 = vpop.f32.mrf.mxu0
        %v3403 = vadd.f32 0.0, %v3402
        %v3404 = vpop.f32.mrf.mxu0
        %3405 = vmatprep.mubr.f32.mxu0 0.0
        %3406 = vmatmul.mubr.f32.gmra.mxu0 %v3156
        %v3407 = vpop.f32.mrf.mxu0
        %v3408 = vadd.f32 0.0, %v3407
        %v3409 = vpop.f32.mrf.mxu0
        %3410 = vmatprep.mubr.f32.mxu0 0.0
        %3411 = vmatmul.mubr.f32.gmra.mxu0 %v3159
        %v3412 = vpop.f32.mrf.mxu0
        %v3413 = vadd.f32 0.0, %v3412
        %v3414 = vpop.f32.mrf.mxu0
        %3415 = vmatprep.mubr.f32.mxu0 0.0
        %3416 = vmatmul.mubr.f32.gmra.mxu0 %v3162
        %v3417 = vpop.f32.mrf.mxu0
        %v3418 = vadd.f32 0.0, %v3417
        %v3419 = vpop.f32.mrf.mxu0
        %3420 = vmatprep.mubr.f32.mxu0 0.0
        %3421 = vmatmul.mubr.f32.gmra.mxu0 %v3165
        %v3422 = vpop.f32.mrf.mxu0
        %v3423 = vadd.f32 0.0, %v3422
        %v3424 = vpop.f32.mrf.mxu0
        %3425 = vmatprep.mubr.f32.mxu0 0.0
        %3426 = vmatmul.mubr.f32.gmra.mxu0 %v3168
        %v3427 = vpop.f32.mrf.mxu0
        %v3428 = vadd.f32 0.0, %v3427
        %v3429 = vpop.f32.mrf.mxu0
        %3430 = vmatprep.mubr.f32.mxu0 0.0
        %3431 = vmatmul.mubr.f32.gmra.mxu0 %v3171
        %v3432 = vpop.f32.mrf.mxu0
        %v3433 = vadd.f32 0.0, %v3432
        %v3434 = vpop.f32.mrf.mxu0
        %3435 = vmatprep.mubr.f32.mxu0 0.0
        %3436 = vmatmul.mubr.f32.gmra.mxu0 %v3174
        %v3437 = vpop.f32.mrf.mxu0
        %v3438 = vadd.f32 0.0, %v3437
        %v3439 = vpop.f32.mrf.mxu0
        %3440 = vmatprep.mubr.f32.mxu0 0.0
        %3441 = vmatmul.mubr.f32.gmra.mxu0 %v3177
        %v3442 = vpop.f32.mrf.mxu0
        %v3443 = vadd.f32 0.0, %v3442
        %v3444 = vpop.f32.mrf.mxu0
        %3445 = vmatprep.mubr.f32.mxu0 0.0
        %3446 = vmatmul.mubr.f32.gmra.mxu0 %v3180
        %v3447 = vpop.f32.mrf.mxu0
        %v3448 = vadd.f32 0.0, %v3447
        %v3449 = vpop.f32.mrf.mxu0
        %3450 = vmatprep.mubr.f32.mxu0 0.0
        %3451 = vmatmul.mubr.f32.gmra.mxu0 %v3183
        %v3452 = vpop.f32.mrf.mxu0
        %v3453 = vadd.f32 0.0, %v3452
        %v3454 = vpop.f32.mrf.mxu0
        %3455 = vmatprep.mubr.f32.mxu0 0.0
        %3456 = vmatmul.mubr.f32.gmra.mxu0 %v3186
        %v3457 = vpop.f32.mrf.mxu0
        %v3458 = vadd.f32 0.0, %v3457
        %v3459 = vpop.f32.mrf.mxu0
        %3460 = vmatprep.mubr.f32.mxu0 0.0
        %3461 = vmatmul.mubr.f32.gmra.mxu0 %v3189
        %v3462 = vpop.f32.mrf.mxu0
        %v3463 = vadd.f32 0.0, %v3462
        %v3464 = vpop.f32.mrf.mxu0
        %3465 = vmatprep.mubr.f32.mxu0 0.0
        %3466 = vmatmul.mubr.f32.gmra.mxu0 %v3192
        %v3467 = vpop.f32.mrf.mxu0
        %v3468 = vadd.f32 0.0, %v3467
        %v3469 = vpop.f32.mrf.mxu0
        %3470 = vmatprep.mubr.f32.mxu0 0.0
        %3471 = vmatmul.mubr.f32.gmra.mxu0 %v3195
        %v3472 = vpop.f32.mrf.mxu0
        %v3473 = vadd.f32 0.0, %v3472
        %v3474 = vpop.f32.mrf.mxu0
        %3475 = vmatprep.mubr.f32.mxu0 0.0
        %3476 = vmatmul.mubr.f32.gmra.mxu0 %v3198
        %v3477 = vpop.f32.mrf.mxu0
        %v3478 = vadd.f32 0.0, %v3477
        %v3479 = vpop.f32.mrf.mxu0
        %3480 = vmatprep.mubr.f32.mxu0 0.0
        %3481 = vmatmul.mubr.f32.gmra.mxu0 %v3201
        %v3482 = vpop.f32.mrf.mxu0
        %v3483 = vadd.f32 0.0, %v3482
        %v3484 = vpop.f32.mrf.mxu0
        %3485 = vmatprep.mubr.f32.mxu0 0.0
        %3486 = vmatmul.mubr.f32.gmra.mxu0 %v3204
        %v3487 = vpop.f32.mrf.mxu0
        %v3488 = vadd.f32 0.0, %v3487
        %v3489 = vpop.f32.mrf.mxu0
        %3490 = vmatprep.mubr.f32.mxu0 0.0
        %3491 = vmatmul.mubr.f32.gmra.mxu0 %v3207
        %v3492 = vpop.f32.mrf.mxu0
        %v3493 = vadd.f32 0.0, %v3492
        %v3494 = vpop.f32.mrf.mxu0
        %3495 = vmatprep.mubr.f32.mxu0 0.0
        %3496 = vmatmul.mubr.f32.gmra.mxu0 %v3210
        %v3497 = vpop.f32.mrf.mxu0
        %v3498 = vadd.f32 0.0, %v3497
        %v3499 = vpop.f32.mrf.mxu0
        %3500 = vmatprep.mubr.f32.mxu0 0.0
        %3501 = vmatmul.mubr.f32.gmra.mxu0 %v3213
        %v3502 = vpop.f32.mrf.mxu0
        %v3503 = vadd.f32 0.0, %v3502
        %v3504 = vpop.f32.mrf.mxu0
        %3505 = vmatprep.mubr.f32.mxu0 0.0
        %3506 = vmatmul.mubr.f32.gmra.mxu0 %v3216
        %v3507 = vpop.f32.mrf.mxu0
        %v3508 = vadd.f32 0.0, %v3507
        %v3509 = vpop.f32.mrf.mxu0
        %3510 = vmatprep.mubr.f32.mxu0 0.0
        %3511 = vmatmul.mubr.f32.gmra.mxu0 %v3219
        %v3512 = vpop.f32.mrf.mxu0
        %v3513 = vadd.f32 0.0, %v3512
        %v3514 = vpop.f32.mrf.mxu0
        %3515 = vmatprep.mubr.f32.mxu0 0.0
        %3516 = vmatmul.mubr.f32.gmra.mxu0 %v3222
        %v3517 = vpop.f32.mrf.mxu0
        %v3518 = vadd.f32 0.0, %v3517
        %v3519 = vpop.f32.mrf.mxu0
        %3520 = vmatprep.mubr.f32.mxu0 0.0
        %3521 = vmatmul.mubr.f32.gmra.mxu0 %v3225
        %v3522 = vpop.f32.mrf.mxu0
        %v3523 = vadd.f32 0.0, %v3522
        %v3524 = vpop.f32.mrf.mxu0
        %3525 = vmatprep.mubr.f32.mxu0 0.0
        %3526 = vmatmul.mubr.f32.gmra.mxu0 %v3228
        %v3527 = vpop.f32.mrf.mxu0
        %v3528 = vadd.f32 0.0, %v3527
        %v3529 = vpop.f32.mrf.mxu0
        %3530 = vmatprep.mubr.f32.mxu0 0.0
        %3531 = vmatmul.mubr.f32.gmra.mxu0 %v3231
        %v3532 = vpop.f32.mrf.mxu0
        %v3533 = vadd.f32 0.0, %v3532
        %v3534 = vpop.f32.mrf.mxu0
        %3535 = vmatprep.mubr.f32.mxu0 0.0
        %3536 = vmatmul.mubr.f32.gmra.mxu0 %v3234
        %v3537 = vpop.f32.mrf.mxu0
        %v3538 = vadd.f32 0.0, %v3537
        %v3539 = vpop.f32.mrf.mxu0
        %3540 = vmatprep.mubr.f32.mxu0 0.0
        %3541 = vmatmul.mubr.f32.gmra.mxu0 %v3237
        %v3542 = vpop.f32.mrf.mxu0
        %v3543 = vadd.f32 0.0, %v3542
        %v3544 = vpop.f32.mrf.mxu0
        %3545 = vmatprep.mubr.f32.mxu0 0.0
        %3546 = vmatmul.mubr.f32.gmra.mxu0 %v3240
        %v3547 = vpop.f32.mrf.mxu0
        %v3548 = vadd.f32 0.0, %v3547
        %v3549 = vpop.f32.mrf.mxu0
        %3550 = vmatprep.mubr.f32.mxu0 0.0
        %3551 = vmatmul.mubr.f32.gmra.mxu0 %v3243
        %v3552 = vpop.f32.mrf.mxu0
        %v3553 = vadd.f32 0.0, %v3552
        %v3554 = vpop.f32.mrf.mxu0
        %3555 = vmatprep.mubr.f32.mxu0 0.0
        %3556 = vmatmul.mubr.f32.gmra.mxu0 %v3246
        %v3557 = vpop.f32.mrf.mxu0
        %v3558 = vadd.f32 0.0, %v3557
        %v3559 = vpop.f32.mrf.mxu0
        %3560 = vmatprep.mubr.f32.mxu0 0.0
        %3561 = vmatmul.mubr.f32.gmra.mxu0 %v3249
        %v3562 = vpop.f32.mrf.mxu0
        %v3563 = vadd.f32 0.0, %v3562
        %v3564 = vpop.f32.mrf.mxu0
        %3565 = vmatprep.mubr.f32.mxu0 0.0
        %3566 = vmatmul.mubr.f32.gmra.mxu0 %v3252
        %v3567 = vpop.f32.mrf.mxu0
        %v3568 = vadd.f32 0.0, %v3567
        %v3569 = vpop.f32.mrf.mxu0
        %3570 = vmatprep.mubr.f32.mxu0 0.0
        %3571 = vmatmul.mubr.f32.gmra.mxu0 %v3255
        %v3572 = vpop.f32.mrf.mxu0
        %v3573 = vadd.f32 0.0, %v3572
        %v3574 = vpop.f32.mrf.mxu0
        %3575 = vmatprep.mubr.f32.mxu0 0.0
        %3576 = vmatmul.mubr.f32.gmra.mxu0 %v3258
        %v3577 = vpop.f32.mrf.mxu0
        %v3578 = vadd.f32 0.0, %v3577
        %v3579 = vpop.f32.mrf.mxu0
        %3580 = vmatprep.mubr.f32.mxu0 0.0
        %3581 = vmatmul.mubr.f32.gmra.mxu0 %v3261
        %v3582 = vpop.f32.mrf.mxu0
        %v3583 = vadd.f32 0.0, %v3582
        %v3584 = vpop.f32.mrf.mxu0
        %3585 = vmatprep.mubr.f32.mxu0 0.0
        %3586 = vmatmul.mubr.f32.gmra.mxu0 %v3264
        %v3587 = vpop.f32.mrf.mxu0
        %v3588 = vadd.f32 0.0, %v3587
        %v3589 = vpop.f32.mrf.mxu0
        %3590 = vmatprep.mubr.f32.mxu0 0.0
        %3591 = vmatmul.mubr.f32.gmra.mxu0 %v3267
        %v3592 = vpop.f32.mrf.mxu0
        %v3593 = vadd.f32 0.0, %v3592
        %v3594 = vpop.f32.mrf.mxu0
        %3595 = vmatprep.mubr.f32.mxu0 0.0
        %3596 = vmatmul.mubr.f32.gmra.mxu0 %v3270
        %v3597 = vpop.f32.mrf.mxu0
        %v3598 = vadd.f32 0.0, %v3597
        %v3599 = vpop.f32.mrf.mxu0
        %3600 = vmatprep.mubr.f32.mxu0 0.0
        %3601 = vmatmul.mubr.f32.gmra.mxu0 %v3273
        %v3602 = vpop.f32.mrf.mxu0
        %v3603 = vadd.f32 0.0, %v3602
        %v3604 = vpop.f32.mrf.mxu0
        %3605 = vmatprep.mubr.f32.mxu0 0.0
        %3606 = vmatmul.mubr.f32.gmra.mxu0 %v3276
        %v3607 = vpop.f32.mrf.mxu0
        %v3608 = vadd.f32 0.0, %v3607
        %v3609 = vpop.f32.mrf.mxu0
        %3610 = vdwg.mxu0
        %v3611 = vadd.f32 %v3011, %v3348
        %v3612 = vadd.f32 %v3012, %v3353
        %v3613 = vadd.f32 %v3013, %v3358
        %v3614 = vadd.f32 %v3014, %v3363
        %v3615 = vadd.f32 %v3015, %v3368
        %v3616 = vadd.f32 %v3016, %v3373
        %v3617 = vadd.f32 %v3017, %v3378
        %v3618 = vadd.f32 %v3018, %v3383
        %v3619 = vadd.f32 %v3019, %v3388
        %v3620 = vadd.f32 %v3020, %v3393
        %v3621 = vadd.f32 %v3021, %v3398
        %v3622 = vadd.f32 %v3022, %v3403
        %v3623 = vadd.f32 %v3023, %v3408
        %v3624 = vadd.f32 %v3024, %v3413
        %v3625 = vadd.f32 %v3025, %v3418
        %v3626 = vadd.f32 %v3026, %v3423
        %v3627 = vadd.f32 %v3027, %v3428
        %v3628 = vadd.f32 %v3028, %v3433
        %v3629 = vadd.f32 %v3029, %v3438
        %v3630 = vadd.f32 %v3030, %v3443
        %v3631 = vadd.f32 %v3031, %v3448
        %v3632 = vadd.f32 %v3032, %v3453
        %v3633 = vadd.f32 %v3033, %v3458
        %v3634 = vadd.f32 %v3034, %v3463
        %v3635 = vadd.f32 %v3035, %v3468
        %v3636 = vadd.f32 %v3036, %v3473
        %v3637 = vadd.f32 %v3037, %v3478
        %v3638 = vadd.f32 %v3038, %v3483
        %v3639 = vadd.f32 %v3039, %v3488
        %v3640 = vadd.f32 %v3040, %v3493
        %v3641 = vadd.f32 %v3041, %v3498
        %v3642 = vadd.f32 %v3042, %v3503
        %v3643 = vadd.f32 %v3043, %v3508
        %v3644 = vadd.f32 %v3044, %v3513
        %v3645 = vadd.f32 %v3045, %v3518
        %v3646 = vadd.f32 %v3046, %v3523
        %v3647 = vadd.f32 %v3047, %v3528
        %v3648 = vadd.f32 %v3048, %v3533
        %v3649 = vadd.f32 %v3049, %v3538
        %v3650 = vadd.f32 %v3050, %v3543
        %v3651 = vadd.f32 %v3051, %v3548
        %v3652 = vadd.f32 %v3052, %v3553
        %v3653 = vadd.f32 %v3053, %v3558
        %v3654 = vadd.f32 %v3054, %v3563
        %v3655 = vadd.f32 %v3055, %v3568
        %v3656 = vadd.f32 %v3056, %v3573
        %v3657 = vadd.f32 %v3057, %v3578
        %v3658 = vadd.f32 %v3058, %v3583
        %v3659 = vadd.f32 %v3059, %v3588
        %v3660 = vadd.f32 %v3060, %v3593
        %v3661 = vadd.f32 %v3061, %v3598
        %v3662 = vadd.f32 %v3062, %v3603
        %v3663 = vadd.f32 %v3063, %v3608
        %v3664 = vld [vmem:[%s168 + $0x18] sm:$0xff]
        %v3665 = vld [vmem:[%s168 + $0x20] sm:$0xff]
        %v3666 = vld [vmem:[%s168 + $0x28] sm:$0xff]
        %v3667 = vld [vmem:[%s168 + $0x30] sm:$0xff]
        %v3668 = vld [vmem:[%s168 + $0x38] sm:$0xff]
        %v3669 = vld [vmem:[%s168 + $0x40] sm:$0xff]
        %v3670 = vld [vmem:[%s168 + $0x48] sm:$0xff]
        %v3671 = vld [vmem:[%s168 + $0x50] sm:$0xff]
        %v3672 = vld [vmem:[%s168 + $0x58] sm:$0xff]
        %v3673 = vld [vmem:[%s168 + $0x60] sm:$0xff]
        %v3674 = vld [vmem:[%s168 + $0x68] sm:$0xff]
        %v3675 = vld [vmem:[%s168 + $0x70] sm:$0xff]
        %v3676 = vld [vmem:[%s168 + $0x78] sm:$0xff]
        %v3677 = vld [vmem:[%s168 + $0x80] sm:$0xff]
        %v3678 = vld [vmem:[%s168 + $0x88] sm:$0xff]
        %v3679 = vld [vmem:[%s168 + $0x90] sm:$0xff]
        %v3680 = vld [vmem:[%s168 + $0x98] sm:$0xff]
        %v3681 = vld [vmem:[%s168 + $0xa0] sm:$0xff]
        %v3682 = vld [vmem:[%s168 + $0xa8] sm:$0xff]
        %v3683 = vld [vmem:[%s168 + $0xb0] sm:$0xff]
        %v3684 = vld [vmem:[%s168 + $0xb8] sm:$0xff]
        %v3685 = vld [vmem:[%s168 + $0xc0] sm:$0xff]
        %v3686 = vld [vmem:[%s168 + $0xc8] sm:$0xff]
        %v3687 = vld [vmem:[%s168 + $0xd0] sm:$0xff]
        %v3688 = vld [vmem:[%s168 + $0xd8] sm:$0xff]
        %v3689 = vld [vmem:[%s168 + $0xe0] sm:$0xff]
        %v3690 = vld [vmem:[%s168 + $0xe8] sm:$0xff]
        %v3691 = vld [vmem:[%s168 + $0xf0] sm:$0xff]
        %v3692 = vld [vmem:[%s168 + $0xf8] sm:$0xff]
        %v3693 = vld [vmem:[%s168 + $0x100] sm:$0xff]
        %v3694 = vld [vmem:[%s168 + $0x108] sm:$0xff]
        %v3695 = vld [vmem:[%s168 + $0x110] sm:$0xff]
        %v3696 = vld [vmem:[%s168 + $0x118] sm:$0xff]
        %v3697 = vld [vmem:[%s168 + $0x120] sm:$0xff]
        %v3698 = vld [vmem:[%s168 + $0x128] sm:$0xff]
        %v3699 = vld [vmem:[%s168 + $0x130] sm:$0xff]
        %v3700 = vld [vmem:[%s168 + $0x138] sm:$0xff]
        %v3701 = vld [vmem:[%s168 + $0x140] sm:$0xff]
        %v3702 = vld [vmem:[%s168 + $0x148] sm:$0xff]
        %v3703 = vld [vmem:[%s168 + $0x150] sm:$0xff]
        %v3704 = vld [vmem:[%s168 + $0x158] sm:$0xff]
        %v3705 = vld [vmem:[%s168 + $0x160] sm:$0xff]
        %v3706 = vld [vmem:[%s168 + $0x168] sm:$0xff]
        %v3707 = vld [vmem:[%s168 + $0x170] sm:$0xff]
        %v3708 = vld [vmem:[%s168 + $0x178] sm:$0xff]
        %v3709 = vld [vmem:[%s168 + $0x180] sm:$0xff]
        %v3710 = vld [vmem:[%s168 + $0x188] sm:$0xff]
        %v3711 = vld [vmem:[%s168 + $0x190] sm:$0xff]
        %v3712 = vld [vmem:[%s168 + $0x198] sm:$0xff]
        %v3713 = vld [vmem:[%s168 + $0x1a0] sm:$0xff]
        %v3714 = vld [vmem:[%s168 + $0x1a8] sm:$0xff]
        %v3715 = vld [vmem:[%s168 + $0x1b0] sm:$0xff]
        %v3716 = vld [vmem:[%s168 + $0x1b8] sm:$0x3]
        %s3717 = scalar_lea.vmem %s1, 24
        %v3718 = vld [vmem:[%s3717] sm:$0xf]
        %v3720 = vsel %vm278, %v3664, 0
        %v3723 = vsel %vm278, %v3665, 0
        %v3726 = vsel %vm278, %v3666, 0
        %v3729 = vsel %vm278, %v3667, 0
        %v3732 = vsel %vm278, %v3668, 0
        %v3735 = vsel %vm278, %v3669, 0
        %v3738 = vsel %vm278, %v3670, 0
        %v3741 = vsel %vm278, %v3671, 0
        %v3744 = vsel %vm278, %v3672, 0
        %v3747 = vsel %vm278, %v3673, 0
        %v3750 = vsel %vm278, %v3674, 0
        %v3753 = vsel %vm278, %v3675, 0
        %v3756 = vsel %vm278, %v3676, 0
        %v3759 = vsel %vm278, %v3677, 0
        %v3762 = vsel %vm278, %v3678, 0
        %v3765 = vsel %vm278, %v3679, 0
        %v3768 = vsel %vm278, %v3680, 0
        %v3771 = vsel %vm278, %v3681, 0
        %v3774 = vsel %vm278, %v3682, 0
        %v3777 = vsel %vm278, %v3683, 0
        %v3780 = vsel %vm278, %v3684, 0
        %v3783 = vsel %vm278, %v3685, 0
        %v3786 = vsel %vm278, %v3686, 0
        %v3789 = vsel %vm278, %v3687, 0
        %v3792 = vsel %vm278, %v3688, 0
        %v3795 = vsel %vm278, %v3689, 0
        %v3798 = vsel %vm278, %v3690, 0
        %v3801 = vsel %vm278, %v3691, 0
        %v3804 = vsel %vm278, %v3692, 0
        %v3807 = vsel %vm278, %v3693, 0
        %v3810 = vsel %vm278, %v3694, 0
        %v3813 = vsel %vm278, %v3695, 0
        %v3816 = vsel %vm278, %v3696, 0
        %v3819 = vsel %vm278, %v3697, 0
        %v3822 = vsel %vm278, %v3698, 0
        %v3825 = vsel %vm278, %v3699, 0
        %v3828 = vsel %vm278, %v3700, 0
        %v3831 = vsel %vm278, %v3701, 0
        %v3834 = vsel %vm278, %v3702, 0
        %v3837 = vsel %vm278, %v3703, 0
        %v3840 = vsel %vm278, %v3704, 0
        %v3843 = vsel %vm278, %v3705, 0
        %v3846 = vsel %vm278, %v3706, 0
        %v3849 = vsel %vm278, %v3707, 0
        %v3852 = vsel %vm278, %v3708, 0
        %v3855 = vsel %vm278, %v3709, 0
        %v3858 = vsel %vm278, %v3710, 0
        %v3861 = vsel %vm278, %v3711, 0
        %v3864 = vsel %vm278, %v3712, 0
        %v3867 = vsel %vm278, %v3713, 0
        %v3870 = vsel %vm278, %v3714, 0
        %v3873 = vsel %vm278, %v3715, 0
        %v3876 = vsel %vm278, %v3716, 0
        %v3879 = vsel %vm438, %v3718, 0
        %3881 = vmatprep.subr.mxu0 0.0
        %3882 = vmatpush1.msra.mxu0 0.0
        %3883 = vmatprep.subr.mxu0 0.0
        %3884 = vmatpush1.msra.mxu0 0.0
        %3885 = vmatprep.subr.mxu0 0.0
        %3886 = vmatpush1.msra.mxu0 0.0
        %3887 = vmatprep.subr.mxu0 0.0
        %3888 = vmatpush1.msra.mxu0 0.0
        %3889 = vmatprep.subr.mxu0 0.0
        %3890 = vmatpush1.msra.mxu0 0.0
        %3891 = vmatprep.subr.mxu0 0.0
        %3892 = vmatpush1.msra.mxu0 0.0
        %3893 = vmatprep.subr.mxu0 0.0
        %3894 = vmatpush1.msra.mxu0 0.0
        %3895 = vmatprep.subr.mxu0 0.0
        %3896 = vmatpush1.msra.mxu0 0.0
        %3897 = vmatprep.subr.mxu0 0.0
        %3898 = vmatpush1.msra.mxu0 0.0
        %3899 = vmatprep.subr.mxu0 0.0
        %3900 = vmatpush1.msra.mxu0 0.0
        %3901 = vmatprep.subr.mxu0 0.0
        %3902 = vmatpush1.msra.mxu0 0.0
        %3903 = vmatprep.subr.mxu0 0.0
        %3904 = vmatpush1.msra.mxu0 0.0
        %3905 = vmatprep.subr.mxu0 0.0
        %3906 = vmatpush1.msra.mxu0 0.0
        %3907 = vmatprep.subr.mxu0 0.0
        %3908 = vmatpush1.msra.mxu0 0.0
        %3909 = vmatprep.subr.mxu0 0.0
        %3910 = vmatpush1.msra.mxu0 0.0
        %3911 = vmatprep.subr.mxu0 0.0
        %3912 = vmatpush1.msra.mxu0 %v3879
        %3913 = vmatprep.subr.mxu0 0.0
        %3914 = vmatpush2.msra.mxu0 0.0
        %3915 = vmatprep.subr.mxu0 0.0
        %3916 = vmatpush2.msra.mxu0 0.0
        %3917 = vmatprep.subr.mxu0 0.0
        %3918 = vmatpush2.msra.mxu0 0.0
        %3919 = vmatprep.subr.mxu0 0.0
        %3920 = vmatpush2.msra.mxu0 0.0
        %3921 = vmatprep.subr.mxu0 0.0
        %3922 = vmatpush2.msra.mxu0 0.0
        %3923 = vmatprep.subr.mxu0 0.0
        %3924 = vmatpush2.msra.mxu0 0.0
        %3925 = vmatprep.subr.mxu0 0.0
        %3926 = vmatpush2.msra.mxu0 0.0
        %3927 = vmatprep.subr.mxu0 0.0
        %3928 = vmatpush2.msra.mxu0 0.0
        %3929 = vmatprep.subr.mxu0 0.0
        %3930 = vmatpush2.msra.mxu0 0.0
        %3931 = vmatprep.subr.mxu0 0.0
        %3932 = vmatpush2.msra.mxu0 0.0
        %3933 = vmatprep.subr.mxu0 0.0
        %3934 = vmatpush2.msra.mxu0 0.0
        %3935 = vmatprep.subr.mxu0 0.0
        %3936 = vmatpush2.msra.mxu0 0.0
        %3937 = vmatprep.subr.mxu0 0.0
        %3938 = vmatpush2.msra.mxu0 0.0
        %3939 = vmatprep.subr.mxu0 0.0
        %3940 = vmatpush2.msra.mxu0 0.0
        %3941 = vmatprep.subr.mxu0 0.0
        %3942 = vmatpush2.msra.mxu0 0.0
        %3943 = vmatprep.subr.mxu0 0.0
        %3944 = vmatpush2.msra.mxu0 0.0
        %3945 = vmatprep.mubr.f32.mxu0 0.0
        %3946 = vmatmul.mubr.f32.gmra.mxu0 %v3720
        %v3947 = vpop.f32.mrf.mxu0
        %v3948 = vadd.f32 0.0, %v3947
        %v3949 = vpop.f32.mrf.mxu0
        %3950 = vmatprep.mubr.f32.mxu0 0.0
        %3951 = vmatmul.mubr.f32.gmra.mxu0 %v3723
        %v3952 = vpop.f32.mrf.mxu0
        %v3953 = vadd.f32 0.0, %v3952
        %v3954 = vpop.f32.mrf.mxu0
        %3955 = vmatprep.mubr.f32.mxu0 0.0
        %3956 = vmatmul.mubr.f32.gmra.mxu0 %v3726
        %v3957 = vpop.f32.mrf.mxu0
        %v3958 = vadd.f32 0.0, %v3957
        %v3959 = vpop.f32.mrf.mxu0
        %3960 = vmatprep.mubr.f32.mxu0 0.0
        %3961 = vmatmul.mubr.f32.gmra.mxu0 %v3729
        %v3962 = vpop.f32.mrf.mxu0
        %v3963 = vadd.f32 0.0, %v3962
        %v3964 = vpop.f32.mrf.mxu0
        %3965 = vmatprep.mubr.f32.mxu0 0.0
        %3966 = vmatmul.mubr.f32.gmra.mxu0 %v3732
        %v3967 = vpop.f32.mrf.mxu0
        %v3968 = vadd.f32 0.0, %v3967
        %v3969 = vpop.f32.mrf.mxu0
        %3970 = vmatprep.mubr.f32.mxu0 0.0
        %3971 = vmatmul.mubr.f32.gmra.mxu0 %v3735
        %v3972 = vpop.f32.mrf.mxu0
        %v3973 = vadd.f32 0.0, %v3972
        %v3974 = vpop.f32.mrf.mxu0
        %3975 = vmatprep.mubr.f32.mxu0 0.0
        %3976 = vmatmul.mubr.f32.gmra.mxu0 %v3738
        %v3977 = vpop.f32.mrf.mxu0
        %v3978 = vadd.f32 0.0, %v3977
        %v3979 = vpop.f32.mrf.mxu0
        %3980 = vmatprep.mubr.f32.mxu0 0.0
        %3981 = vmatmul.mubr.f32.gmra.mxu0 %v3741
        %v3982 = vpop.f32.mrf.mxu0
        %v3983 = vadd.f32 0.0, %v3982
        %v3984 = vpop.f32.mrf.mxu0
        %3985 = vmatprep.mubr.f32.mxu0 0.0
        %3986 = vmatmul.mubr.f32.gmra.mxu0 %v3744
        %v3987 = vpop.f32.mrf.mxu0
        %v3988 = vadd.f32 0.0, %v3987
        %v3989 = vpop.f32.mrf.mxu0
        %3990 = vmatprep.mubr.f32.mxu0 0.0
        %3991 = vmatmul.mubr.f32.gmra.mxu0 %v3747
        %v3992 = vpop.f32.mrf.mxu0
        %v3993 = vadd.f32 0.0, %v3992
        %v3994 = vpop.f32.mrf.mxu0
        %3995 = vmatprep.mubr.f32.mxu0 0.0
        %3996 = vmatmul.mubr.f32.gmra.mxu0 %v3750
        %v3997 = vpop.f32.mrf.mxu0
        %v3998 = vadd.f32 0.0, %v3997
        %v3999 = vpop.f32.mrf.mxu0
        %4000 = vmatprep.mubr.f32.mxu0 0.0
        %4001 = vmatmul.mubr.f32.gmra.mxu0 %v3753
        %v4002 = vpop.f32.mrf.mxu0
        %v4003 = vadd.f32 0.0, %v4002
        %v4004 = vpop.f32.mrf.mxu0
        %4005 = vmatprep.mubr.f32.mxu0 0.0
        %4006 = vmatmul.mubr.f32.gmra.mxu0 %v3756
        %v4007 = vpop.f32.mrf.mxu0
        %v4008 = vadd.f32 0.0, %v4007
        %v4009 = vpop.f32.mrf.mxu0
        %4010 = vmatprep.mubr.f32.mxu0 0.0
        %4011 = vmatmul.mubr.f32.gmra.mxu0 %v3759
        %v4012 = vpop.f32.mrf.mxu0
        %v4013 = vadd.f32 0.0, %v4012
        %v4014 = vpop.f32.mrf.mxu0
        %4015 = vmatprep.mubr.f32.mxu0 0.0
        %4016 = vmatmul.mubr.f32.gmra.mxu0 %v3762
        %v4017 = vpop.f32.mrf.mxu0
        %v4018 = vadd.f32 0.0, %v4017
        %v4019 = vpop.f32.mrf.mxu0
        %4020 = vmatprep.mubr.f32.mxu0 0.0
        %4021 = vmatmul.mubr.f32.gmra.mxu0 %v3765
        %v4022 = vpop.f32.mrf.mxu0
        %v4023 = vadd.f32 0.0, %v4022
        %v4024 = vpop.f32.mrf.mxu0
        %4025 = vmatprep.mubr.f32.mxu0 0.0
        %4026 = vmatmul.mubr.f32.gmra.mxu0 %v3768
        %v4027 = vpop.f32.mrf.mxu0
        %v4028 = vadd.f32 0.0, %v4027
        %v4029 = vpop.f32.mrf.mxu0
        %4030 = vmatprep.mubr.f32.mxu0 0.0
        %4031 = vmatmul.mubr.f32.gmra.mxu0 %v3771
        %v4032 = vpop.f32.mrf.mxu0
        %v4033 = vadd.f32 0.0, %v4032
        %v4034 = vpop.f32.mrf.mxu0
        %4035 = vmatprep.mubr.f32.mxu0 0.0
        %4036 = vmatmul.mubr.f32.gmra.mxu0 %v3774
        %v4037 = vpop.f32.mrf.mxu0
        %v4038 = vadd.f32 0.0, %v4037
        %v4039 = vpop.f32.mrf.mxu0
        %4040 = vmatprep.mubr.f32.mxu0 0.0
        %4041 = vmatmul.mubr.f32.gmra.mxu0 %v3777
        %v4042 = vpop.f32.mrf.mxu0
        %v4043 = vadd.f32 0.0, %v4042
        %v4044 = vpop.f32.mrf.mxu0
        %4045 = vmatprep.mubr.f32.mxu0 0.0
        %4046 = vmatmul.mubr.f32.gmra.mxu0 %v3780
        %v4047 = vpop.f32.mrf.mxu0
        %v4048 = vadd.f32 0.0, %v4047
        %v4049 = vpop.f32.mrf.mxu0
        %4050 = vmatprep.mubr.f32.mxu0 0.0
        %4051 = vmatmul.mubr.f32.gmra.mxu0 %v3783
        %v4052 = vpop.f32.mrf.mxu0
        %v4053 = vadd.f32 0.0, %v4052
        %v4054 = vpop.f32.mrf.mxu0
        %4055 = vmatprep.mubr.f32.mxu0 0.0
        %4056 = vmatmul.mubr.f32.gmra.mxu0 %v3786
        %v4057 = vpop.f32.mrf.mxu0
        %v4058 = vadd.f32 0.0, %v4057
        %v4059 = vpop.f32.mrf.mxu0
        %4060 = vmatprep.mubr.f32.mxu0 0.0
        %4061 = vmatmul.mubr.f32.gmra.mxu0 %v3789
        %v4062 = vpop.f32.mrf.mxu0
        %v4063 = vadd.f32 0.0, %v4062
        %v4064 = vpop.f32.mrf.mxu0
        %4065 = vmatprep.mubr.f32.mxu0 0.0
        %4066 = vmatmul.mubr.f32.gmra.mxu0 %v3792
        %v4067 = vpop.f32.mrf.mxu0
        %v4068 = vadd.f32 0.0, %v4067
        %v4069 = vpop.f32.mrf.mxu0
        %4070 = vmatprep.mubr.f32.mxu0 0.0
        %4071 = vmatmul.mubr.f32.gmra.mxu0 %v3795
        %v4072 = vpop.f32.mrf.mxu0
        %v4073 = vadd.f32 0.0, %v4072
        %v4074 = vpop.f32.mrf.mxu0
        %4075 = vmatprep.mubr.f32.mxu0 0.0
        %4076 = vmatmul.mubr.f32.gmra.mxu0 %v3798
        %v4077 = vpop.f32.mrf.mxu0
        %v4078 = vadd.f32 0.0, %v4077
        %v4079 = vpop.f32.mrf.mxu0
        %4080 = vmatprep.mubr.f32.mxu0 0.0
        %4081 = vmatmul.mubr.f32.gmra.mxu0 %v3801
        %v4082 = vpop.f32.mrf.mxu0
        %v4083 = vadd.f32 0.0, %v4082
        %v4084 = vpop.f32.mrf.mxu0
        %4085 = vmatprep.mubr.f32.mxu0 0.0
        %4086 = vmatmul.mubr.f32.gmra.mxu0 %v3804
        %v4087 = vpop.f32.mrf.mxu0
        %v4088 = vadd.f32 0.0, %v4087
        %v4089 = vpop.f32.mrf.mxu0
        %4090 = vmatprep.mubr.f32.mxu0 0.0
        %4091 = vmatmul.mubr.f32.gmra.mxu0 %v3807
        %v4092 = vpop.f32.mrf.mxu0
        %v4093 = vadd.f32 0.0, %v4092
        %v4094 = vpop.f32.mrf.mxu0
        %4095 = vmatprep.mubr.f32.mxu0 0.0
        %4096 = vmatmul.mubr.f32.gmra.mxu0 %v3810
        %v4097 = vpop.f32.mrf.mxu0
        %v4098 = vadd.f32 0.0, %v4097
        %v4099 = vpop.f32.mrf.mxu0
        %4100 = vmatprep.mubr.f32.mxu0 0.0
        %4101 = vmatmul.mubr.f32.gmra.mxu0 %v3813
        %v4102 = vpop.f32.mrf.mxu0
        %v4103 = vadd.f32 0.0, %v4102
        %v4104 = vpop.f32.mrf.mxu0
        %4105 = vmatprep.mubr.f32.mxu0 0.0
        %4106 = vmatmul.mubr.f32.gmra.mxu0 %v3816
        %v4107 = vpop.f32.mrf.mxu0
        %v4108 = vadd.f32 0.0, %v4107
        %v4109 = vpop.f32.mrf.mxu0
        %4110 = vmatprep.mubr.f32.mxu0 0.0
        %4111 = vmatmul.mubr.f32.gmra.mxu0 %v3819
        %v4112 = vpop.f32.mrf.mxu0
        %v4113 = vadd.f32 0.0, %v4112
        %v4114 = vpop.f32.mrf.mxu0
        %4115 = vmatprep.mubr.f32.mxu0 0.0
        %4116 = vmatmul.mubr.f32.gmra.mxu0 %v3822
        %v4117 = vpop.f32.mrf.mxu0
        %v4118 = vadd.f32 0.0, %v4117
        %v4119 = vpop.f32.mrf.mxu0
        %4120 = vmatprep.mubr.f32.mxu0 0.0
        %4121 = vmatmul.mubr.f32.gmra.mxu0 %v3825
        %v4122 = vpop.f32.mrf.mxu0
        %v4123 = vadd.f32 0.0, %v4122
        %v4124 = vpop.f32.mrf.mxu0
        %4125 = vmatprep.mubr.f32.mxu0 0.0
        %4126 = vmatmul.mubr.f32.gmra.mxu0 %v3828
        %v4127 = vpop.f32.mrf.mxu0
        %v4128 = vadd.f32 0.0, %v4127
        %v4129 = vpop.f32.mrf.mxu0
        %4130 = vmatprep.mubr.f32.mxu0 0.0
        %4131 = vmatmul.mubr.f32.gmra.mxu0 %v3831
        %v4132 = vpop.f32.mrf.mxu0
        %v4133 = vadd.f32 0.0, %v4132
        %v4134 = vpop.f32.mrf.mxu0
        %4135 = vmatprep.mubr.f32.mxu0 0.0
        %4136 = vmatmul.mubr.f32.gmra.mxu0 %v3834
        %v4137 = vpop.f32.mrf.mxu0
        %v4138 = vadd.f32 0.0, %v4137
        %v4139 = vpop.f32.mrf.mxu0
        %4140 = vmatprep.mubr.f32.mxu0 0.0
        %4141 = vmatmul.mubr.f32.gmra.mxu0 %v3837
        %v4142 = vpop.f32.mrf.mxu0
        %v4143 = vadd.f32 0.0, %v4142
        %v4144 = vpop.f32.mrf.mxu0
        %4145 = vmatprep.mubr.f32.mxu0 0.0
        %4146 = vmatmul.mubr.f32.gmra.mxu0 %v3840
        %v4147 = vpop.f32.mrf.mxu0
        %v4148 = vadd.f32 0.0, %v4147
        %v4149 = vpop.f32.mrf.mxu0
        %4150 = vmatprep.mubr.f32.mxu0 0.0
        %4151 = vmatmul.mubr.f32.gmra.mxu0 %v3843
        %v4152 = vpop.f32.mrf.mxu0
        %v4153 = vadd.f32 0.0, %v4152
        %v4154 = vpop.f32.mrf.mxu0
        %4155 = vmatprep.mubr.f32.mxu0 0.0
        %4156 = vmatmul.mubr.f32.gmra.mxu0 %v3846
        %v4157 = vpop.f32.mrf.mxu0
        %v4158 = vadd.f32 0.0, %v4157
        %v4159 = vpop.f32.mrf.mxu0
        %4160 = vmatprep.mubr.f32.mxu0 0.0
        %4161 = vmatmul.mubr.f32.gmra.mxu0 %v3849
        %v4162 = vpop.f32.mrf.mxu0
        %v4163 = vadd.f32 0.0, %v4162
        %v4164 = vpop.f32.mrf.mxu0
        %4165 = vmatprep.mubr.f32.mxu0 0.0
        %4166 = vmatmul.mubr.f32.gmra.mxu0 %v3852
        %v4167 = vpop.f32.mrf.mxu0
        %v4168 = vadd.f32 0.0, %v4167
        %v4169 = vpop.f32.mrf.mxu0
        %4170 = vmatprep.mubr.f32.mxu0 0.0
        %4171 = vmatmul.mubr.f32.gmra.mxu0 %v3855
        %v4172 = vpop.f32.mrf.mxu0
        %v4173 = vadd.f32 0.0, %v4172
        %v4174 = vpop.f32.mrf.mxu0
        %4175 = vmatprep.mubr.f32.mxu0 0.0
        %4176 = vmatmul.mubr.f32.gmra.mxu0 %v3858
        %v4177 = vpop.f32.mrf.mxu0
        %v4178 = vadd.f32 0.0, %v4177
        %v4179 = vpop.f32.mrf.mxu0
        %4180 = vmatprep.mubr.f32.mxu0 0.0
        %4181 = vmatmul.mubr.f32.gmra.mxu0 %v3861
        %v4182 = vpop.f32.mrf.mxu0
        %v4183 = vadd.f32 0.0, %v4182
        %v4184 = vpop.f32.mrf.mxu0
        %4185 = vmatprep.mubr.f32.mxu0 0.0
        %4186 = vmatmul.mubr.f32.gmra.mxu0 %v3864
        %v4187 = vpop.f32.mrf.mxu0
        %v4188 = vadd.f32 0.0, %v4187
        %v4189 = vpop.f32.mrf.mxu0
        %4190 = vmatprep.mubr.f32.mxu0 0.0
        %4191 = vmatmul.mubr.f32.gmra.mxu0 %v3867
        %v4192 = vpop.f32.mrf.mxu0
        %v4193 = vadd.f32 0.0, %v4192
        %v4194 = vpop.f32.mrf.mxu0
        %4195 = vmatprep.mubr.f32.mxu0 0.0
        %4196 = vmatmul.mubr.f32.gmra.mxu0 %v3870
        %v4197 = vpop.f32.mrf.mxu0
        %v4198 = vadd.f32 0.0, %v4197
        %v4199 = vpop.f32.mrf.mxu0
        %4200 = vmatprep.mubr.f32.mxu0 0.0
        %4201 = vmatmul.mubr.f32.gmra.mxu0 %v3873
        %v4202 = vpop.f32.mrf.mxu0
        %v4203 = vadd.f32 0.0, %v4202
        %v4204 = vpop.f32.mrf.mxu0
        %4205 = vmatprep.mubr.f32.mxu0 0.0
        %4206 = vmatmul.mubr.f32.gmra.mxu0 %v3876
        %v4207 = vpop.f32.mrf.mxu0
        %v4208 = vadd.f32 0.0, %v4207
        %v4209 = vpop.f32.mrf.mxu0
        %4210 = vdwg.mxu0
        %v4211 = vadd.f32 %v3611, %v3948
        %v4212 = vadd.f32 %v3612, %v3953
        %v4213 = vadd.f32 %v3613, %v3958
        %v4214 = vadd.f32 %v3614, %v3963
        %v4215 = vadd.f32 %v3615, %v3968
        %v4216 = vadd.f32 %v3616, %v3973
        %v4217 = vadd.f32 %v3617, %v3978
        %v4218 = vadd.f32 %v3618, %v3983
        %v4219 = vadd.f32 %v3619, %v3988
        %v4220 = vadd.f32 %v3620, %v3993
        %v4221 = vadd.f32 %v3621, %v3998
        %v4222 = vadd.f32 %v3622, %v4003
        %v4223 = vadd.f32 %v3623, %v4008
        %v4224 = vadd.f32 %v3624, %v4013
        %v4225 = vadd.f32 %v3625, %v4018
        %v4226 = vadd.f32 %v3626, %v4023
        %v4227 = vadd.f32 %v3627, %v4028
        %v4228 = vadd.f32 %v3628, %v4033
        %v4229 = vadd.f32 %v3629, %v4038
        %v4230 = vadd.f32 %v3630, %v4043
        %v4231 = vadd.f32 %v3631, %v4048
        %v4232 = vadd.f32 %v3632, %v4053
        %v4233 = vadd.f32 %v3633, %v4058
        %v4234 = vadd.f32 %v3634, %v4063
        %v4235 = vadd.f32 %v3635, %v4068
        %v4236 = vadd.f32 %v3636, %v4073
        %v4237 = vadd.f32 %v3637, %v4078
        %v4238 = vadd.f32 %v3638, %v4083
        %v4239 = vadd.f32 %v3639, %v4088
        %v4240 = vadd.f32 %v3640, %v4093
        %v4241 = vadd.f32 %v3641, %v4098
        %v4242 = vadd.f32 %v3642, %v4103
        %v4243 = vadd.f32 %v3643, %v4108
        %v4244 = vadd.f32 %v3644, %v4113
        %v4245 = vadd.f32 %v3645, %v4118
        %v4246 = vadd.f32 %v3646, %v4123
        %v4247 = vadd.f32 %v3647, %v4128
        %v4248 = vadd.f32 %v3648, %v4133
        %v4249 = vadd.f32 %v3649, %v4138
        %v4250 = vadd.f32 %v3650, %v4143
        %v4251 = vadd.f32 %v3651, %v4148
        %v4252 = vadd.f32 %v3652, %v4153
        %v4253 = vadd.f32 %v3653, %v4158
        %v4254 = vadd.f32 %v3654, %v4163
        %v4255 = vadd.f32 %v3655, %v4168
        %v4256 = vadd.f32 %v3656, %v4173
        %v4257 = vadd.f32 %v3657, %v4178
        %v4258 = vadd.f32 %v3658, %v4183
        %v4259 = vadd.f32 %v3659, %v4188
        %v4260 = vadd.f32 %v3660, %v4193
        %v4261 = vadd.f32 %v3661, %v4198
        %v4262 = vadd.f32 %v3662, %v4203
        %v4263 = vadd.f32 %v3663, %v4208
        %v4264 = vld [vmem:[%s168 + $0x19] sm:$0xff]
        %v4265 = vld [vmem:[%s168 + $0x21] sm:$0xff]
        %v4266 = vld [vmem:[%s168 + $0x29] sm:$0xff]
        %v4267 = vld [vmem:[%s168 + $0x31] sm:$0xff]
        %v4268 = vld [vmem:[%s168 + $0x39] sm:$0xff]
        %v4269 = vld [vmem:[%s168 + $0x41] sm:$0xff]
        %v4270 = vld [vmem:[%s168 + $0x49] sm:$0xff]
        %v4271 = vld [vmem:[%s168 + $0x51] sm:$0xff]
        %v4272 = vld [vmem:[%s168 + $0x59] sm:$0xff]
        %v4273 = vld [vmem:[%s168 + $0x61] sm:$0xff]
        %v4274 = vld [vmem:[%s168 + $0x69] sm:$0xff]
        %v4275 = vld [vmem:[%s168 + $0x71] sm:$0xff]
        %v4276 = vld [vmem:[%s168 + $0x79] sm:$0xff]
        %v4277 = vld [vmem:[%s168 + $0x81] sm:$0xff]
        %v4278 = vld [vmem:[%s168 + $0x89] sm:$0xff]
        %v4279 = vld [vmem:[%s168 + $0x91] sm:$0xff]
        %v4280 = vld [vmem:[%s168 + $0x99] sm:$0xff]
        %v4281 = vld [vmem:[%s168 + $0xa1] sm:$0xff]
        %v4282 = vld [vmem:[%s168 + $0xa9] sm:$0xff]
        %v4283 = vld [vmem:[%s168 + $0xb1] sm:$0xff]
        %v4284 = vld [vmem:[%s168 + $0xb9] sm:$0xff]
        %v4285 = vld [vmem:[%s168 + $0xc1] sm:$0xff]
        %v4286 = vld [vmem:[%s168 + $0xc9] sm:$0xff]
        %v4287 = vld [vmem:[%s168 + $0xd1] sm:$0xff]
        %v4288 = vld [vmem:[%s168 + $0xd9] sm:$0xff]
        %v4289 = vld [vmem:[%s168 + $0xe1] sm:$0xff]
        %v4290 = vld [vmem:[%s168 + $0xe9] sm:$0xff]
        %v4291 = vld [vmem:[%s168 + $0xf1] sm:$0xff]
        %v4292 = vld [vmem:[%s168 + $0xf9] sm:$0xff]
        %v4293 = vld [vmem:[%s168 + $0x101] sm:$0xff]
        %v4294 = vld [vmem:[%s168 + $0x109] sm:$0xff]
        %v4295 = vld [vmem:[%s168 + $0x111] sm:$0xff]
        %v4296 = vld [vmem:[%s168 + $0x119] sm:$0xff]
        %v4297 = vld [vmem:[%s168 + $0x121] sm:$0xff]
        %v4298 = vld [vmem:[%s168 + $0x129] sm:$0xff]
        %v4299 = vld [vmem:[%s168 + $0x131] sm:$0xff]
        %v4300 = vld [vmem:[%s168 + $0x139] sm:$0xff]
        %v4301 = vld [vmem:[%s168 + $0x141] sm:$0xff]
        %v4302 = vld [vmem:[%s168 + $0x149] sm:$0xff]
        %v4303 = vld [vmem:[%s168 + $0x151] sm:$0xff]
        %v4304 = vld [vmem:[%s168 + $0x159] sm:$0xff]
        %v4305 = vld [vmem:[%s168 + $0x161] sm:$0xff]
        %v4306 = vld [vmem:[%s168 + $0x169] sm:$0xff]
        %v4307 = vld [vmem:[%s168 + $0x171] sm:$0xff]
        %v4308 = vld [vmem:[%s168 + $0x179] sm:$0xff]
        %v4309 = vld [vmem:[%s168 + $0x181] sm:$0xff]
        %v4310 = vld [vmem:[%s168 + $0x189] sm:$0xff]
        %v4311 = vld [vmem:[%s168 + $0x191] sm:$0xff]
        %v4312 = vld [vmem:[%s168 + $0x199] sm:$0xff]
        %v4313 = vld [vmem:[%s168 + $0x1a1] sm:$0xff]
        %v4314 = vld [vmem:[%s168 + $0x1a9] sm:$0xff]
        %v4315 = vld [vmem:[%s168 + $0x1b1] sm:$0xff]
        %v4316 = vld [vmem:[%s168 + $0x1b9] sm:$0x3]
        %s4317 = scalar_lea.vmem %s1, 28
        %v4318 = vld [vmem:[%s4317] sm:$0xf]
        %v4320 = vsel %vm278, %v4264, 0
        %v4323 = vsel %vm278, %v4265, 0
        %v4326 = vsel %vm278, %v4266, 0
        %v4329 = vsel %vm278, %v4267, 0
        %v4332 = vsel %vm278, %v4268, 0
        %v4335 = vsel %vm278, %v4269, 0
        %v4338 = vsel %vm278, %v4270, 0
        %v4341 = vsel %vm278, %v4271, 0
        %v4344 = vsel %vm278, %v4272, 0
        %v4347 = vsel %vm278, %v4273, 0
        %v4350 = vsel %vm278, %v4274, 0
        %v4353 = vsel %vm278, %v4275, 0
        %v4356 = vsel %vm278, %v4276, 0
        %v4359 = vsel %vm278, %v4277, 0
        %v4362 = vsel %vm278, %v4278, 0
        %v4365 = vsel %vm278, %v4279, 0
        %v4368 = vsel %vm278, %v4280, 0
        %v4371 = vsel %vm278, %v4281, 0
        %v4374 = vsel %vm278, %v4282, 0
        %v4377 = vsel %vm278, %v4283, 0
        %v4380 = vsel %vm278, %v4284, 0
        %v4383 = vsel %vm278, %v4285, 0
        %v4386 = vsel %vm278, %v4286, 0
        %v4389 = vsel %vm278, %v4287, 0
        %v4392 = vsel %vm278, %v4288, 0
        %v4395 = vsel %vm278, %v4289, 0
        %v4398 = vsel %vm278, %v4290, 0
        %v4401 = vsel %vm278, %v4291, 0
        %v4404 = vsel %vm278, %v4292, 0
        %v4407 = vsel %vm278, %v4293, 0
        %v4410 = vsel %vm278, %v4294, 0
        %v4413 = vsel %vm278, %v4295, 0
        %v4416 = vsel %vm278, %v4296, 0
        %v4419 = vsel %vm278, %v4297, 0
        %v4422 = vsel %vm278, %v4298, 0
        %v4425 = vsel %vm278, %v4299, 0
        %v4428 = vsel %vm278, %v4300, 0
        %v4431 = vsel %vm278, %v4301, 0
        %v4434 = vsel %vm278, %v4302, 0
        %v4437 = vsel %vm278, %v4303, 0
        %v4440 = vsel %vm278, %v4304, 0
        %v4443 = vsel %vm278, %v4305, 0
        %v4446 = vsel %vm278, %v4306, 0
        %v4449 = vsel %vm278, %v4307, 0
        %v4452 = vsel %vm278, %v4308, 0
        %v4455 = vsel %vm278, %v4309, 0
        %v4458 = vsel %vm278, %v4310, 0
        %v4461 = vsel %vm278, %v4311, 0
        %v4464 = vsel %vm278, %v4312, 0
        %v4467 = vsel %vm278, %v4313, 0
        %v4470 = vsel %vm278, %v4314, 0
        %v4473 = vsel %vm278, %v4315, 0
        %v4476 = vsel %vm278, %v4316, 0
        %v4479 = vsel %vm438, %v4318, 0
        %4481 = vmatprep.subr.mxu0 0.0
        %4482 = vmatpush1.msra.mxu0 0.0
        %4483 = vmatprep.subr.mxu0 0.0
        %4484 = vmatpush1.msra.mxu0 0.0
        %4485 = vmatprep.subr.mxu0 0.0
        %4486 = vmatpush1.msra.mxu0 0.0
        %4487 = vmatprep.subr.mxu0 0.0
        %4488 = vmatpush1.msra.mxu0 0.0
        %4489 = vmatprep.subr.mxu0 0.0
        %4490 = vmatpush1.msra.mxu0 0.0
        %4491 = vmatprep.subr.mxu0 0.0
        %4492 = vmatpush1.msra.mxu0 0.0
        %4493 = vmatprep.subr.mxu0 0.0
        %4494 = vmatpush1.msra.mxu0 0.0
        %4495 = vmatprep.subr.mxu0 0.0
        %4496 = vmatpush1.msra.mxu0 0.0
        %4497 = vmatprep.subr.mxu0 0.0
        %4498 = vmatpush1.msra.mxu0 0.0
        %4499 = vmatprep.subr.mxu0 0.0
        %4500 = vmatpush1.msra.mxu0 0.0
        %4501 = vmatprep.subr.mxu0 0.0
        %4502 = vmatpush1.msra.mxu0 0.0
        %4503 = vmatprep.subr.mxu0 0.0
        %4504 = vmatpush1.msra.mxu0 0.0
        %4505 = vmatprep.subr.mxu0 0.0
        %4506 = vmatpush1.msra.mxu0 0.0
        %4507 = vmatprep.subr.mxu0 0.0
        %4508 = vmatpush1.msra.mxu0 0.0
        %4509 = vmatprep.subr.mxu0 0.0
        %4510 = vmatpush1.msra.mxu0 0.0
        %4511 = vmatprep.subr.mxu0 0.0
        %4512 = vmatpush1.msra.mxu0 %v4479
        %4513 = vmatprep.subr.mxu0 0.0
        %4514 = vmatpush2.msra.mxu0 0.0
        %4515 = vmatprep.subr.mxu0 0.0
        %4516 = vmatpush2.msra.mxu0 0.0
        %4517 = vmatprep.subr.mxu0 0.0
        %4518 = vmatpush2.msra.mxu0 0.0
        %4519 = vmatprep.subr.mxu0 0.0
        %4520 = vmatpush2.msra.mxu0 0.0
        %4521 = vmatprep.subr.mxu0 0.0
        %4522 = vmatpush2.msra.mxu0 0.0
        %4523 = vmatprep.subr.mxu0 0.0
        %4524 = vmatpush2.msra.mxu0 0.0
        %4525 = vmatprep.subr.mxu0 0.0
        %4526 = vmatpush2.msra.mxu0 0.0
        %4527 = vmatprep.subr.mxu0 0.0
        %4528 = vmatpush2.msra.mxu0 0.0
        %4529 = vmatprep.subr.mxu0 0.0
        %4530 = vmatpush2.msra.mxu0 0.0
        %4531 = vmatprep.subr.mxu0 0.0
        %4532 = vmatpush2.msra.mxu0 0.0
        %4533 = vmatprep.subr.mxu0 0.0
        %4534 = vmatpush2.msra.mxu0 0.0
        %4535 = vmatprep.subr.mxu0 0.0
        %4536 = vmatpush2.msra.mxu0 0.0
        %4537 = vmatprep.subr.mxu0 0.0
        %4538 = vmatpush2.msra.mxu0 0.0
        %4539 = vmatprep.subr.mxu0 0.0
        %4540 = vmatpush2.msra.mxu0 0.0
        %4541 = vmatprep.subr.mxu0 0.0
        %4542 = vmatpush2.msra.mxu0 0.0
        %4543 = vmatprep.subr.mxu0 0.0
        %4544 = vmatpush2.msra.mxu0 0.0
        %4545 = vmatprep.mubr.f32.mxu0 0.0
        %4546 = vmatmul.mubr.f32.gmra.mxu0 %v4320
        %v4547 = vpop.f32.mrf.mxu0
        %v4548 = vadd.f32 0.0, %v4547
        %v4549 = vpop.f32.mrf.mxu0
        %4550 = vmatprep.mubr.f32.mxu0 0.0
        %4551 = vmatmul.mubr.f32.gmra.mxu0 %v4323
        %v4552 = vpop.f32.mrf.mxu0
        %v4553 = vadd.f32 0.0, %v4552
        %v4554 = vpop.f32.mrf.mxu0
        %4555 = vmatprep.mubr.f32.mxu0 0.0
        %4556 = vmatmul.mubr.f32.gmra.mxu0 %v4326
        %v4557 = vpop.f32.mrf.mxu0
        %v4558 = vadd.f32 0.0, %v4557
        %v4559 = vpop.f32.mrf.mxu0
        %4560 = vmatprep.mubr.f32.mxu0 0.0
        %4561 = vmatmul.mubr.f32.gmra.mxu0 %v4329
        %v4562 = vpop.f32.mrf.mxu0
        %v4563 = vadd.f32 0.0, %v4562
        %v4564 = vpop.f32.mrf.mxu0
        %4565 = vmatprep.mubr.f32.mxu0 0.0
        %4566 = vmatmul.mubr.f32.gmra.mxu0 %v4332
        %v4567 = vpop.f32.mrf.mxu0
        %v4568 = vadd.f32 0.0, %v4567
        %v4569 = vpop.f32.mrf.mxu0
        %4570 = vmatprep.mubr.f32.mxu0 0.0
        %4571 = vmatmul.mubr.f32.gmra.mxu0 %v4335
        %v4572 = vpop.f32.mrf.mxu0
        %v4573 = vadd.f32 0.0, %v4572
        %v4574 = vpop.f32.mrf.mxu0
        %4575 = vmatprep.mubr.f32.mxu0 0.0
        %4576 = vmatmul.mubr.f32.gmra.mxu0 %v4338
        %v4577 = vpop.f32.mrf.mxu0
        %v4578 = vadd.f32 0.0, %v4577
        %v4579 = vpop.f32.mrf.mxu0
        %4580 = vmatprep.mubr.f32.mxu0 0.0
        %4581 = vmatmul.mubr.f32.gmra.mxu0 %v4341
        %v4582 = vpop.f32.mrf.mxu0
        %v4583 = vadd.f32 0.0, %v4582
        %v4584 = vpop.f32.mrf.mxu0
        %4585 = vmatprep.mubr.f32.mxu0 0.0
        %4586 = vmatmul.mubr.f32.gmra.mxu0 %v4344
        %v4587 = vpop.f32.mrf.mxu0
        %v4588 = vadd.f32 0.0, %v4587
        %v4589 = vpop.f32.mrf.mxu0
        %4590 = vmatprep.mubr.f32.mxu0 0.0
        %4591 = vmatmul.mubr.f32.gmra.mxu0 %v4347
        %v4592 = vpop.f32.mrf.mxu0
        %v4593 = vadd.f32 0.0, %v4592
        %v4594 = vpop.f32.mrf.mxu0
        %4595 = vmatprep.mubr.f32.mxu0 0.0
        %4596 = vmatmul.mubr.f32.gmra.mxu0 %v4350
        %v4597 = vpop.f32.mrf.mxu0
        %v4598 = vadd.f32 0.0, %v4597
        %v4599 = vpop.f32.mrf.mxu0
        %4600 = vmatprep.mubr.f32.mxu0 0.0
        %4601 = vmatmul.mubr.f32.gmra.mxu0 %v4353
        %v4602 = vpop.f32.mrf.mxu0
        %v4603 = vadd.f32 0.0, %v4602
        %v4604 = vpop.f32.mrf.mxu0
        %4605 = vmatprep.mubr.f32.mxu0 0.0
        %4606 = vmatmul.mubr.f32.gmra.mxu0 %v4356
        %v4607 = vpop.f32.mrf.mxu0
        %v4608 = vadd.f32 0.0, %v4607
        %v4609 = vpop.f32.mrf.mxu0
        %4610 = vmatprep.mubr.f32.mxu0 0.0
        %4611 = vmatmul.mubr.f32.gmra.mxu0 %v4359
        %v4612 = vpop.f32.mrf.mxu0
        %v4613 = vadd.f32 0.0, %v4612
        %v4614 = vpop.f32.mrf.mxu0
        %4615 = vmatprep.mubr.f32.mxu0 0.0
        %4616 = vmatmul.mubr.f32.gmra.mxu0 %v4362
        %v4617 = vpop.f32.mrf.mxu0
        %v4618 = vadd.f32 0.0, %v4617
        %v4619 = vpop.f32.mrf.mxu0
        %4620 = vmatprep.mubr.f32.mxu0 0.0
        %4621 = vmatmul.mubr.f32.gmra.mxu0 %v4365
        %v4622 = vpop.f32.mrf.mxu0
        %v4623 = vadd.f32 0.0, %v4622
        %v4624 = vpop.f32.mrf.mxu0
        %4625 = vmatprep.mubr.f32.mxu0 0.0
        %4626 = vmatmul.mubr.f32.gmra.mxu0 %v4368
        %v4627 = vpop.f32.mrf.mxu0
        %v4628 = vadd.f32 0.0, %v4627
        %v4629 = vpop.f32.mrf.mxu0
        %4630 = vmatprep.mubr.f32.mxu0 0.0
        %4631 = vmatmul.mubr.f32.gmra.mxu0 %v4371
        %v4632 = vpop.f32.mrf.mxu0
        %v4633 = vadd.f32 0.0, %v4632
        %v4634 = vpop.f32.mrf.mxu0
        %4635 = vmatprep.mubr.f32.mxu0 0.0
        %4636 = vmatmul.mubr.f32.gmra.mxu0 %v4374
        %v4637 = vpop.f32.mrf.mxu0
        %v4638 = vadd.f32 0.0, %v4637
        %v4639 = vpop.f32.mrf.mxu0
        %4640 = vmatprep.mubr.f32.mxu0 0.0
        %4641 = vmatmul.mubr.f32.gmra.mxu0 %v4377
        %v4642 = vpop.f32.mrf.mxu0
        %v4643 = vadd.f32 0.0, %v4642
        %v4644 = vpop.f32.mrf.mxu0
        %4645 = vmatprep.mubr.f32.mxu0 0.0
        %4646 = vmatmul.mubr.f32.gmra.mxu0 %v4380
        %v4647 = vpop.f32.mrf.mxu0
        %v4648 = vadd.f32 0.0, %v4647
        %v4649 = vpop.f32.mrf.mxu0
        %4650 = vmatprep.mubr.f32.mxu0 0.0
        %4651 = vmatmul.mubr.f32.gmra.mxu0 %v4383
        %v4652 = vpop.f32.mrf.mxu0
        %v4653 = vadd.f32 0.0, %v4652
        %v4654 = vpop.f32.mrf.mxu0
        %4655 = vmatprep.mubr.f32.mxu0 0.0
        %4656 = vmatmul.mubr.f32.gmra.mxu0 %v4386
        %v4657 = vpop.f32.mrf.mxu0
        %v4658 = vadd.f32 0.0, %v4657
        %v4659 = vpop.f32.mrf.mxu0
        %4660 = vmatprep.mubr.f32.mxu0 0.0
        %4661 = vmatmul.mubr.f32.gmra.mxu0 %v4389
        %v4662 = vpop.f32.mrf.mxu0
        %v4663 = vadd.f32 0.0, %v4662
        %v4664 = vpop.f32.mrf.mxu0
        %4665 = vmatprep.mubr.f32.mxu0 0.0
        %4666 = vmatmul.mubr.f32.gmra.mxu0 %v4392
        %v4667 = vpop.f32.mrf.mxu0
        %v4668 = vadd.f32 0.0, %v4667
        %v4669 = vpop.f32.mrf.mxu0
        %4670 = vmatprep.mubr.f32.mxu0 0.0
        %4671 = vmatmul.mubr.f32.gmra.mxu0 %v4395
        %v4672 = vpop.f32.mrf.mxu0
        %v4673 = vadd.f32 0.0, %v4672
        %v4674 = vpop.f32.mrf.mxu0
        %4675 = vmatprep.mubr.f32.mxu0 0.0
        %4676 = vmatmul.mubr.f32.gmra.mxu0 %v4398
        %v4677 = vpop.f32.mrf.mxu0
        %v4678 = vadd.f32 0.0, %v4677
        %v4679 = vpop.f32.mrf.mxu0
        %4680 = vmatprep.mubr.f32.mxu0 0.0
        %4681 = vmatmul.mubr.f32.gmra.mxu0 %v4401
        %v4682 = vpop.f32.mrf.mxu0
        %v4683 = vadd.f32 0.0, %v4682
        %v4684 = vpop.f32.mrf.mxu0
        %4685 = vmatprep.mubr.f32.mxu0 0.0
        %4686 = vmatmul.mubr.f32.gmra.mxu0 %v4404
        %v4687 = vpop.f32.mrf.mxu0
        %v4688 = vadd.f32 0.0, %v4687
        %v4689 = vpop.f32.mrf.mxu0
        %4690 = vmatprep.mubr.f32.mxu0 0.0
        %4691 = vmatmul.mubr.f32.gmra.mxu0 %v4407
        %v4692 = vpop.f32.mrf.mxu0
        %v4693 = vadd.f32 0.0, %v4692
        %v4694 = vpop.f32.mrf.mxu0
        %4695 = vmatprep.mubr.f32.mxu0 0.0
        %4696 = vmatmul.mubr.f32.gmra.mxu0 %v4410
        %v4697 = vpop.f32.mrf.mxu0
        %v4698 = vadd.f32 0.0, %v4697
        %v4699 = vpop.f32.mrf.mxu0
        %4700 = vmatprep.mubr.f32.mxu0 0.0
        %4701 = vmatmul.mubr.f32.gmra.mxu0 %v4413
        %v4702 = vpop.f32.mrf.mxu0
        %v4703 = vadd.f32 0.0, %v4702
        %v4704 = vpop.f32.mrf.mxu0
        %4705 = vmatprep.mubr.f32.mxu0 0.0
        %4706 = vmatmul.mubr.f32.gmra.mxu0 %v4416
        %v4707 = vpop.f32.mrf.mxu0
        %v4708 = vadd.f32 0.0, %v4707
        %v4709 = vpop.f32.mrf.mxu0
        %4710 = vmatprep.mubr.f32.mxu0 0.0
        %4711 = vmatmul.mubr.f32.gmra.mxu0 %v4419
        %v4712 = vpop.f32.mrf.mxu0
        %v4713 = vadd.f32 0.0, %v4712
        %v4714 = vpop.f32.mrf.mxu0
        %4715 = vmatprep.mubr.f32.mxu0 0.0
        %4716 = vmatmul.mubr.f32.gmra.mxu0 %v4422
        %v4717 = vpop.f32.mrf.mxu0
        %v4718 = vadd.f32 0.0, %v4717
        %v4719 = vpop.f32.mrf.mxu0
        %4720 = vmatprep.mubr.f32.mxu0 0.0
        %4721 = vmatmul.mubr.f32.gmra.mxu0 %v4425
        %v4722 = vpop.f32.mrf.mxu0
        %v4723 = vadd.f32 0.0, %v4722
        %v4724 = vpop.f32.mrf.mxu0
        %4725 = vmatprep.mubr.f32.mxu0 0.0
        %4726 = vmatmul.mubr.f32.gmra.mxu0 %v4428
        %v4727 = vpop.f32.mrf.mxu0
        %v4728 = vadd.f32 0.0, %v4727
        %v4729 = vpop.f32.mrf.mxu0
        %4730 = vmatprep.mubr.f32.mxu0 0.0
        %4731 = vmatmul.mubr.f32.gmra.mxu0 %v4431
        %v4732 = vpop.f32.mrf.mxu0
        %v4733 = vadd.f32 0.0, %v4732
        %v4734 = vpop.f32.mrf.mxu0
        %4735 = vmatprep.mubr.f32.mxu0 0.0
        %4736 = vmatmul.mubr.f32.gmra.mxu0 %v4434
        %v4737 = vpop.f32.mrf.mxu0
        %v4738 = vadd.f32 0.0, %v4737
        %v4739 = vpop.f32.mrf.mxu0
        %4740 = vmatprep.mubr.f32.mxu0 0.0
        %4741 = vmatmul.mubr.f32.gmra.mxu0 %v4437
        %v4742 = vpop.f32.mrf.mxu0
        %v4743 = vadd.f32 0.0, %v4742
        %v4744 = vpop.f32.mrf.mxu0
        %4745 = vmatprep.mubr.f32.mxu0 0.0
        %4746 = vmatmul.mubr.f32.gmra.mxu0 %v4440
        %v4747 = vpop.f32.mrf.mxu0
        %v4748 = vadd.f32 0.0, %v4747
        %v4749 = vpop.f32.mrf.mxu0
        %4750 = vmatprep.mubr.f32.mxu0 0.0
        %4751 = vmatmul.mubr.f32.gmra.mxu0 %v4443
        %v4752 = vpop.f32.mrf.mxu0
        %v4753 = vadd.f32 0.0, %v4752
        %v4754 = vpop.f32.mrf.mxu0
        %4755 = vmatprep.mubr.f32.mxu0 0.0
        %4756 = vmatmul.mubr.f32.gmra.mxu0 %v4446
        %v4757 = vpop.f32.mrf.mxu0
        %v4758 = vadd.f32 0.0, %v4757
        %v4759 = vpop.f32.mrf.mxu0
        %4760 = vmatprep.mubr.f32.mxu0 0.0
        %4761 = vmatmul.mubr.f32.gmra.mxu0 %v4449
        %v4762 = vpop.f32.mrf.mxu0
        %v4763 = vadd.f32 0.0, %v4762
        %v4764 = vpop.f32.mrf.mxu0
        %4765 = vmatprep.mubr.f32.mxu0 0.0
        %4766 = vmatmul.mubr.f32.gmra.mxu0 %v4452
        %v4767 = vpop.f32.mrf.mxu0
        %v4768 = vadd.f32 0.0, %v4767
        %v4769 = vpop.f32.mrf.mxu0
        %4770 = vmatprep.mubr.f32.mxu0 0.0
        %4771 = vmatmul.mubr.f32.gmra.mxu0 %v4455
        %v4772 = vpop.f32.mrf.mxu0
        %v4773 = vadd.f32 0.0, %v4772
        %v4774 = vpop.f32.mrf.mxu0
        %4775 = vmatprep.mubr.f32.mxu0 0.0
        %4776 = vmatmul.mubr.f32.gmra.mxu0 %v4458
        %v4777 = vpop.f32.mrf.mxu0
        %v4778 = vadd.f32 0.0, %v4777
        %v4779 = vpop.f32.mrf.mxu0
        %4780 = vmatprep.mubr.f32.mxu0 0.0
        %4781 = vmatmul.mubr.f32.gmra.mxu0 %v4461
        %v4782 = vpop.f32.mrf.mxu0
        %v4783 = vadd.f32 0.0, %v4782
        %v4784 = vpop.f32.mrf.mxu0
        %4785 = vmatprep.mubr.f32.mxu0 0.0
        %4786 = vmatmul.mubr.f32.gmra.mxu0 %v4464
        %v4787 = vpop.f32.mrf.mxu0
        %v4788 = vadd.f32 0.0, %v4787
        %v4789 = vpop.f32.mrf.mxu0
        %4790 = vmatprep.mubr.f32.mxu0 0.0
        %4791 = vmatmul.mubr.f32.gmra.mxu0 %v4467
        %v4792 = vpop.f32.mrf.mxu0
        %v4793 = vadd.f32 0.0, %v4792
        %v4794 = vpop.f32.mrf.mxu0
        %4795 = vmatprep.mubr.f32.mxu0 0.0
        %4796 = vmatmul.mubr.f32.gmra.mxu0 %v4470
        %v4797 = vpop.f32.mrf.mxu0
        %v4798 = vadd.f32 0.0, %v4797
        %v4799 = vpop.f32.mrf.mxu0
        %4800 = vmatprep.mubr.f32.mxu0 0.0
        %4801 = vmatmul.mubr.f32.gmra.mxu0 %v4473
        %v4802 = vpop.f32.mrf.mxu0
        %v4803 = vadd.f32 0.0, %v4802
        %v4804 = vpop.f32.mrf.mxu0
        %4805 = vmatprep.mubr.f32.mxu0 0.0
        %4806 = vmatmul.mubr.f32.gmra.mxu0 %v4476
        %v4807 = vpop.f32.mrf.mxu0
        %v4808 = vadd.f32 0.0, %v4807
        %v4809 = vpop.f32.mrf.mxu0
        %4810 = vdwg.mxu0
        %v4811 = vadd.f32 %v4211, %v4548
        %v4812 = vadd.f32 %v4212, %v4553
        %v4813 = vadd.f32 %v4213, %v4558
        %v4814 = vadd.f32 %v4214, %v4563
        %v4815 = vadd.f32 %v4215, %v4568
        %v4816 = vadd.f32 %v4216, %v4573
        %v4817 = vadd.f32 %v4217, %v4578
        %v4818 = vadd.f32 %v4218, %v4583
        %v4819 = vadd.f32 %v4219, %v4588
        %v4820 = vadd.f32 %v4220, %v4593
        %v4821 = vadd.f32 %v4221, %v4598
        %v4822 = vadd.f32 %v4222, %v4603
        %v4823 = vadd.f32 %v4223, %v4608
        %v4824 = vadd.f32 %v4224, %v4613
        %v4825 = vadd.f32 %v4225, %v4618
        %v4826 = vadd.f32 %v4226, %v4623
        %v4827 = vadd.f32 %v4227, %v4628
        %v4828 = vadd.f32 %v4228, %v4633
        %v4829 = vadd.f32 %v4229, %v4638
        %v4830 = vadd.f32 %v4230, %v4643
        %v4831 = vadd.f32 %v4231, %v4648
        %v4832 = vadd.f32 %v4232, %v4653
        %v4833 = vadd.f32 %v4233, %v4658
        %v4834 = vadd.f32 %v4234, %v4663
        %v4835 = vadd.f32 %v4235, %v4668
        %v4836 = vadd.f32 %v4236, %v4673
        %v4837 = vadd.f32 %v4237, %v4678
        %v4838 = vadd.f32 %v4238, %v4683
        %v4839 = vadd.f32 %v4239, %v4688
        %v4840 = vadd.f32 %v4240, %v4693
        %v4841 = vadd.f32 %v4241, %v4698
        %v4842 = vadd.f32 %v4242, %v4703
        %v4843 = vadd.f32 %v4243, %v4708
        %v4844 = vadd.f32 %v4244, %v4713
        %v4845 = vadd.f32 %v4245, %v4718
        %v4846 = vadd.f32 %v4246, %v4723
        %v4847 = vadd.f32 %v4247, %v4728
        %v4848 = vadd.f32 %v4248, %v4733
        %v4849 = vadd.f32 %v4249, %v4738
        %v4850 = vadd.f32 %v4250, %v4743
        %v4851 = vadd.f32 %v4251, %v4748
        %v4852 = vadd.f32 %v4252, %v4753
        %v4853 = vadd.f32 %v4253, %v4758
        %v4854 = vadd.f32 %v4254, %v4763
        %v4855 = vadd.f32 %v4255, %v4768
        %v4856 = vadd.f32 %v4256, %v4773
        %v4857 = vadd.f32 %v4257, %v4778
        %v4858 = vadd.f32 %v4258, %v4783
        %v4859 = vadd.f32 %v4259, %v4788
        %v4860 = vadd.f32 %v4260, %v4793
        %v4861 = vadd.f32 %v4261, %v4798
        %v4862 = vadd.f32 %v4262, %v4803
        %v4863 = vadd.f32 %v4263, %v4808
        %v4864 = vld [vmem:[%s168 + $0x2c] sm:$0xff]
        %v4865 = vld [vmem:[%s168 + $0x34] sm:$0xff]
        %v4866 = vld [vmem:[%s168 + $0x3c] sm:$0xff]
        %v4867 = vld [vmem:[%s168 + $0x44] sm:$0xff]
        %v4868 = vld [vmem:[%s168 + $0x4c] sm:$0xff]
        %v4869 = vld [vmem:[%s168 + $0x54] sm:$0xff]
        %v4870 = vld [vmem:[%s168 + $0x5c] sm:$0xff]
        %v4871 = vld [vmem:[%s168 + $0x64] sm:$0xff]
        %v4872 = vld [vmem:[%s168 + $0x6c] sm:$0xff]
        %v4873 = vld [vmem:[%s168 + $0x74] sm:$0xff]
        %v4874 = vld [vmem:[%s168 + $0x7c] sm:$0xff]
        %v4875 = vld [vmem:[%s168 + $0x84] sm:$0xff]
        %v4876 = vld [vmem:[%s168 + $0x8c] sm:$0xff]
        %v4877 = vld [vmem:[%s168 + $0x94] sm:$0xff]
        %v4878 = vld [vmem:[%s168 + $0x9c] sm:$0xff]
        %v4879 = vld [vmem:[%s168 + $0xa4] sm:$0xff]
        %v4880 = vld [vmem:[%s168 + $0xac] sm:$0xff]
        %v4881 = vld [vmem:[%s168 + $0xb4] sm:$0xff]
        %v4882 = vld [vmem:[%s168 + $0xbc] sm:$0xff]
        %v4883 = vld [vmem:[%s168 + $0xc4] sm:$0xff]
        %v4884 = vld [vmem:[%s168 + $0xcc] sm:$0xff]
        %v4885 = vld [vmem:[%s168 + $0xd4] sm:$0xff]
        %v4886 = vld [vmem:[%s168 + $0xdc] sm:$0xff]
        %v4887 = vld [vmem:[%s168 + $0xe4] sm:$0xff]
        %v4888 = vld [vmem:[%s168 + $0xec] sm:$0xff]
        %v4889 = vld [vmem:[%s168 + $0xf4] sm:$0xff]
        %v4890 = vld [vmem:[%s168 + $0xfc] sm:$0xff]
        %v4891 = vld [vmem:[%s168 + $0x104] sm:$0xff]
        %v4892 = vld [vmem:[%s168 + $0x10c] sm:$0xff]
        %v4893 = vld [vmem:[%s168 + $0x114] sm:$0xff]
        %v4894 = vld [vmem:[%s168 + $0x11c] sm:$0xff]
        %v4895 = vld [vmem:[%s168 + $0x124] sm:$0xff]
        %v4896 = vld [vmem:[%s168 + $0x12c] sm:$0xff]
        %v4897 = vld [vmem:[%s168 + $0x134] sm:$0xff]
        %v4898 = vld [vmem:[%s168 + $0x13c] sm:$0xff]
        %v4899 = vld [vmem:[%s168 + $0x144] sm:$0xff]
        %v4900 = vld [vmem:[%s168 + $0x14c] sm:$0xff]
        %v4901 = vld [vmem:[%s168 + $0x154] sm:$0xff]
        %v4902 = vld [vmem:[%s168 + $0x15c] sm:$0xff]
        %v4903 = vld [vmem:[%s168 + $0x164] sm:$0xff]
        %v4904 = vld [vmem:[%s168 + $0x16c] sm:$0xff]
        %v4905 = vld [vmem:[%s168 + $0x174] sm:$0xff]
        %v4906 = vld [vmem:[%s168 + $0x17c] sm:$0xff]
        %v4907 = vld [vmem:[%s168 + $0x184] sm:$0xff]
        %v4908 = vld [vmem:[%s168 + $0x18c] sm:$0xff]
        %v4909 = vld [vmem:[%s168 + $0x194] sm:$0xff]
        %v4910 = vld [vmem:[%s168 + $0x19c] sm:$0xff]
        %v4911 = vld [vmem:[%s168 + $0x1a4] sm:$0xff]
        %v4912 = vld [vmem:[%s168 + $0x1ac] sm:$0xff]
        %v4913 = vld [vmem:[%s168 + $0x1b4] sm:$0xff]
        %v4914 = vld [vmem:[%s168 + $0x1bc] sm:$0xff]
        %v4915 = vld [vmem:[%s168 + $0x1c4] sm:$0xff]
        %v4916 = vld [vmem:[%s168 + $0x1cc] sm:$0x3]
        %s4917 = scalar_lea.vmem %s1, 32
        %v4918 = vld [vmem:[%s4917] sm:$0xf]
        %v4920 = vsel %vm278, %v4864, 0
        %v4923 = vsel %vm278, %v4865, 0
        %v4926 = vsel %vm278, %v4866, 0
        %v4929 = vsel %vm278, %v4867, 0
        %v4932 = vsel %vm278, %v4868, 0
        %v4935 = vsel %vm278, %v4869, 0
        %v4938 = vsel %vm278, %v4870, 0
        %v4941 = vsel %vm278, %v4871, 0
        %v4944 = vsel %vm278, %v4872, 0
        %v4947 = vsel %vm278, %v4873, 0
        %v4950 = vsel %vm278, %v4874, 0
        %v4953 = vsel %vm278, %v4875, 0
        %v4956 = vsel %vm278, %v4876, 0
        %v4959 = vsel %vm278, %v4877, 0
        %v4962 = vsel %vm278, %v4878, 0
        %v4965 = vsel %vm278, %v4879, 0
        %v4968 = vsel %vm278, %v4880, 0
        %v4971 = vsel %vm278, %v4881, 0
        %v4974 = vsel %vm278, %v4882, 0
        %v4977 = vsel %vm278, %v4883, 0
        %v4980 = vsel %vm278, %v4884, 0
        %v4983 = vsel %vm278, %v4885, 0
        %v4986 = vsel %vm278, %v4886, 0
        %v4989 = vsel %vm278, %v4887, 0
        %v4992 = vsel %vm278, %v4888, 0
        %v4995 = vsel %vm278, %v4889, 0
        %v4998 = vsel %vm278, %v4890, 0
        %v5001 = vsel %vm278, %v4891, 0
        %v5004 = vsel %vm278, %v4892, 0
        %v5007 = vsel %vm278, %v4893, 0
        %v5010 = vsel %vm278, %v4894, 0
        %v5013 = vsel %vm278, %v4895, 0
        %v5016 = vsel %vm278, %v4896, 0
        %v5019 = vsel %vm278, %v4897, 0
        %v5022 = vsel %vm278, %v4898, 0
        %v5025 = vsel %vm278, %v4899, 0
        %v5028 = vsel %vm278, %v4900, 0
        %v5031 = vsel %vm278, %v4901, 0
        %v5034 = vsel %vm278, %v4902, 0
        %v5037 = vsel %vm278, %v4903, 0
        %v5040 = vsel %vm278, %v4904, 0
        %v5043 = vsel %vm278, %v4905, 0
        %v5046 = vsel %vm278, %v4906, 0
        %v5049 = vsel %vm278, %v4907, 0
        %v5052 = vsel %vm278, %v4908, 0
        %v5055 = vsel %vm278, %v4909, 0
        %v5058 = vsel %vm278, %v4910, 0
        %v5061 = vsel %vm278, %v4911, 0
        %v5064 = vsel %vm278, %v4912, 0
        %v5067 = vsel %vm278, %v4913, 0
        %v5070 = vsel %vm278, %v4914, 0
        %v5073 = vsel %vm278, %v4915, 0
        %v5076 = vsel %vm278, %v4916, 0
        %v5079 = vsel %vm438, %v4918, 0
        %5081 = vmatprep.subr.mxu0 0.0
        %5082 = vmatpush1.msra.mxu0 0.0
        %5083 = vmatprep.subr.mxu0 0.0
        %5084 = vmatpush1.msra.mxu0 0.0
        %5085 = vmatprep.subr.mxu0 0.0
        %5086 = vmatpush1.msra.mxu0 0.0
        %5087 = vmatprep.subr.mxu0 0.0
        %5088 = vmatpush1.msra.mxu0 0.0
        %5089 = vmatprep.subr.mxu0 0.0
        %5090 = vmatpush1.msra.mxu0 0.0
        %5091 = vmatprep.subr.mxu0 0.0
        %5092 = vmatpush1.msra.mxu0 0.0
        %5093 = vmatprep.subr.mxu0 0.0
        %5094 = vmatpush1.msra.mxu0 0.0
        %5095 = vmatprep.subr.mxu0 0.0
        %5096 = vmatpush1.msra.mxu0 0.0
        %5097 = vmatprep.subr.mxu0 0.0
        %5098 = vmatpush1.msra.mxu0 0.0
        %5099 = vmatprep.subr.mxu0 0.0
        %5100 = vmatpush1.msra.mxu0 0.0
        %5101 = vmatprep.subr.mxu0 0.0
        %5102 = vmatpush1.msra.mxu0 0.0
        %5103 = vmatprep.subr.mxu0 0.0
        %5104 = vmatpush1.msra.mxu0 0.0
        %5105 = vmatprep.subr.mxu0 0.0
        %5106 = vmatpush1.msra.mxu0 0.0
        %5107 = vmatprep.subr.mxu0 0.0
        %5108 = vmatpush1.msra.mxu0 0.0
        %5109 = vmatprep.subr.mxu0 0.0
        %5110 = vmatpush1.msra.mxu0 0.0
        %5111 = vmatprep.subr.mxu0 0.0
        %5112 = vmatpush1.msra.mxu0 %v5079
        %5113 = vmatprep.subr.mxu0 0.0
        %5114 = vmatpush2.msra.mxu0 0.0
        %5115 = vmatprep.subr.mxu0 0.0
        %5116 = vmatpush2.msra.mxu0 0.0
        %5117 = vmatprep.subr.mxu0 0.0
        %5118 = vmatpush2.msra.mxu0 0.0
        %5119 = vmatprep.subr.mxu0 0.0
        %5120 = vmatpush2.msra.mxu0 0.0
        %5121 = vmatprep.subr.mxu0 0.0
        %5122 = vmatpush2.msra.mxu0 0.0
        %5123 = vmatprep.subr.mxu0 0.0
        %5124 = vmatpush2.msra.mxu0 0.0
        %5125 = vmatprep.subr.mxu0 0.0
        %5126 = vmatpush2.msra.mxu0 0.0
        %5127 = vmatprep.subr.mxu0 0.0
        %5128 = vmatpush2.msra.mxu0 0.0
        %5129 = vmatprep.subr.mxu0 0.0
        %5130 = vmatpush2.msra.mxu0 0.0
        %5131 = vmatprep.subr.mxu0 0.0
        %5132 = vmatpush2.msra.mxu0 0.0
        %5133 = vmatprep.subr.mxu0 0.0
        %5134 = vmatpush2.msra.mxu0 0.0
        %5135 = vmatprep.subr.mxu0 0.0
        %5136 = vmatpush2.msra.mxu0 0.0
        %5137 = vmatprep.subr.mxu0 0.0
        %5138 = vmatpush2.msra.mxu0 0.0
        %5139 = vmatprep.subr.mxu0 0.0
        %5140 = vmatpush2.msra.mxu0 0.0
        %5141 = vmatprep.subr.mxu0 0.0
        %5142 = vmatpush2.msra.mxu0 0.0
        %5143 = vmatprep.subr.mxu0 0.0
        %5144 = vmatpush2.msra.mxu0 0.0
        %5145 = vmatprep.mubr.f32.mxu0 0.0
        %5146 = vmatmul.mubr.f32.gmra.mxu0 %v4920
        %v5147 = vpop.f32.mrf.mxu0
        %v5148 = vadd.f32 0.0, %v5147
        %v5149 = vpop.f32.mrf.mxu0
        %5150 = vmatprep.mubr.f32.mxu0 0.0
        %5151 = vmatmul.mubr.f32.gmra.mxu0 %v4923
        %v5152 = vpop.f32.mrf.mxu0
        %v5153 = vadd.f32 0.0, %v5152
        %v5154 = vpop.f32.mrf.mxu0
        %5155 = vmatprep.mubr.f32.mxu0 0.0
        %5156 = vmatmul.mubr.f32.gmra.mxu0 %v4926
        %v5157 = vpop.f32.mrf.mxu0
        %v5158 = vadd.f32 0.0, %v5157
        %v5159 = vpop.f32.mrf.mxu0
        %5160 = vmatprep.mubr.f32.mxu0 0.0
        %5161 = vmatmul.mubr.f32.gmra.mxu0 %v4929
        %v5162 = vpop.f32.mrf.mxu0
        %v5163 = vadd.f32 0.0, %v5162
        %v5164 = vpop.f32.mrf.mxu0
        %5165 = vmatprep.mubr.f32.mxu0 0.0
        %5166 = vmatmul.mubr.f32.gmra.mxu0 %v4932
        %v5167 = vpop.f32.mrf.mxu0
        %v5168 = vadd.f32 0.0, %v5167
        %v5169 = vpop.f32.mrf.mxu0
        %5170 = vmatprep.mubr.f32.mxu0 0.0
        %5171 = vmatmul.mubr.f32.gmra.mxu0 %v4935
        %v5172 = vpop.f32.mrf.mxu0
        %v5173 = vadd.f32 0.0, %v5172
        %v5174 = vpop.f32.mrf.mxu0
        %5175 = vmatprep.mubr.f32.mxu0 0.0
        %5176 = vmatmul.mubr.f32.gmra.mxu0 %v4938
        %v5177 = vpop.f32.mrf.mxu0
        %v5178 = vadd.f32 0.0, %v5177
        %v5179 = vpop.f32.mrf.mxu0
        %5180 = vmatprep.mubr.f32.mxu0 0.0
        %5181 = vmatmul.mubr.f32.gmra.mxu0 %v4941
        %v5182 = vpop.f32.mrf.mxu0
        %v5183 = vadd.f32 0.0, %v5182
        %v5184 = vpop.f32.mrf.mxu0
        %5185 = vmatprep.mubr.f32.mxu0 0.0
        %5186 = vmatmul.mubr.f32.gmra.mxu0 %v4944
        %v5187 = vpop.f32.mrf.mxu0
        %v5188 = vadd.f32 0.0, %v5187
        %v5189 = vpop.f32.mrf.mxu0
        %5190 = vmatprep.mubr.f32.mxu0 0.0
        %5191 = vmatmul.mubr.f32.gmra.mxu0 %v4947
        %v5192 = vpop.f32.mrf.mxu0
        %v5193 = vadd.f32 0.0, %v5192
        %v5194 = vpop.f32.mrf.mxu0
        %5195 = vmatprep.mubr.f32.mxu0 0.0
        %5196 = vmatmul.mubr.f32.gmra.mxu0 %v4950
        %v5197 = vpop.f32.mrf.mxu0
        %v5198 = vadd.f32 0.0, %v5197
        %v5199 = vpop.f32.mrf.mxu0
        %5200 = vmatprep.mubr.f32.mxu0 0.0
        %5201 = vmatmul.mubr.f32.gmra.mxu0 %v4953
        %v5202 = vpop.f32.mrf.mxu0
        %v5203 = vadd.f32 0.0, %v5202
        %v5204 = vpop.f32.mrf.mxu0
        %5205 = vmatprep.mubr.f32.mxu0 0.0
        %5206 = vmatmul.mubr.f32.gmra.mxu0 %v4956
        %v5207 = vpop.f32.mrf.mxu0
        %v5208 = vadd.f32 0.0, %v5207
        %v5209 = vpop.f32.mrf.mxu0
        %5210 = vmatprep.mubr.f32.mxu0 0.0
        %5211 = vmatmul.mubr.f32.gmra.mxu0 %v4959
        %v5212 = vpop.f32.mrf.mxu0
        %v5213 = vadd.f32 0.0, %v5212
        %v5214 = vpop.f32.mrf.mxu0
        %5215 = vmatprep.mubr.f32.mxu0 0.0
        %5216 = vmatmul.mubr.f32.gmra.mxu0 %v4962
        %v5217 = vpop.f32.mrf.mxu0
        %v5218 = vadd.f32 0.0, %v5217
        %v5219 = vpop.f32.mrf.mxu0
        %5220 = vmatprep.mubr.f32.mxu0 0.0
        %5221 = vmatmul.mubr.f32.gmra.mxu0 %v4965
        %v5222 = vpop.f32.mrf.mxu0
        %v5223 = vadd.f32 0.0, %v5222
        %v5224 = vpop.f32.mrf.mxu0
        %5225 = vmatprep.mubr.f32.mxu0 0.0
        %5226 = vmatmul.mubr.f32.gmra.mxu0 %v4968
        %v5227 = vpop.f32.mrf.mxu0
        %v5228 = vadd.f32 0.0, %v5227
        %v5229 = vpop.f32.mrf.mxu0
        %5230 = vmatprep.mubr.f32.mxu0 0.0
        %5231 = vmatmul.mubr.f32.gmra.mxu0 %v4971
        %v5232 = vpop.f32.mrf.mxu0
        %v5233 = vadd.f32 0.0, %v5232
        %v5234 = vpop.f32.mrf.mxu0
        %5235 = vmatprep.mubr.f32.mxu0 0.0
        %5236 = vmatmul.mubr.f32.gmra.mxu0 %v4974
        %v5237 = vpop.f32.mrf.mxu0
        %v5238 = vadd.f32 0.0, %v5237
        %v5239 = vpop.f32.mrf.mxu0
        %5240 = vmatprep.mubr.f32.mxu0 0.0
        %5241 = vmatmul.mubr.f32.gmra.mxu0 %v4977
        %v5242 = vpop.f32.mrf.mxu0
        %v5243 = vadd.f32 0.0, %v5242
        %v5244 = vpop.f32.mrf.mxu0
        %5245 = vmatprep.mubr.f32.mxu0 0.0
        %5246 = vmatmul.mubr.f32.gmra.mxu0 %v4980
        %v5247 = vpop.f32.mrf.mxu0
        %v5248 = vadd.f32 0.0, %v5247
        %v5249 = vpop.f32.mrf.mxu0
        %5250 = vmatprep.mubr.f32.mxu0 0.0
        %5251 = vmatmul.mubr.f32.gmra.mxu0 %v4983
        %v5252 = vpop.f32.mrf.mxu0
        %v5253 = vadd.f32 0.0, %v5252
        %v5254 = vpop.f32.mrf.mxu0
        %5255 = vmatprep.mubr.f32.mxu0 0.0
        %5256 = vmatmul.mubr.f32.gmra.mxu0 %v4986
        %v5257 = vpop.f32.mrf.mxu0
        %v5258 = vadd.f32 0.0, %v5257
        %v5259 = vpop.f32.mrf.mxu0
        %5260 = vmatprep.mubr.f32.mxu0 0.0
        %5261 = vmatmul.mubr.f32.gmra.mxu0 %v4989
        %v5262 = vpop.f32.mrf.mxu0
        %v5263 = vadd.f32 0.0, %v5262
        %v5264 = vpop.f32.mrf.mxu0
        %5265 = vmatprep.mubr.f32.mxu0 0.0
        %5266 = vmatmul.mubr.f32.gmra.mxu0 %v4992
        %v5267 = vpop.f32.mrf.mxu0
        %v5268 = vadd.f32 0.0, %v5267
        %v5269 = vpop.f32.mrf.mxu0
        %5270 = vmatprep.mubr.f32.mxu0 0.0
        %5271 = vmatmul.mubr.f32.gmra.mxu0 %v4995
        %v5272 = vpop.f32.mrf.mxu0
        %v5273 = vadd.f32 0.0, %v5272
        %v5274 = vpop.f32.mrf.mxu0
        %5275 = vmatprep.mubr.f32.mxu0 0.0
        %5276 = vmatmul.mubr.f32.gmra.mxu0 %v4998
        %v5277 = vpop.f32.mrf.mxu0
        %v5278 = vadd.f32 0.0, %v5277
        %v5279 = vpop.f32.mrf.mxu0
        %5280 = vmatprep.mubr.f32.mxu0 0.0
        %5281 = vmatmul.mubr.f32.gmra.mxu0 %v5001
        %v5282 = vpop.f32.mrf.mxu0
        %v5283 = vadd.f32 0.0, %v5282
        %v5284 = vpop.f32.mrf.mxu0
        %5285 = vmatprep.mubr.f32.mxu0 0.0
        %5286 = vmatmul.mubr.f32.gmra.mxu0 %v5004
        %v5287 = vpop.f32.mrf.mxu0
        %v5288 = vadd.f32 0.0, %v5287
        %v5289 = vpop.f32.mrf.mxu0
        %5290 = vmatprep.mubr.f32.mxu0 0.0
        %5291 = vmatmul.mubr.f32.gmra.mxu0 %v5007
        %v5292 = vpop.f32.mrf.mxu0
        %v5293 = vadd.f32 0.0, %v5292
        %v5294 = vpop.f32.mrf.mxu0
        %5295 = vmatprep.mubr.f32.mxu0 0.0
        %5296 = vmatmul.mubr.f32.gmra.mxu0 %v5010
        %v5297 = vpop.f32.mrf.mxu0
        %v5298 = vadd.f32 0.0, %v5297
        %v5299 = vpop.f32.mrf.mxu0
        %5300 = vmatprep.mubr.f32.mxu0 0.0
        %5301 = vmatmul.mubr.f32.gmra.mxu0 %v5013
        %v5302 = vpop.f32.mrf.mxu0
        %v5303 = vadd.f32 0.0, %v5302
        %v5304 = vpop.f32.mrf.mxu0
        %5305 = vmatprep.mubr.f32.mxu0 0.0
        %5306 = vmatmul.mubr.f32.gmra.mxu0 %v5016
        %v5307 = vpop.f32.mrf.mxu0
        %v5308 = vadd.f32 0.0, %v5307
        %v5309 = vpop.f32.mrf.mxu0
        %5310 = vmatprep.mubr.f32.mxu0 0.0
        %5311 = vmatmul.mubr.f32.gmra.mxu0 %v5019
        %v5312 = vpop.f32.mrf.mxu0
        %v5313 = vadd.f32 0.0, %v5312
        %v5314 = vpop.f32.mrf.mxu0
        %5315 = vmatprep.mubr.f32.mxu0 0.0
        %5316 = vmatmul.mubr.f32.gmra.mxu0 %v5022
        %v5317 = vpop.f32.mrf.mxu0
        %v5318 = vadd.f32 0.0, %v5317
        %v5319 = vpop.f32.mrf.mxu0
        %5320 = vmatprep.mubr.f32.mxu0 0.0
        %5321 = vmatmul.mubr.f32.gmra.mxu0 %v5025
        %v5322 = vpop.f32.mrf.mxu0
        %v5323 = vadd.f32 0.0, %v5322
        %v5324 = vpop.f32.mrf.mxu0
        %5325 = vmatprep.mubr.f32.mxu0 0.0
        %5326 = vmatmul.mubr.f32.gmra.mxu0 %v5028
        %v5327 = vpop.f32.mrf.mxu0
        %v5328 = vadd.f32 0.0, %v5327
        %v5329 = vpop.f32.mrf.mxu0
        %5330 = vmatprep.mubr.f32.mxu0 0.0
        %5331 = vmatmul.mubr.f32.gmra.mxu0 %v5031
        %v5332 = vpop.f32.mrf.mxu0
        %v5333 = vadd.f32 0.0, %v5332
        %v5334 = vpop.f32.mrf.mxu0
        %5335 = vmatprep.mubr.f32.mxu0 0.0
        %5336 = vmatmul.mubr.f32.gmra.mxu0 %v5034
        %v5337 = vpop.f32.mrf.mxu0
        %v5338 = vadd.f32 0.0, %v5337
        %v5339 = vpop.f32.mrf.mxu0
        %5340 = vmatprep.mubr.f32.mxu0 0.0
        %5341 = vmatmul.mubr.f32.gmra.mxu0 %v5037
        %v5342 = vpop.f32.mrf.mxu0
        %v5343 = vadd.f32 0.0, %v5342
        %v5344 = vpop.f32.mrf.mxu0
        %5345 = vmatprep.mubr.f32.mxu0 0.0
        %5346 = vmatmul.mubr.f32.gmra.mxu0 %v5040
        %v5347 = vpop.f32.mrf.mxu0
        %v5348 = vadd.f32 0.0, %v5347
        %v5349 = vpop.f32.mrf.mxu0
        %5350 = vmatprep.mubr.f32.mxu0 0.0
        %5351 = vmatmul.mubr.f32.gmra.mxu0 %v5043
        %v5352 = vpop.f32.mrf.mxu0
        %v5353 = vadd.f32 0.0, %v5352
        %v5354 = vpop.f32.mrf.mxu0
        %5355 = vmatprep.mubr.f32.mxu0 0.0
        %5356 = vmatmul.mubr.f32.gmra.mxu0 %v5046
        %v5357 = vpop.f32.mrf.mxu0
        %v5358 = vadd.f32 0.0, %v5357
        %v5359 = vpop.f32.mrf.mxu0
        %5360 = vmatprep.mubr.f32.mxu0 0.0
        %5361 = vmatmul.mubr.f32.gmra.mxu0 %v5049
        %v5362 = vpop.f32.mrf.mxu0
        %v5363 = vadd.f32 0.0, %v5362
        %v5364 = vpop.f32.mrf.mxu0
        %5365 = vmatprep.mubr.f32.mxu0 0.0
        %5366 = vmatmul.mubr.f32.gmra.mxu0 %v5052
        %v5367 = vpop.f32.mrf.mxu0
        %v5368 = vadd.f32 0.0, %v5367
        %v5369 = vpop.f32.mrf.mxu0
        %5370 = vmatprep.mubr.f32.mxu0 0.0
        %5371 = vmatmul.mubr.f32.gmra.mxu0 %v5055
        %v5372 = vpop.f32.mrf.mxu0
        %v5373 = vadd.f32 0.0, %v5372
        %v5374 = vpop.f32.mrf.mxu0
        %5375 = vmatprep.mubr.f32.mxu0 0.0
        %5376 = vmatmul.mubr.f32.gmra.mxu0 %v5058
        %v5377 = vpop.f32.mrf.mxu0
        %v5378 = vadd.f32 0.0, %v5377
        %v5379 = vpop.f32.mrf.mxu0
        %5380 = vmatprep.mubr.f32.mxu0 0.0
        %5381 = vmatmul.mubr.f32.gmra.mxu0 %v5061
        %v5382 = vpop.f32.mrf.mxu0
        %v5383 = vadd.f32 0.0, %v5382
        %v5384 = vpop.f32.mrf.mxu0
        %5385 = vmatprep.mubr.f32.mxu0 0.0
        %5386 = vmatmul.mubr.f32.gmra.mxu0 %v5064
        %v5387 = vpop.f32.mrf.mxu0
        %v5388 = vadd.f32 0.0, %v5387
        %v5389 = vpop.f32.mrf.mxu0
        %5390 = vmatprep.mubr.f32.mxu0 0.0
        %5391 = vmatmul.mubr.f32.gmra.mxu0 %v5067
        %v5392 = vpop.f32.mrf.mxu0
        %v5393 = vadd.f32 0.0, %v5392
        %v5394 = vpop.f32.mrf.mxu0
        %5395 = vmatprep.mubr.f32.mxu0 0.0
        %5396 = vmatmul.mubr.f32.gmra.mxu0 %v5070
        %v5397 = vpop.f32.mrf.mxu0
        %v5398 = vadd.f32 0.0, %v5397
        %v5399 = vpop.f32.mrf.mxu0
        %5400 = vmatprep.mubr.f32.mxu0 0.0
        %5401 = vmatmul.mubr.f32.gmra.mxu0 %v5073
        %v5402 = vpop.f32.mrf.mxu0
        %v5403 = vadd.f32 0.0, %v5402
        %v5404 = vpop.f32.mrf.mxu0
        %5405 = vmatprep.mubr.f32.mxu0 0.0
        %5406 = vmatmul.mubr.f32.gmra.mxu0 %v5076
        %v5407 = vpop.f32.mrf.mxu0
        %v5408 = vadd.f32 0.0, %v5407
        %v5409 = vpop.f32.mrf.mxu0
        %5410 = vdwg.mxu0
        %v5411 = vadd.f32 %v4811, %v5148
        %v5412 = vadd.f32 %v4812, %v5153
        %v5413 = vadd.f32 %v4813, %v5158
        %v5414 = vadd.f32 %v4814, %v5163
        %v5415 = vadd.f32 %v4815, %v5168
        %v5416 = vadd.f32 %v4816, %v5173
        %v5417 = vadd.f32 %v4817, %v5178
        %v5418 = vadd.f32 %v4818, %v5183
        %v5419 = vadd.f32 %v4819, %v5188
        %v5420 = vadd.f32 %v4820, %v5193
        %v5421 = vadd.f32 %v4821, %v5198
        %v5422 = vadd.f32 %v4822, %v5203
        %v5423 = vadd.f32 %v4823, %v5208
        %v5424 = vadd.f32 %v4824, %v5213
        %v5425 = vadd.f32 %v4825, %v5218
        %v5426 = vadd.f32 %v4826, %v5223
        %v5427 = vadd.f32 %v4827, %v5228
        %v5428 = vadd.f32 %v4828, %v5233
        %v5429 = vadd.f32 %v4829, %v5238
        %v5430 = vadd.f32 %v4830, %v5243
        %v5431 = vadd.f32 %v4831, %v5248
        %v5432 = vadd.f32 %v4832, %v5253
        %v5433 = vadd.f32 %v4833, %v5258
        %v5434 = vadd.f32 %v4834, %v5263
        %v5435 = vadd.f32 %v4835, %v5268
        %v5436 = vadd.f32 %v4836, %v5273
        %v5437 = vadd.f32 %v4837, %v5278
        %v5438 = vadd.f32 %v4838, %v5283
        %v5439 = vadd.f32 %v4839, %v5288
        %v5440 = vadd.f32 %v4840, %v5293
        %v5441 = vadd.f32 %v4841, %v5298
        %v5442 = vadd.f32 %v4842, %v5303
        %v5443 = vadd.f32 %v4843, %v5308
        %v5444 = vadd.f32 %v4844, %v5313
        %v5445 = vadd.f32 %v4845, %v5318
        %v5446 = vadd.f32 %v4846, %v5323
        %v5447 = vadd.f32 %v4847, %v5328
        %v5448 = vadd.f32 %v4848, %v5333
        %v5449 = vadd.f32 %v4849, %v5338
        %v5450 = vadd.f32 %v4850, %v5343
        %v5451 = vadd.f32 %v4851, %v5348
        %v5452 = vadd.f32 %v4852, %v5353
        %v5453 = vadd.f32 %v4853, %v5358
        %v5454 = vadd.f32 %v4854, %v5363
        %v5455 = vadd.f32 %v4855, %v5368
        %v5456 = vadd.f32 %v4856, %v5373
        %v5457 = vadd.f32 %v4857, %v5378
        %v5458 = vadd.f32 %v4858, %v5383
        %v5459 = vadd.f32 %v4859, %v5388
        %v5460 = vadd.f32 %v4860, %v5393
        %v5461 = vadd.f32 %v4861, %v5398
        %v5462 = vadd.f32 %v4862, %v5403
        %v5463 = vadd.f32 %v4863, %v5408
        %v5464 = vld [vmem:[%s168 + $0x2d] sm:$0xff]
        %v5465 = vld [vmem:[%s168 + $0x35] sm:$0xff]
        %v5466 = vld [vmem:[%s168 + $0x3d] sm:$0xff]
        %v5467 = vld [vmem:[%s168 + $0x45] sm:$0xff]
        %v5468 = vld [vmem:[%s168 + $0x4d] sm:$0xff]
        %v5469 = vld [vmem:[%s168 + $0x55] sm:$0xff]
        %v5470 = vld [vmem:[%s168 + $0x5d] sm:$0xff]
        %v5471 = vld [vmem:[%s168 + $0x65] sm:$0xff]
        %v5472 = vld [vmem:[%s168 + $0x6d] sm:$0xff]
        %v5473 = vld [vmem:[%s168 + $0x75] sm:$0xff]
        %v5474 = vld [vmem:[%s168 + $0x7d] sm:$0xff]
        %v5475 = vld [vmem:[%s168 + $0x85] sm:$0xff]
        %v5476 = vld [vmem:[%s168 + $0x8d] sm:$0xff]
        %v5477 = vld [vmem:[%s168 + $0x95] sm:$0xff]
        %v5478 = vld [vmem:[%s168 + $0x9d] sm:$0xff]
        %v5479 = vld [vmem:[%s168 + $0xa5] sm:$0xff]
        %v5480 = vld [vmem:[%s168 + $0xad] sm:$0xff]
        %v5481 = vld [vmem:[%s168 + $0xb5] sm:$0xff]
        %v5482 = vld [vmem:[%s168 + $0xbd] sm:$0xff]
        %v5483 = vld [vmem:[%s168 + $0xc5] sm:$0xff]
        %v5484 = vld [vmem:[%s168 + $0xcd] sm:$0xff]
        %v5485 = vld [vmem:[%s168 + $0xd5] sm:$0xff]
        %v5486 = vld [vmem:[%s168 + $0xdd] sm:$0xff]
        %v5487 = vld [vmem:[%s168 + $0xe5] sm:$0xff]
        %v5488 = vld [vmem:[%s168 + $0xed] sm:$0xff]
        %v5489 = vld [vmem:[%s168 + $0xf5] sm:$0xff]
        %v5490 = vld [vmem:[%s168 + $0xfd] sm:$0xff]
        %v5491 = vld [vmem:[%s168 + $0x105] sm:$0xff]
        %v5492 = vld [vmem:[%s168 + $0x10d] sm:$0xff]
        %v5493 = vld [vmem:[%s168 + $0x115] sm:$0xff]
        %v5494 = vld [vmem:[%s168 + $0x11d] sm:$0xff]
        %v5495 = vld [vmem:[%s168 + $0x125] sm:$0xff]
        %v5496 = vld [vmem:[%s168 + $0x12d] sm:$0xff]
        %v5497 = vld [vmem:[%s168 + $0x135] sm:$0xff]
        %v5498 = vld [vmem:[%s168 + $0x13d] sm:$0xff]
        %v5499 = vld [vmem:[%s168 + $0x145] sm:$0xff]
        %v5500 = vld [vmem:[%s168 + $0x14d] sm:$0xff]
        %v5501 = vld [vmem:[%s168 + $0x155] sm:$0xff]
        %v5502 = vld [vmem:[%s168 + $0x15d] sm:$0xff]
        %v5503 = vld [vmem:[%s168 + $0x165] sm:$0xff]
        %v5504 = vld [vmem:[%s168 + $0x16d] sm:$0xff]
        %v5505 = vld [vmem:[%s168 + $0x175] sm:$0xff]
        %v5506 = vld [vmem:[%s168 + $0x17d] sm:$0xff]
        %v5507 = vld [vmem:[%s168 + $0x185] sm:$0xff]
        %v5508 = vld [vmem:[%s168 + $0x18d] sm:$0xff]
        %v5509 = vld [vmem:[%s168 + $0x195] sm:$0xff]
        %v5510 = vld [vmem:[%s168 + $0x19d] sm:$0xff]
        %v5511 = vld [vmem:[%s168 + $0x1a5] sm:$0xff]
        %v5512 = vld [vmem:[%s168 + $0x1ad] sm:$0xff]
        %v5513 = vld [vmem:[%s168 + $0x1b5] sm:$0xff]
        %v5514 = vld [vmem:[%s168 + $0x1bd] sm:$0xff]
        %v5515 = vld [vmem:[%s168 + $0x1c5] sm:$0xff]
        %v5516 = vld [vmem:[%s168 + $0x1cd] sm:$0x3]
        %s5517 = scalar_lea.vmem %s1, 36
        %v5518 = vld [vmem:[%s5517] sm:$0xf]
        %v5520 = vsel %vm278, %v5464, 0
        %v5523 = vsel %vm278, %v5465, 0
        %v5526 = vsel %vm278, %v5466, 0
        %v5529 = vsel %vm278, %v5467, 0
        %v5532 = vsel %vm278, %v5468, 0
        %v5535 = vsel %vm278, %v5469, 0
        %v5538 = vsel %vm278, %v5470, 0
        %v5541 = vsel %vm278, %v5471, 0
        %v5544 = vsel %vm278, %v5472, 0
        %v5547 = vsel %vm278, %v5473, 0
        %v5550 = vsel %vm278, %v5474, 0
        %v5553 = vsel %vm278, %v5475, 0
        %v5556 = vsel %vm278, %v5476, 0
        %v5559 = vsel %vm278, %v5477, 0
        %v5562 = vsel %vm278, %v5478, 0
        %v5565 = vsel %vm278, %v5479, 0
        %v5568 = vsel %vm278, %v5480, 0
        %v5571 = vsel %vm278, %v5481, 0
        %v5574 = vsel %vm278, %v5482, 0
        %v5577 = vsel %vm278, %v5483, 0
        %v5580 = vsel %vm278, %v5484, 0
        %v5583 = vsel %vm278, %v5485, 0
        %v5586 = vsel %vm278, %v5486, 0
        %v5589 = vsel %vm278, %v5487, 0
        %v5592 = vsel %vm278, %v5488, 0
        %v5595 = vsel %vm278, %v5489, 0
        %v5598 = vsel %vm278, %v5490, 0
        %v5601 = vsel %vm278, %v5491, 0
        %v5604 = vsel %vm278, %v5492, 0
        %v5607 = vsel %vm278, %v5493, 0
        %v5610 = vsel %vm278, %v5494, 0
        %v5613 = vsel %vm278, %v5495, 0
        %v5616 = vsel %vm278, %v5496, 0
        %v5619 = vsel %vm278, %v5497, 0
        %v5622 = vsel %vm278, %v5498, 0
        %v5625 = vsel %vm278, %v5499, 0
        %v5628 = vsel %vm278, %v5500, 0
        %v5631 = vsel %vm278, %v5501, 0
        %v5634 = vsel %vm278, %v5502, 0
        %v5637 = vsel %vm278, %v5503, 0
        %v5640 = vsel %vm278, %v5504, 0
        %v5643 = vsel %vm278, %v5505, 0
        %v5646 = vsel %vm278, %v5506, 0
        %v5649 = vsel %vm278, %v5507, 0
        %v5652 = vsel %vm278, %v5508, 0
        %v5655 = vsel %vm278, %v5509, 0
        %v5658 = vsel %vm278, %v5510, 0
        %v5661 = vsel %vm278, %v5511, 0
        %v5664 = vsel %vm278, %v5512, 0
        %v5667 = vsel %vm278, %v5513, 0
        %v5670 = vsel %vm278, %v5514, 0
        %v5673 = vsel %vm278, %v5515, 0
        %v5676 = vsel %vm278, %v5516, 0
        %v5679 = vsel %vm438, %v5518, 0
        %5681 = vmatprep.subr.mxu0 0.0
        %5682 = vmatpush1.msra.mxu0 0.0
        %5683 = vmatprep.subr.mxu0 0.0
        %5684 = vmatpush1.msra.mxu0 0.0
        %5685 = vmatprep.subr.mxu0 0.0
        %5686 = vmatpush1.msra.mxu0 0.0
        %5687 = vmatprep.subr.mxu0 0.0
        %5688 = vmatpush1.msra.mxu0 0.0
        %5689 = vmatprep.subr.mxu0 0.0
        %5690 = vmatpush1.msra.mxu0 0.0
        %5691 = vmatprep.subr.mxu0 0.0
        %5692 = vmatpush1.msra.mxu0 0.0
        %5693 = vmatprep.subr.mxu0 0.0
        %5694 = vmatpush1.msra.mxu0 0.0
        %5695 = vmatprep.subr.mxu0 0.0
        %5696 = vmatpush1.msra.mxu0 0.0
        %5697 = vmatprep.subr.mxu0 0.0
        %5698 = vmatpush1.msra.mxu0 0.0
        %5699 = vmatprep.subr.mxu0 0.0
        %5700 = vmatpush1.msra.mxu0 0.0
        %5701 = vmatprep.subr.mxu0 0.0
        %5702 = vmatpush1.msra.mxu0 0.0
        %5703 = vmatprep.subr.mxu0 0.0
        %5704 = vmatpush1.msra.mxu0 0.0
        %5705 = vmatprep.subr.mxu0 0.0
        %5706 = vmatpush1.msra.mxu0 0.0
        %5707 = vmatprep.subr.mxu0 0.0
        %5708 = vmatpush1.msra.mxu0 0.0
        %5709 = vmatprep.subr.mxu0 0.0
        %5710 = vmatpush1.msra.mxu0 0.0
        %5711 = vmatprep.subr.mxu0 0.0
        %5712 = vmatpush1.msra.mxu0 %v5679
        %5713 = vmatprep.subr.mxu0 0.0
        %5714 = vmatpush2.msra.mxu0 0.0
        %5715 = vmatprep.subr.mxu0 0.0
        %5716 = vmatpush2.msra.mxu0 0.0
        %5717 = vmatprep.subr.mxu0 0.0
        %5718 = vmatpush2.msra.mxu0 0.0
        %5719 = vmatprep.subr.mxu0 0.0
        %5720 = vmatpush2.msra.mxu0 0.0
        %5721 = vmatprep.subr.mxu0 0.0
        %5722 = vmatpush2.msra.mxu0 0.0
        %5723 = vmatprep.subr.mxu0 0.0
        %5724 = vmatpush2.msra.mxu0 0.0
        %5725 = vmatprep.subr.mxu0 0.0
        %5726 = vmatpush2.msra.mxu0 0.0
        %5727 = vmatprep.subr.mxu0 0.0
        %5728 = vmatpush2.msra.mxu0 0.0
        %5729 = vmatprep.subr.mxu0 0.0
        %5730 = vmatpush2.msra.mxu0 0.0
        %5731 = vmatprep.subr.mxu0 0.0
        %5732 = vmatpush2.msra.mxu0 0.0
        %5733 = vmatprep.subr.mxu0 0.0
        %5734 = vmatpush2.msra.mxu0 0.0
        %5735 = vmatprep.subr.mxu0 0.0
        %5736 = vmatpush2.msra.mxu0 0.0
        %5737 = vmatprep.subr.mxu0 0.0
        %5738 = vmatpush2.msra.mxu0 0.0
        %5739 = vmatprep.subr.mxu0 0.0
        %5740 = vmatpush2.msra.mxu0 0.0
        %5741 = vmatprep.subr.mxu0 0.0
        %5742 = vmatpush2.msra.mxu0 0.0
        %5743 = vmatprep.subr.mxu0 0.0
        %5744 = vmatpush2.msra.mxu0 0.0
        %5745 = vmatprep.mubr.f32.mxu0 0.0
        %5746 = vmatmul.mubr.f32.gmra.mxu0 %v5520
        %v5747 = vpop.f32.mrf.mxu0
        %v5748 = vadd.f32 0.0, %v5747
        %v5749 = vpop.f32.mrf.mxu0
        %5750 = vmatprep.mubr.f32.mxu0 0.0
        %5751 = vmatmul.mubr.f32.gmra.mxu0 %v5523
        %v5752 = vpop.f32.mrf.mxu0
        %v5753 = vadd.f32 0.0, %v5752
        %v5754 = vpop.f32.mrf.mxu0
        %5755 = vmatprep.mubr.f32.mxu0 0.0
        %5756 = vmatmul.mubr.f32.gmra.mxu0 %v5526
        %v5757 = vpop.f32.mrf.mxu0
        %v5758 = vadd.f32 0.0, %v5757
        %v5759 = vpop.f32.mrf.mxu0
        %5760 = vmatprep.mubr.f32.mxu0 0.0
        %5761 = vmatmul.mubr.f32.gmra.mxu0 %v5529
        %v5762 = vpop.f32.mrf.mxu0
        %v5763 = vadd.f32 0.0, %v5762
        %v5764 = vpop.f32.mrf.mxu0
        %5765 = vmatprep.mubr.f32.mxu0 0.0
        %5766 = vmatmul.mubr.f32.gmra.mxu0 %v5532
        %v5767 = vpop.f32.mrf.mxu0
        %v5768 = vadd.f32 0.0, %v5767
        %v5769 = vpop.f32.mrf.mxu0
        %5770 = vmatprep.mubr.f32.mxu0 0.0
        %5771 = vmatmul.mubr.f32.gmra.mxu0 %v5535
        %v5772 = vpop.f32.mrf.mxu0
        %v5773 = vadd.f32 0.0, %v5772
        %v5774 = vpop.f32.mrf.mxu0
        %5775 = vmatprep.mubr.f32.mxu0 0.0
        %5776 = vmatmul.mubr.f32.gmra.mxu0 %v5538
        %v5777 = vpop.f32.mrf.mxu0
        %v5778 = vadd.f32 0.0, %v5777
        %v5779 = vpop.f32.mrf.mxu0
        %5780 = vmatprep.mubr.f32.mxu0 0.0
        %5781 = vmatmul.mubr.f32.gmra.mxu0 %v5541
        %v5782 = vpop.f32.mrf.mxu0
        %v5783 = vadd.f32 0.0, %v5782
        %v5784 = vpop.f32.mrf.mxu0
        %5785 = vmatprep.mubr.f32.mxu0 0.0
        %5786 = vmatmul.mubr.f32.gmra.mxu0 %v5544
        %v5787 = vpop.f32.mrf.mxu0
        %v5788 = vadd.f32 0.0, %v5787
        %v5789 = vpop.f32.mrf.mxu0
        %5790 = vmatprep.mubr.f32.mxu0 0.0
        %5791 = vmatmul.mubr.f32.gmra.mxu0 %v5547
        %v5792 = vpop.f32.mrf.mxu0
        %v5793 = vadd.f32 0.0, %v5792
        %v5794 = vpop.f32.mrf.mxu0
        %5795 = vmatprep.mubr.f32.mxu0 0.0
        %5796 = vmatmul.mubr.f32.gmra.mxu0 %v5550
        %v5797 = vpop.f32.mrf.mxu0
        %v5798 = vadd.f32 0.0, %v5797
        %v5799 = vpop.f32.mrf.mxu0
        %5800 = vmatprep.mubr.f32.mxu0 0.0
        %5801 = vmatmul.mubr.f32.gmra.mxu0 %v5553
        %v5802 = vpop.f32.mrf.mxu0
        %v5803 = vadd.f32 0.0, %v5802
        %v5804 = vpop.f32.mrf.mxu0
        %5805 = vmatprep.mubr.f32.mxu0 0.0
        %5806 = vmatmul.mubr.f32.gmra.mxu0 %v5556
        %v5807 = vpop.f32.mrf.mxu0
        %v5808 = vadd.f32 0.0, %v5807
        %v5809 = vpop.f32.mrf.mxu0
        %5810 = vmatprep.mubr.f32.mxu0 0.0
        %5811 = vmatmul.mubr.f32.gmra.mxu0 %v5559
        %v5812 = vpop.f32.mrf.mxu0
        %v5813 = vadd.f32 0.0, %v5812
        %v5814 = vpop.f32.mrf.mxu0
        %5815 = vmatprep.mubr.f32.mxu0 0.0
        %5816 = vmatmul.mubr.f32.gmra.mxu0 %v5562
        %v5817 = vpop.f32.mrf.mxu0
        %v5818 = vadd.f32 0.0, %v5817
        %v5819 = vpop.f32.mrf.mxu0
        %5820 = vmatprep.mubr.f32.mxu0 0.0
        %5821 = vmatmul.mubr.f32.gmra.mxu0 %v5565
        %v5822 = vpop.f32.mrf.mxu0
        %v5823 = vadd.f32 0.0, %v5822
        %v5824 = vpop.f32.mrf.mxu0
        %5825 = vmatprep.mubr.f32.mxu0 0.0
        %5826 = vmatmul.mubr.f32.gmra.mxu0 %v5568
        %v5827 = vpop.f32.mrf.mxu0
        %v5828 = vadd.f32 0.0, %v5827
        %v5829 = vpop.f32.mrf.mxu0
        %5830 = vmatprep.mubr.f32.mxu0 0.0
        %5831 = vmatmul.mubr.f32.gmra.mxu0 %v5571
        %v5832 = vpop.f32.mrf.mxu0
        %v5833 = vadd.f32 0.0, %v5832
        %v5834 = vpop.f32.mrf.mxu0
        %5835 = vmatprep.mubr.f32.mxu0 0.0
        %5836 = vmatmul.mubr.f32.gmra.mxu0 %v5574
        %v5837 = vpop.f32.mrf.mxu0
        %v5838 = vadd.f32 0.0, %v5837
        %v5839 = vpop.f32.mrf.mxu0
        %5840 = vmatprep.mubr.f32.mxu0 0.0
        %5841 = vmatmul.mubr.f32.gmra.mxu0 %v5577
        %v5842 = vpop.f32.mrf.mxu0
        %v5843 = vadd.f32 0.0, %v5842
        %v5844 = vpop.f32.mrf.mxu0
        %5845 = vmatprep.mubr.f32.mxu0 0.0
        %5846 = vmatmul.mubr.f32.gmra.mxu0 %v5580
        %v5847 = vpop.f32.mrf.mxu0
        %v5848 = vadd.f32 0.0, %v5847
        %v5849 = vpop.f32.mrf.mxu0
        %5850 = vmatprep.mubr.f32.mxu0 0.0
        %5851 = vmatmul.mubr.f32.gmra.mxu0 %v5583
        %v5852 = vpop.f32.mrf.mxu0
        %v5853 = vadd.f32 0.0, %v5852
        %v5854 = vpop.f32.mrf.mxu0
        %5855 = vmatprep.mubr.f32.mxu0 0.0
        %5856 = vmatmul.mubr.f32.gmra.mxu0 %v5586
        %v5857 = vpop.f32.mrf.mxu0
        %v5858 = vadd.f32 0.0, %v5857
        %v5859 = vpop.f32.mrf.mxu0
        %5860 = vmatprep.mubr.f32.mxu0 0.0
        %5861 = vmatmul.mubr.f32.gmra.mxu0 %v5589
        %v5862 = vpop.f32.mrf.mxu0
        %v5863 = vadd.f32 0.0, %v5862
        %v5864 = vpop.f32.mrf.mxu0
        %5865 = vmatprep.mubr.f32.mxu0 0.0
        %5866 = vmatmul.mubr.f32.gmra.mxu0 %v5592
        %v5867 = vpop.f32.mrf.mxu0
        %v5868 = vadd.f32 0.0, %v5867
        %v5869 = vpop.f32.mrf.mxu0
        %5870 = vmatprep.mubr.f32.mxu0 0.0
        %5871 = vmatmul.mubr.f32.gmra.mxu0 %v5595
        %v5872 = vpop.f32.mrf.mxu0
        %v5873 = vadd.f32 0.0, %v5872
        %v5874 = vpop.f32.mrf.mxu0
        %5875 = vmatprep.mubr.f32.mxu0 0.0
        %5876 = vmatmul.mubr.f32.gmra.mxu0 %v5598
        %v5877 = vpop.f32.mrf.mxu0
        %v5878 = vadd.f32 0.0, %v5877
        %v5879 = vpop.f32.mrf.mxu0
        %5880 = vmatprep.mubr.f32.mxu0 0.0
        %5881 = vmatmul.mubr.f32.gmra.mxu0 %v5601
        %v5882 = vpop.f32.mrf.mxu0
        %v5883 = vadd.f32 0.0, %v5882
        %v5884 = vpop.f32.mrf.mxu0
        %5885 = vmatprep.mubr.f32.mxu0 0.0
        %5886 = vmatmul.mubr.f32.gmra.mxu0 %v5604
        %v5887 = vpop.f32.mrf.mxu0
        %v5888 = vadd.f32 0.0, %v5887
        %v5889 = vpop.f32.mrf.mxu0
        %5890 = vmatprep.mubr.f32.mxu0 0.0
        %5891 = vmatmul.mubr.f32.gmra.mxu0 %v5607
        %v5892 = vpop.f32.mrf.mxu0
        %v5893 = vadd.f32 0.0, %v5892
        %v5894 = vpop.f32.mrf.mxu0
        %5895 = vmatprep.mubr.f32.mxu0 0.0
        %5896 = vmatmul.mubr.f32.gmra.mxu0 %v5610
        %v5897 = vpop.f32.mrf.mxu0
        %v5898 = vadd.f32 0.0, %v5897
        %v5899 = vpop.f32.mrf.mxu0
        %5900 = vmatprep.mubr.f32.mxu0 0.0
        %5901 = vmatmul.mubr.f32.gmra.mxu0 %v5613
        %v5902 = vpop.f32.mrf.mxu0
        %v5903 = vadd.f32 0.0, %v5902
        %v5904 = vpop.f32.mrf.mxu0
        %5905 = vmatprep.mubr.f32.mxu0 0.0
        %5906 = vmatmul.mubr.f32.gmra.mxu0 %v5616
        %v5907 = vpop.f32.mrf.mxu0
        %v5908 = vadd.f32 0.0, %v5907
        %v5909 = vpop.f32.mrf.mxu0
        %5910 = vmatprep.mubr.f32.mxu0 0.0
        %5911 = vmatmul.mubr.f32.gmra.mxu0 %v5619
        %v5912 = vpop.f32.mrf.mxu0
        %v5913 = vadd.f32 0.0, %v5912
        %v5914 = vpop.f32.mrf.mxu0
        %5915 = vmatprep.mubr.f32.mxu0 0.0
        %5916 = vmatmul.mubr.f32.gmra.mxu0 %v5622
        %v5917 = vpop.f32.mrf.mxu0
        %v5918 = vadd.f32 0.0, %v5917
        %v5919 = vpop.f32.mrf.mxu0
        %5920 = vmatprep.mubr.f32.mxu0 0.0
        %5921 = vmatmul.mubr.f32.gmra.mxu0 %v5625
        %v5922 = vpop.f32.mrf.mxu0
        %v5923 = vadd.f32 0.0, %v5922
        %v5924 = vpop.f32.mrf.mxu0
        %5925 = vmatprep.mubr.f32.mxu0 0.0
        %5926 = vmatmul.mubr.f32.gmra.mxu0 %v5628
        %v5927 = vpop.f32.mrf.mxu0
        %v5928 = vadd.f32 0.0, %v5927
        %v5929 = vpop.f32.mrf.mxu0
        %5930 = vmatprep.mubr.f32.mxu0 0.0
        %5931 = vmatmul.mubr.f32.gmra.mxu0 %v5631
        %v5932 = vpop.f32.mrf.mxu0
        %v5933 = vadd.f32 0.0, %v5932
        %v5934 = vpop.f32.mrf.mxu0
        %5935 = vmatprep.mubr.f32.mxu0 0.0
        %5936 = vmatmul.mubr.f32.gmra.mxu0 %v5634
        %v5937 = vpop.f32.mrf.mxu0
        %v5938 = vadd.f32 0.0, %v5937
        %v5939 = vpop.f32.mrf.mxu0
        %5940 = vmatprep.mubr.f32.mxu0 0.0
        %5941 = vmatmul.mubr.f32.gmra.mxu0 %v5637
        %v5942 = vpop.f32.mrf.mxu0
        %v5943 = vadd.f32 0.0, %v5942
        %v5944 = vpop.f32.mrf.mxu0
        %5945 = vmatprep.mubr.f32.mxu0 0.0
        %5946 = vmatmul.mubr.f32.gmra.mxu0 %v5640
        %v5947 = vpop.f32.mrf.mxu0
        %v5948 = vadd.f32 0.0, %v5947
        %v5949 = vpop.f32.mrf.mxu0
        %5950 = vmatprep.mubr.f32.mxu0 0.0
        %5951 = vmatmul.mubr.f32.gmra.mxu0 %v5643
        %v5952 = vpop.f32.mrf.mxu0
        %v5953 = vadd.f32 0.0, %v5952
        %v5954 = vpop.f32.mrf.mxu0
        %5955 = vmatprep.mubr.f32.mxu0 0.0
        %5956 = vmatmul.mubr.f32.gmra.mxu0 %v5646
        %v5957 = vpop.f32.mrf.mxu0
        %v5958 = vadd.f32 0.0, %v5957
        %v5959 = vpop.f32.mrf.mxu0
        %5960 = vmatprep.mubr.f32.mxu0 0.0
        %5961 = vmatmul.mubr.f32.gmra.mxu0 %v5649
        %v5962 = vpop.f32.mrf.mxu0
        %v5963 = vadd.f32 0.0, %v5962
        %v5964 = vpop.f32.mrf.mxu0
        %5965 = vmatprep.mubr.f32.mxu0 0.0
        %5966 = vmatmul.mubr.f32.gmra.mxu0 %v5652
        %v5967 = vpop.f32.mrf.mxu0
        %v5968 = vadd.f32 0.0, %v5967
        %v5969 = vpop.f32.mrf.mxu0
        %5970 = vmatprep.mubr.f32.mxu0 0.0
        %5971 = vmatmul.mubr.f32.gmra.mxu0 %v5655
        %v5972 = vpop.f32.mrf.mxu0
        %v5973 = vadd.f32 0.0, %v5972
        %v5974 = vpop.f32.mrf.mxu0
        %5975 = vmatprep.mubr.f32.mxu0 0.0
        %5976 = vmatmul.mubr.f32.gmra.mxu0 %v5658
        %v5977 = vpop.f32.mrf.mxu0
        %v5978 = vadd.f32 0.0, %v5977
        %v5979 = vpop.f32.mrf.mxu0
        %5980 = vmatprep.mubr.f32.mxu0 0.0
        %5981 = vmatmul.mubr.f32.gmra.mxu0 %v5661
        %v5982 = vpop.f32.mrf.mxu0
        %v5983 = vadd.f32 0.0, %v5982
        %v5984 = vpop.f32.mrf.mxu0
        %5985 = vmatprep.mubr.f32.mxu0 0.0
        %5986 = vmatmul.mubr.f32.gmra.mxu0 %v5664
        %v5987 = vpop.f32.mrf.mxu0
        %v5988 = vadd.f32 0.0, %v5987
        %v5989 = vpop.f32.mrf.mxu0
        %5990 = vmatprep.mubr.f32.mxu0 0.0
        %5991 = vmatmul.mubr.f32.gmra.mxu0 %v5667
        %v5992 = vpop.f32.mrf.mxu0
        %v5993 = vadd.f32 0.0, %v5992
        %v5994 = vpop.f32.mrf.mxu0
        %5995 = vmatprep.mubr.f32.mxu0 0.0
        %5996 = vmatmul.mubr.f32.gmra.mxu0 %v5670
        %v5997 = vpop.f32.mrf.mxu0
        %v5998 = vadd.f32 0.0, %v5997
        %v5999 = vpop.f32.mrf.mxu0
        %6000 = vmatprep.mubr.f32.mxu0 0.0
        %6001 = vmatmul.mubr.f32.gmra.mxu0 %v5673
        %v6002 = vpop.f32.mrf.mxu0
        %v6003 = vadd.f32 0.0, %v6002
        %v6004 = vpop.f32.mrf.mxu0
        %6005 = vmatprep.mubr.f32.mxu0 0.0
        %6006 = vmatmul.mubr.f32.gmra.mxu0 %v5676
        %v6007 = vpop.f32.mrf.mxu0
        %v6008 = vadd.f32 0.0, %v6007
        %v6009 = vpop.f32.mrf.mxu0
        %6010 = vdwg.mxu0
        %v6011 = vadd.f32 %v5411, %v5748
        %v6012 = vadd.f32 %v5412, %v5753
        %v6013 = vadd.f32 %v5413, %v5758
        %v6014 = vadd.f32 %v5414, %v5763
        %v6015 = vadd.f32 %v5415, %v5768
        %v6016 = vadd.f32 %v5416, %v5773
        %v6017 = vadd.f32 %v5417, %v5778
        %v6018 = vadd.f32 %v5418, %v5783
        %v6019 = vadd.f32 %v5419, %v5788
        %v6020 = vadd.f32 %v5420, %v5793
        %v6021 = vadd.f32 %v5421, %v5798
        %v6022 = vadd.f32 %v5422, %v5803
        %v6023 = vadd.f32 %v5423, %v5808
        %v6024 = vadd.f32 %v5424, %v5813
        %v6025 = vadd.f32 %v5425, %v5818
        %v6026 = vadd.f32 %v5426, %v5823
        %v6027 = vadd.f32 %v5427, %v5828
        %v6028 = vadd.f32 %v5428, %v5833
        %v6029 = vadd.f32 %v5429, %v5838
        %v6030 = vadd.f32 %v5430, %v5843
        %v6031 = vadd.f32 %v5431, %v5848
        %v6032 = vadd.f32 %v5432, %v5853
        %v6033 = vadd.f32 %v5433, %v5858
        %v6034 = vadd.f32 %v5434, %v5863
        %v6035 = vadd.f32 %v5435, %v5868
        %v6036 = vadd.f32 %v5436, %v5873
        %v6037 = vadd.f32 %v5437, %v5878
        %v6038 = vadd.f32 %v5438, %v5883
        %v6039 = vadd.f32 %v5439, %v5888
        %v6040 = vadd.f32 %v5440, %v5893
        %v6041 = vadd.f32 %v5441, %v5898
        %v6042 = vadd.f32 %v5442, %v5903
        %v6043 = vadd.f32 %v5443, %v5908
        %v6044 = vadd.f32 %v5444, %v5913
        %v6045 = vadd.f32 %v5445, %v5918
        %v6046 = vadd.f32 %v5446, %v5923
        %v6047 = vadd.f32 %v5447, %v5928
        %v6048 = vadd.f32 %v5448, %v5933
        %v6049 = vadd.f32 %v5449, %v5938
        %v6050 = vadd.f32 %v5450, %v5943
        %v6051 = vadd.f32 %v5451, %v5948
        %v6052 = vadd.f32 %v5452, %v5953
        %v6053 = vadd.f32 %v5453, %v5958
        %v6054 = vadd.f32 %v5454, %v5963
        %v6055 = vadd.f32 %v5455, %v5968
        %v6056 = vadd.f32 %v5456, %v5973
        %v6057 = vadd.f32 %v5457, %v5978
        %v6058 = vadd.f32 %v5458, %v5983
        %v6059 = vadd.f32 %v5459, %v5988
        %v6060 = vadd.f32 %v5460, %v5993
        %v6061 = vadd.f32 %v5461, %v5998
        %v6062 = vadd.f32 %v5462, %v6003
        %v6063 = vadd.f32 %v5463, %v6008
        %v6064 = vld [vmem:[%s168 + $0x2e] sm:$0xff]
        %v6065 = vld [vmem:[%s168 + $0x36] sm:$0xff]
        %v6066 = vld [vmem:[%s168 + $0x3e] sm:$0xff]
        %v6067 = vld [vmem:[%s168 + $0x46] sm:$0xff]
        %v6068 = vld [vmem:[%s168 + $0x4e] sm:$0xff]
        %v6069 = vld [vmem:[%s168 + $0x56] sm:$0xff]
        %v6070 = vld [vmem:[%s168 + $0x5e] sm:$0xff]
        %v6071 = vld [vmem:[%s168 + $0x66] sm:$0xff]
        %v6072 = vld [vmem:[%s168 + $0x6e] sm:$0xff]
        %v6073 = vld [vmem:[%s168 + $0x76] sm:$0xff]
        %v6074 = vld [vmem:[%s168 + $0x7e] sm:$0xff]
        %v6075 = vld [vmem:[%s168 + $0x86] sm:$0xff]
        %v6076 = vld [vmem:[%s168 + $0x8e] sm:$0xff]
        %v6077 = vld [vmem:[%s168 + $0x96] sm:$0xff]
        %v6078 = vld [vmem:[%s168 + $0x9e] sm:$0xff]
        %v6079 = vld [vmem:[%s168 + $0xa6] sm:$0xff]
        %v6080 = vld [vmem:[%s168 + $0xae] sm:$0xff]
        %v6081 = vld [vmem:[%s168 + $0xb6] sm:$0xff]
        %v6082 = vld [vmem:[%s168 + $0xbe] sm:$0xff]
        %v6083 = vld [vmem:[%s168 + $0xc6] sm:$0xff]
        %v6084 = vld [vmem:[%s168 + $0xce] sm:$0xff]
        %v6085 = vld [vmem:[%s168 + $0xd6] sm:$0xff]
        %v6086 = vld [vmem:[%s168 + $0xde] sm:$0xff]
        %v6087 = vld [vmem:[%s168 + $0xe6] sm:$0xff]
        %v6088 = vld [vmem:[%s168 + $0xee] sm:$0xff]
        %v6089 = vld [vmem:[%s168 + $0xf6] sm:$0xff]
        %v6090 = vld [vmem:[%s168 + $0xfe] sm:$0xff]
        %v6091 = vld [vmem:[%s168 + $0x106] sm:$0xff]
        %v6092 = vld [vmem:[%s168 + $0x10e] sm:$0xff]
        %v6093 = vld [vmem:[%s168 + $0x116] sm:$0xff]
        %v6094 = vld [vmem:[%s168 + $0x11e] sm:$0xff]
        %v6095 = vld [vmem:[%s168 + $0x126] sm:$0xff]
        %v6096 = vld [vmem:[%s168 + $0x12e] sm:$0xff]
        %v6097 = vld [vmem:[%s168 + $0x136] sm:$0xff]
        %v6098 = vld [vmem:[%s168 + $0x13e] sm:$0xff]
        %v6099 = vld [vmem:[%s168 + $0x146] sm:$0xff]
        %v6100 = vld [vmem:[%s168 + $0x14e] sm:$0xff]
        %v6101 = vld [vmem:[%s168 + $0x156] sm:$0xff]
        %v6102 = vld [vmem:[%s168 + $0x15e] sm:$0xff]
        %v6103 = vld [vmem:[%s168 + $0x166] sm:$0xff]
        %v6104 = vld [vmem:[%s168 + $0x16e] sm:$0xff]
        %v6105 = vld [vmem:[%s168 + $0x176] sm:$0xff]
        %v6106 = vld [vmem:[%s168 + $0x17e] sm:$0xff]
        %v6107 = vld [vmem:[%s168 + $0x186] sm:$0xff]
        %v6108 = vld [vmem:[%s168 + $0x18e] sm:$0xff]
        %v6109 = vld [vmem:[%s168 + $0x196] sm:$0xff]
        %v6110 = vld [vmem:[%s168 + $0x19e] sm:$0xff]
        %v6111 = vld [vmem:[%s168 + $0x1a6] sm:$0xff]
        %v6112 = vld [vmem:[%s168 + $0x1ae] sm:$0xff]
        %v6113 = vld [vmem:[%s168 + $0x1b6] sm:$0xff]
        %v6114 = vld [vmem:[%s168 + $0x1be] sm:$0xff]
        %v6115 = vld [vmem:[%s168 + $0x1c6] sm:$0xff]
        %v6116 = vld [vmem:[%s168 + $0x1ce] sm:$0x3]
        %s6117 = scalar_lea.vmem %s1, 40
        %v6118 = vld [vmem:[%s6117] sm:$0xf]
        %v6120 = vsel %vm278, %v6064, 0
        %v6123 = vsel %vm278, %v6065, 0
        %v6126 = vsel %vm278, %v6066, 0
        %v6129 = vsel %vm278, %v6067, 0
        %v6132 = vsel %vm278, %v6068, 0
        %v6135 = vsel %vm278, %v6069, 0
        %v6138 = vsel %vm278, %v6070, 0
        %v6141 = vsel %vm278, %v6071, 0
        %v6144 = vsel %vm278, %v6072, 0
        %v6147 = vsel %vm278, %v6073, 0
        %v6150 = vsel %vm278, %v6074, 0
        %v6153 = vsel %vm278, %v6075, 0
        %v6156 = vsel %vm278, %v6076, 0
        %v6159 = vsel %vm278, %v6077, 0
        %v6162 = vsel %vm278, %v6078, 0
        %v6165 = vsel %vm278, %v6079, 0
        %v6168 = vsel %vm278, %v6080, 0
        %v6171 = vsel %vm278, %v6081, 0
        %v6174 = vsel %vm278, %v6082, 0
        %v6177 = vsel %vm278, %v6083, 0
        %v6180 = vsel %vm278, %v6084, 0
        %v6183 = vsel %vm278, %v6085, 0
        %v6186 = vsel %vm278, %v6086, 0
        %v6189 = vsel %vm278, %v6087, 0
        %v6192 = vsel %vm278, %v6088, 0
        %v6195 = vsel %vm278, %v6089, 0
        %v6198 = vsel %vm278, %v6090, 0
        %v6201 = vsel %vm278, %v6091, 0
        %v6204 = vsel %vm278, %v6092, 0
        %v6207 = vsel %vm278, %v6093, 0
        %v6210 = vsel %vm278, %v6094, 0
        %v6213 = vsel %vm278, %v6095, 0
        %v6216 = vsel %vm278, %v6096, 0
        %v6219 = vsel %vm278, %v6097, 0
        %v6222 = vsel %vm278, %v6098, 0
        %v6225 = vsel %vm278, %v6099, 0
        %v6228 = vsel %vm278, %v6100, 0
        %v6231 = vsel %vm278, %v6101, 0
        %v6234 = vsel %vm278, %v6102, 0
        %v6237 = vsel %vm278, %v6103, 0
        %v6240 = vsel %vm278, %v6104, 0
        %v6243 = vsel %vm278, %v6105, 0
        %v6246 = vsel %vm278, %v6106, 0
        %v6249 = vsel %vm278, %v6107, 0
        %v6252 = vsel %vm278, %v6108, 0
        %v6255 = vsel %vm278, %v6109, 0
        %v6258 = vsel %vm278, %v6110, 0
        %v6261 = vsel %vm278, %v6111, 0
        %v6264 = vsel %vm278, %v6112, 0
        %v6267 = vsel %vm278, %v6113, 0
        %v6270 = vsel %vm278, %v6114, 0
        %v6273 = vsel %vm278, %v6115, 0
        %v6276 = vsel %vm278, %v6116, 0
        %v6279 = vsel %vm438, %v6118, 0
        %6281 = vmatprep.subr.mxu0 0.0
        %6282 = vmatpush1.msra.mxu0 0.0
        %6283 = vmatprep.subr.mxu0 0.0
        %6284 = vmatpush1.msra.mxu0 0.0
        %6285 = vmatprep.subr.mxu0 0.0
        %6286 = vmatpush1.msra.mxu0 0.0
        %6287 = vmatprep.subr.mxu0 0.0
        %6288 = vmatpush1.msra.mxu0 0.0
        %6289 = vmatprep.subr.mxu0 0.0
        %6290 = vmatpush1.msra.mxu0 0.0
        %6291 = vmatprep.subr.mxu0 0.0
        %6292 = vmatpush1.msra.mxu0 0.0
        %6293 = vmatprep.subr.mxu0 0.0
        %6294 = vmatpush1.msra.mxu0 0.0
        %6295 = vmatprep.subr.mxu0 0.0
        %6296 = vmatpush1.msra.mxu0 0.0
        %6297 = vmatprep.subr.mxu0 0.0
        %6298 = vmatpush1.msra.mxu0 0.0
        %6299 = vmatprep.subr.mxu0 0.0
        %6300 = vmatpush1.msra.mxu0 0.0
        %6301 = vmatprep.subr.mxu0 0.0
        %6302 = vmatpush1.msra.mxu0 0.0
        %6303 = vmatprep.subr.mxu0 0.0
        %6304 = vmatpush1.msra.mxu0 0.0
        %6305 = vmatprep.subr.mxu0 0.0
        %6306 = vmatpush1.msra.mxu0 0.0
        %6307 = vmatprep.subr.mxu0 0.0
        %6308 = vmatpush1.msra.mxu0 0.0
        %6309 = vmatprep.subr.mxu0 0.0
        %6310 = vmatpush1.msra.mxu0 0.0
        %6311 = vmatprep.subr.mxu0 0.0
        %6312 = vmatpush1.msra.mxu0 %v6279
        %6313 = vmatprep.subr.mxu0 0.0
        %6314 = vmatpush2.msra.mxu0 0.0
        %6315 = vmatprep.subr.mxu0 0.0
        %6316 = vmatpush2.msra.mxu0 0.0
        %6317 = vmatprep.subr.mxu0 0.0
        %6318 = vmatpush2.msra.mxu0 0.0
        %6319 = vmatprep.subr.mxu0 0.0
        %6320 = vmatpush2.msra.mxu0 0.0
        %6321 = vmatprep.subr.mxu0 0.0
        %6322 = vmatpush2.msra.mxu0 0.0
        %6323 = vmatprep.subr.mxu0 0.0
        %6324 = vmatpush2.msra.mxu0 0.0
        %6325 = vmatprep.subr.mxu0 0.0
        %6326 = vmatpush2.msra.mxu0 0.0
        %6327 = vmatprep.subr.mxu0 0.0
        %6328 = vmatpush2.msra.mxu0 0.0
        %6329 = vmatprep.subr.mxu0 0.0
        %6330 = vmatpush2.msra.mxu0 0.0
        %6331 = vmatprep.subr.mxu0 0.0
        %6332 = vmatpush2.msra.mxu0 0.0
        %6333 = vmatprep.subr.mxu0 0.0
        %6334 = vmatpush2.msra.mxu0 0.0
        %6335 = vmatprep.subr.mxu0 0.0
        %6336 = vmatpush2.msra.mxu0 0.0
        %6337 = vmatprep.subr.mxu0 0.0
        %6338 = vmatpush2.msra.mxu0 0.0
        %6339 = vmatprep.subr.mxu0 0.0
        %6340 = vmatpush2.msra.mxu0 0.0
        %6341 = vmatprep.subr.mxu0 0.0
        %6342 = vmatpush2.msra.mxu0 0.0
        %6343 = vmatprep.subr.mxu0 0.0
        %6344 = vmatpush2.msra.mxu0 0.0
        %6345 = vmatprep.mubr.f32.mxu0 0.0
        %6346 = vmatmul.mubr.f32.gmra.mxu0 %v6120
        %v6347 = vpop.f32.mrf.mxu0
        %v6348 = vadd.f32 0.0, %v6347
        %v6349 = vpop.f32.mrf.mxu0
        %6350 = vmatprep.mubr.f32.mxu0 0.0
        %6351 = vmatmul.mubr.f32.gmra.mxu0 %v6123
        %v6352 = vpop.f32.mrf.mxu0
        %v6353 = vadd.f32 0.0, %v6352
        %v6354 = vpop.f32.mrf.mxu0
        %6355 = vmatprep.mubr.f32.mxu0 0.0
        %6356 = vmatmul.mubr.f32.gmra.mxu0 %v6126
        %v6357 = vpop.f32.mrf.mxu0
        %v6358 = vadd.f32 0.0, %v6357
        %v6359 = vpop.f32.mrf.mxu0
        %6360 = vmatprep.mubr.f32.mxu0 0.0
        %6361 = vmatmul.mubr.f32.gmra.mxu0 %v6129
        %v6362 = vpop.f32.mrf.mxu0
        %v6363 = vadd.f32 0.0, %v6362
        %v6364 = vpop.f32.mrf.mxu0
        %6365 = vmatprep.mubr.f32.mxu0 0.0
        %6366 = vmatmul.mubr.f32.gmra.mxu0 %v6132
        %v6367 = vpop.f32.mrf.mxu0
        %v6368 = vadd.f32 0.0, %v6367
        %v6369 = vpop.f32.mrf.mxu0
        %6370 = vmatprep.mubr.f32.mxu0 0.0
        %6371 = vmatmul.mubr.f32.gmra.mxu0 %v6135
        %v6372 = vpop.f32.mrf.mxu0
        %v6373 = vadd.f32 0.0, %v6372
        %v6374 = vpop.f32.mrf.mxu0
        %6375 = vmatprep.mubr.f32.mxu0 0.0
        %6376 = vmatmul.mubr.f32.gmra.mxu0 %v6138
        %v6377 = vpop.f32.mrf.mxu0
        %v6378 = vadd.f32 0.0, %v6377
        %v6379 = vpop.f32.mrf.mxu0
        %6380 = vmatprep.mubr.f32.mxu0 0.0
        %6381 = vmatmul.mubr.f32.gmra.mxu0 %v6141
        %v6382 = vpop.f32.mrf.mxu0
        %v6383 = vadd.f32 0.0, %v6382
        %v6384 = vpop.f32.mrf.mxu0
        %6385 = vmatprep.mubr.f32.mxu0 0.0
        %6386 = vmatmul.mubr.f32.gmra.mxu0 %v6144
        %v6387 = vpop.f32.mrf.mxu0
        %v6388 = vadd.f32 0.0, %v6387
        %v6389 = vpop.f32.mrf.mxu0
        %6390 = vmatprep.mubr.f32.mxu0 0.0
        %6391 = vmatmul.mubr.f32.gmra.mxu0 %v6147
        %v6392 = vpop.f32.mrf.mxu0
        %v6393 = vadd.f32 0.0, %v6392
        %v6394 = vpop.f32.mrf.mxu0
        %6395 = vmatprep.mubr.f32.mxu0 0.0
        %6396 = vmatmul.mubr.f32.gmra.mxu0 %v6150
        %v6397 = vpop.f32.mrf.mxu0
        %v6398 = vadd.f32 0.0, %v6397
        %v6399 = vpop.f32.mrf.mxu0
        %6400 = vmatprep.mubr.f32.mxu0 0.0
        %6401 = vmatmul.mubr.f32.gmra.mxu0 %v6153
        %v6402 = vpop.f32.mrf.mxu0
        %v6403 = vadd.f32 0.0, %v6402
        %v6404 = vpop.f32.mrf.mxu0
        %6405 = vmatprep.mubr.f32.mxu0 0.0
        %6406 = vmatmul.mubr.f32.gmra.mxu0 %v6156
        %v6407 = vpop.f32.mrf.mxu0
        %v6408 = vadd.f32 0.0, %v6407
        %v6409 = vpop.f32.mrf.mxu0
        %6410 = vmatprep.mubr.f32.mxu0 0.0
        %6411 = vmatmul.mubr.f32.gmra.mxu0 %v6159
        %v6412 = vpop.f32.mrf.mxu0
        %v6413 = vadd.f32 0.0, %v6412
        %v6414 = vpop.f32.mrf.mxu0
        %6415 = vmatprep.mubr.f32.mxu0 0.0
        %6416 = vmatmul.mubr.f32.gmra.mxu0 %v6162
        %v6417 = vpop.f32.mrf.mxu0
        %v6418 = vadd.f32 0.0, %v6417
        %v6419 = vpop.f32.mrf.mxu0
        %6420 = vmatprep.mubr.f32.mxu0 0.0
        %6421 = vmatmul.mubr.f32.gmra.mxu0 %v6165
        %v6422 = vpop.f32.mrf.mxu0
        %v6423 = vadd.f32 0.0, %v6422
        %v6424 = vpop.f32.mrf.mxu0
        %6425 = vmatprep.mubr.f32.mxu0 0.0
        %6426 = vmatmul.mubr.f32.gmra.mxu0 %v6168
        %v6427 = vpop.f32.mrf.mxu0
        %v6428 = vadd.f32 0.0, %v6427
        %v6429 = vpop.f32.mrf.mxu0
        %6430 = vmatprep.mubr.f32.mxu0 0.0
        %6431 = vmatmul.mubr.f32.gmra.mxu0 %v6171
        %v6432 = vpop.f32.mrf.mxu0
        %v6433 = vadd.f32 0.0, %v6432
        %v6434 = vpop.f32.mrf.mxu0
        %6435 = vmatprep.mubr.f32.mxu0 0.0
        %6436 = vmatmul.mubr.f32.gmra.mxu0 %v6174
        %v6437 = vpop.f32.mrf.mxu0
        %v6438 = vadd.f32 0.0, %v6437
        %v6439 = vpop.f32.mrf.mxu0
        %6440 = vmatprep.mubr.f32.mxu0 0.0
        %6441 = vmatmul.mubr.f32.gmra.mxu0 %v6177
        %v6442 = vpop.f32.mrf.mxu0
        %v6443 = vadd.f32 0.0, %v6442
        %v6444 = vpop.f32.mrf.mxu0
        %6445 = vmatprep.mubr.f32.mxu0 0.0
        %6446 = vmatmul.mubr.f32.gmra.mxu0 %v6180
        %v6447 = vpop.f32.mrf.mxu0
        %v6448 = vadd.f32 0.0, %v6447
        %v6449 = vpop.f32.mrf.mxu0
        %6450 = vmatprep.mubr.f32.mxu0 0.0
        %6451 = vmatmul.mubr.f32.gmra.mxu0 %v6183
        %v6452 = vpop.f32.mrf.mxu0
        %v6453 = vadd.f32 0.0, %v6452
        %v6454 = vpop.f32.mrf.mxu0
        %6455 = vmatprep.mubr.f32.mxu0 0.0
        %6456 = vmatmul.mubr.f32.gmra.mxu0 %v6186
        %v6457 = vpop.f32.mrf.mxu0
        %v6458 = vadd.f32 0.0, %v6457
        %v6459 = vpop.f32.mrf.mxu0
        %6460 = vmatprep.mubr.f32.mxu0 0.0
        %6461 = vmatmul.mubr.f32.gmra.mxu0 %v6189
        %v6462 = vpop.f32.mrf.mxu0
        %v6463 = vadd.f32 0.0, %v6462
        %v6464 = vpop.f32.mrf.mxu0
        %6465 = vmatprep.mubr.f32.mxu0 0.0
        %6466 = vmatmul.mubr.f32.gmra.mxu0 %v6192
        %v6467 = vpop.f32.mrf.mxu0
        %v6468 = vadd.f32 0.0, %v6467
        %v6469 = vpop.f32.mrf.mxu0
        %6470 = vmatprep.mubr.f32.mxu0 0.0
        %6471 = vmatmul.mubr.f32.gmra.mxu0 %v6195
        %v6472 = vpop.f32.mrf.mxu0
        %v6473 = vadd.f32 0.0, %v6472
        %v6474 = vpop.f32.mrf.mxu0
        %6475 = vmatprep.mubr.f32.mxu0 0.0
        %6476 = vmatmul.mubr.f32.gmra.mxu0 %v6198
        %v6477 = vpop.f32.mrf.mxu0
        %v6478 = vadd.f32 0.0, %v6477
        %v6479 = vpop.f32.mrf.mxu0
        %6480 = vmatprep.mubr.f32.mxu0 0.0
        %6481 = vmatmul.mubr.f32.gmra.mxu0 %v6201
        %v6482 = vpop.f32.mrf.mxu0
        %v6483 = vadd.f32 0.0, %v6482
        %v6484 = vpop.f32.mrf.mxu0
        %6485 = vmatprep.mubr.f32.mxu0 0.0
        %6486 = vmatmul.mubr.f32.gmra.mxu0 %v6204
        %v6487 = vpop.f32.mrf.mxu0
        %v6488 = vadd.f32 0.0, %v6487
        %v6489 = vpop.f32.mrf.mxu0
        %6490 = vmatprep.mubr.f32.mxu0 0.0
        %6491 = vmatmul.mubr.f32.gmra.mxu0 %v6207
        %v6492 = vpop.f32.mrf.mxu0
        %v6493 = vadd.f32 0.0, %v6492
        %v6494 = vpop.f32.mrf.mxu0
        %6495 = vmatprep.mubr.f32.mxu0 0.0
        %6496 = vmatmul.mubr.f32.gmra.mxu0 %v6210
        %v6497 = vpop.f32.mrf.mxu0
        %v6498 = vadd.f32 0.0, %v6497
        %v6499 = vpop.f32.mrf.mxu0
        %6500 = vmatprep.mubr.f32.mxu0 0.0
        %6501 = vmatmul.mubr.f32.gmra.mxu0 %v6213
        %v6502 = vpop.f32.mrf.mxu0
        %v6503 = vadd.f32 0.0, %v6502
        %v6504 = vpop.f32.mrf.mxu0
        %6505 = vmatprep.mubr.f32.mxu0 0.0
        %6506 = vmatmul.mubr.f32.gmra.mxu0 %v6216
        %v6507 = vpop.f32.mrf.mxu0
        %v6508 = vadd.f32 0.0, %v6507
        %v6509 = vpop.f32.mrf.mxu0
        %6510 = vmatprep.mubr.f32.mxu0 0.0
        %6511 = vmatmul.mubr.f32.gmra.mxu0 %v6219
        %v6512 = vpop.f32.mrf.mxu0
        %v6513 = vadd.f32 0.0, %v6512
        %v6514 = vpop.f32.mrf.mxu0
        %6515 = vmatprep.mubr.f32.mxu0 0.0
        %6516 = vmatmul.mubr.f32.gmra.mxu0 %v6222
        %v6517 = vpop.f32.mrf.mxu0
        %v6518 = vadd.f32 0.0, %v6517
        %v6519 = vpop.f32.mrf.mxu0
        %6520 = vmatprep.mubr.f32.mxu0 0.0
        %6521 = vmatmul.mubr.f32.gmra.mxu0 %v6225
        %v6522 = vpop.f32.mrf.mxu0
        %v6523 = vadd.f32 0.0, %v6522
        %v6524 = vpop.f32.mrf.mxu0
        %6525 = vmatprep.mubr.f32.mxu0 0.0
        %6526 = vmatmul.mubr.f32.gmra.mxu0 %v6228
        %v6527 = vpop.f32.mrf.mxu0
        %v6528 = vadd.f32 0.0, %v6527
        %v6529 = vpop.f32.mrf.mxu0
        %6530 = vmatprep.mubr.f32.mxu0 0.0
        %6531 = vmatmul.mubr.f32.gmra.mxu0 %v6231
        %v6532 = vpop.f32.mrf.mxu0
        %v6533 = vadd.f32 0.0, %v6532
        %v6534 = vpop.f32.mrf.mxu0
        %6535 = vmatprep.mubr.f32.mxu0 0.0
        %6536 = vmatmul.mubr.f32.gmra.mxu0 %v6234
        %v6537 = vpop.f32.mrf.mxu0
        %v6538 = vadd.f32 0.0, %v6537
        %v6539 = vpop.f32.mrf.mxu0
        %6540 = vmatprep.mubr.f32.mxu0 0.0
        %6541 = vmatmul.mubr.f32.gmra.mxu0 %v6237
        %v6542 = vpop.f32.mrf.mxu0
        %v6543 = vadd.f32 0.0, %v6542
        %v6544 = vpop.f32.mrf.mxu0
        %6545 = vmatprep.mubr.f32.mxu0 0.0
        %6546 = vmatmul.mubr.f32.gmra.mxu0 %v6240
        %v6547 = vpop.f32.mrf.mxu0
        %v6548 = vadd.f32 0.0, %v6547
        %v6549 = vpop.f32.mrf.mxu0
        %6550 = vmatprep.mubr.f32.mxu0 0.0
        %6551 = vmatmul.mubr.f32.gmra.mxu0 %v6243
        %v6552 = vpop.f32.mrf.mxu0
        %v6553 = vadd.f32 0.0, %v6552
        %v6554 = vpop.f32.mrf.mxu0
        %6555 = vmatprep.mubr.f32.mxu0 0.0
        %6556 = vmatmul.mubr.f32.gmra.mxu0 %v6246
        %v6557 = vpop.f32.mrf.mxu0
        %v6558 = vadd.f32 0.0, %v6557
        %v6559 = vpop.f32.mrf.mxu0
        %6560 = vmatprep.mubr.f32.mxu0 0.0
        %6561 = vmatmul.mubr.f32.gmra.mxu0 %v6249
        %v6562 = vpop.f32.mrf.mxu0
        %v6563 = vadd.f32 0.0, %v6562
        %v6564 = vpop.f32.mrf.mxu0
        %6565 = vmatprep.mubr.f32.mxu0 0.0
        %6566 = vmatmul.mubr.f32.gmra.mxu0 %v6252
        %v6567 = vpop.f32.mrf.mxu0
        %v6568 = vadd.f32 0.0, %v6567
        %v6569 = vpop.f32.mrf.mxu0
        %6570 = vmatprep.mubr.f32.mxu0 0.0
        %6571 = vmatmul.mubr.f32.gmra.mxu0 %v6255
        %v6572 = vpop.f32.mrf.mxu0
        %v6573 = vadd.f32 0.0, %v6572
        %v6574 = vpop.f32.mrf.mxu0
        %6575 = vmatprep.mubr.f32.mxu0 0.0
        %6576 = vmatmul.mubr.f32.gmra.mxu0 %v6258
        %v6577 = vpop.f32.mrf.mxu0
        %v6578 = vadd.f32 0.0, %v6577
        %v6579 = vpop.f32.mrf.mxu0
        %6580 = vmatprep.mubr.f32.mxu0 0.0
        %6581 = vmatmul.mubr.f32.gmra.mxu0 %v6261
        %v6582 = vpop.f32.mrf.mxu0
        %v6583 = vadd.f32 0.0, %v6582
        %v6584 = vpop.f32.mrf.mxu0
        %6585 = vmatprep.mubr.f32.mxu0 0.0
        %6586 = vmatmul.mubr.f32.gmra.mxu0 %v6264
        %v6587 = vpop.f32.mrf.mxu0
        %v6588 = vadd.f32 0.0, %v6587
        %v6589 = vpop.f32.mrf.mxu0
        %6590 = vmatprep.mubr.f32.mxu0 0.0
        %6591 = vmatmul.mubr.f32.gmra.mxu0 %v6267
        %v6592 = vpop.f32.mrf.mxu0
        %v6593 = vadd.f32 0.0, %v6592
        %v6594 = vpop.f32.mrf.mxu0
        %6595 = vmatprep.mubr.f32.mxu0 0.0
        %6596 = vmatmul.mubr.f32.gmra.mxu0 %v6270
        %v6597 = vpop.f32.mrf.mxu0
        %v6598 = vadd.f32 0.0, %v6597
        %v6599 = vpop.f32.mrf.mxu0
        %6600 = vmatprep.mubr.f32.mxu0 0.0
        %6601 = vmatmul.mubr.f32.gmra.mxu0 %v6273
        %v6602 = vpop.f32.mrf.mxu0
        %v6603 = vadd.f32 0.0, %v6602
        %v6604 = vpop.f32.mrf.mxu0
        %6605 = vmatprep.mubr.f32.mxu0 0.0
        %6606 = vmatmul.mubr.f32.gmra.mxu0 %v6276
        %v6607 = vpop.f32.mrf.mxu0
        %v6608 = vadd.f32 0.0, %v6607
        %v6609 = vpop.f32.mrf.mxu0
        %6610 = vdwg.mxu0
        %v6611 = vadd.f32 %v6011, %v6348
        %v6612 = vadd.f32 %v6012, %v6353
        %v6613 = vadd.f32 %v6013, %v6358
        %v6614 = vadd.f32 %v6014, %v6363
        %v6615 = vadd.f32 %v6015, %v6368
        %v6616 = vadd.f32 %v6016, %v6373
        %v6617 = vadd.f32 %v6017, %v6378
        %v6618 = vadd.f32 %v6018, %v6383
        %v6619 = vadd.f32 %v6019, %v6388
        %v6620 = vadd.f32 %v6020, %v6393
        %v6621 = vadd.f32 %v6021, %v6398
        %v6622 = vadd.f32 %v6022, %v6403
        %v6623 = vadd.f32 %v6023, %v6408
        %v6624 = vadd.f32 %v6024, %v6413
        %v6625 = vadd.f32 %v6025, %v6418
        %v6626 = vadd.f32 %v6026, %v6423
        %v6627 = vadd.f32 %v6027, %v6428
        %v6628 = vadd.f32 %v6028, %v6433
        %v6629 = vadd.f32 %v6029, %v6438
        %v6630 = vadd.f32 %v6030, %v6443
        %v6631 = vadd.f32 %v6031, %v6448
        %v6632 = vadd.f32 %v6032, %v6453
        %v6633 = vadd.f32 %v6033, %v6458
        %v6634 = vadd.f32 %v6034, %v6463
        %v6635 = vadd.f32 %v6035, %v6468
        %v6636 = vadd.f32 %v6036, %v6473
        %v6637 = vadd.f32 %v6037, %v6478
        %v6638 = vadd.f32 %v6038, %v6483
        %v6639 = vadd.f32 %v6039, %v6488
        %v6640 = vadd.f32 %v6040, %v6493
        %v6641 = vadd.f32 %v6041, %v6498
        %v6642 = vadd.f32 %v6042, %v6503
        %v6643 = vadd.f32 %v6043, %v6508
        %v6644 = vadd.f32 %v6044, %v6513
        %v6645 = vadd.f32 %v6045, %v6518
        %v6646 = vadd.f32 %v6046, %v6523
        %v6647 = vadd.f32 %v6047, %v6528
        %v6648 = vadd.f32 %v6048, %v6533
        %v6649 = vadd.f32 %v6049, %v6538
        %v6650 = vadd.f32 %v6050, %v6543
        %v6651 = vadd.f32 %v6051, %v6548
        %v6652 = vadd.f32 %v6052, %v6553
        %v6653 = vadd.f32 %v6053, %v6558
        %v6654 = vadd.f32 %v6054, %v6563
        %v6655 = vadd.f32 %v6055, %v6568
        %v6656 = vadd.f32 %v6056, %v6573
        %v6657 = vadd.f32 %v6057, %v6578
        %v6658 = vadd.f32 %v6058, %v6583
        %v6659 = vadd.f32 %v6059, %v6588
        %v6660 = vadd.f32 %v6060, %v6593
        %v6661 = vadd.f32 %v6061, %v6598
        %v6662 = vadd.f32 %v6062, %v6603
        %v6663 = vadd.f32 %v6063, %v6608
        %v6664 = vld [vmem:[%s168 + $0x2f] sm:$0xff]
        %v6665 = vld [vmem:[%s168 + $0x37] sm:$0xff]
        %v6666 = vld [vmem:[%s168 + $0x3f] sm:$0xff]
        %v6667 = vld [vmem:[%s168 + $0x47] sm:$0xff]
        %v6668 = vld [vmem:[%s168 + $0x4f] sm:$0xff]
        %v6669 = vld [vmem:[%s168 + $0x57] sm:$0xff]
        %v6670 = vld [vmem:[%s168 + $0x5f] sm:$0xff]
        %v6671 = vld [vmem:[%s168 + $0x67] sm:$0xff]
        %v6672 = vld [vmem:[%s168 + $0x6f] sm:$0xff]
        %v6673 = vld [vmem:[%s168 + $0x77] sm:$0xff]
        %v6674 = vld [vmem:[%s168 + $0x7f] sm:$0xff]
        %v6675 = vld [vmem:[%s168 + $0x87] sm:$0xff]
        %v6676 = vld [vmem:[%s168 + $0x8f] sm:$0xff]
        %v6677 = vld [vmem:[%s168 + $0x97] sm:$0xff]
        %v6678 = vld [vmem:[%s168 + $0x9f] sm:$0xff]
        %v6679 = vld [vmem:[%s168 + $0xa7] sm:$0xff]
        %v6680 = vld [vmem:[%s168 + $0xaf] sm:$0xff]
        %v6681 = vld [vmem:[%s168 + $0xb7] sm:$0xff]
        %v6682 = vld [vmem:[%s168 + $0xbf] sm:$0xff]
        %v6683 = vld [vmem:[%s168 + $0xc7] sm:$0xff]
        %v6684 = vld [vmem:[%s168 + $0xcf] sm:$0xff]
        %v6685 = vld [vmem:[%s168 + $0xd7] sm:$0xff]
        %v6686 = vld [vmem:[%s168 + $0xdf] sm:$0xff]
        %v6687 = vld [vmem:[%s168 + $0xe7] sm:$0xff]
        %v6688 = vld [vmem:[%s168 + $0xef] sm:$0xff]
        %v6689 = vld [vmem:[%s168 + $0xf7] sm:$0xff]
        %v6690 = vld [vmem:[%s168 + $0xff] sm:$0xff]
        %v6691 = vld [vmem:[%s168 + $0x107] sm:$0xff]
        %v6692 = vld [vmem:[%s168 + $0x10f] sm:$0xff]
        %v6693 = vld [vmem:[%s168 + $0x117] sm:$0xff]
        %v6694 = vld [vmem:[%s168 + $0x11f] sm:$0xff]
        %v6695 = vld [vmem:[%s168 + $0x127] sm:$0xff]
        %v6696 = vld [vmem:[%s168 + $0x12f] sm:$0xff]
        %v6697 = vld [vmem:[%s168 + $0x137] sm:$0xff]
        %v6698 = vld [vmem:[%s168 + $0x13f] sm:$0xff]
        %v6699 = vld [vmem:[%s168 + $0x147] sm:$0xff]
        %v6700 = vld [vmem:[%s168 + $0x14f] sm:$0xff]
        %v6701 = vld [vmem:[%s168 + $0x157] sm:$0xff]
        %v6702 = vld [vmem:[%s168 + $0x15f] sm:$0xff]
        %v6703 = vld [vmem:[%s168 + $0x167] sm:$0xff]
        %v6704 = vld [vmem:[%s168 + $0x16f] sm:$0xff]
        %v6705 = vld [vmem:[%s168 + $0x177] sm:$0xff]
        %v6706 = vld [vmem:[%s168 + $0x17f] sm:$0xff]
        %v6707 = vld [vmem:[%s168 + $0x187] sm:$0xff]
        %v6708 = vld [vmem:[%s168 + $0x18f] sm:$0xff]
        %v6709 = vld [vmem:[%s168 + $0x197] sm:$0xff]
        %v6710 = vld [vmem:[%s168 + $0x19f] sm:$0xff]
        %v6711 = vld [vmem:[%s168 + $0x1a7] sm:$0xff]
        %v6712 = vld [vmem:[%s168 + $0x1af] sm:$0xff]
        %v6713 = vld [vmem:[%s168 + $0x1b7] sm:$0xff]
        %v6714 = vld [vmem:[%s168 + $0x1bf] sm:$0xff]
        %v6715 = vld [vmem:[%s168 + $0x1c7] sm:$0xff]
        %v6716 = vld [vmem:[%s168 + $0x1cf] sm:$0x3]
        %s6717 = scalar_lea.vmem %s1, 44
        %v6718 = vld [vmem:[%s6717] sm:$0xf]
        %v6720 = vsel %vm278, %v6664, 0
        %v6723 = vsel %vm278, %v6665, 0
        %v6726 = vsel %vm278, %v6666, 0
        %v6729 = vsel %vm278, %v6667, 0
        %v6732 = vsel %vm278, %v6668, 0
        %v6735 = vsel %vm278, %v6669, 0
        %v6738 = vsel %vm278, %v6670, 0
        %v6741 = vsel %vm278, %v6671, 0
        %v6744 = vsel %vm278, %v6672, 0
        %v6747 = vsel %vm278, %v6673, 0
        %v6750 = vsel %vm278, %v6674, 0
        %v6753 = vsel %vm278, %v6675, 0
        %v6756 = vsel %vm278, %v6676, 0
        %v6759 = vsel %vm278, %v6677, 0
        %v6762 = vsel %vm278, %v6678, 0
        %v6765 = vsel %vm278, %v6679, 0
        %v6768 = vsel %vm278, %v6680, 0
        %v6771 = vsel %vm278, %v6681, 0
        %v6774 = vsel %vm278, %v6682, 0
        %v6777 = vsel %vm278, %v6683, 0
        %v6780 = vsel %vm278, %v6684, 0
        %v6783 = vsel %vm278, %v6685, 0
        %v6786 = vsel %vm278, %v6686, 0
        %v6789 = vsel %vm278, %v6687, 0
        %v6792 = vsel %vm278, %v6688, 0
        %v6795 = vsel %vm278, %v6689, 0
        %v6798 = vsel %vm278, %v6690, 0
        %v6801 = vsel %vm278, %v6691, 0
        %v6804 = vsel %vm278, %v6692, 0
        %v6807 = vsel %vm278, %v6693, 0
        %v6810 = vsel %vm278, %v6694, 0
        %v6813 = vsel %vm278, %v6695, 0
        %v6816 = vsel %vm278, %v6696, 0
        %v6819 = vsel %vm278, %v6697, 0
        %v6822 = vsel %vm278, %v6698, 0
        %v6825 = vsel %vm278, %v6699, 0
        %v6828 = vsel %vm278, %v6700, 0
        %v6831 = vsel %vm278, %v6701, 0
        %v6834 = vsel %vm278, %v6702, 0
        %v6837 = vsel %vm278, %v6703, 0
        %v6840 = vsel %vm278, %v6704, 0
        %v6843 = vsel %vm278, %v6705, 0
        %v6846 = vsel %vm278, %v6706, 0
        %v6849 = vsel %vm278, %v6707, 0
        %v6852 = vsel %vm278, %v6708, 0
        %v6855 = vsel %vm278, %v6709, 0
        %v6858 = vsel %vm278, %v6710, 0
        %v6861 = vsel %vm278, %v6711, 0
        %v6864 = vsel %vm278, %v6712, 0
        %v6867 = vsel %vm278, %v6713, 0
        %v6870 = vsel %vm278, %v6714, 0
        %v6873 = vsel %vm278, %v6715, 0
        %v6876 = vsel %vm278, %v6716, 0
        %v6879 = vsel %vm438, %v6718, 0
        %6881 = vmatprep.subr.mxu0 0.0
        %6882 = vmatpush1.msra.mxu0 0.0
        %6883 = vmatprep.subr.mxu0 0.0
        %6884 = vmatpush1.msra.mxu0 0.0
        %6885 = vmatprep.subr.mxu0 0.0
        %6886 = vmatpush1.msra.mxu0 0.0
        %6887 = vmatprep.subr.mxu0 0.0
        %6888 = vmatpush1.msra.mxu0 0.0
        %6889 = vmatprep.subr.mxu0 0.0
        %6890 = vmatpush1.msra.mxu0 0.0
        %6891 = vmatprep.subr.mxu0 0.0
        %6892 = vmatpush1.msra.mxu0 0.0
        %6893 = vmatprep.subr.mxu0 0.0
        %6894 = vmatpush1.msra.mxu0 0.0
        %6895 = vmatprep.subr.mxu0 0.0
        %6896 = vmatpush1.msra.mxu0 0.0
        %6897 = vmatprep.subr.mxu0 0.0
        %6898 = vmatpush1.msra.mxu0 0.0
        %6899 = vmatprep.subr.mxu0 0.0
        %6900 = vmatpush1.msra.mxu0 0.0
        %6901 = vmatprep.subr.mxu0 0.0
        %6902 = vmatpush1.msra.mxu0 0.0
        %6903 = vmatprep.subr.mxu0 0.0
        %6904 = vmatpush1.msra.mxu0 0.0
        %6905 = vmatprep.subr.mxu0 0.0
        %6906 = vmatpush1.msra.mxu0 0.0
        %6907 = vmatprep.subr.mxu0 0.0
        %6908 = vmatpush1.msra.mxu0 0.0
        %6909 = vmatprep.subr.mxu0 0.0
        %6910 = vmatpush1.msra.mxu0 0.0
        %6911 = vmatprep.subr.mxu0 0.0
        %6912 = vmatpush1.msra.mxu0 %v6879
        %6913 = vmatprep.subr.mxu0 0.0
        %6914 = vmatpush2.msra.mxu0 0.0
        %6915 = vmatprep.subr.mxu0 0.0
        %6916 = vmatpush2.msra.mxu0 0.0
        %6917 = vmatprep.subr.mxu0 0.0
        %6918 = vmatpush2.msra.mxu0 0.0
        %6919 = vmatprep.subr.mxu0 0.0
        %6920 = vmatpush2.msra.mxu0 0.0
        %6921 = vmatprep.subr.mxu0 0.0
        %6922 = vmatpush2.msra.mxu0 0.0
        %6923 = vmatprep.subr.mxu0 0.0
        %6924 = vmatpush2.msra.mxu0 0.0
        %6925 = vmatprep.subr.mxu0 0.0
        %6926 = vmatpush2.msra.mxu0 0.0
        %6927 = vmatprep.subr.mxu0 0.0
        %6928 = vmatpush2.msra.mxu0 0.0
        %6929 = vmatprep.subr.mxu0 0.0
        %6930 = vmatpush2.msra.mxu0 0.0
        %6931 = vmatprep.subr.mxu0 0.0
        %6932 = vmatpush2.msra.mxu0 0.0
        %6933 = vmatprep.subr.mxu0 0.0
        %6934 = vmatpush2.msra.mxu0 0.0
        %6935 = vmatprep.subr.mxu0 0.0
        %6936 = vmatpush2.msra.mxu0 0.0
        %6937 = vmatprep.subr.mxu0 0.0
        %6938 = vmatpush2.msra.mxu0 0.0
        %6939 = vmatprep.subr.mxu0 0.0
        %6940 = vmatpush2.msra.mxu0 0.0
        %6941 = vmatprep.subr.mxu0 0.0
        %6942 = vmatpush2.msra.mxu0 0.0
        %6943 = vmatprep.subr.mxu0 0.0
        %6944 = vmatpush2.msra.mxu0 0.0
        %6945 = vmatprep.mubr.f32.mxu0 0.0
        %6946 = vmatmul.mubr.f32.gmra.mxu0 %v6720
        %v6947 = vpop.f32.mrf.mxu0
        %v6948 = vadd.f32 0.0, %v6947
        %v6949 = vpop.f32.mrf.mxu0
        %6950 = vmatprep.mubr.f32.mxu0 0.0
        %6951 = vmatmul.mubr.f32.gmra.mxu0 %v6723
        %v6952 = vpop.f32.mrf.mxu0
        %v6953 = vadd.f32 0.0, %v6952
        %v6954 = vpop.f32.mrf.mxu0
        %6955 = vmatprep.mubr.f32.mxu0 0.0
        %6956 = vmatmul.mubr.f32.gmra.mxu0 %v6726
        %v6957 = vpop.f32.mrf.mxu0
        %v6958 = vadd.f32 0.0, %v6957
        %v6959 = vpop.f32.mrf.mxu0
        %6960 = vmatprep.mubr.f32.mxu0 0.0
        %6961 = vmatmul.mubr.f32.gmra.mxu0 %v6729
        %v6962 = vpop.f32.mrf.mxu0
        %v6963 = vadd.f32 0.0, %v6962
        %v6964 = vpop.f32.mrf.mxu0
        %6965 = vmatprep.mubr.f32.mxu0 0.0
        %6966 = vmatmul.mubr.f32.gmra.mxu0 %v6732
        %v6967 = vpop.f32.mrf.mxu0
        %v6968 = vadd.f32 0.0, %v6967
        %v6969 = vpop.f32.mrf.mxu0
        %6970 = vmatprep.mubr.f32.mxu0 0.0
        %6971 = vmatmul.mubr.f32.gmra.mxu0 %v6735
        %v6972 = vpop.f32.mrf.mxu0
        %v6973 = vadd.f32 0.0, %v6972
        %v6974 = vpop.f32.mrf.mxu0
        %6975 = vmatprep.mubr.f32.mxu0 0.0
        %6976 = vmatmul.mubr.f32.gmra.mxu0 %v6738
        %v6977 = vpop.f32.mrf.mxu0
        %v6978 = vadd.f32 0.0, %v6977
        %v6979 = vpop.f32.mrf.mxu0
        %6980 = vmatprep.mubr.f32.mxu0 0.0
        %6981 = vmatmul.mubr.f32.gmra.mxu0 %v6741
        %v6982 = vpop.f32.mrf.mxu0
        %v6983 = vadd.f32 0.0, %v6982
        %v6984 = vpop.f32.mrf.mxu0
        %6985 = vmatprep.mubr.f32.mxu0 0.0
        %6986 = vmatmul.mubr.f32.gmra.mxu0 %v6744
        %v6987 = vpop.f32.mrf.mxu0
        %v6988 = vadd.f32 0.0, %v6987
        %v6989 = vpop.f32.mrf.mxu0
        %6990 = vmatprep.mubr.f32.mxu0 0.0
        %6991 = vmatmul.mubr.f32.gmra.mxu0 %v6747
        %v6992 = vpop.f32.mrf.mxu0
        %v6993 = vadd.f32 0.0, %v6992
        %v6994 = vpop.f32.mrf.mxu0
        %6995 = vmatprep.mubr.f32.mxu0 0.0
        %6996 = vmatmul.mubr.f32.gmra.mxu0 %v6750
        %v6997 = vpop.f32.mrf.mxu0
        %v6998 = vadd.f32 0.0, %v6997
        %v6999 = vpop.f32.mrf.mxu0
        %7000 = vmatprep.mubr.f32.mxu0 0.0
        %7001 = vmatmul.mubr.f32.gmra.mxu0 %v6753
        %v7002 = vpop.f32.mrf.mxu0
        %v7003 = vadd.f32 0.0, %v7002
        %v7004 = vpop.f32.mrf.mxu0
        %7005 = vmatprep.mubr.f32.mxu0 0.0
        %7006 = vmatmul.mubr.f32.gmra.mxu0 %v6756
        %v7007 = vpop.f32.mrf.mxu0
        %v7008 = vadd.f32 0.0, %v7007
        %v7009 = vpop.f32.mrf.mxu0
        %7010 = vmatprep.mubr.f32.mxu0 0.0
        %7011 = vmatmul.mubr.f32.gmra.mxu0 %v6759
        %v7012 = vpop.f32.mrf.mxu0
        %v7013 = vadd.f32 0.0, %v7012
        %v7014 = vpop.f32.mrf.mxu0
        %7015 = vmatprep.mubr.f32.mxu0 0.0
        %7016 = vmatmul.mubr.f32.gmra.mxu0 %v6762
        %v7017 = vpop.f32.mrf.mxu0
        %v7018 = vadd.f32 0.0, %v7017
        %v7019 = vpop.f32.mrf.mxu0
        %7020 = vmatprep.mubr.f32.mxu0 0.0
        %7021 = vmatmul.mubr.f32.gmra.mxu0 %v6765
        %v7022 = vpop.f32.mrf.mxu0
        %v7023 = vadd.f32 0.0, %v7022
        %v7024 = vpop.f32.mrf.mxu0
        %7025 = vmatprep.mubr.f32.mxu0 0.0
        %7026 = vmatmul.mubr.f32.gmra.mxu0 %v6768
        %v7027 = vpop.f32.mrf.mxu0
        %v7028 = vadd.f32 0.0, %v7027
        %v7029 = vpop.f32.mrf.mxu0
        %7030 = vmatprep.mubr.f32.mxu0 0.0
        %7031 = vmatmul.mubr.f32.gmra.mxu0 %v6771
        %v7032 = vpop.f32.mrf.mxu0
        %v7033 = vadd.f32 0.0, %v7032
        %v7034 = vpop.f32.mrf.mxu0
        %7035 = vmatprep.mubr.f32.mxu0 0.0
        %7036 = vmatmul.mubr.f32.gmra.mxu0 %v6774
        %v7037 = vpop.f32.mrf.mxu0
        %v7038 = vadd.f32 0.0, %v7037
        %v7039 = vpop.f32.mrf.mxu0
        %7040 = vmatprep.mubr.f32.mxu0 0.0
        %7041 = vmatmul.mubr.f32.gmra.mxu0 %v6777
        %v7042 = vpop.f32.mrf.mxu0
        %v7043 = vadd.f32 0.0, %v7042
        %v7044 = vpop.f32.mrf.mxu0
        %7045 = vmatprep.mubr.f32.mxu0 0.0
        %7046 = vmatmul.mubr.f32.gmra.mxu0 %v6780
        %v7047 = vpop.f32.mrf.mxu0
        %v7048 = vadd.f32 0.0, %v7047
        %v7049 = vpop.f32.mrf.mxu0
        %7050 = vmatprep.mubr.f32.mxu0 0.0
        %7051 = vmatmul.mubr.f32.gmra.mxu0 %v6783
        %v7052 = vpop.f32.mrf.mxu0
        %v7053 = vadd.f32 0.0, %v7052
        %v7054 = vpop.f32.mrf.mxu0
        %7055 = vmatprep.mubr.f32.mxu0 0.0
        %7056 = vmatmul.mubr.f32.gmra.mxu0 %v6786
        %v7057 = vpop.f32.mrf.mxu0
        %v7058 = vadd.f32 0.0, %v7057
        %v7059 = vpop.f32.mrf.mxu0
        %7060 = vmatprep.mubr.f32.mxu0 0.0
        %7061 = vmatmul.mubr.f32.gmra.mxu0 %v6789
        %v7062 = vpop.f32.mrf.mxu0
        %v7063 = vadd.f32 0.0, %v7062
        %v7064 = vpop.f32.mrf.mxu0
        %7065 = vmatprep.mubr.f32.mxu0 0.0
        %7066 = vmatmul.mubr.f32.gmra.mxu0 %v6792
        %v7067 = vpop.f32.mrf.mxu0
        %v7068 = vadd.f32 0.0, %v7067
        %v7069 = vpop.f32.mrf.mxu0
        %7070 = vmatprep.mubr.f32.mxu0 0.0
        %7071 = vmatmul.mubr.f32.gmra.mxu0 %v6795
        %v7072 = vpop.f32.mrf.mxu0
        %v7073 = vadd.f32 0.0, %v7072
        %v7074 = vpop.f32.mrf.mxu0
        %7075 = vmatprep.mubr.f32.mxu0 0.0
        %7076 = vmatmul.mubr.f32.gmra.mxu0 %v6798
        %v7077 = vpop.f32.mrf.mxu0
        %v7078 = vadd.f32 0.0, %v7077
        %v7079 = vpop.f32.mrf.mxu0
        %7080 = vmatprep.mubr.f32.mxu0 0.0
        %7081 = vmatmul.mubr.f32.gmra.mxu0 %v6801
        %v7082 = vpop.f32.mrf.mxu0
        %v7083 = vadd.f32 0.0, %v7082
        %v7084 = vpop.f32.mrf.mxu0
        %7085 = vmatprep.mubr.f32.mxu0 0.0
        %7086 = vmatmul.mubr.f32.gmra.mxu0 %v6804
        %v7087 = vpop.f32.mrf.mxu0
        %v7088 = vadd.f32 0.0, %v7087
        %v7089 = vpop.f32.mrf.mxu0
        %7090 = vmatprep.mubr.f32.mxu0 0.0
        %7091 = vmatmul.mubr.f32.gmra.mxu0 %v6807
        %v7092 = vpop.f32.mrf.mxu0
        %v7093 = vadd.f32 0.0, %v7092
        %v7094 = vpop.f32.mrf.mxu0
        %7095 = vmatprep.mubr.f32.mxu0 0.0
        %7096 = vmatmul.mubr.f32.gmra.mxu0 %v6810
        %v7097 = vpop.f32.mrf.mxu0
        %v7098 = vadd.f32 0.0, %v7097
        %v7099 = vpop.f32.mrf.mxu0
        %7100 = vmatprep.mubr.f32.mxu0 0.0
        %7101 = vmatmul.mubr.f32.gmra.mxu0 %v6813
        %v7102 = vpop.f32.mrf.mxu0
        %v7103 = vadd.f32 0.0, %v7102
        %v7104 = vpop.f32.mrf.mxu0
        %7105 = vmatprep.mubr.f32.mxu0 0.0
        %7106 = vmatmul.mubr.f32.gmra.mxu0 %v6816
        %v7107 = vpop.f32.mrf.mxu0
        %v7108 = vadd.f32 0.0, %v7107
        %v7109 = vpop.f32.mrf.mxu0
        %7110 = vmatprep.mubr.f32.mxu0 0.0
        %7111 = vmatmul.mubr.f32.gmra.mxu0 %v6819
        %v7112 = vpop.f32.mrf.mxu0
        %v7113 = vadd.f32 0.0, %v7112
        %v7114 = vpop.f32.mrf.mxu0
        %7115 = vmatprep.mubr.f32.mxu0 0.0
        %7116 = vmatmul.mubr.f32.gmra.mxu0 %v6822
        %v7117 = vpop.f32.mrf.mxu0
        %v7118 = vadd.f32 0.0, %v7117
        %v7119 = vpop.f32.mrf.mxu0
        %7120 = vmatprep.mubr.f32.mxu0 0.0
        %7121 = vmatmul.mubr.f32.gmra.mxu0 %v6825
        %v7122 = vpop.f32.mrf.mxu0
        %v7123 = vadd.f32 0.0, %v7122
        %v7124 = vpop.f32.mrf.mxu0
        %7125 = vmatprep.mubr.f32.mxu0 0.0
        %7126 = vmatmul.mubr.f32.gmra.mxu0 %v6828
        %v7127 = vpop.f32.mrf.mxu0
        %v7128 = vadd.f32 0.0, %v7127
        %v7129 = vpop.f32.mrf.mxu0
        %7130 = vmatprep.mubr.f32.mxu0 0.0
        %7131 = vmatmul.mubr.f32.gmra.mxu0 %v6831
        %v7132 = vpop.f32.mrf.mxu0
        %v7133 = vadd.f32 0.0, %v7132
        %v7134 = vpop.f32.mrf.mxu0
        %7135 = vmatprep.mubr.f32.mxu0 0.0
        %7136 = vmatmul.mubr.f32.gmra.mxu0 %v6834
        %v7137 = vpop.f32.mrf.mxu0
        %v7138 = vadd.f32 0.0, %v7137
        %v7139 = vpop.f32.mrf.mxu0
        %7140 = vmatprep.mubr.f32.mxu0 0.0
        %7141 = vmatmul.mubr.f32.gmra.mxu0 %v6837
        %v7142 = vpop.f32.mrf.mxu0
        %v7143 = vadd.f32 0.0, %v7142
        %v7144 = vpop.f32.mrf.mxu0
        %7145 = vmatprep.mubr.f32.mxu0 0.0
        %7146 = vmatmul.mubr.f32.gmra.mxu0 %v6840
        %v7147 = vpop.f32.mrf.mxu0
        %v7148 = vadd.f32 0.0, %v7147
        %v7149 = vpop.f32.mrf.mxu0
        %7150 = vmatprep.mubr.f32.mxu0 0.0
        %7151 = vmatmul.mubr.f32.gmra.mxu0 %v6843
        %v7152 = vpop.f32.mrf.mxu0
        %v7153 = vadd.f32 0.0, %v7152
        %v7154 = vpop.f32.mrf.mxu0
        %7155 = vmatprep.mubr.f32.mxu0 0.0
        %7156 = vmatmul.mubr.f32.gmra.mxu0 %v6846
        %v7157 = vpop.f32.mrf.mxu0
        %v7158 = vadd.f32 0.0, %v7157
        %v7159 = vpop.f32.mrf.mxu0
        %7160 = vmatprep.mubr.f32.mxu0 0.0
        %7161 = vmatmul.mubr.f32.gmra.mxu0 %v6849
        %v7162 = vpop.f32.mrf.mxu0
        %v7163 = vadd.f32 0.0, %v7162
        %v7164 = vpop.f32.mrf.mxu0
        %7165 = vmatprep.mubr.f32.mxu0 0.0
        %7166 = vmatmul.mubr.f32.gmra.mxu0 %v6852
        %v7167 = vpop.f32.mrf.mxu0
        %v7168 = vadd.f32 0.0, %v7167
        %v7169 = vpop.f32.mrf.mxu0
        %7170 = vmatprep.mubr.f32.mxu0 0.0
        %7171 = vmatmul.mubr.f32.gmra.mxu0 %v6855
        %v7172 = vpop.f32.mrf.mxu0
        %v7173 = vadd.f32 0.0, %v7172
        %v7174 = vpop.f32.mrf.mxu0
        %7175 = vmatprep.mubr.f32.mxu0 0.0
        %7176 = vmatmul.mubr.f32.gmra.mxu0 %v6858
        %v7177 = vpop.f32.mrf.mxu0
        %v7178 = vadd.f32 0.0, %v7177
        %v7179 = vpop.f32.mrf.mxu0
        %7180 = vmatprep.mubr.f32.mxu0 0.0
        %7181 = vmatmul.mubr.f32.gmra.mxu0 %v6861
        %v7182 = vpop.f32.mrf.mxu0
        %v7183 = vadd.f32 0.0, %v7182
        %v7184 = vpop.f32.mrf.mxu0
        %7185 = vmatprep.mubr.f32.mxu0 0.0
        %7186 = vmatmul.mubr.f32.gmra.mxu0 %v6864
        %v7187 = vpop.f32.mrf.mxu0
        %v7188 = vadd.f32 0.0, %v7187
        %v7189 = vpop.f32.mrf.mxu0
        %7190 = vmatprep.mubr.f32.mxu0 0.0
        %7191 = vmatmul.mubr.f32.gmra.mxu0 %v6867
        %v7192 = vpop.f32.mrf.mxu0
        %v7193 = vadd.f32 0.0, %v7192
        %v7194 = vpop.f32.mrf.mxu0
        %7195 = vmatprep.mubr.f32.mxu0 0.0
        %7196 = vmatmul.mubr.f32.gmra.mxu0 %v6870
        %v7197 = vpop.f32.mrf.mxu0
        %v7198 = vadd.f32 0.0, %v7197
        %v7199 = vpop.f32.mrf.mxu0
        %7200 = vmatprep.mubr.f32.mxu0 0.0
        %7201 = vmatmul.mubr.f32.gmra.mxu0 %v6873
        %v7202 = vpop.f32.mrf.mxu0
        %v7203 = vadd.f32 0.0, %v7202
        %v7204 = vpop.f32.mrf.mxu0
        %7205 = vmatprep.mubr.f32.mxu0 0.0
        %7206 = vmatmul.mubr.f32.gmra.mxu0 %v6876
        %v7207 = vpop.f32.mrf.mxu0
        %v7208 = vadd.f32 0.0, %v7207
        %v7209 = vpop.f32.mrf.mxu0
        %7210 = vdwg.mxu0
        %v7211 = vadd.f32 %v6611, %v6948
        %v7212 = vadd.f32 %v6612, %v6953
        %v7213 = vadd.f32 %v6613, %v6958
        %v7214 = vadd.f32 %v6614, %v6963
        %v7215 = vadd.f32 %v6615, %v6968
        %v7216 = vadd.f32 %v6616, %v6973
        %v7217 = vadd.f32 %v6617, %v6978
        %v7218 = vadd.f32 %v6618, %v6983
        %v7219 = vadd.f32 %v6619, %v6988
        %v7220 = vadd.f32 %v6620, %v6993
        %v7221 = vadd.f32 %v6621, %v6998
        %v7222 = vadd.f32 %v6622, %v7003
        %v7223 = vadd.f32 %v6623, %v7008
        %v7224 = vadd.f32 %v6624, %v7013
        %v7225 = vadd.f32 %v6625, %v7018
        %v7226 = vadd.f32 %v6626, %v7023
        %v7227 = vadd.f32 %v6627, %v7028
        %v7228 = vadd.f32 %v6628, %v7033
        %v7229 = vadd.f32 %v6629, %v7038
        %v7230 = vadd.f32 %v6630, %v7043
        %v7231 = vadd.f32 %v6631, %v7048
        %v7232 = vadd.f32 %v6632, %v7053
        %v7233 = vadd.f32 %v6633, %v7058
        %v7234 = vadd.f32 %v6634, %v7063
        %v7235 = vadd.f32 %v6635, %v7068
        %v7236 = vadd.f32 %v6636, %v7073
        %v7237 = vadd.f32 %v6637, %v7078
        %v7238 = vadd.f32 %v6638, %v7083
        %v7239 = vadd.f32 %v6639, %v7088
        %v7240 = vadd.f32 %v6640, %v7093
        %v7241 = vadd.f32 %v6641, %v7098
        %v7242 = vadd.f32 %v6642, %v7103
        %v7243 = vadd.f32 %v6643, %v7108
        %v7244 = vadd.f32 %v6644, %v7113
        %v7245 = vadd.f32 %v6645, %v7118
        %v7246 = vadd.f32 %v6646, %v7123
        %v7247 = vadd.f32 %v6647, %v7128
        %v7248 = vadd.f32 %v6648, %v7133
        %v7249 = vadd.f32 %v6649, %v7138
        %v7250 = vadd.f32 %v6650, %v7143
        %v7251 = vadd.f32 %v6651, %v7148
        %v7252 = vadd.f32 %v6652, %v7153
        %v7253 = vadd.f32 %v6653, %v7158
        %v7254 = vadd.f32 %v6654, %v7163
        %v7255 = vadd.f32 %v6655, %v7168
        %v7256 = vadd.f32 %v6656, %v7173
        %v7257 = vadd.f32 %v6657, %v7178
        %v7258 = vadd.f32 %v6658, %v7183
        %v7259 = vadd.f32 %v6659, %v7188
        %v7260 = vadd.f32 %v6660, %v7193
        %v7261 = vadd.f32 %v6661, %v7198
        %v7262 = vadd.f32 %v6662, %v7203
        %v7263 = vadd.f32 %v6663, %v7208
        %v7264 = vld [vmem:[%s168 + $0x42] sm:$0xff]
        %v7265 = vld [vmem:[%s168 + $0x4a] sm:$0xff]
        %v7266 = vld [vmem:[%s168 + $0x52] sm:$0xff]
        %v7267 = vld [vmem:[%s168 + $0x5a] sm:$0xff]
        %v7268 = vld [vmem:[%s168 + $0x62] sm:$0xff]
        %v7269 = vld [vmem:[%s168 + $0x6a] sm:$0xff]
        %v7270 = vld [vmem:[%s168 + $0x72] sm:$0xff]
        %v7271 = vld [vmem:[%s168 + $0x7a] sm:$0xff]
        %v7272 = vld [vmem:[%s168 + $0x82] sm:$0xff]
        %v7273 = vld [vmem:[%s168 + $0x8a] sm:$0xff]
        %v7274 = vld [vmem:[%s168 + $0x92] sm:$0xff]
        %v7275 = vld [vmem:[%s168 + $0x9a] sm:$0xff]
        %v7276 = vld [vmem:[%s168 + $0xa2] sm:$0xff]
        %v7277 = vld [vmem:[%s168 + $0xaa] sm:$0xff]
        %v7278 = vld [vmem:[%s168 + $0xb2] sm:$0xff]
        %v7279 = vld [vmem:[%s168 + $0xba] sm:$0xff]
        %v7280 = vld [vmem:[%s168 + $0xc2] sm:$0xff]
        %v7281 = vld [vmem:[%s168 + $0xca] sm:$0xff]
        %v7282 = vld [vmem:[%s168 + $0xd2] sm:$0xff]
        %v7283 = vld [vmem:[%s168 + $0xda] sm:$0xff]
        %v7284 = vld [vmem:[%s168 + $0xe2] sm:$0xff]
        %v7285 = vld [vmem:[%s168 + $0xea] sm:$0xff]
        %v7286 = vld [vmem:[%s168 + $0xf2] sm:$0xff]
        %v7287 = vld [vmem:[%s168 + $0xfa] sm:$0xff]
        %v7288 = vld [vmem:[%s168 + $0x102] sm:$0xff]
        %v7289 = vld [vmem:[%s168 + $0x10a] sm:$0xff]
        %v7290 = vld [vmem:[%s168 + $0x112] sm:$0xff]
        %v7291 = vld [vmem:[%s168 + $0x11a] sm:$0xff]
        %v7292 = vld [vmem:[%s168 + $0x122] sm:$0xff]
        %v7293 = vld [vmem:[%s168 + $0x12a] sm:$0xff]
        %v7294 = vld [vmem:[%s168 + $0x132] sm:$0xff]
        %v7295 = vld [vmem:[%s168 + $0x13a] sm:$0xff]
        %v7296 = vld [vmem:[%s168 + $0x142] sm:$0xff]
        %v7297 = vld [vmem:[%s168 + $0x14a] sm:$0xff]
        %v7298 = vld [vmem:[%s168 + $0x152] sm:$0xff]
        %v7299 = vld [vmem:[%s168 + $0x15a] sm:$0xff]
        %v7300 = vld [vmem:[%s168 + $0x162] sm:$0xff]
        %v7301 = vld [vmem:[%s168 + $0x16a] sm:$0xff]
        %v7302 = vld [vmem:[%s168 + $0x172] sm:$0xff]
        %v7303 = vld [vmem:[%s168 + $0x17a] sm:$0xff]
        %v7304 = vld [vmem:[%s168 + $0x182] sm:$0xff]
        %v7305 = vld [vmem:[%s168 + $0x18a] sm:$0xff]
        %v7306 = vld [vmem:[%s168 + $0x192] sm:$0xff]
        %v7307 = vld [vmem:[%s168 + $0x19a] sm:$0xff]
        %v7308 = vld [vmem:[%s168 + $0x1a2] sm:$0xff]
        %v7309 = vld [vmem:[%s168 + $0x1aa] sm:$0xff]
        %v7310 = vld [vmem:[%s168 + $0x1b2] sm:$0xff]
        %v7311 = vld [vmem:[%s168 + $0x1ba] sm:$0xff]
        %v7312 = vld [vmem:[%s168 + $0x1c2] sm:$0xff]
        %v7313 = vld [vmem:[%s168 + $0x1ca] sm:$0xff]
        %v7314 = vld [vmem:[%s168 + $0x1d2] sm:$0xff]
        %v7315 = vld [vmem:[%s168 + $0x1da] sm:$0xff]
        %v7316 = vld [vmem:[%s168 + $0x1e2] sm:$0x3]
        %s7317 = scalar_lea.vmem %s1, 48
        %v7318 = vld [vmem:[%s7317] sm:$0xf]
        %v7320 = vsel %vm278, %v7264, 0
        %v7323 = vsel %vm278, %v7265, 0
        %v7326 = vsel %vm278, %v7266, 0
        %v7329 = vsel %vm278, %v7267, 0
        %v7332 = vsel %vm278, %v7268, 0
        %v7335 = vsel %vm278, %v7269, 0
        %v7338 = vsel %vm278, %v7270, 0
        %v7341 = vsel %vm278, %v7271, 0
        %v7344 = vsel %vm278, %v7272, 0
        %v7347 = vsel %vm278, %v7273, 0
        %v7350 = vsel %vm278, %v7274, 0
        %v7353 = vsel %vm278, %v7275, 0
        %v7356 = vsel %vm278, %v7276, 0
        %v7359 = vsel %vm278, %v7277, 0
        %v7362 = vsel %vm278, %v7278, 0
        %v7365 = vsel %vm278, %v7279, 0
        %v7368 = vsel %vm278, %v7280, 0
        %v7371 = vsel %vm278, %v7281, 0
        %v7374 = vsel %vm278, %v7282, 0
        %v7377 = vsel %vm278, %v7283, 0
        %v7380 = vsel %vm278, %v7284, 0
        %v7383 = vsel %vm278, %v7285, 0
        %v7386 = vsel %vm278, %v7286, 0
        %v7389 = vsel %vm278, %v7287, 0
        %v7392 = vsel %vm278, %v7288, 0
        %v7395 = vsel %vm278, %v7289, 0
        %v7398 = vsel %vm278, %v7290, 0
        %v7401 = vsel %vm278, %v7291, 0
        %v7404 = vsel %vm278, %v7292, 0
        %v7407 = vsel %vm278, %v7293, 0
        %v7410 = vsel %vm278, %v7294, 0
        %v7413 = vsel %vm278, %v7295, 0
        %v7416 = vsel %vm278, %v7296, 0
        %v7419 = vsel %vm278, %v7297, 0
        %v7422 = vsel %vm278, %v7298, 0
        %v7425 = vsel %vm278, %v7299, 0
        %v7428 = vsel %vm278, %v7300, 0
        %v7431 = vsel %vm278, %v7301, 0
        %v7434 = vsel %vm278, %v7302, 0
        %v7437 = vsel %vm278, %v7303, 0
        %v7440 = vsel %vm278, %v7304, 0
        %v7443 = vsel %vm278, %v7305, 0
        %v7446 = vsel %vm278, %v7306, 0
        %v7449 = vsel %vm278, %v7307, 0
        %v7452 = vsel %vm278, %v7308, 0
        %v7455 = vsel %vm278, %v7309, 0
        %v7458 = vsel %vm278, %v7310, 0
        %v7461 = vsel %vm278, %v7311, 0
        %v7464 = vsel %vm278, %v7312, 0
        %v7467 = vsel %vm278, %v7313, 0
        %v7470 = vsel %vm278, %v7314, 0
        %v7473 = vsel %vm278, %v7315, 0
        %v7476 = vsel %vm278, %v7316, 0
        %v7479 = vsel %vm438, %v7318, 0
        %7481 = vmatprep.subr.mxu0 0.0
        %7482 = vmatpush1.msra.mxu0 0.0
        %7483 = vmatprep.subr.mxu0 0.0
        %7484 = vmatpush1.msra.mxu0 0.0
        %7485 = vmatprep.subr.mxu0 0.0
        %7486 = vmatpush1.msra.mxu0 0.0
        %7487 = vmatprep.subr.mxu0 0.0
        %7488 = vmatpush1.msra.mxu0 0.0
        %7489 = vmatprep.subr.mxu0 0.0
        %7490 = vmatpush1.msra.mxu0 0.0
        %7491 = vmatprep.subr.mxu0 0.0
        %7492 = vmatpush1.msra.mxu0 0.0
        %7493 = vmatprep.subr.mxu0 0.0
        %7494 = vmatpush1.msra.mxu0 0.0
        %7495 = vmatprep.subr.mxu0 0.0
        %7496 = vmatpush1.msra.mxu0 0.0
        %7497 = vmatprep.subr.mxu0 0.0
        %7498 = vmatpush1.msra.mxu0 0.0
        %7499 = vmatprep.subr.mxu0 0.0
        %7500 = vmatpush1.msra.mxu0 0.0
        %7501 = vmatprep.subr.mxu0 0.0
        %7502 = vmatpush1.msra.mxu0 0.0
        %7503 = vmatprep.subr.mxu0 0.0
        %7504 = vmatpush1.msra.mxu0 0.0
        %7505 = vmatprep.subr.mxu0 0.0
        %7506 = vmatpush1.msra.mxu0 0.0
        %7507 = vmatprep.subr.mxu0 0.0
        %7508 = vmatpush1.msra.mxu0 0.0
        %7509 = vmatprep.subr.mxu0 0.0
        %7510 = vmatpush1.msra.mxu0 0.0
        %7511 = vmatprep.subr.mxu0 0.0
        %7512 = vmatpush1.msra.mxu0 %v7479
        %7513 = vmatprep.subr.mxu0 0.0
        %7514 = vmatpush2.msra.mxu0 0.0
        %7515 = vmatprep.subr.mxu0 0.0
        %7516 = vmatpush2.msra.mxu0 0.0
        %7517 = vmatprep.subr.mxu0 0.0
        %7518 = vmatpush2.msra.mxu0 0.0
        %7519 = vmatprep.subr.mxu0 0.0
        %7520 = vmatpush2.msra.mxu0 0.0
        %7521 = vmatprep.subr.mxu0 0.0
        %7522 = vmatpush2.msra.mxu0 0.0
        %7523 = vmatprep.subr.mxu0 0.0
        %7524 = vmatpush2.msra.mxu0 0.0
        %7525 = vmatprep.subr.mxu0 0.0
        %7526 = vmatpush2.msra.mxu0 0.0
        %7527 = vmatprep.subr.mxu0 0.0
        %7528 = vmatpush2.msra.mxu0 0.0
        %7529 = vmatprep.subr.mxu0 0.0
        %7530 = vmatpush2.msra.mxu0 0.0
        %7531 = vmatprep.subr.mxu0 0.0
        %7532 = vmatpush2.msra.mxu0 0.0
        %7533 = vmatprep.subr.mxu0 0.0
        %7534 = vmatpush2.msra.mxu0 0.0
        %7535 = vmatprep.subr.mxu0 0.0
        %7536 = vmatpush2.msra.mxu0 0.0
        %7537 = vmatprep.subr.mxu0 0.0
        %7538 = vmatpush2.msra.mxu0 0.0
        %7539 = vmatprep.subr.mxu0 0.0
        %7540 = vmatpush2.msra.mxu0 0.0
        %7541 = vmatprep.subr.mxu0 0.0
        %7542 = vmatpush2.msra.mxu0 0.0
        %7543 = vmatprep.subr.mxu0 0.0
        %7544 = vmatpush2.msra.mxu0 0.0
        %7545 = vmatprep.mubr.f32.mxu0 0.0
        %7546 = vmatmul.mubr.f32.gmra.mxu0 %v7320
        %v7547 = vpop.f32.mrf.mxu0
        %v7548 = vadd.f32 0.0, %v7547
        %v7549 = vpop.f32.mrf.mxu0
        %7550 = vmatprep.mubr.f32.mxu0 0.0
        %7551 = vmatmul.mubr.f32.gmra.mxu0 %v7323
        %v7552 = vpop.f32.mrf.mxu0
        %v7553 = vadd.f32 0.0, %v7552
        %v7554 = vpop.f32.mrf.mxu0
        %7555 = vmatprep.mubr.f32.mxu0 0.0
        %7556 = vmatmul.mubr.f32.gmra.mxu0 %v7326
        %v7557 = vpop.f32.mrf.mxu0
        %v7558 = vadd.f32 0.0, %v7557
        %v7559 = vpop.f32.mrf.mxu0
        %7560 = vmatprep.mubr.f32.mxu0 0.0
        %7561 = vmatmul.mubr.f32.gmra.mxu0 %v7329
        %v7562 = vpop.f32.mrf.mxu0
        %v7563 = vadd.f32 0.0, %v7562
        %v7564 = vpop.f32.mrf.mxu0
        %7565 = vmatprep.mubr.f32.mxu0 0.0
        %7566 = vmatmul.mubr.f32.gmra.mxu0 %v7332
        %v7567 = vpop.f32.mrf.mxu0
        %v7568 = vadd.f32 0.0, %v7567
        %v7569 = vpop.f32.mrf.mxu0
        %7570 = vmatprep.mubr.f32.mxu0 0.0
        %7571 = vmatmul.mubr.f32.gmra.mxu0 %v7335
        %v7572 = vpop.f32.mrf.mxu0
        %v7573 = vadd.f32 0.0, %v7572
        %v7574 = vpop.f32.mrf.mxu0
        %7575 = vmatprep.mubr.f32.mxu0 0.0
        %7576 = vmatmul.mubr.f32.gmra.mxu0 %v7338
        %v7577 = vpop.f32.mrf.mxu0
        %v7578 = vadd.f32 0.0, %v7577
        %v7579 = vpop.f32.mrf.mxu0
        %7580 = vmatprep.mubr.f32.mxu0 0.0
        %7581 = vmatmul.mubr.f32.gmra.mxu0 %v7341
        %v7582 = vpop.f32.mrf.mxu0
        %v7583 = vadd.f32 0.0, %v7582
        %v7584 = vpop.f32.mrf.mxu0
        %7585 = vmatprep.mubr.f32.mxu0 0.0
        %7586 = vmatmul.mubr.f32.gmra.mxu0 %v7344
        %v7587 = vpop.f32.mrf.mxu0
        %v7588 = vadd.f32 0.0, %v7587
        %v7589 = vpop.f32.mrf.mxu0
        %7590 = vmatprep.mubr.f32.mxu0 0.0
        %7591 = vmatmul.mubr.f32.gmra.mxu0 %v7347
        %v7592 = vpop.f32.mrf.mxu0
        %v7593 = vadd.f32 0.0, %v7592
        %v7594 = vpop.f32.mrf.mxu0
        %7595 = vmatprep.mubr.f32.mxu0 0.0
        %7596 = vmatmul.mubr.f32.gmra.mxu0 %v7350
        %v7597 = vpop.f32.mrf.mxu0
        %v7598 = vadd.f32 0.0, %v7597
        %v7599 = vpop.f32.mrf.mxu0
        %7600 = vmatprep.mubr.f32.mxu0 0.0
        %7601 = vmatmul.mubr.f32.gmra.mxu0 %v7353
        %v7602 = vpop.f32.mrf.mxu0
        %v7603 = vadd.f32 0.0, %v7602
        %v7604 = vpop.f32.mrf.mxu0
        %7605 = vmatprep.mubr.f32.mxu0 0.0
        %7606 = vmatmul.mubr.f32.gmra.mxu0 %v7356
        %v7607 = vpop.f32.mrf.mxu0
        %v7608 = vadd.f32 0.0, %v7607
        %v7609 = vpop.f32.mrf.mxu0
        %7610 = vmatprep.mubr.f32.mxu0 0.0
        %7611 = vmatmul.mubr.f32.gmra.mxu0 %v7359
        %v7612 = vpop.f32.mrf.mxu0
        %v7613 = vadd.f32 0.0, %v7612
        %v7614 = vpop.f32.mrf.mxu0
        %7615 = vmatprep.mubr.f32.mxu0 0.0
        %7616 = vmatmul.mubr.f32.gmra.mxu0 %v7362
        %v7617 = vpop.f32.mrf.mxu0
        %v7618 = vadd.f32 0.0, %v7617
        %v7619 = vpop.f32.mrf.mxu0
        %7620 = vmatprep.mubr.f32.mxu0 0.0
        %7621 = vmatmul.mubr.f32.gmra.mxu0 %v7365
        %v7622 = vpop.f32.mrf.mxu0
        %v7623 = vadd.f32 0.0, %v7622
        %v7624 = vpop.f32.mrf.mxu0
        %7625 = vmatprep.mubr.f32.mxu0 0.0
        %7626 = vmatmul.mubr.f32.gmra.mxu0 %v7368
        %v7627 = vpop.f32.mrf.mxu0
        %v7628 = vadd.f32 0.0, %v7627
        %v7629 = vpop.f32.mrf.mxu0
        %7630 = vmatprep.mubr.f32.mxu0 0.0
        %7631 = vmatmul.mubr.f32.gmra.mxu0 %v7371
        %v7632 = vpop.f32.mrf.mxu0
        %v7633 = vadd.f32 0.0, %v7632
        %v7634 = vpop.f32.mrf.mxu0
        %7635 = vmatprep.mubr.f32.mxu0 0.0
        %7636 = vmatmul.mubr.f32.gmra.mxu0 %v7374
        %v7637 = vpop.f32.mrf.mxu0
        %v7638 = vadd.f32 0.0, %v7637
        %v7639 = vpop.f32.mrf.mxu0
        %7640 = vmatprep.mubr.f32.mxu0 0.0
        %7641 = vmatmul.mubr.f32.gmra.mxu0 %v7377
        %v7642 = vpop.f32.mrf.mxu0
        %v7643 = vadd.f32 0.0, %v7642
        %v7644 = vpop.f32.mrf.mxu0
        %7645 = vmatprep.mubr.f32.mxu0 0.0
        %7646 = vmatmul.mubr.f32.gmra.mxu0 %v7380
        %v7647 = vpop.f32.mrf.mxu0
        %v7648 = vadd.f32 0.0, %v7647
        %v7649 = vpop.f32.mrf.mxu0
        %7650 = vmatprep.mubr.f32.mxu0 0.0
        %7651 = vmatmul.mubr.f32.gmra.mxu0 %v7383
        %v7652 = vpop.f32.mrf.mxu0
        %v7653 = vadd.f32 0.0, %v7652
        %v7654 = vpop.f32.mrf.mxu0
        %7655 = vmatprep.mubr.f32.mxu0 0.0
        %7656 = vmatmul.mubr.f32.gmra.mxu0 %v7386
        %v7657 = vpop.f32.mrf.mxu0
        %v7658 = vadd.f32 0.0, %v7657
        %v7659 = vpop.f32.mrf.mxu0
        %7660 = vmatprep.mubr.f32.mxu0 0.0
        %7661 = vmatmul.mubr.f32.gmra.mxu0 %v7389
        %v7662 = vpop.f32.mrf.mxu0
        %v7663 = vadd.f32 0.0, %v7662
        %v7664 = vpop.f32.mrf.mxu0
        %7665 = vmatprep.mubr.f32.mxu0 0.0
        %7666 = vmatmul.mubr.f32.gmra.mxu0 %v7392
        %v7667 = vpop.f32.mrf.mxu0
        %v7668 = vadd.f32 0.0, %v7667
        %v7669 = vpop.f32.mrf.mxu0
        %7670 = vmatprep.mubr.f32.mxu0 0.0
        %7671 = vmatmul.mubr.f32.gmra.mxu0 %v7395
        %v7672 = vpop.f32.mrf.mxu0
        %v7673 = vadd.f32 0.0, %v7672
        %v7674 = vpop.f32.mrf.mxu0
        %7675 = vmatprep.mubr.f32.mxu0 0.0
        %7676 = vmatmul.mubr.f32.gmra.mxu0 %v7398
        %v7677 = vpop.f32.mrf.mxu0
        %v7678 = vadd.f32 0.0, %v7677
        %v7679 = vpop.f32.mrf.mxu0
        %7680 = vmatprep.mubr.f32.mxu0 0.0
        %7681 = vmatmul.mubr.f32.gmra.mxu0 %v7401
        %v7682 = vpop.f32.mrf.mxu0
        %v7683 = vadd.f32 0.0, %v7682
        %v7684 = vpop.f32.mrf.mxu0
        %7685 = vmatprep.mubr.f32.mxu0 0.0
        %7686 = vmatmul.mubr.f32.gmra.mxu0 %v7404
        %v7687 = vpop.f32.mrf.mxu0
        %v7688 = vadd.f32 0.0, %v7687
        %v7689 = vpop.f32.mrf.mxu0
        %7690 = vmatprep.mubr.f32.mxu0 0.0
        %7691 = vmatmul.mubr.f32.gmra.mxu0 %v7407
        %v7692 = vpop.f32.mrf.mxu0
        %v7693 = vadd.f32 0.0, %v7692
        %v7694 = vpop.f32.mrf.mxu0
        %7695 = vmatprep.mubr.f32.mxu0 0.0
        %7696 = vmatmul.mubr.f32.gmra.mxu0 %v7410
        %v7697 = vpop.f32.mrf.mxu0
        %v7698 = vadd.f32 0.0, %v7697
        %v7699 = vpop.f32.mrf.mxu0
        %7700 = vmatprep.mubr.f32.mxu0 0.0
        %7701 = vmatmul.mubr.f32.gmra.mxu0 %v7413
        %v7702 = vpop.f32.mrf.mxu0
        %v7703 = vadd.f32 0.0, %v7702
        %v7704 = vpop.f32.mrf.mxu0
        %7705 = vmatprep.mubr.f32.mxu0 0.0
        %7706 = vmatmul.mubr.f32.gmra.mxu0 %v7416
        %v7707 = vpop.f32.mrf.mxu0
        %v7708 = vadd.f32 0.0, %v7707
        %v7709 = vpop.f32.mrf.mxu0
        %7710 = vmatprep.mubr.f32.mxu0 0.0
        %7711 = vmatmul.mubr.f32.gmra.mxu0 %v7419
        %v7712 = vpop.f32.mrf.mxu0
        %v7713 = vadd.f32 0.0, %v7712
        %v7714 = vpop.f32.mrf.mxu0
        %7715 = vmatprep.mubr.f32.mxu0 0.0
        %7716 = vmatmul.mubr.f32.gmra.mxu0 %v7422
        %v7717 = vpop.f32.mrf.mxu0
        %v7718 = vadd.f32 0.0, %v7717
        %v7719 = vpop.f32.mrf.mxu0
        %7720 = vmatprep.mubr.f32.mxu0 0.0
        %7721 = vmatmul.mubr.f32.gmra.mxu0 %v7425
        %v7722 = vpop.f32.mrf.mxu0
        %v7723 = vadd.f32 0.0, %v7722
        %v7724 = vpop.f32.mrf.mxu0
        %7725 = vmatprep.mubr.f32.mxu0 0.0
        %7726 = vmatmul.mubr.f32.gmra.mxu0 %v7428
        %v7727 = vpop.f32.mrf.mxu0
        %v7728 = vadd.f32 0.0, %v7727
        %v7729 = vpop.f32.mrf.mxu0
        %7730 = vmatprep.mubr.f32.mxu0 0.0
        %7731 = vmatmul.mubr.f32.gmra.mxu0 %v7431
        %v7732 = vpop.f32.mrf.mxu0
        %v7733 = vadd.f32 0.0, %v7732
        %v7734 = vpop.f32.mrf.mxu0
        %7735 = vmatprep.mubr.f32.mxu0 0.0
        %7736 = vmatmul.mubr.f32.gmra.mxu0 %v7434
        %v7737 = vpop.f32.mrf.mxu0
        %v7738 = vadd.f32 0.0, %v7737
        %v7739 = vpop.f32.mrf.mxu0
        %7740 = vmatprep.mubr.f32.mxu0 0.0
        %7741 = vmatmul.mubr.f32.gmra.mxu0 %v7437
        %v7742 = vpop.f32.mrf.mxu0
        %v7743 = vadd.f32 0.0, %v7742
        %v7744 = vpop.f32.mrf.mxu0
        %7745 = vmatprep.mubr.f32.mxu0 0.0
        %7746 = vmatmul.mubr.f32.gmra.mxu0 %v7440
        %v7747 = vpop.f32.mrf.mxu0
        %v7748 = vadd.f32 0.0, %v7747
        %v7749 = vpop.f32.mrf.mxu0
        %7750 = vmatprep.mubr.f32.mxu0 0.0
        %7751 = vmatmul.mubr.f32.gmra.mxu0 %v7443
        %v7752 = vpop.f32.mrf.mxu0
        %v7753 = vadd.f32 0.0, %v7752
        %v7754 = vpop.f32.mrf.mxu0
        %7755 = vmatprep.mubr.f32.mxu0 0.0
        %7756 = vmatmul.mubr.f32.gmra.mxu0 %v7446
        %v7757 = vpop.f32.mrf.mxu0
        %v7758 = vadd.f32 0.0, %v7757
        %v7759 = vpop.f32.mrf.mxu0
        %7760 = vmatprep.mubr.f32.mxu0 0.0
        %7761 = vmatmul.mubr.f32.gmra.mxu0 %v7449
        %v7762 = vpop.f32.mrf.mxu0
        %v7763 = vadd.f32 0.0, %v7762
        %v7764 = vpop.f32.mrf.mxu0
        %7765 = vmatprep.mubr.f32.mxu0 0.0
        %7766 = vmatmul.mubr.f32.gmra.mxu0 %v7452
        %v7767 = vpop.f32.mrf.mxu0
        %v7768 = vadd.f32 0.0, %v7767
        %v7769 = vpop.f32.mrf.mxu0
        %7770 = vmatprep.mubr.f32.mxu0 0.0
        %7771 = vmatmul.mubr.f32.gmra.mxu0 %v7455
        %v7772 = vpop.f32.mrf.mxu0
        %v7773 = vadd.f32 0.0, %v7772
        %v7774 = vpop.f32.mrf.mxu0
        %7775 = vmatprep.mubr.f32.mxu0 0.0
        %7776 = vmatmul.mubr.f32.gmra.mxu0 %v7458
        %v7777 = vpop.f32.mrf.mxu0
        %v7778 = vadd.f32 0.0, %v7777
        %v7779 = vpop.f32.mrf.mxu0
        %7780 = vmatprep.mubr.f32.mxu0 0.0
        %7781 = vmatmul.mubr.f32.gmra.mxu0 %v7461
        %v7782 = vpop.f32.mrf.mxu0
        %v7783 = vadd.f32 0.0, %v7782
        %v7784 = vpop.f32.mrf.mxu0
        %7785 = vmatprep.mubr.f32.mxu0 0.0
        %7786 = vmatmul.mubr.f32.gmra.mxu0 %v7464
        %v7787 = vpop.f32.mrf.mxu0
        %v7788 = vadd.f32 0.0, %v7787
        %v7789 = vpop.f32.mrf.mxu0
        %7790 = vmatprep.mubr.f32.mxu0 0.0
        %7791 = vmatmul.mubr.f32.gmra.mxu0 %v7467
        %v7792 = vpop.f32.mrf.mxu0
        %v7793 = vadd.f32 0.0, %v7792
        %v7794 = vpop.f32.mrf.mxu0
        %7795 = vmatprep.mubr.f32.mxu0 0.0
        %7796 = vmatmul.mubr.f32.gmra.mxu0 %v7470
        %v7797 = vpop.f32.mrf.mxu0
        %v7798 = vadd.f32 0.0, %v7797
        %v7799 = vpop.f32.mrf.mxu0
        %7800 = vmatprep.mubr.f32.mxu0 0.0
        %7801 = vmatmul.mubr.f32.gmra.mxu0 %v7473
        %v7802 = vpop.f32.mrf.mxu0
        %v7803 = vadd.f32 0.0, %v7802
        %v7804 = vpop.f32.mrf.mxu0
        %7805 = vmatprep.mubr.f32.mxu0 0.0
        %7806 = vmatmul.mubr.f32.gmra.mxu0 %v7476
        %v7807 = vpop.f32.mrf.mxu0
        %v7808 = vadd.f32 0.0, %v7807
        %v7809 = vpop.f32.mrf.mxu0
        %7810 = vdwg.mxu0
        %v7811 = vadd.f32 %v7211, %v7548
        %v7812 = vadd.f32 %v7212, %v7553
        %v7813 = vadd.f32 %v7213, %v7558
        %v7814 = vadd.f32 %v7214, %v7563
        %v7815 = vadd.f32 %v7215, %v7568
        %v7816 = vadd.f32 %v7216, %v7573
        %v7817 = vadd.f32 %v7217, %v7578
        %v7818 = vadd.f32 %v7218, %v7583
        %v7819 = vadd.f32 %v7219, %v7588
        %v7820 = vadd.f32 %v7220, %v7593
        %v7821 = vadd.f32 %v7221, %v7598
        %v7822 = vadd.f32 %v7222, %v7603
        %v7823 = vadd.f32 %v7223, %v7608
        %v7824 = vadd.f32 %v7224, %v7613
        %v7825 = vadd.f32 %v7225, %v7618
        %v7826 = vadd.f32 %v7226, %v7623
        %v7827 = vadd.f32 %v7227, %v7628
        %v7828 = vadd.f32 %v7228, %v7633
        %v7829 = vadd.f32 %v7229, %v7638
        %v7830 = vadd.f32 %v7230, %v7643
        %v7831 = vadd.f32 %v7231, %v7648
        %v7832 = vadd.f32 %v7232, %v7653
        %v7833 = vadd.f32 %v7233, %v7658
        %v7834 = vadd.f32 %v7234, %v7663
        %v7835 = vadd.f32 %v7235, %v7668
        %v7836 = vadd.f32 %v7236, %v7673
        %v7837 = vadd.f32 %v7237, %v7678
        %v7838 = vadd.f32 %v7238, %v7683
        %v7839 = vadd.f32 %v7239, %v7688
        %v7840 = vadd.f32 %v7240, %v7693
        %v7841 = vadd.f32 %v7241, %v7698
        %v7842 = vadd.f32 %v7242, %v7703
        %v7843 = vadd.f32 %v7243, %v7708
        %v7844 = vadd.f32 %v7244, %v7713
        %v7845 = vadd.f32 %v7245, %v7718
        %v7846 = vadd.f32 %v7246, %v7723
        %v7847 = vadd.f32 %v7247, %v7728
        %v7848 = vadd.f32 %v7248, %v7733
        %v7849 = vadd.f32 %v7249, %v7738
        %v7850 = vadd.f32 %v7250, %v7743
        %v7851 = vadd.f32 %v7251, %v7748
        %v7852 = vadd.f32 %v7252, %v7753
        %v7853 = vadd.f32 %v7253, %v7758
        %v7854 = vadd.f32 %v7254, %v7763
        %v7855 = vadd.f32 %v7255, %v7768
        %v7856 = vadd.f32 %v7256, %v7773
        %v7857 = vadd.f32 %v7257, %v7778
        %v7858 = vadd.f32 %v7258, %v7783
        %v7859 = vadd.f32 %v7259, %v7788
        %v7860 = vadd.f32 %v7260, %v7793
        %v7861 = vadd.f32 %v7261, %v7798
        %v7862 = vadd.f32 %v7262, %v7803
        %v7863 = vadd.f32 %v7263, %v7808
        %v7864 = vld [vmem:[%s168 + $0x43] sm:$0xff]
        %v7865 = vld [vmem:[%s168 + $0x4b] sm:$0xff]
        %v7866 = vld [vmem:[%s168 + $0x53] sm:$0xff]
        %v7867 = vld [vmem:[%s168 + $0x5b] sm:$0xff]
        %v7868 = vld [vmem:[%s168 + $0x63] sm:$0xff]
        %v7869 = vld [vmem:[%s168 + $0x6b] sm:$0xff]
        %v7870 = vld [vmem:[%s168 + $0x73] sm:$0xff]
        %v7871 = vld [vmem:[%s168 + $0x7b] sm:$0xff]
        %v7872 = vld [vmem:[%s168 + $0x83] sm:$0xff]
        %v7873 = vld [vmem:[%s168 + $0x8b] sm:$0xff]
        %v7874 = vld [vmem:[%s168 + $0x93] sm:$0xff]
        %v7875 = vld [vmem:[%s168 + $0x9b] sm:$0xff]
        %v7876 = vld [vmem:[%s168 + $0xa3] sm:$0xff]
        %v7877 = vld [vmem:[%s168 + $0xab] sm:$0xff]
        %v7878 = vld [vmem:[%s168 + $0xb3] sm:$0xff]
        %v7879 = vld [vmem:[%s168 + $0xbb] sm:$0xff]
        %v7880 = vld [vmem:[%s168 + $0xc3] sm:$0xff]
        %v7881 = vld [vmem:[%s168 + $0xcb] sm:$0xff]
        %v7882 = vld [vmem:[%s168 + $0xd3] sm:$0xff]
        %v7883 = vld [vmem:[%s168 + $0xdb] sm:$0xff]
        %v7884 = vld [vmem:[%s168 + $0xe3] sm:$0xff]
        %v7885 = vld [vmem:[%s168 + $0xeb] sm:$0xff]
        %v7886 = vld [vmem:[%s168 + $0xf3] sm:$0xff]
        %v7887 = vld [vmem:[%s168 + $0xfb] sm:$0xff]
        %v7888 = vld [vmem:[%s168 + $0x103] sm:$0xff]
        %v7889 = vld [vmem:[%s168 + $0x10b] sm:$0xff]
        %v7890 = vld [vmem:[%s168 + $0x113] sm:$0xff]
        %v7891 = vld [vmem:[%s168 + $0x11b] sm:$0xff]
        %v7892 = vld [vmem:[%s168 + $0x123] sm:$0xff]
        %v7893 = vld [vmem:[%s168 + $0x12b] sm:$0xff]
        %v7894 = vld [vmem:[%s168 + $0x133] sm:$0xff]
        %v7895 = vld [vmem:[%s168 + $0x13b] sm:$0xff]
        %v7896 = vld [vmem:[%s168 + $0x143] sm:$0xff]
        %v7897 = vld [vmem:[%s168 + $0x14b] sm:$0xff]
        %v7898 = vld [vmem:[%s168 + $0x153] sm:$0xff]
        %v7899 = vld [vmem:[%s168 + $0x15b] sm:$0xff]
        %v7900 = vld [vmem:[%s168 + $0x163] sm:$0xff]
        %v7901 = vld [vmem:[%s168 + $0x16b] sm:$0xff]
        %v7902 = vld [vmem:[%s168 + $0x173] sm:$0xff]
        %v7903 = vld [vmem:[%s168 + $0x17b] sm:$0xff]
        %v7904 = vld [vmem:[%s168 + $0x183] sm:$0xff]
        %v7905 = vld [vmem:[%s168 + $0x18b] sm:$0xff]
        %v7906 = vld [vmem:[%s168 + $0x193] sm:$0xff]
        %v7907 = vld [vmem:[%s168 + $0x19b] sm:$0xff]
        %v7908 = vld [vmem:[%s168 + $0x1a3] sm:$0xff]
        %v7909 = vld [vmem:[%s168 + $0x1ab] sm:$0xff]
        %v7910 = vld [vmem:[%s168 + $0x1b3] sm:$0xff]
        %v7911 = vld [vmem:[%s168 + $0x1bb] sm:$0xff]
        %v7912 = vld [vmem:[%s168 + $0x1c3] sm:$0xff]
        %v7913 = vld [vmem:[%s168 + $0x1cb] sm:$0xff]
        %v7914 = vld [vmem:[%s168 + $0x1d3] sm:$0xff]
        %v7915 = vld [vmem:[%s168 + $0x1db] sm:$0xff]
        %v7916 = vld [vmem:[%s168 + $0x1e3] sm:$0x3]
        %s7917 = scalar_lea.vmem %s1, 52
        %v7918 = vld [vmem:[%s7917] sm:$0xf]
        %v7920 = vsel %vm278, %v7864, 0
        %v7923 = vsel %vm278, %v7865, 0
        %v7926 = vsel %vm278, %v7866, 0
        %v7929 = vsel %vm278, %v7867, 0
        %v7932 = vsel %vm278, %v7868, 0
        %v7935 = vsel %vm278, %v7869, 0
        %v7938 = vsel %vm278, %v7870, 0
        %v7941 = vsel %vm278, %v7871, 0
        %v7944 = vsel %vm278, %v7872, 0
        %v7947 = vsel %vm278, %v7873, 0
        %v7950 = vsel %vm278, %v7874, 0
        %v7953 = vsel %vm278, %v7875, 0
        %v7956 = vsel %vm278, %v7876, 0
        %v7959 = vsel %vm278, %v7877, 0
        %v7962 = vsel %vm278, %v7878, 0
        %v7965 = vsel %vm278, %v7879, 0
        %v7968 = vsel %vm278, %v7880, 0
        %v7971 = vsel %vm278, %v7881, 0
        %v7974 = vsel %vm278, %v7882, 0
        %v7977 = vsel %vm278, %v7883, 0
        %v7980 = vsel %vm278, %v7884, 0
        %v7983 = vsel %vm278, %v7885, 0
        %v7986 = vsel %vm278, %v7886, 0
        %v7989 = vsel %vm278, %v7887, 0
        %v7992 = vsel %vm278, %v7888, 0
        %v7995 = vsel %vm278, %v7889, 0
        %v7998 = vsel %vm278, %v7890, 0
        %v8001 = vsel %vm278, %v7891, 0
        %v8004 = vsel %vm278, %v7892, 0
        %v8007 = vsel %vm278, %v7893, 0
        %v8010 = vsel %vm278, %v7894, 0
        %v8013 = vsel %vm278, %v7895, 0
        %v8016 = vsel %vm278, %v7896, 0
        %v8019 = vsel %vm278, %v7897, 0
        %v8022 = vsel %vm278, %v7898, 0
        %v8025 = vsel %vm278, %v7899, 0
        %v8028 = vsel %vm278, %v7900, 0
        %v8031 = vsel %vm278, %v7901, 0
        %v8034 = vsel %vm278, %v7902, 0
        %v8037 = vsel %vm278, %v7903, 0
        %v8040 = vsel %vm278, %v7904, 0
        %v8043 = vsel %vm278, %v7905, 0
        %v8046 = vsel %vm278, %v7906, 0
        %v8049 = vsel %vm278, %v7907, 0
        %v8052 = vsel %vm278, %v7908, 0
        %v8055 = vsel %vm278, %v7909, 0
        %v8058 = vsel %vm278, %v7910, 0
        %v8061 = vsel %vm278, %v7911, 0
        %v8064 = vsel %vm278, %v7912, 0
        %v8067 = vsel %vm278, %v7913, 0
        %v8070 = vsel %vm278, %v7914, 0
        %v8073 = vsel %vm278, %v7915, 0
        %v8076 = vsel %vm278, %v7916, 0
        %v8079 = vsel %vm438, %v7918, 0
        %8081 = vmatprep.subr.mxu0 0.0
        %8082 = vmatpush1.msra.mxu0 0.0
        %8083 = vmatprep.subr.mxu0 0.0
        %8084 = vmatpush1.msra.mxu0 0.0
        %8085 = vmatprep.subr.mxu0 0.0
        %8086 = vmatpush1.msra.mxu0 0.0
        %8087 = vmatprep.subr.mxu0 0.0
        %8088 = vmatpush1.msra.mxu0 0.0
        %8089 = vmatprep.subr.mxu0 0.0
        %8090 = vmatpush1.msra.mxu0 0.0
        %8091 = vmatprep.subr.mxu0 0.0
        %8092 = vmatpush1.msra.mxu0 0.0
        %8093 = vmatprep.subr.mxu0 0.0
        %8094 = vmatpush1.msra.mxu0 0.0
        %8095 = vmatprep.subr.mxu0 0.0
        %8096 = vmatpush1.msra.mxu0 0.0
        %8097 = vmatprep.subr.mxu0 0.0
        %8098 = vmatpush1.msra.mxu0 0.0
        %8099 = vmatprep.subr.mxu0 0.0
        %8100 = vmatpush1.msra.mxu0 0.0
        %8101 = vmatprep.subr.mxu0 0.0
        %8102 = vmatpush1.msra.mxu0 0.0
        %8103 = vmatprep.subr.mxu0 0.0
        %8104 = vmatpush1.msra.mxu0 0.0
        %8105 = vmatprep.subr.mxu0 0.0
        %8106 = vmatpush1.msra.mxu0 0.0
        %8107 = vmatprep.subr.mxu0 0.0
        %8108 = vmatpush1.msra.mxu0 0.0
        %8109 = vmatprep.subr.mxu0 0.0
        %8110 = vmatpush1.msra.mxu0 0.0
        %8111 = vmatprep.subr.mxu0 0.0
        %8112 = vmatpush1.msra.mxu0 %v8079
        %8113 = vmatprep.subr.mxu0 0.0
        %8114 = vmatpush2.msra.mxu0 0.0
        %8115 = vmatprep.subr.mxu0 0.0
        %8116 = vmatpush2.msra.mxu0 0.0
        %8117 = vmatprep.subr.mxu0 0.0
        %8118 = vmatpush2.msra.mxu0 0.0
        %8119 = vmatprep.subr.mxu0 0.0
        %8120 = vmatpush2.msra.mxu0 0.0
        %8121 = vmatprep.subr.mxu0 0.0
        %8122 = vmatpush2.msra.mxu0 0.0
        %8123 = vmatprep.subr.mxu0 0.0
        %8124 = vmatpush2.msra.mxu0 0.0
        %8125 = vmatprep.subr.mxu0 0.0
        %8126 = vmatpush2.msra.mxu0 0.0
        %8127 = vmatprep.subr.mxu0 0.0
        %8128 = vmatpush2.msra.mxu0 0.0
        %8129 = vmatprep.subr.mxu0 0.0
        %8130 = vmatpush2.msra.mxu0 0.0
        %8131 = vmatprep.subr.mxu0 0.0
        %8132 = vmatpush2.msra.mxu0 0.0
        %8133 = vmatprep.subr.mxu0 0.0
        %8134 = vmatpush2.msra.mxu0 0.0
        %8135 = vmatprep.subr.mxu0 0.0
        %8136 = vmatpush2.msra.mxu0 0.0
        %8137 = vmatprep.subr.mxu0 0.0
        %8138 = vmatpush2.msra.mxu0 0.0
        %8139 = vmatprep.subr.mxu0 0.0
        %8140 = vmatpush2.msra.mxu0 0.0
        %8141 = vmatprep.subr.mxu0 0.0
        %8142 = vmatpush2.msra.mxu0 0.0
        %8143 = vmatprep.subr.mxu0 0.0
        %8144 = vmatpush2.msra.mxu0 0.0
        %8145 = vmatprep.mubr.f32.mxu0 0.0
        %8146 = vmatmul.mubr.f32.gmra.mxu0 %v7920
        %v8147 = vpop.f32.mrf.mxu0
        %v8148 = vadd.f32 0.0, %v8147
        %v8149 = vpop.f32.mrf.mxu0
        %8150 = vmatprep.mubr.f32.mxu0 0.0
        %8151 = vmatmul.mubr.f32.gmra.mxu0 %v7923
        %v8152 = vpop.f32.mrf.mxu0
        %v8153 = vadd.f32 0.0, %v8152
        %v8154 = vpop.f32.mrf.mxu0
        %8155 = vmatprep.mubr.f32.mxu0 0.0
        %8156 = vmatmul.mubr.f32.gmra.mxu0 %v7926
        %v8157 = vpop.f32.mrf.mxu0
        %v8158 = vadd.f32 0.0, %v8157
        %v8159 = vpop.f32.mrf.mxu0
        %8160 = vmatprep.mubr.f32.mxu0 0.0
        %8161 = vmatmul.mubr.f32.gmra.mxu0 %v7929
        %v8162 = vpop.f32.mrf.mxu0
        %v8163 = vadd.f32 0.0, %v8162
        %v8164 = vpop.f32.mrf.mxu0
        %8165 = vmatprep.mubr.f32.mxu0 0.0
        %8166 = vmatmul.mubr.f32.gmra.mxu0 %v7932
        %v8167 = vpop.f32.mrf.mxu0
        %v8168 = vadd.f32 0.0, %v8167
        %v8169 = vpop.f32.mrf.mxu0
        %8170 = vmatprep.mubr.f32.mxu0 0.0
        %8171 = vmatmul.mubr.f32.gmra.mxu0 %v7935
        %v8172 = vpop.f32.mrf.mxu0
        %v8173 = vadd.f32 0.0, %v8172
        %v8174 = vpop.f32.mrf.mxu0
        %8175 = vmatprep.mubr.f32.mxu0 0.0
        %8176 = vmatmul.mubr.f32.gmra.mxu0 %v7938
        %v8177 = vpop.f32.mrf.mxu0
        %v8178 = vadd.f32 0.0, %v8177
        %v8179 = vpop.f32.mrf.mxu0
        %8180 = vmatprep.mubr.f32.mxu0 0.0
        %8181 = vmatmul.mubr.f32.gmra.mxu0 %v7941
        %v8182 = vpop.f32.mrf.mxu0
        %v8183 = vadd.f32 0.0, %v8182
        %v8184 = vpop.f32.mrf.mxu0
        %8185 = vmatprep.mubr.f32.mxu0 0.0
        %8186 = vmatmul.mubr.f32.gmra.mxu0 %v7944
        %v8187 = vpop.f32.mrf.mxu0
        %v8188 = vadd.f32 0.0, %v8187
        %v8189 = vpop.f32.mrf.mxu0
        %8190 = vmatprep.mubr.f32.mxu0 0.0
        %8191 = vmatmul.mubr.f32.gmra.mxu0 %v7947
        %v8192 = vpop.f32.mrf.mxu0
        %v8193 = vadd.f32 0.0, %v8192
        %v8194 = vpop.f32.mrf.mxu0
        %8195 = vmatprep.mubr.f32.mxu0 0.0
        %8196 = vmatmul.mubr.f32.gmra.mxu0 %v7950
        %v8197 = vpop.f32.mrf.mxu0
        %v8198 = vadd.f32 0.0, %v8197
        %v8199 = vpop.f32.mrf.mxu0
        %8200 = vmatprep.mubr.f32.mxu0 0.0
        %8201 = vmatmul.mubr.f32.gmra.mxu0 %v7953
        %v8202 = vpop.f32.mrf.mxu0
        %v8203 = vadd.f32 0.0, %v8202
        %v8204 = vpop.f32.mrf.mxu0
        %8205 = vmatprep.mubr.f32.mxu0 0.0
        %8206 = vmatmul.mubr.f32.gmra.mxu0 %v7956
        %v8207 = vpop.f32.mrf.mxu0
        %v8208 = vadd.f32 0.0, %v8207
        %v8209 = vpop.f32.mrf.mxu0
        %8210 = vmatprep.mubr.f32.mxu0 0.0
        %8211 = vmatmul.mubr.f32.gmra.mxu0 %v7959
        %v8212 = vpop.f32.mrf.mxu0
        %v8213 = vadd.f32 0.0, %v8212
        %v8214 = vpop.f32.mrf.mxu0
        %8215 = vmatprep.mubr.f32.mxu0 0.0
        %8216 = vmatmul.mubr.f32.gmra.mxu0 %v7962
        %v8217 = vpop.f32.mrf.mxu0
        %v8218 = vadd.f32 0.0, %v8217
        %v8219 = vpop.f32.mrf.mxu0
        %8220 = vmatprep.mubr.f32.mxu0 0.0
        %8221 = vmatmul.mubr.f32.gmra.mxu0 %v7965
        %v8222 = vpop.f32.mrf.mxu0
        %v8223 = vadd.f32 0.0, %v8222
        %v8224 = vpop.f32.mrf.mxu0
        %8225 = vmatprep.mubr.f32.mxu0 0.0
        %8226 = vmatmul.mubr.f32.gmra.mxu0 %v7968
        %v8227 = vpop.f32.mrf.mxu0
        %v8228 = vadd.f32 0.0, %v8227
        %v8229 = vpop.f32.mrf.mxu0
        %8230 = vmatprep.mubr.f32.mxu0 0.0
        %8231 = vmatmul.mubr.f32.gmra.mxu0 %v7971
        %v8232 = vpop.f32.mrf.mxu0
        %v8233 = vadd.f32 0.0, %v8232
        %v8234 = vpop.f32.mrf.mxu0
        %8235 = vmatprep.mubr.f32.mxu0 0.0
        %8236 = vmatmul.mubr.f32.gmra.mxu0 %v7974
        %v8237 = vpop.f32.mrf.mxu0
        %v8238 = vadd.f32 0.0, %v8237
        %v8239 = vpop.f32.mrf.mxu0
        %8240 = vmatprep.mubr.f32.mxu0 0.0
        %8241 = vmatmul.mubr.f32.gmra.mxu0 %v7977
        %v8242 = vpop.f32.mrf.mxu0
        %v8243 = vadd.f32 0.0, %v8242
        %v8244 = vpop.f32.mrf.mxu0
        %8245 = vmatprep.mubr.f32.mxu0 0.0
        %8246 = vmatmul.mubr.f32.gmra.mxu0 %v7980
        %v8247 = vpop.f32.mrf.mxu0
        %v8248 = vadd.f32 0.0, %v8247
        %v8249 = vpop.f32.mrf.mxu0
        %8250 = vmatprep.mubr.f32.mxu0 0.0
        %8251 = vmatmul.mubr.f32.gmra.mxu0 %v7983
        %v8252 = vpop.f32.mrf.mxu0
        %v8253 = vadd.f32 0.0, %v8252
        %v8254 = vpop.f32.mrf.mxu0
        %8255 = vmatprep.mubr.f32.mxu0 0.0
        %8256 = vmatmul.mubr.f32.gmra.mxu0 %v7986
        %v8257 = vpop.f32.mrf.mxu0
        %v8258 = vadd.f32 0.0, %v8257
        %v8259 = vpop.f32.mrf.mxu0
        %8260 = vmatprep.mubr.f32.mxu0 0.0
        %8261 = vmatmul.mubr.f32.gmra.mxu0 %v7989
        %v8262 = vpop.f32.mrf.mxu0
        %v8263 = vadd.f32 0.0, %v8262
        %v8264 = vpop.f32.mrf.mxu0
        %8265 = vmatprep.mubr.f32.mxu0 0.0
        %8266 = vmatmul.mubr.f32.gmra.mxu0 %v7992
        %v8267 = vpop.f32.mrf.mxu0
        %v8268 = vadd.f32 0.0, %v8267
        %v8269 = vpop.f32.mrf.mxu0
        %8270 = vmatprep.mubr.f32.mxu0 0.0
        %8271 = vmatmul.mubr.f32.gmra.mxu0 %v7995
        %v8272 = vpop.f32.mrf.mxu0
        %v8273 = vadd.f32 0.0, %v8272
        %v8274 = vpop.f32.mrf.mxu0
        %8275 = vmatprep.mubr.f32.mxu0 0.0
        %8276 = vmatmul.mubr.f32.gmra.mxu0 %v7998
        %v8277 = vpop.f32.mrf.mxu0
        %v8278 = vadd.f32 0.0, %v8277
        %v8279 = vpop.f32.mrf.mxu0
        %8280 = vmatprep.mubr.f32.mxu0 0.0
        %8281 = vmatmul.mubr.f32.gmra.mxu0 %v8001
        %v8282 = vpop.f32.mrf.mxu0
        %v8283 = vadd.f32 0.0, %v8282
        %v8284 = vpop.f32.mrf.mxu0
        %8285 = vmatprep.mubr.f32.mxu0 0.0
        %8286 = vmatmul.mubr.f32.gmra.mxu0 %v8004
        %v8287 = vpop.f32.mrf.mxu0
        %v8288 = vadd.f32 0.0, %v8287
        %v8289 = vpop.f32.mrf.mxu0
        %8290 = vmatprep.mubr.f32.mxu0 0.0
        %8291 = vmatmul.mubr.f32.gmra.mxu0 %v8007
        %v8292 = vpop.f32.mrf.mxu0
        %v8293 = vadd.f32 0.0, %v8292
        %v8294 = vpop.f32.mrf.mxu0
        %8295 = vmatprep.mubr.f32.mxu0 0.0
        %8296 = vmatmul.mubr.f32.gmra.mxu0 %v8010
        %v8297 = vpop.f32.mrf.mxu0
        %v8298 = vadd.f32 0.0, %v8297
        %v8299 = vpop.f32.mrf.mxu0
        %8300 = vmatprep.mubr.f32.mxu0 0.0
        %8301 = vmatmul.mubr.f32.gmra.mxu0 %v8013
        %v8302 = vpop.f32.mrf.mxu0
        %v8303 = vadd.f32 0.0, %v8302
        %v8304 = vpop.f32.mrf.mxu0
        %8305 = vmatprep.mubr.f32.mxu0 0.0
        %8306 = vmatmul.mubr.f32.gmra.mxu0 %v8016
        %v8307 = vpop.f32.mrf.mxu0
        %v8308 = vadd.f32 0.0, %v8307
        %v8309 = vpop.f32.mrf.mxu0
        %8310 = vmatprep.mubr.f32.mxu0 0.0
        %8311 = vmatmul.mubr.f32.gmra.mxu0 %v8019
        %v8312 = vpop.f32.mrf.mxu0
        %v8313 = vadd.f32 0.0, %v8312
        %v8314 = vpop.f32.mrf.mxu0
        %8315 = vmatprep.mubr.f32.mxu0 0.0
        %8316 = vmatmul.mubr.f32.gmra.mxu0 %v8022
        %v8317 = vpop.f32.mrf.mxu0
        %v8318 = vadd.f32 0.0, %v8317
        %v8319 = vpop.f32.mrf.mxu0
        %8320 = vmatprep.mubr.f32.mxu0 0.0
        %8321 = vmatmul.mubr.f32.gmra.mxu0 %v8025
        %v8322 = vpop.f32.mrf.mxu0
        %v8323 = vadd.f32 0.0, %v8322
        %v8324 = vpop.f32.mrf.mxu0
        %8325 = vmatprep.mubr.f32.mxu0 0.0
        %8326 = vmatmul.mubr.f32.gmra.mxu0 %v8028
        %v8327 = vpop.f32.mrf.mxu0
        %v8328 = vadd.f32 0.0, %v8327
        %v8329 = vpop.f32.mrf.mxu0
        %8330 = vmatprep.mubr.f32.mxu0 0.0
        %8331 = vmatmul.mubr.f32.gmra.mxu0 %v8031
        %v8332 = vpop.f32.mrf.mxu0
        %v8333 = vadd.f32 0.0, %v8332
        %v8334 = vpop.f32.mrf.mxu0
        %8335 = vmatprep.mubr.f32.mxu0 0.0
        %8336 = vmatmul.mubr.f32.gmra.mxu0 %v8034
        %v8337 = vpop.f32.mrf.mxu0
        %v8338 = vadd.f32 0.0, %v8337
        %v8339 = vpop.f32.mrf.mxu0
        %8340 = vmatprep.mubr.f32.mxu0 0.0
        %8341 = vmatmul.mubr.f32.gmra.mxu0 %v8037
        %v8342 = vpop.f32.mrf.mxu0
        %v8343 = vadd.f32 0.0, %v8342
        %v8344 = vpop.f32.mrf.mxu0
        %8345 = vmatprep.mubr.f32.mxu0 0.0
        %8346 = vmatmul.mubr.f32.gmra.mxu0 %v8040
        %v8347 = vpop.f32.mrf.mxu0
        %v8348 = vadd.f32 0.0, %v8347
        %v8349 = vpop.f32.mrf.mxu0
        %8350 = vmatprep.mubr.f32.mxu0 0.0
        %8351 = vmatmul.mubr.f32.gmra.mxu0 %v8043
        %v8352 = vpop.f32.mrf.mxu0
        %v8353 = vadd.f32 0.0, %v8352
        %v8354 = vpop.f32.mrf.mxu0
        %8355 = vmatprep.mubr.f32.mxu0 0.0
        %8356 = vmatmul.mubr.f32.gmra.mxu0 %v8046
        %v8357 = vpop.f32.mrf.mxu0
        %v8358 = vadd.f32 0.0, %v8357
        %v8359 = vpop.f32.mrf.mxu0
        %8360 = vmatprep.mubr.f32.mxu0 0.0
        %8361 = vmatmul.mubr.f32.gmra.mxu0 %v8049
        %v8362 = vpop.f32.mrf.mxu0
        %v8363 = vadd.f32 0.0, %v8362
        %v8364 = vpop.f32.mrf.mxu0
        %8365 = vmatprep.mubr.f32.mxu0 0.0
        %8366 = vmatmul.mubr.f32.gmra.mxu0 %v8052
        %v8367 = vpop.f32.mrf.mxu0
        %v8368 = vadd.f32 0.0, %v8367
        %v8369 = vpop.f32.mrf.mxu0
        %8370 = vmatprep.mubr.f32.mxu0 0.0
        %8371 = vmatmul.mubr.f32.gmra.mxu0 %v8055
        %v8372 = vpop.f32.mrf.mxu0
        %v8373 = vadd.f32 0.0, %v8372
        %v8374 = vpop.f32.mrf.mxu0
        %8375 = vmatprep.mubr.f32.mxu0 0.0
        %8376 = vmatmul.mubr.f32.gmra.mxu0 %v8058
        %v8377 = vpop.f32.mrf.mxu0
        %v8378 = vadd.f32 0.0, %v8377
        %v8379 = vpop.f32.mrf.mxu0
        %8380 = vmatprep.mubr.f32.mxu0 0.0
        %8381 = vmatmul.mubr.f32.gmra.mxu0 %v8061
        %v8382 = vpop.f32.mrf.mxu0
        %v8383 = vadd.f32 0.0, %v8382
        %v8384 = vpop.f32.mrf.mxu0
        %8385 = vmatprep.mubr.f32.mxu0 0.0
        %8386 = vmatmul.mubr.f32.gmra.mxu0 %v8064
        %v8387 = vpop.f32.mrf.mxu0
        %v8388 = vadd.f32 0.0, %v8387
        %v8389 = vpop.f32.mrf.mxu0
        %8390 = vmatprep.mubr.f32.mxu0 0.0
        %8391 = vmatmul.mubr.f32.gmra.mxu0 %v8067
        %v8392 = vpop.f32.mrf.mxu0
        %v8393 = vadd.f32 0.0, %v8392
        %v8394 = vpop.f32.mrf.mxu0
        %8395 = vmatprep.mubr.f32.mxu0 0.0
        %8396 = vmatmul.mubr.f32.gmra.mxu0 %v8070
        %v8397 = vpop.f32.mrf.mxu0
        %v8398 = vadd.f32 0.0, %v8397
        %v8399 = vpop.f32.mrf.mxu0
        %8400 = vmatprep.mubr.f32.mxu0 0.0
        %8401 = vmatmul.mubr.f32.gmra.mxu0 %v8073
        %v8402 = vpop.f32.mrf.mxu0
        %v8403 = vadd.f32 0.0, %v8402
        %v8404 = vpop.f32.mrf.mxu0
        %8405 = vmatprep.mubr.f32.mxu0 0.0
        %8406 = vmatmul.mubr.f32.gmra.mxu0 %v8076
        %v8407 = vpop.f32.mrf.mxu0
        %v8408 = vadd.f32 0.0, %v8407
        %v8409 = vpop.f32.mrf.mxu0
        %8410 = vdwg.mxu0
        %v8411 = vadd.f32 %v7811, %v8148
        %v8412 = vadd.f32 %v7812, %v8153
        %v8413 = vadd.f32 %v7813, %v8158
        %v8414 = vadd.f32 %v7814, %v8163
        %v8415 = vadd.f32 %v7815, %v8168
        %v8416 = vadd.f32 %v7816, %v8173
        %v8417 = vadd.f32 %v7817, %v8178
        %v8418 = vadd.f32 %v7818, %v8183
        %v8419 = vadd.f32 %v7819, %v8188
        %v8420 = vadd.f32 %v7820, %v8193
        %v8421 = vadd.f32 %v7821, %v8198
        %v8422 = vadd.f32 %v7822, %v8203
        %v8423 = vadd.f32 %v7823, %v8208
        %v8424 = vadd.f32 %v7824, %v8213
        %v8425 = vadd.f32 %v7825, %v8218
        %v8426 = vadd.f32 %v7826, %v8223
        %v8427 = vadd.f32 %v7827, %v8228
        %v8428 = vadd.f32 %v7828, %v8233
        %v8429 = vadd.f32 %v7829, %v8238
        %v8430 = vadd.f32 %v7830, %v8243
        %v8431 = vadd.f32 %v7831, %v8248
        %v8432 = vadd.f32 %v7832, %v8253
        %v8433 = vadd.f32 %v7833, %v8258
        %v8434 = vadd.f32 %v7834, %v8263
        %v8435 = vadd.f32 %v7835, %v8268
        %v8436 = vadd.f32 %v7836, %v8273
        %v8437 = vadd.f32 %v7837, %v8278
        %v8438 = vadd.f32 %v7838, %v8283
        %v8439 = vadd.f32 %v7839, %v8288
        %v8440 = vadd.f32 %v7840, %v8293
        %v8441 = vadd.f32 %v7841, %v8298
        %v8442 = vadd.f32 %v7842, %v8303
        %v8443 = vadd.f32 %v7843, %v8308
        %v8444 = vadd.f32 %v7844, %v8313
        %v8445 = vadd.f32 %v7845, %v8318
        %v8446 = vadd.f32 %v7846, %v8323
        %v8447 = vadd.f32 %v7847, %v8328
        %v8448 = vadd.f32 %v7848, %v8333
        %v8449 = vadd.f32 %v7849, %v8338
        %v8450 = vadd.f32 %v7850, %v8343
        %v8451 = vadd.f32 %v7851, %v8348
        %v8452 = vadd.f32 %v7852, %v8353
        %v8453 = vadd.f32 %v7853, %v8358
        %v8454 = vadd.f32 %v7854, %v8363
        %v8455 = vadd.f32 %v7855, %v8368
        %v8456 = vadd.f32 %v7856, %v8373
        %v8457 = vadd.f32 %v7857, %v8378
        %v8458 = vadd.f32 %v7858, %v8383
        %v8459 = vadd.f32 %v7859, %v8388
        %v8460 = vadd.f32 %v7860, %v8393
        %v8461 = vadd.f32 %v7861, %v8398
        %v8462 = vadd.f32 %v7862, %v8403
        %v8463 = vadd.f32 %v7863, %v8408
        %v8464 = vld [vmem:[%s168 + $0x44] sm:$0xff]
        %v8465 = vld [vmem:[%s168 + $0x4c] sm:$0xff]
        %v8466 = vld [vmem:[%s168 + $0x54] sm:$0xff]
        %v8467 = vld [vmem:[%s168 + $0x5c] sm:$0xff]
        %v8468 = vld [vmem:[%s168 + $0x64] sm:$0xff]
        %v8469 = vld [vmem:[%s168 + $0x6c] sm:$0xff]
        %v8470 = vld [vmem:[%s168 + $0x74] sm:$0xff]
        %v8471 = vld [vmem:[%s168 + $0x7c] sm:$0xff]
        %v8472 = vld [vmem:[%s168 + $0x84] sm:$0xff]
        %v8473 = vld [vmem:[%s168 + $0x8c] sm:$0xff]
        %v8474 = vld [vmem:[%s168 + $0x94] sm:$0xff]
        %v8475 = vld [vmem:[%s168 + $0x9c] sm:$0xff]
        %v8476 = vld [vmem:[%s168 + $0xa4] sm:$0xff]
        %v8477 = vld [vmem:[%s168 + $0xac] sm:$0xff]
        %v8478 = vld [vmem:[%s168 + $0xb4] sm:$0xff]
        %v8479 = vld [vmem:[%s168 + $0xbc] sm:$0xff]
        %v8480 = vld [vmem:[%s168 + $0xc4] sm:$0xff]
        %v8481 = vld [vmem:[%s168 + $0xcc] sm:$0xff]
        %v8482 = vld [vmem:[%s168 + $0xd4] sm:$0xff]
        %v8483 = vld [vmem:[%s168 + $0xdc] sm:$0xff]
        %v8484 = vld [vmem:[%s168 + $0xe4] sm:$0xff]
        %v8485 = vld [vmem:[%s168 + $0xec] sm:$0xff]
        %v8486 = vld [vmem:[%s168 + $0xf4] sm:$0xff]
        %v8487 = vld [vmem:[%s168 + $0xfc] sm:$0xff]
        %v8488 = vld [vmem:[%s168 + $0x104] sm:$0xff]
        %v8489 = vld [vmem:[%s168 + $0x10c] sm:$0xff]
        %v8490 = vld [vmem:[%s168 + $0x114] sm:$0xff]
        %v8491 = vld [vmem:[%s168 + $0x11c] sm:$0xff]
        %v8492 = vld [vmem:[%s168 + $0x124] sm:$0xff]
        %v8493 = vld [vmem:[%s168 + $0x12c] sm:$0xff]
        %v8494 = vld [vmem:[%s168 + $0x134] sm:$0xff]
        %v8495 = vld [vmem:[%s168 + $0x13c] sm:$0xff]
        %v8496 = vld [vmem:[%s168 + $0x144] sm:$0xff]
        %v8497 = vld [vmem:[%s168 + $0x14c] sm:$0xff]
        %v8498 = vld [vmem:[%s168 + $0x154] sm:$0xff]
        %v8499 = vld [vmem:[%s168 + $0x15c] sm:$0xff]
        %v8500 = vld [vmem:[%s168 + $0x164] sm:$0xff]
        %v8501 = vld [vmem:[%s168 + $0x16c] sm:$0xff]
        %v8502 = vld [vmem:[%s168 + $0x174] sm:$0xff]
        %v8503 = vld [vmem:[%s168 + $0x17c] sm:$0xff]
        %v8504 = vld [vmem:[%s168 + $0x184] sm:$0xff]
        %v8505 = vld [vmem:[%s168 + $0x18c] sm:$0xff]
        %v8506 = vld [vmem:[%s168 + $0x194] sm:$0xff]
        %v8507 = vld [vmem:[%s168 + $0x19c] sm:$0xff]
        %v8508 = vld [vmem:[%s168 + $0x1a4] sm:$0xff]
        %v8509 = vld [vmem:[%s168 + $0x1ac] sm:$0xff]
        %v8510 = vld [vmem:[%s168 + $0x1b4] sm:$0xff]
        %v8511 = vld [vmem:[%s168 + $0x1bc] sm:$0xff]
        %v8512 = vld [vmem:[%s168 + $0x1c4] sm:$0xff]
        %v8513 = vld [vmem:[%s168 + $0x1cc] sm:$0xff]
        %v8514 = vld [vmem:[%s168 + $0x1d4] sm:$0xff]
        %v8515 = vld [vmem:[%s168 + $0x1dc] sm:$0xff]
        %v8516 = vld [vmem:[%s168 + $0x1e4] sm:$0x3]
        %s8517 = scalar_lea.vmem %s1, 56
        %v8518 = vld [vmem:[%s8517] sm:$0xf]
        %v8520 = vsel %vm278, %v8464, 0
        %v8523 = vsel %vm278, %v8465, 0
        %v8526 = vsel %vm278, %v8466, 0
        %v8529 = vsel %vm278, %v8467, 0
        %v8532 = vsel %vm278, %v8468, 0
        %v8535 = vsel %vm278, %v8469, 0
        %v8538 = vsel %vm278, %v8470, 0
        %v8541 = vsel %vm278, %v8471, 0
        %v8544 = vsel %vm278, %v8472, 0
        %v8547 = vsel %vm278, %v8473, 0
        %v8550 = vsel %vm278, %v8474, 0
        %v8553 = vsel %vm278, %v8475, 0
        %v8556 = vsel %vm278, %v8476, 0
        %v8559 = vsel %vm278, %v8477, 0
        %v8562 = vsel %vm278, %v8478, 0
        %v8565 = vsel %vm278, %v8479, 0
        %v8568 = vsel %vm278, %v8480, 0
        %v8571 = vsel %vm278, %v8481, 0
        %v8574 = vsel %vm278, %v8482, 0
        %v8577 = vsel %vm278, %v8483, 0
        %v8580 = vsel %vm278, %v8484, 0
        %v8583 = vsel %vm278, %v8485, 0
        %v8586 = vsel %vm278, %v8486, 0
        %v8589 = vsel %vm278, %v8487, 0
        %v8592 = vsel %vm278, %v8488, 0
        %v8595 = vsel %vm278, %v8489, 0
        %v8598 = vsel %vm278, %v8490, 0
        %v8601 = vsel %vm278, %v8491, 0
        %v8604 = vsel %vm278, %v8492, 0
        %v8607 = vsel %vm278, %v8493, 0
        %v8610 = vsel %vm278, %v8494, 0
        %v8613 = vsel %vm278, %v8495, 0
        %v8616 = vsel %vm278, %v8496, 0
        %v8619 = vsel %vm278, %v8497, 0
        %v8622 = vsel %vm278, %v8498, 0
        %v8625 = vsel %vm278, %v8499, 0
        %v8628 = vsel %vm278, %v8500, 0
        %v8631 = vsel %vm278, %v8501, 0
        %v8634 = vsel %vm278, %v8502, 0
        %v8637 = vsel %vm278, %v8503, 0
        %v8640 = vsel %vm278, %v8504, 0
        %v8643 = vsel %vm278, %v8505, 0
        %v8646 = vsel %vm278, %v8506, 0
        %v8649 = vsel %vm278, %v8507, 0
        %v8652 = vsel %vm278, %v8508, 0
        %v8655 = vsel %vm278, %v8509, 0
        %v8658 = vsel %vm278, %v8510, 0
        %v8661 = vsel %vm278, %v8511, 0
        %v8664 = vsel %vm278, %v8512, 0
        %v8667 = vsel %vm278, %v8513, 0
        %v8670 = vsel %vm278, %v8514, 0
        %v8673 = vsel %vm278, %v8515, 0
        %v8676 = vsel %vm278, %v8516, 0
        %v8679 = vsel %vm438, %v8518, 0
        %8681 = vmatprep.subr.mxu0 0.0
        %8682 = vmatpush1.msra.mxu0 0.0
        %8683 = vmatprep.subr.mxu0 0.0
        %8684 = vmatpush1.msra.mxu0 0.0
        %8685 = vmatprep.subr.mxu0 0.0
        %8686 = vmatpush1.msra.mxu0 0.0
        %8687 = vmatprep.subr.mxu0 0.0
        %8688 = vmatpush1.msra.mxu0 0.0
        %8689 = vmatprep.subr.mxu0 0.0
        %8690 = vmatpush1.msra.mxu0 0.0
        %8691 = vmatprep.subr.mxu0 0.0
        %8692 = vmatpush1.msra.mxu0 0.0
        %8693 = vmatprep.subr.mxu0 0.0
        %8694 = vmatpush1.msra.mxu0 0.0
        %8695 = vmatprep.subr.mxu0 0.0
        %8696 = vmatpush1.msra.mxu0 0.0
        %8697 = vmatprep.subr.mxu0 0.0
        %8698 = vmatpush1.msra.mxu0 0.0
        %8699 = vmatprep.subr.mxu0 0.0
        %8700 = vmatpush1.msra.mxu0 0.0
        %8701 = vmatprep.subr.mxu0 0.0
        %8702 = vmatpush1.msra.mxu0 0.0
        %8703 = vmatprep.subr.mxu0 0.0
        %8704 = vmatpush1.msra.mxu0 0.0
        %8705 = vmatprep.subr.mxu0 0.0
        %8706 = vmatpush1.msra.mxu0 0.0
        %8707 = vmatprep.subr.mxu0 0.0
        %8708 = vmatpush1.msra.mxu0 0.0
        %8709 = vmatprep.subr.mxu0 0.0
        %8710 = vmatpush1.msra.mxu0 0.0
        %8711 = vmatprep.subr.mxu0 0.0
        %8712 = vmatpush1.msra.mxu0 %v8679
        %8713 = vmatprep.subr.mxu0 0.0
        %8714 = vmatpush2.msra.mxu0 0.0
        %8715 = vmatprep.subr.mxu0 0.0
        %8716 = vmatpush2.msra.mxu0 0.0
        %8717 = vmatprep.subr.mxu0 0.0
        %8718 = vmatpush2.msra.mxu0 0.0
        %8719 = vmatprep.subr.mxu0 0.0
        %8720 = vmatpush2.msra.mxu0 0.0
        %8721 = vmatprep.subr.mxu0 0.0
        %8722 = vmatpush2.msra.mxu0 0.0
        %8723 = vmatprep.subr.mxu0 0.0
        %8724 = vmatpush2.msra.mxu0 0.0
        %8725 = vmatprep.subr.mxu0 0.0
        %8726 = vmatpush2.msra.mxu0 0.0
        %8727 = vmatprep.subr.mxu0 0.0
        %8728 = vmatpush2.msra.mxu0 0.0
        %8729 = vmatprep.subr.mxu0 0.0
        %8730 = vmatpush2.msra.mxu0 0.0
        %8731 = vmatprep.subr.mxu0 0.0
        %8732 = vmatpush2.msra.mxu0 0.0
        %8733 = vmatprep.subr.mxu0 0.0
        %8734 = vmatpush2.msra.mxu0 0.0
        %8735 = vmatprep.subr.mxu0 0.0
        %8736 = vmatpush2.msra.mxu0 0.0
        %8737 = vmatprep.subr.mxu0 0.0
        %8738 = vmatpush2.msra.mxu0 0.0
        %8739 = vmatprep.subr.mxu0 0.0
        %8740 = vmatpush2.msra.mxu0 0.0
        %8741 = vmatprep.subr.mxu0 0.0
        %8742 = vmatpush2.msra.mxu0 0.0
        %8743 = vmatprep.subr.mxu0 0.0
        %8744 = vmatpush2.msra.mxu0 0.0
        %8745 = vmatprep.mubr.f32.mxu0 0.0
        %8746 = vmatmul.mubr.f32.gmra.mxu0 %v8520
        %v8747 = vpop.f32.mrf.mxu0
        %v8748 = vadd.f32 0.0, %v8747
        %v8749 = vpop.f32.mrf.mxu0
        %8750 = vmatprep.mubr.f32.mxu0 0.0
        %8751 = vmatmul.mubr.f32.gmra.mxu0 %v8523
        %v8752 = vpop.f32.mrf.mxu0
        %v8753 = vadd.f32 0.0, %v8752
        %v8754 = vpop.f32.mrf.mxu0
        %8755 = vmatprep.mubr.f32.mxu0 0.0
        %8756 = vmatmul.mubr.f32.gmra.mxu0 %v8526
        %v8757 = vpop.f32.mrf.mxu0
        %v8758 = vadd.f32 0.0, %v8757
        %v8759 = vpop.f32.mrf.mxu0
        %8760 = vmatprep.mubr.f32.mxu0 0.0
        %8761 = vmatmul.mubr.f32.gmra.mxu0 %v8529
        %v8762 = vpop.f32.mrf.mxu0
        %v8763 = vadd.f32 0.0, %v8762
        %v8764 = vpop.f32.mrf.mxu0
        %8765 = vmatprep.mubr.f32.mxu0 0.0
        %8766 = vmatmul.mubr.f32.gmra.mxu0 %v8532
        %v8767 = vpop.f32.mrf.mxu0
        %v8768 = vadd.f32 0.0, %v8767
        %v8769 = vpop.f32.mrf.mxu0
        %8770 = vmatprep.mubr.f32.mxu0 0.0
        %8771 = vmatmul.mubr.f32.gmra.mxu0 %v8535
        %v8772 = vpop.f32.mrf.mxu0
        %v8773 = vadd.f32 0.0, %v8772
        %v8774 = vpop.f32.mrf.mxu0
        %8775 = vmatprep.mubr.f32.mxu0 0.0
        %8776 = vmatmul.mubr.f32.gmra.mxu0 %v8538
        %v8777 = vpop.f32.mrf.mxu0
        %v8778 = vadd.f32 0.0, %v8777
        %v8779 = vpop.f32.mrf.mxu0
        %8780 = vmatprep.mubr.f32.mxu0 0.0
        %8781 = vmatmul.mubr.f32.gmra.mxu0 %v8541
        %v8782 = vpop.f32.mrf.mxu0
        %v8783 = vadd.f32 0.0, %v8782
        %v8784 = vpop.f32.mrf.mxu0
        %8785 = vmatprep.mubr.f32.mxu0 0.0
        %8786 = vmatmul.mubr.f32.gmra.mxu0 %v8544
        %v8787 = vpop.f32.mrf.mxu0
        %v8788 = vadd.f32 0.0, %v8787
        %v8789 = vpop.f32.mrf.mxu0
        %8790 = vmatprep.mubr.f32.mxu0 0.0
        %8791 = vmatmul.mubr.f32.gmra.mxu0 %v8547
        %v8792 = vpop.f32.mrf.mxu0
        %v8793 = vadd.f32 0.0, %v8792
        %v8794 = vpop.f32.mrf.mxu0
        %8795 = vmatprep.mubr.f32.mxu0 0.0
        %8796 = vmatmul.mubr.f32.gmra.mxu0 %v8550
        %v8797 = vpop.f32.mrf.mxu0
        %v8798 = vadd.f32 0.0, %v8797
        %v8799 = vpop.f32.mrf.mxu0
        %8800 = vmatprep.mubr.f32.mxu0 0.0
        %8801 = vmatmul.mubr.f32.gmra.mxu0 %v8553
        %v8802 = vpop.f32.mrf.mxu0
        %v8803 = vadd.f32 0.0, %v8802
        %v8804 = vpop.f32.mrf.mxu0
        %8805 = vmatprep.mubr.f32.mxu0 0.0
        %8806 = vmatmul.mubr.f32.gmra.mxu0 %v8556
        %v8807 = vpop.f32.mrf.mxu0
        %v8808 = vadd.f32 0.0, %v8807
        %v8809 = vpop.f32.mrf.mxu0
        %8810 = vmatprep.mubr.f32.mxu0 0.0
        %8811 = vmatmul.mubr.f32.gmra.mxu0 %v8559
        %v8812 = vpop.f32.mrf.mxu0
        %v8813 = vadd.f32 0.0, %v8812
        %v8814 = vpop.f32.mrf.mxu0
        %8815 = vmatprep.mubr.f32.mxu0 0.0
        %8816 = vmatmul.mubr.f32.gmra.mxu0 %v8562
        %v8817 = vpop.f32.mrf.mxu0
        %v8818 = vadd.f32 0.0, %v8817
        %v8819 = vpop.f32.mrf.mxu0
        %8820 = vmatprep.mubr.f32.mxu0 0.0
        %8821 = vmatmul.mubr.f32.gmra.mxu0 %v8565
        %v8822 = vpop.f32.mrf.mxu0
        %v8823 = vadd.f32 0.0, %v8822
        %v8824 = vpop.f32.mrf.mxu0
        %8825 = vmatprep.mubr.f32.mxu0 0.0
        %8826 = vmatmul.mubr.f32.gmra.mxu0 %v8568
        %v8827 = vpop.f32.mrf.mxu0
        %v8828 = vadd.f32 0.0, %v8827
        %v8829 = vpop.f32.mrf.mxu0
        %8830 = vmatprep.mubr.f32.mxu0 0.0
        %8831 = vmatmul.mubr.f32.gmra.mxu0 %v8571
        %v8832 = vpop.f32.mrf.mxu0
        %v8833 = vadd.f32 0.0, %v8832
        %v8834 = vpop.f32.mrf.mxu0
        %8835 = vmatprep.mubr.f32.mxu0 0.0
        %8836 = vmatmul.mubr.f32.gmra.mxu0 %v8574
        %v8837 = vpop.f32.mrf.mxu0
        %v8838 = vadd.f32 0.0, %v8837
        %v8839 = vpop.f32.mrf.mxu0
        %8840 = vmatprep.mubr.f32.mxu0 0.0
        %8841 = vmatmul.mubr.f32.gmra.mxu0 %v8577
        %v8842 = vpop.f32.mrf.mxu0
        %v8843 = vadd.f32 0.0, %v8842
        %v8844 = vpop.f32.mrf.mxu0
        %8845 = vmatprep.mubr.f32.mxu0 0.0
        %8846 = vmatmul.mubr.f32.gmra.mxu0 %v8580
        %v8847 = vpop.f32.mrf.mxu0
        %v8848 = vadd.f32 0.0, %v8847
        %v8849 = vpop.f32.mrf.mxu0
        %8850 = vmatprep.mubr.f32.mxu0 0.0
        %8851 = vmatmul.mubr.f32.gmra.mxu0 %v8583
        %v8852 = vpop.f32.mrf.mxu0
        %v8853 = vadd.f32 0.0, %v8852
        %v8854 = vpop.f32.mrf.mxu0
        %8855 = vmatprep.mubr.f32.mxu0 0.0
        %8856 = vmatmul.mubr.f32.gmra.mxu0 %v8586
        %v8857 = vpop.f32.mrf.mxu0
        %v8858 = vadd.f32 0.0, %v8857
        %v8859 = vpop.f32.mrf.mxu0
        %8860 = vmatprep.mubr.f32.mxu0 0.0
        %8861 = vmatmul.mubr.f32.gmra.mxu0 %v8589
        %v8862 = vpop.f32.mrf.mxu0
        %v8863 = vadd.f32 0.0, %v8862
        %v8864 = vpop.f32.mrf.mxu0
        %8865 = vmatprep.mubr.f32.mxu0 0.0
        %8866 = vmatmul.mubr.f32.gmra.mxu0 %v8592
        %v8867 = vpop.f32.mrf.mxu0
        %v8868 = vadd.f32 0.0, %v8867
        %v8869 = vpop.f32.mrf.mxu0
        %8870 = vmatprep.mubr.f32.mxu0 0.0
        %8871 = vmatmul.mubr.f32.gmra.mxu0 %v8595
        %v8872 = vpop.f32.mrf.mxu0
        %v8873 = vadd.f32 0.0, %v8872
        %v8874 = vpop.f32.mrf.mxu0
        %8875 = vmatprep.mubr.f32.mxu0 0.0
        %8876 = vmatmul.mubr.f32.gmra.mxu0 %v8598
        %v8877 = vpop.f32.mrf.mxu0
        %v8878 = vadd.f32 0.0, %v8877
        %v8879 = vpop.f32.mrf.mxu0
        %8880 = vmatprep.mubr.f32.mxu0 0.0
        %8881 = vmatmul.mubr.f32.gmra.mxu0 %v8601
        %v8882 = vpop.f32.mrf.mxu0
        %v8883 = vadd.f32 0.0, %v8882
        %v8884 = vpop.f32.mrf.mxu0
        %8885 = vmatprep.mubr.f32.mxu0 0.0
        %8886 = vmatmul.mubr.f32.gmra.mxu0 %v8604
        %v8887 = vpop.f32.mrf.mxu0
        %v8888 = vadd.f32 0.0, %v8887
        %v8889 = vpop.f32.mrf.mxu0
        %8890 = vmatprep.mubr.f32.mxu0 0.0
        %8891 = vmatmul.mubr.f32.gmra.mxu0 %v8607
        %v8892 = vpop.f32.mrf.mxu0
        %v8893 = vadd.f32 0.0, %v8892
        %v8894 = vpop.f32.mrf.mxu0
        %8895 = vmatprep.mubr.f32.mxu0 0.0
        %8896 = vmatmul.mubr.f32.gmra.mxu0 %v8610
        %v8897 = vpop.f32.mrf.mxu0
        %v8898 = vadd.f32 0.0, %v8897
        %v8899 = vpop.f32.mrf.mxu0
        %8900 = vmatprep.mubr.f32.mxu0 0.0
        %8901 = vmatmul.mubr.f32.gmra.mxu0 %v8613
        %v8902 = vpop.f32.mrf.mxu0
        %v8903 = vadd.f32 0.0, %v8902
        %v8904 = vpop.f32.mrf.mxu0
        %8905 = vmatprep.mubr.f32.mxu0 0.0
        %8906 = vmatmul.mubr.f32.gmra.mxu0 %v8616
        %v8907 = vpop.f32.mrf.mxu0
        %v8908 = vadd.f32 0.0, %v8907
        %v8909 = vpop.f32.mrf.mxu0
        %8910 = vmatprep.mubr.f32.mxu0 0.0
        %8911 = vmatmul.mubr.f32.gmra.mxu0 %v8619
        %v8912 = vpop.f32.mrf.mxu0
        %v8913 = vadd.f32 0.0, %v8912
        %v8914 = vpop.f32.mrf.mxu0
        %8915 = vmatprep.mubr.f32.mxu0 0.0
        %8916 = vmatmul.mubr.f32.gmra.mxu0 %v8622
        %v8917 = vpop.f32.mrf.mxu0
        %v8918 = vadd.f32 0.0, %v8917
        %v8919 = vpop.f32.mrf.mxu0
        %8920 = vmatprep.mubr.f32.mxu0 0.0
        %8921 = vmatmul.mubr.f32.gmra.mxu0 %v8625
        %v8922 = vpop.f32.mrf.mxu0
        %v8923 = vadd.f32 0.0, %v8922
        %v8924 = vpop.f32.mrf.mxu0
        %8925 = vmatprep.mubr.f32.mxu0 0.0
        %8926 = vmatmul.mubr.f32.gmra.mxu0 %v8628
        %v8927 = vpop.f32.mrf.mxu0
        %v8928 = vadd.f32 0.0, %v8927
        %v8929 = vpop.f32.mrf.mxu0
        %8930 = vmatprep.mubr.f32.mxu0 0.0
        %8931 = vmatmul.mubr.f32.gmra.mxu0 %v8631
        %v8932 = vpop.f32.mrf.mxu0
        %v8933 = vadd.f32 0.0, %v8932
        %v8934 = vpop.f32.mrf.mxu0
        %8935 = vmatprep.mubr.f32.mxu0 0.0
        %8936 = vmatmul.mubr.f32.gmra.mxu0 %v8634
        %v8937 = vpop.f32.mrf.mxu0
        %v8938 = vadd.f32 0.0, %v8937
        %v8939 = vpop.f32.mrf.mxu0
        %8940 = vmatprep.mubr.f32.mxu0 0.0
        %8941 = vmatmul.mubr.f32.gmra.mxu0 %v8637
        %v8942 = vpop.f32.mrf.mxu0
        %v8943 = vadd.f32 0.0, %v8942
        %v8944 = vpop.f32.mrf.mxu0
        %8945 = vmatprep.mubr.f32.mxu0 0.0
        %8946 = vmatmul.mubr.f32.gmra.mxu0 %v8640
        %v8947 = vpop.f32.mrf.mxu0
        %v8948 = vadd.f32 0.0, %v8947
        %v8949 = vpop.f32.mrf.mxu0
        %8950 = vmatprep.mubr.f32.mxu0 0.0
        %8951 = vmatmul.mubr.f32.gmra.mxu0 %v8643
        %v8952 = vpop.f32.mrf.mxu0
        %v8953 = vadd.f32 0.0, %v8952
        %v8954 = vpop.f32.mrf.mxu0
        %8955 = vmatprep.mubr.f32.mxu0 0.0
        %8956 = vmatmul.mubr.f32.gmra.mxu0 %v8646
        %v8957 = vpop.f32.mrf.mxu0
        %v8958 = vadd.f32 0.0, %v8957
        %v8959 = vpop.f32.mrf.mxu0
        %8960 = vmatprep.mubr.f32.mxu0 0.0
        %8961 = vmatmul.mubr.f32.gmra.mxu0 %v8649
        %v8962 = vpop.f32.mrf.mxu0
        %v8963 = vadd.f32 0.0, %v8962
        %v8964 = vpop.f32.mrf.mxu0
        %8965 = vmatprep.mubr.f32.mxu0 0.0
        %8966 = vmatmul.mubr.f32.gmra.mxu0 %v8652
        %v8967 = vpop.f32.mrf.mxu0
        %v8968 = vadd.f32 0.0, %v8967
        %v8969 = vpop.f32.mrf.mxu0
        %8970 = vmatprep.mubr.f32.mxu0 0.0
        %8971 = vmatmul.mubr.f32.gmra.mxu0 %v8655
        %v8972 = vpop.f32.mrf.mxu0
        %v8973 = vadd.f32 0.0, %v8972
        %v8974 = vpop.f32.mrf.mxu0
        %8975 = vmatprep.mubr.f32.mxu0 0.0
        %8976 = vmatmul.mubr.f32.gmra.mxu0 %v8658
        %v8977 = vpop.f32.mrf.mxu0
        %v8978 = vadd.f32 0.0, %v8977
        %v8979 = vpop.f32.mrf.mxu0
        %8980 = vmatprep.mubr.f32.mxu0 0.0
        %8981 = vmatmul.mubr.f32.gmra.mxu0 %v8661
        %v8982 = vpop.f32.mrf.mxu0
        %v8983 = vadd.f32 0.0, %v8982
        %v8984 = vpop.f32.mrf.mxu0
        %8985 = vmatprep.mubr.f32.mxu0 0.0
        %8986 = vmatmul.mubr.f32.gmra.mxu0 %v8664
        %v8987 = vpop.f32.mrf.mxu0
        %v8988 = vadd.f32 0.0, %v8987
        %v8989 = vpop.f32.mrf.mxu0
        %8990 = vmatprep.mubr.f32.mxu0 0.0
        %8991 = vmatmul.mubr.f32.gmra.mxu0 %v8667
        %v8992 = vpop.f32.mrf.mxu0
        %v8993 = vadd.f32 0.0, %v8992
        %v8994 = vpop.f32.mrf.mxu0
        %8995 = vmatprep.mubr.f32.mxu0 0.0
        %8996 = vmatmul.mubr.f32.gmra.mxu0 %v8670
        %v8997 = vpop.f32.mrf.mxu0
        %v8998 = vadd.f32 0.0, %v8997
        %v8999 = vpop.f32.mrf.mxu0
        %9000 = vmatprep.mubr.f32.mxu0 0.0
        %9001 = vmatmul.mubr.f32.gmra.mxu0 %v8673
        %v9002 = vpop.f32.mrf.mxu0
        %v9003 = vadd.f32 0.0, %v9002
        %v9004 = vpop.f32.mrf.mxu0
        %9005 = vmatprep.mubr.f32.mxu0 0.0
        %9006 = vmatmul.mubr.f32.gmra.mxu0 %v8676
        %v9007 = vpop.f32.mrf.mxu0
        %v9008 = vadd.f32 0.0, %v9007
        %v9009 = vpop.f32.mrf.mxu0
        %9010 = vdwg.mxu0
        %v9011 = vadd.f32 %v8411, %v8748
        %v9012 = vadd.f32 %v8412, %v8753
        %v9013 = vadd.f32 %v8413, %v8758
        %v9014 = vadd.f32 %v8414, %v8763
        %v9015 = vadd.f32 %v8415, %v8768
        %v9016 = vadd.f32 %v8416, %v8773
        %v9017 = vadd.f32 %v8417, %v8778
        %v9018 = vadd.f32 %v8418, %v8783
        %v9019 = vadd.f32 %v8419, %v8788
        %v9020 = vadd.f32 %v8420, %v8793
        %v9021 = vadd.f32 %v8421, %v8798
        %v9022 = vadd.f32 %v8422, %v8803
        %v9023 = vadd.f32 %v8423, %v8808
        %v9024 = vadd.f32 %v8424, %v8813
        %v9025 = vadd.f32 %v8425, %v8818
        %v9026 = vadd.f32 %v8426, %v8823
        %v9027 = vadd.f32 %v8427, %v8828
        %v9028 = vadd.f32 %v8428, %v8833
        %v9029 = vadd.f32 %v8429, %v8838
        %v9030 = vadd.f32 %v8430, %v8843
        %v9031 = vadd.f32 %v8431, %v8848
        %v9032 = vadd.f32 %v8432, %v8853
        %v9033 = vadd.f32 %v8433, %v8858
        %v9034 = vadd.f32 %v8434, %v8863
        %v9035 = vadd.f32 %v8435, %v8868
        %v9036 = vadd.f32 %v8436, %v8873
        %v9037 = vadd.f32 %v8437, %v8878
        %v9038 = vadd.f32 %v8438, %v8883
        %v9039 = vadd.f32 %v8439, %v8888
        %v9040 = vadd.f32 %v8440, %v8893
        %v9041 = vadd.f32 %v8441, %v8898
        %v9042 = vadd.f32 %v8442, %v8903
        %v9043 = vadd.f32 %v8443, %v8908
        %v9044 = vadd.f32 %v8444, %v8913
        %v9045 = vadd.f32 %v8445, %v8918
        %v9046 = vadd.f32 %v8446, %v8923
        %v9047 = vadd.f32 %v8447, %v8928
        %v9048 = vadd.f32 %v8448, %v8933
        %v9049 = vadd.f32 %v8449, %v8938
        %v9050 = vadd.f32 %v8450, %v8943
        %v9051 = vadd.f32 %v8451, %v8948
        %v9052 = vadd.f32 %v8452, %v8953
        %v9053 = vadd.f32 %v8453, %v8958
        %v9054 = vadd.f32 %v8454, %v8963
        %v9055 = vadd.f32 %v8455, %v8968
        %v9056 = vadd.f32 %v8456, %v8973
        %v9057 = vadd.f32 %v8457, %v8978
        %v9058 = vadd.f32 %v8458, %v8983
        %v9059 = vadd.f32 %v8459, %v8988
        %v9060 = vadd.f32 %v8460, %v8993
        %v9061 = vadd.f32 %v8461, %v8998
        %v9062 = vadd.f32 %v8462, %v9003
        %v9063 = vadd.f32 %v8463, %v9008
        %v9064 = vld [vmem:[%s168 + $0x45] sm:$0xff]
        %v9065 = vld [vmem:[%s168 + $0x4d] sm:$0xff]
        %v9066 = vld [vmem:[%s168 + $0x55] sm:$0xff]
        %v9067 = vld [vmem:[%s168 + $0x5d] sm:$0xff]
        %v9068 = vld [vmem:[%s168 + $0x65] sm:$0xff]
        %v9069 = vld [vmem:[%s168 + $0x6d] sm:$0xff]
        %v9070 = vld [vmem:[%s168 + $0x75] sm:$0xff]
        %v9071 = vld [vmem:[%s168 + $0x7d] sm:$0xff]
        %v9072 = vld [vmem:[%s168 + $0x85] sm:$0xff]
        %v9073 = vld [vmem:[%s168 + $0x8d] sm:$0xff]
        %v9074 = vld [vmem:[%s168 + $0x95] sm:$0xff]
        %v9075 = vld [vmem:[%s168 + $0x9d] sm:$0xff]
        %v9076 = vld [vmem:[%s168 + $0xa5] sm:$0xff]
        %v9077 = vld [vmem:[%s168 + $0xad] sm:$0xff]
        %v9078 = vld [vmem:[%s168 + $0xb5] sm:$0xff]
        %v9079 = vld [vmem:[%s168 + $0xbd] sm:$0xff]
        %v9080 = vld [vmem:[%s168 + $0xc5] sm:$0xff]
        %v9081 = vld [vmem:[%s168 + $0xcd] sm:$0xff]
        %v9082 = vld [vmem:[%s168 + $0xd5] sm:$0xff]
        %v9083 = vld [vmem:[%s168 + $0xdd] sm:$0xff]
        %v9084 = vld [vmem:[%s168 + $0xe5] sm:$0xff]
        %v9085 = vld [vmem:[%s168 + $0xed] sm:$0xff]
        %v9086 = vld [vmem:[%s168 + $0xf5] sm:$0xff]
        %v9087 = vld [vmem:[%s168 + $0xfd] sm:$0xff]
        %v9088 = vld [vmem:[%s168 + $0x105] sm:$0xff]
        %v9089 = vld [vmem:[%s168 + $0x10d] sm:$0xff]
        %v9090 = vld [vmem:[%s168 + $0x115] sm:$0xff]
        %v9091 = vld [vmem:[%s168 + $0x11d] sm:$0xff]
        %v9092 = vld [vmem:[%s168 + $0x125] sm:$0xff]
        %v9093 = vld [vmem:[%s168 + $0x12d] sm:$0xff]
        %v9094 = vld [vmem:[%s168 + $0x135] sm:$0xff]
        %v9095 = vld [vmem:[%s168 + $0x13d] sm:$0xff]
        %v9096 = vld [vmem:[%s168 + $0x145] sm:$0xff]
        %v9097 = vld [vmem:[%s168 + $0x14d] sm:$0xff]
        %v9098 = vld [vmem:[%s168 + $0x155] sm:$0xff]
        %v9099 = vld [vmem:[%s168 + $0x15d] sm:$0xff]
        %v9100 = vld [vmem:[%s168 + $0x165] sm:$0xff]
        %v9101 = vld [vmem:[%s168 + $0x16d] sm:$0xff]
        %v9102 = vld [vmem:[%s168 + $0x175] sm:$0xff]
        %v9103 = vld [vmem:[%s168 + $0x17d] sm:$0xff]
        %v9104 = vld [vmem:[%s168 + $0x185] sm:$0xff]
        %v9105 = vld [vmem:[%s168 + $0x18d] sm:$0xff]
        %v9106 = vld [vmem:[%s168 + $0x195] sm:$0xff]
        %v9107 = vld [vmem:[%s168 + $0x19d] sm:$0xff]
        %v9108 = vld [vmem:[%s168 + $0x1a5] sm:$0xff]
        %v9109 = vld [vmem:[%s168 + $0x1ad] sm:$0xff]
        %v9110 = vld [vmem:[%s168 + $0x1b5] sm:$0xff]
        %v9111 = vld [vmem:[%s168 + $0x1bd] sm:$0xff]
        %v9112 = vld [vmem:[%s168 + $0x1c5] sm:$0xff]
        %v9113 = vld [vmem:[%s168 + $0x1cd] sm:$0xff]
        %v9114 = vld [vmem:[%s168 + $0x1d5] sm:$0xff]
        %v9115 = vld [vmem:[%s168 + $0x1dd] sm:$0xff]
        %v9116 = vld [vmem:[%s168 + $0x1e5] sm:$0x3]
        %s9117 = scalar_lea.vmem %s1, 60
        %v9118 = vld [vmem:[%s9117] sm:$0xf]
        %v9120 = vsel %vm278, %v9064, 0
        %v9123 = vsel %vm278, %v9065, 0
        %v9126 = vsel %vm278, %v9066, 0
        %v9129 = vsel %vm278, %v9067, 0
        %v9132 = vsel %vm278, %v9068, 0
        %v9135 = vsel %vm278, %v9069, 0
        %v9138 = vsel %vm278, %v9070, 0
        %v9141 = vsel %vm278, %v9071, 0
        %v9144 = vsel %vm278, %v9072, 0
        %v9147 = vsel %vm278, %v9073, 0
        %v9150 = vsel %vm278, %v9074, 0
        %v9153 = vsel %vm278, %v9075, 0
        %v9156 = vsel %vm278, %v9076, 0
        %v9159 = vsel %vm278, %v9077, 0
        %v9162 = vsel %vm278, %v9078, 0
        %v9165 = vsel %vm278, %v9079, 0
        %v9168 = vsel %vm278, %v9080, 0
        %v9171 = vsel %vm278, %v9081, 0
        %v9174 = vsel %vm278, %v9082, 0
        %v9177 = vsel %vm278, %v9083, 0
        %v9180 = vsel %vm278, %v9084, 0
        %v9183 = vsel %vm278, %v9085, 0
        %v9186 = vsel %vm278, %v9086, 0
        %v9189 = vsel %vm278, %v9087, 0
        %v9192 = vsel %vm278, %v9088, 0
        %v9195 = vsel %vm278, %v9089, 0
        %v9198 = vsel %vm278, %v9090, 0
        %v9201 = vsel %vm278, %v9091, 0
        %v9204 = vsel %vm278, %v9092, 0
        %v9207 = vsel %vm278, %v9093, 0
        %v9210 = vsel %vm278, %v9094, 0
        %v9213 = vsel %vm278, %v9095, 0
        %v9216 = vsel %vm278, %v9096, 0
        %v9219 = vsel %vm278, %v9097, 0
        %v9222 = vsel %vm278, %v9098, 0
        %v9225 = vsel %vm278, %v9099, 0
        %v9228 = vsel %vm278, %v9100, 0
        %v9231 = vsel %vm278, %v9101, 0
        %v9234 = vsel %vm278, %v9102, 0
        %v9237 = vsel %vm278, %v9103, 0
        %v9240 = vsel %vm278, %v9104, 0
        %v9243 = vsel %vm278, %v9105, 0
        %v9246 = vsel %vm278, %v9106, 0
        %v9249 = vsel %vm278, %v9107, 0
        %v9252 = vsel %vm278, %v9108, 0
        %v9255 = vsel %vm278, %v9109, 0
        %v9258 = vsel %vm278, %v9110, 0
        %v9261 = vsel %vm278, %v9111, 0
        %v9264 = vsel %vm278, %v9112, 0
        %v9267 = vsel %vm278, %v9113, 0
        %v9270 = vsel %vm278, %v9114, 0
        %v9273 = vsel %vm278, %v9115, 0
        %v9276 = vsel %vm278, %v9116, 0
        %v9279 = vsel %vm438, %v9118, 0
        %9281 = vmatprep.subr.mxu0 0.0
        %9282 = vmatpush1.msra.mxu0 0.0
        %9283 = vmatprep.subr.mxu0 0.0
        %9284 = vmatpush1.msra.mxu0 0.0
        %9285 = vmatprep.subr.mxu0 0.0
        %9286 = vmatpush1.msra.mxu0 0.0
        %9287 = vmatprep.subr.mxu0 0.0
        %9288 = vmatpush1.msra.mxu0 0.0
        %9289 = vmatprep.subr.mxu0 0.0
        %9290 = vmatpush1.msra.mxu0 0.0
        %9291 = vmatprep.subr.mxu0 0.0
        %9292 = vmatpush1.msra.mxu0 0.0
        %9293 = vmatprep.subr.mxu0 0.0
        %9294 = vmatpush1.msra.mxu0 0.0
        %9295 = vmatprep.subr.mxu0 0.0
        %9296 = vmatpush1.msra.mxu0 0.0
        %9297 = vmatprep.subr.mxu0 0.0
        %9298 = vmatpush1.msra.mxu0 0.0
        %9299 = vmatprep.subr.mxu0 0.0
        %9300 = vmatpush1.msra.mxu0 0.0
        %9301 = vmatprep.subr.mxu0 0.0
        %9302 = vmatpush1.msra.mxu0 0.0
        %9303 = vmatprep.subr.mxu0 0.0
        %9304 = vmatpush1.msra.mxu0 0.0
        %9305 = vmatprep.subr.mxu0 0.0
        %9306 = vmatpush1.msra.mxu0 0.0
        %9307 = vmatprep.subr.mxu0 0.0
        %9308 = vmatpush1.msra.mxu0 0.0
        %9309 = vmatprep.subr.mxu0 0.0
        %9310 = vmatpush1.msra.mxu0 0.0
        %9311 = vmatprep.subr.mxu0 0.0
        %9312 = vmatpush1.msra.mxu0 %v9279
        %9313 = vmatprep.subr.mxu0 0.0
        %9314 = vmatpush2.msra.mxu0 0.0
        %9315 = vmatprep.subr.mxu0 0.0
        %9316 = vmatpush2.msra.mxu0 0.0
        %9317 = vmatprep.subr.mxu0 0.0
        %9318 = vmatpush2.msra.mxu0 0.0
        %9319 = vmatprep.subr.mxu0 0.0
        %9320 = vmatpush2.msra.mxu0 0.0
        %9321 = vmatprep.subr.mxu0 0.0
        %9322 = vmatpush2.msra.mxu0 0.0
        %9323 = vmatprep.subr.mxu0 0.0
        %9324 = vmatpush2.msra.mxu0 0.0
        %9325 = vmatprep.subr.mxu0 0.0
        %9326 = vmatpush2.msra.mxu0 0.0
        %9327 = vmatprep.subr.mxu0 0.0
        %9328 = vmatpush2.msra.mxu0 0.0
        %9329 = vmatprep.subr.mxu0 0.0
        %9330 = vmatpush2.msra.mxu0 0.0
        %9331 = vmatprep.subr.mxu0 0.0
        %9332 = vmatpush2.msra.mxu0 0.0
        %9333 = vmatprep.subr.mxu0 0.0
        %9334 = vmatpush2.msra.mxu0 0.0
        %9335 = vmatprep.subr.mxu0 0.0
        %9336 = vmatpush2.msra.mxu0 0.0
        %9337 = vmatprep.subr.mxu0 0.0
        %9338 = vmatpush2.msra.mxu0 0.0
        %9339 = vmatprep.subr.mxu0 0.0
        %9340 = vmatpush2.msra.mxu0 0.0
        %9341 = vmatprep.subr.mxu0 0.0
        %9342 = vmatpush2.msra.mxu0 0.0
        %9343 = vmatprep.subr.mxu0 0.0
        %9344 = vmatpush2.msra.mxu0 0.0
        %9345 = vmatprep.mubr.f32.mxu0 0.0
        %9346 = vmatmul.mubr.f32.gmra.mxu0 %v9120
        %v9347 = vpop.f32.mrf.mxu0
        %v9348 = vadd.f32 0.0, %v9347
        %v9349 = vpop.f32.mrf.mxu0
        %9350 = vmatprep.mubr.f32.mxu0 0.0
        %9351 = vmatmul.mubr.f32.gmra.mxu0 %v9123
        %v9352 = vpop.f32.mrf.mxu0
        %v9353 = vadd.f32 0.0, %v9352
        %v9354 = vpop.f32.mrf.mxu0
        %9355 = vmatprep.mubr.f32.mxu0 0.0
        %9356 = vmatmul.mubr.f32.gmra.mxu0 %v9126
        %v9357 = vpop.f32.mrf.mxu0
        %v9358 = vadd.f32 0.0, %v9357
        %v9359 = vpop.f32.mrf.mxu0
        %9360 = vmatprep.mubr.f32.mxu0 0.0
        %9361 = vmatmul.mubr.f32.gmra.mxu0 %v9129
        %v9362 = vpop.f32.mrf.mxu0
        %v9363 = vadd.f32 0.0, %v9362
        %v9364 = vpop.f32.mrf.mxu0
        %9365 = vmatprep.mubr.f32.mxu0 0.0
        %9366 = vmatmul.mubr.f32.gmra.mxu0 %v9132
        %v9367 = vpop.f32.mrf.mxu0
        %v9368 = vadd.f32 0.0, %v9367
        %v9369 = vpop.f32.mrf.mxu0
        %9370 = vmatprep.mubr.f32.mxu0 0.0
        %9371 = vmatmul.mubr.f32.gmra.mxu0 %v9135
        %v9372 = vpop.f32.mrf.mxu0
        %v9373 = vadd.f32 0.0, %v9372
        %v9374 = vpop.f32.mrf.mxu0
        %9375 = vmatprep.mubr.f32.mxu0 0.0
        %9376 = vmatmul.mubr.f32.gmra.mxu0 %v9138
        %v9377 = vpop.f32.mrf.mxu0
        %v9378 = vadd.f32 0.0, %v9377
        %v9379 = vpop.f32.mrf.mxu0
        %9380 = vmatprep.mubr.f32.mxu0 0.0
        %9381 = vmatmul.mubr.f32.gmra.mxu0 %v9141
        %v9382 = vpop.f32.mrf.mxu0
        %v9383 = vadd.f32 0.0, %v9382
        %v9384 = vpop.f32.mrf.mxu0
        %9385 = vmatprep.mubr.f32.mxu0 0.0
        %9386 = vmatmul.mubr.f32.gmra.mxu0 %v9144
        %v9387 = vpop.f32.mrf.mxu0
        %v9388 = vadd.f32 0.0, %v9387
        %v9389 = vpop.f32.mrf.mxu0
        %9390 = vmatprep.mubr.f32.mxu0 0.0
        %9391 = vmatmul.mubr.f32.gmra.mxu0 %v9147
        %v9392 = vpop.f32.mrf.mxu0
        %v9393 = vadd.f32 0.0, %v9392
        %v9394 = vpop.f32.mrf.mxu0
        %9395 = vmatprep.mubr.f32.mxu0 0.0
        %9396 = vmatmul.mubr.f32.gmra.mxu0 %v9150
        %v9397 = vpop.f32.mrf.mxu0
        %v9398 = vadd.f32 0.0, %v9397
        %v9399 = vpop.f32.mrf.mxu0
        %9400 = vmatprep.mubr.f32.mxu0 0.0
        %9401 = vmatmul.mubr.f32.gmra.mxu0 %v9153
        %v9402 = vpop.f32.mrf.mxu0
        %v9403 = vadd.f32 0.0, %v9402
        %v9404 = vpop.f32.mrf.mxu0
        %9405 = vmatprep.mubr.f32.mxu0 0.0
        %9406 = vmatmul.mubr.f32.gmra.mxu0 %v9156
        %v9407 = vpop.f32.mrf.mxu0
        %v9408 = vadd.f32 0.0, %v9407
        %v9409 = vpop.f32.mrf.mxu0
        %9410 = vmatprep.mubr.f32.mxu0 0.0
        %9411 = vmatmul.mubr.f32.gmra.mxu0 %v9159
        %v9412 = vpop.f32.mrf.mxu0
        %v9413 = vadd.f32 0.0, %v9412
        %v9414 = vpop.f32.mrf.mxu0
        %9415 = vmatprep.mubr.f32.mxu0 0.0
        %9416 = vmatmul.mubr.f32.gmra.mxu0 %v9162
        %v9417 = vpop.f32.mrf.mxu0
        %v9418 = vadd.f32 0.0, %v9417
        %v9419 = vpop.f32.mrf.mxu0
        %9420 = vmatprep.mubr.f32.mxu0 0.0
        %9421 = vmatmul.mubr.f32.gmra.mxu0 %v9165
        %v9422 = vpop.f32.mrf.mxu0
        %v9423 = vadd.f32 0.0, %v9422
        %v9424 = vpop.f32.mrf.mxu0
        %9425 = vmatprep.mubr.f32.mxu0 0.0
        %9426 = vmatmul.mubr.f32.gmra.mxu0 %v9168
        %v9427 = vpop.f32.mrf.mxu0
        %v9428 = vadd.f32 0.0, %v9427
        %v9429 = vpop.f32.mrf.mxu0
        %9430 = vmatprep.mubr.f32.mxu0 0.0
        %9431 = vmatmul.mubr.f32.gmra.mxu0 %v9171
        %v9432 = vpop.f32.mrf.mxu0
        %v9433 = vadd.f32 0.0, %v9432
        %v9434 = vpop.f32.mrf.mxu0
        %9435 = vmatprep.mubr.f32.mxu0 0.0
        %9436 = vmatmul.mubr.f32.gmra.mxu0 %v9174
        %v9437 = vpop.f32.mrf.mxu0
        %v9438 = vadd.f32 0.0, %v9437
        %v9439 = vpop.f32.mrf.mxu0
        %9440 = vmatprep.mubr.f32.mxu0 0.0
        %9441 = vmatmul.mubr.f32.gmra.mxu0 %v9177
        %v9442 = vpop.f32.mrf.mxu0
        %v9443 = vadd.f32 0.0, %v9442
        %v9444 = vpop.f32.mrf.mxu0
        %9445 = vmatprep.mubr.f32.mxu0 0.0
        %9446 = vmatmul.mubr.f32.gmra.mxu0 %v9180
        %v9447 = vpop.f32.mrf.mxu0
        %v9448 = vadd.f32 0.0, %v9447
        %v9449 = vpop.f32.mrf.mxu0
        %9450 = vmatprep.mubr.f32.mxu0 0.0
        %9451 = vmatmul.mubr.f32.gmra.mxu0 %v9183
        %v9452 = vpop.f32.mrf.mxu0
        %v9453 = vadd.f32 0.0, %v9452
        %v9454 = vpop.f32.mrf.mxu0
        %9455 = vmatprep.mubr.f32.mxu0 0.0
        %9456 = vmatmul.mubr.f32.gmra.mxu0 %v9186
        %v9457 = vpop.f32.mrf.mxu0
        %v9458 = vadd.f32 0.0, %v9457
        %v9459 = vpop.f32.mrf.mxu0
        %9460 = vmatprep.mubr.f32.mxu0 0.0
        %9461 = vmatmul.mubr.f32.gmra.mxu0 %v9189
        %v9462 = vpop.f32.mrf.mxu0
        %v9463 = vadd.f32 0.0, %v9462
        %v9464 = vpop.f32.mrf.mxu0
        %9465 = vmatprep.mubr.f32.mxu0 0.0
        %9466 = vmatmul.mubr.f32.gmra.mxu0 %v9192
        %v9467 = vpop.f32.mrf.mxu0
        %v9468 = vadd.f32 0.0, %v9467
        %v9469 = vpop.f32.mrf.mxu0
        %9470 = vmatprep.mubr.f32.mxu0 0.0
        %9471 = vmatmul.mubr.f32.gmra.mxu0 %v9195
        %v9472 = vpop.f32.mrf.mxu0
        %v9473 = vadd.f32 0.0, %v9472
        %v9474 = vpop.f32.mrf.mxu0
        %9475 = vmatprep.mubr.f32.mxu0 0.0
        %9476 = vmatmul.mubr.f32.gmra.mxu0 %v9198
        %v9477 = vpop.f32.mrf.mxu0
        %v9478 = vadd.f32 0.0, %v9477
        %v9479 = vpop.f32.mrf.mxu0
        %9480 = vmatprep.mubr.f32.mxu0 0.0
        %9481 = vmatmul.mubr.f32.gmra.mxu0 %v9201
        %v9482 = vpop.f32.mrf.mxu0
        %v9483 = vadd.f32 0.0, %v9482
        %v9484 = vpop.f32.mrf.mxu0
        %9485 = vmatprep.mubr.f32.mxu0 0.0
        %9486 = vmatmul.mubr.f32.gmra.mxu0 %v9204
        %v9487 = vpop.f32.mrf.mxu0
        %v9488 = vadd.f32 0.0, %v9487
        %v9489 = vpop.f32.mrf.mxu0
        %9490 = vmatprep.mubr.f32.mxu0 0.0
        %9491 = vmatmul.mubr.f32.gmra.mxu0 %v9207
        %v9492 = vpop.f32.mrf.mxu0
        %v9493 = vadd.f32 0.0, %v9492
        %v9494 = vpop.f32.mrf.mxu0
        %9495 = vmatprep.mubr.f32.mxu0 0.0
        %9496 = vmatmul.mubr.f32.gmra.mxu0 %v9210
        %v9497 = vpop.f32.mrf.mxu0
        %v9498 = vadd.f32 0.0, %v9497
        %v9499 = vpop.f32.mrf.mxu0
        %9500 = vmatprep.mubr.f32.mxu0 0.0
        %9501 = vmatmul.mubr.f32.gmra.mxu0 %v9213
        %v9502 = vpop.f32.mrf.mxu0
        %v9503 = vadd.f32 0.0, %v9502
        %v9504 = vpop.f32.mrf.mxu0
        %9505 = vmatprep.mubr.f32.mxu0 0.0
        %9506 = vmatmul.mubr.f32.gmra.mxu0 %v9216
        %v9507 = vpop.f32.mrf.mxu0
        %v9508 = vadd.f32 0.0, %v9507
        %v9509 = vpop.f32.mrf.mxu0
        %9510 = vmatprep.mubr.f32.mxu0 0.0
        %9511 = vmatmul.mubr.f32.gmra.mxu0 %v9219
        %v9512 = vpop.f32.mrf.mxu0
        %v9513 = vadd.f32 0.0, %v9512
        %v9514 = vpop.f32.mrf.mxu0
        %9515 = vmatprep.mubr.f32.mxu0 0.0
        %9516 = vmatmul.mubr.f32.gmra.mxu0 %v9222
        %v9517 = vpop.f32.mrf.mxu0
        %v9518 = vadd.f32 0.0, %v9517
        %v9519 = vpop.f32.mrf.mxu0
        %9520 = vmatprep.mubr.f32.mxu0 0.0
        %9521 = vmatmul.mubr.f32.gmra.mxu0 %v9225
        %v9522 = vpop.f32.mrf.mxu0
        %v9523 = vadd.f32 0.0, %v9522
        %v9524 = vpop.f32.mrf.mxu0
        %9525 = vmatprep.mubr.f32.mxu0 0.0
        %9526 = vmatmul.mubr.f32.gmra.mxu0 %v9228
        %v9527 = vpop.f32.mrf.mxu0
        %v9528 = vadd.f32 0.0, %v9527
        %v9529 = vpop.f32.mrf.mxu0
        %9530 = vmatprep.mubr.f32.mxu0 0.0
        %9531 = vmatmul.mubr.f32.gmra.mxu0 %v9231
        %v9532 = vpop.f32.mrf.mxu0
        %v9533 = vadd.f32 0.0, %v9532
        %v9534 = vpop.f32.mrf.mxu0
        %9535 = vmatprep.mubr.f32.mxu0 0.0
        %9536 = vmatmul.mubr.f32.gmra.mxu0 %v9234
        %v9537 = vpop.f32.mrf.mxu0
        %v9538 = vadd.f32 0.0, %v9537
        %v9539 = vpop.f32.mrf.mxu0
        %9540 = vmatprep.mubr.f32.mxu0 0.0
        %9541 = vmatmul.mubr.f32.gmra.mxu0 %v9237
        %v9542 = vpop.f32.mrf.mxu0
        %v9543 = vadd.f32 0.0, %v9542
        %v9544 = vpop.f32.mrf.mxu0
        %9545 = vmatprep.mubr.f32.mxu0 0.0
        %9546 = vmatmul.mubr.f32.gmra.mxu0 %v9240
        %v9547 = vpop.f32.mrf.mxu0
        %v9548 = vadd.f32 0.0, %v9547
        %v9549 = vpop.f32.mrf.mxu0
        %9550 = vmatprep.mubr.f32.mxu0 0.0
        %9551 = vmatmul.mubr.f32.gmra.mxu0 %v9243
        %v9552 = vpop.f32.mrf.mxu0
        %v9553 = vadd.f32 0.0, %v9552
        %v9554 = vpop.f32.mrf.mxu0
        %9555 = vmatprep.mubr.f32.mxu0 0.0
        %9556 = vmatmul.mubr.f32.gmra.mxu0 %v9246
        %v9557 = vpop.f32.mrf.mxu0
        %v9558 = vadd.f32 0.0, %v9557
        %v9559 = vpop.f32.mrf.mxu0
        %9560 = vmatprep.mubr.f32.mxu0 0.0
        %9561 = vmatmul.mubr.f32.gmra.mxu0 %v9249
        %v9562 = vpop.f32.mrf.mxu0
        %v9563 = vadd.f32 0.0, %v9562
        %v9564 = vpop.f32.mrf.mxu0
        %9565 = vmatprep.mubr.f32.mxu0 0.0
        %9566 = vmatmul.mubr.f32.gmra.mxu0 %v9252
        %v9567 = vpop.f32.mrf.mxu0
        %v9568 = vadd.f32 0.0, %v9567
        %v9569 = vpop.f32.mrf.mxu0
        %9570 = vmatprep.mubr.f32.mxu0 0.0
        %9571 = vmatmul.mubr.f32.gmra.mxu0 %v9255
        %v9572 = vpop.f32.mrf.mxu0
        %v9573 = vadd.f32 0.0, %v9572
        %v9574 = vpop.f32.mrf.mxu0
        %9575 = vmatprep.mubr.f32.mxu0 0.0
        %9576 = vmatmul.mubr.f32.gmra.mxu0 %v9258
        %v9577 = vpop.f32.mrf.mxu0
        %v9578 = vadd.f32 0.0, %v9577
        %v9579 = vpop.f32.mrf.mxu0
        %9580 = vmatprep.mubr.f32.mxu0 0.0
        %9581 = vmatmul.mubr.f32.gmra.mxu0 %v9261
        %v9582 = vpop.f32.mrf.mxu0
        %v9583 = vadd.f32 0.0, %v9582
        %v9584 = vpop.f32.mrf.mxu0
        %9585 = vmatprep.mubr.f32.mxu0 0.0
        %9586 = vmatmul.mubr.f32.gmra.mxu0 %v9264
        %v9587 = vpop.f32.mrf.mxu0
        %v9588 = vadd.f32 0.0, %v9587
        %v9589 = vpop.f32.mrf.mxu0
        %9590 = vmatprep.mubr.f32.mxu0 0.0
        %9591 = vmatmul.mubr.f32.gmra.mxu0 %v9267
        %v9592 = vpop.f32.mrf.mxu0
        %v9593 = vadd.f32 0.0, %v9592
        %v9594 = vpop.f32.mrf.mxu0
        %9595 = vmatprep.mubr.f32.mxu0 0.0
        %9596 = vmatmul.mubr.f32.gmra.mxu0 %v9270
        %v9597 = vpop.f32.mrf.mxu0
        %v9598 = vadd.f32 0.0, %v9597
        %v9599 = vpop.f32.mrf.mxu0
        %9600 = vmatprep.mubr.f32.mxu0 0.0
        %9601 = vmatmul.mubr.f32.gmra.mxu0 %v9273
        %v9602 = vpop.f32.mrf.mxu0
        %v9603 = vadd.f32 0.0, %v9602
        %v9604 = vpop.f32.mrf.mxu0
        %9605 = vmatprep.mubr.f32.mxu0 0.0
        %9606 = vmatmul.mubr.f32.gmra.mxu0 %v9276
        %v9607 = vpop.f32.mrf.mxu0
        %v9608 = vadd.f32 0.0, %v9607
        %v9609 = vpop.f32.mrf.mxu0
        %9610 = vdwg.mxu0
        %v9611 = vadd.f32 %v9011, %v9348
        %v9612 = vadd.f32 %v9012, %v9353
        %v9613 = vadd.f32 %v9013, %v9358
        %v9614 = vadd.f32 %v9014, %v9363
        %v9615 = vadd.f32 %v9015, %v9368
        %v9616 = vadd.f32 %v9016, %v9373
        %v9617 = vadd.f32 %v9017, %v9378
        %v9618 = vadd.f32 %v9018, %v9383
        %v9619 = vadd.f32 %v9019, %v9388
        %v9620 = vadd.f32 %v9020, %v9393
        %v9621 = vadd.f32 %v9021, %v9398
        %v9622 = vadd.f32 %v9022, %v9403
        %v9623 = vadd.f32 %v9023, %v9408
        %v9624 = vadd.f32 %v9024, %v9413
        %v9625 = vadd.f32 %v9025, %v9418
        %v9626 = vadd.f32 %v9026, %v9423
        %v9627 = vadd.f32 %v9027, %v9428
        %v9628 = vadd.f32 %v9028, %v9433
        %v9629 = vadd.f32 %v9029, %v9438
        %v9630 = vadd.f32 %v9030, %v9443
        %v9631 = vadd.f32 %v9031, %v9448
        %v9632 = vadd.f32 %v9032, %v9453
        %v9633 = vadd.f32 %v9033, %v9458
        %v9634 = vadd.f32 %v9034, %v9463
        %v9635 = vadd.f32 %v9035, %v9468
        %v9636 = vadd.f32 %v9036, %v9473
        %v9637 = vadd.f32 %v9037, %v9478
        %v9638 = vadd.f32 %v9038, %v9483
        %v9639 = vadd.f32 %v9039, %v9488
        %v9640 = vadd.f32 %v9040, %v9493
        %v9641 = vadd.f32 %v9041, %v9498
        %v9642 = vadd.f32 %v9042, %v9503
        %v9643 = vadd.f32 %v9043, %v9508
        %v9644 = vadd.f32 %v9044, %v9513
        %v9645 = vadd.f32 %v9045, %v9518
        %v9646 = vadd.f32 %v9046, %v9523
        %v9647 = vadd.f32 %v9047, %v9528
        %v9648 = vadd.f32 %v9048, %v9533
        %v9649 = vadd.f32 %v9049, %v9538
        %v9650 = vadd.f32 %v9050, %v9543
        %v9651 = vadd.f32 %v9051, %v9548
        %v9652 = vadd.f32 %v9052, %v9553
        %v9653 = vadd.f32 %v9053, %v9558
        %v9654 = vadd.f32 %v9054, %v9563
        %v9655 = vadd.f32 %v9055, %v9568
        %v9656 = vadd.f32 %v9056, %v9573
        %v9657 = vadd.f32 %v9057, %v9578
        %v9658 = vadd.f32 %v9058, %v9583
        %v9659 = vadd.f32 %v9059, %v9588
        %v9660 = vadd.f32 %v9060, %v9593
        %v9661 = vadd.f32 %v9061, %v9598
        %v9662 = vadd.f32 %v9062, %v9603
        %v9663 = vadd.f32 %v9063, %v9608
        %v9664 = vld [vmem:[%s2] sm:$0xff]
        %v9665 = vld [vmem:[%s2 + $0x8] sm:$0xff]
        %v9666 = vld [vmem:[%s2 + $0x10] sm:$0xff]
        %v9667 = vld [vmem:[%s2 + $0x18] sm:$0xff]
        %v9668 = vld [vmem:[%s2 + $0x20] sm:$0xff]
        %v9669 = vld [vmem:[%s2 + $0x28] sm:$0xff]
        %v9670 = vld [vmem:[%s2 + $0x30] sm:$0xff]
        %v9671 = vld [vmem:[%s2 + $0x38] sm:$0xff]
        %v9672 = vld [vmem:[%s2 + $0x40] sm:$0xff]
        %v9673 = vld [vmem:[%s2 + $0x48] sm:$0xff]
        %v9674 = vld [vmem:[%s2 + $0x50] sm:$0xff]
        %v9675 = vld [vmem:[%s2 + $0x58] sm:$0xff]
        %v9676 = vld [vmem:[%s2 + $0x60] sm:$0xff]
        %v9677 = vld [vmem:[%s2 + $0x68] sm:$0xff]
        %v9678 = vld [vmem:[%s2 + $0x70] sm:$0xff]
        %v9679 = vld [vmem:[%s2 + $0x78] sm:$0xff]
        %v9680 = vld [vmem:[%s2 + $0x80] sm:$0xff]
        %v9681 = vld [vmem:[%s2 + $0x88] sm:$0xff]
        %v9682 = vld [vmem:[%s2 + $0x90] sm:$0xff]
        %v9683 = vld [vmem:[%s2 + $0x98] sm:$0xff]
        %v9684 = vld [vmem:[%s2 + $0xa0] sm:$0xff]
        %v9685 = vld [vmem:[%s2 + $0xa8] sm:$0xff]
        %v9686 = vld [vmem:[%s2 + $0xb0] sm:$0xff]
        %v9687 = vld [vmem:[%s2 + $0xb8] sm:$0xff]
        %v9688 = vld [vmem:[%s2 + $0xc0] sm:$0xff]
        %v9689 = vld [vmem:[%s2 + $0xc8] sm:$0xff]
        %v9690 = vld [vmem:[%s2 + $0xd0] sm:$0xff]
        %v9691 = vld [vmem:[%s2 + $0xd8] sm:$0xff]
        %v9692 = vld [vmem:[%s2 + $0xe0] sm:$0xff]
        %v9693 = vld [vmem:[%s2 + $0xe8] sm:$0xff]
        %v9694 = vld [vmem:[%s2 + $0xf0] sm:$0xff]
        %v9695 = vld [vmem:[%s2 + $0xf8] sm:$0xff]
        %v9696 = vld [vmem:[%s2 + $0x100] sm:$0xff]
        %v9697 = vld [vmem:[%s2 + $0x108] sm:$0xff]
        %v9698 = vld [vmem:[%s2 + $0x110] sm:$0xff]
        %v9699 = vld [vmem:[%s2 + $0x118] sm:$0xff]
        %v9700 = vld [vmem:[%s2 + $0x120] sm:$0xff]
        %v9701 = vld [vmem:[%s2 + $0x128] sm:$0xff]
        %v9702 = vld [vmem:[%s2 + $0x130] sm:$0xff]
        %v9703 = vld [vmem:[%s2 + $0x138] sm:$0xff]
        %v9704 = vld [vmem:[%s2 + $0x140] sm:$0xff]
        %v9705 = vld [vmem:[%s2 + $0x148] sm:$0xff]
        %v9706 = vld [vmem:[%s2 + $0x150] sm:$0xff]
        %v9707 = vld [vmem:[%s2 + $0x158] sm:$0xff]
        %v9708 = vld [vmem:[%s2 + $0x160] sm:$0xff]
        %v9709 = vld [vmem:[%s2 + $0x168] sm:$0xff]
        %v9710 = vld [vmem:[%s2 + $0x170] sm:$0xff]
        %v9711 = vld [vmem:[%s2 + $0x178] sm:$0xff]
        %v9712 = vld [vmem:[%s2 + $0x180] sm:$0xff]
        %v9713 = vld [vmem:[%s2 + $0x188] sm:$0xff]
        %v9714 = vld [vmem:[%s2 + $0x190] sm:$0xff]
        %v9715 = vld [vmem:[%s2 + $0x198] sm:$0xff]
        %v9716 = vld [vmem:[%s2 + $0x1a0] sm:$0x3]
        %9718 = vset.pattern.permute.xlu0 0
        %9719 = vperm.xlu0 %9718, %v9664
        %v9720 = vpop.permute.xlu0 %9719
        %9723 = vset.pattern.permute.xlu0 0
        %9724 = vperm.xlu0 %9723, %v9665
        %v9725 = vpop.permute.xlu0 %9724
        %9728 = vset.pattern.permute.xlu0 0
        %9729 = vperm.xlu0 %9728, %v9666
        %v9730 = vpop.permute.xlu0 %9729
        %9733 = vset.pattern.permute.xlu0 0
        %9734 = vperm.xlu0 %9733, %v9667
        %v9735 = vpop.permute.xlu0 %9734
        %9738 = vset.pattern.permute.xlu0 0
        %9739 = vperm.xlu0 %9738, %v9668
        %v9740 = vpop.permute.xlu0 %9739
        %9743 = vset.pattern.permute.xlu0 0
        %9744 = vperm.xlu0 %9743, %v9669
        %v9745 = vpop.permute.xlu0 %9744
        %9748 = vset.pattern.permute.xlu0 0
        %9749 = vperm.xlu0 %9748, %v9670
        %v9750 = vpop.permute.xlu0 %9749
        %9753 = vset.pattern.permute.xlu0 0
        %9754 = vperm.xlu0 %9753, %v9671
        %v9755 = vpop.permute.xlu0 %9754
        %9758 = vset.pattern.permute.xlu0 0
        %9759 = vperm.xlu0 %9758, %v9672
        %v9760 = vpop.permute.xlu0 %9759
        %9763 = vset.pattern.permute.xlu0 0
        %9764 = vperm.xlu0 %9763, %v9673
        %v9765 = vpop.permute.xlu0 %9764
        %9768 = vset.pattern.permute.xlu0 0
        %9769 = vperm.xlu0 %9768, %v9674
        %v9770 = vpop.permute.xlu0 %9769
        %9773 = vset.pattern.permute.xlu0 0
        %9774 = vperm.xlu0 %9773, %v9675
        %v9775 = vpop.permute.xlu0 %9774
        %9778 = vset.pattern.permute.xlu0 0
        %9779 = vperm.xlu0 %9778, %v9676
        %v9780 = vpop.permute.xlu0 %9779
        %9783 = vset.pattern.permute.xlu0 0
        %9784 = vperm.xlu0 %9783, %v9677
        %v9785 = vpop.permute.xlu0 %9784
        %9788 = vset.pattern.permute.xlu0 0
        %9789 = vperm.xlu0 %9788, %v9678
        %v9790 = vpop.permute.xlu0 %9789
        %9793 = vset.pattern.permute.xlu0 0
        %9794 = vperm.xlu0 %9793, %v9679
        %v9795 = vpop.permute.xlu0 %9794
        %9798 = vset.pattern.permute.xlu0 0
        %9799 = vperm.xlu0 %9798, %v9680
        %v9800 = vpop.permute.xlu0 %9799
        %9803 = vset.pattern.permute.xlu0 0
        %9804 = vperm.xlu0 %9803, %v9681
        %v9805 = vpop.permute.xlu0 %9804
        %9808 = vset.pattern.permute.xlu0 0
        %9809 = vperm.xlu0 %9808, %v9682
        %v9810 = vpop.permute.xlu0 %9809
        %9813 = vset.pattern.permute.xlu0 0
        %9814 = vperm.xlu0 %9813, %v9683
        %v9815 = vpop.permute.xlu0 %9814
        %9818 = vset.pattern.permute.xlu0 0
        %9819 = vperm.xlu0 %9818, %v9684
        %v9820 = vpop.permute.xlu0 %9819
        %9823 = vset.pattern.permute.xlu0 0
        %9824 = vperm.xlu0 %9823, %v9685
        %v9825 = vpop.permute.xlu0 %9824
        %9828 = vset.pattern.permute.xlu0 0
        %9829 = vperm.xlu0 %9828, %v9686
        %v9830 = vpop.permute.xlu0 %9829
        %9833 = vset.pattern.permute.xlu0 0
        %9834 = vperm.xlu0 %9833, %v9687
        %v9835 = vpop.permute.xlu0 %9834
        %9838 = vset.pattern.permute.xlu0 0
        %9839 = vperm.xlu0 %9838, %v9688
        %v9840 = vpop.permute.xlu0 %9839
        %9843 = vset.pattern.permute.xlu0 0
        %9844 = vperm.xlu0 %9843, %v9689
        %v9845 = vpop.permute.xlu0 %9844
        %9848 = vset.pattern.permute.xlu0 0
        %9849 = vperm.xlu0 %9848, %v9690
        %v9850 = vpop.permute.xlu0 %9849
        %9853 = vset.pattern.permute.xlu0 0
        %9854 = vperm.xlu0 %9853, %v9691
        %v9855 = vpop.permute.xlu0 %9854
        %9858 = vset.pattern.permute.xlu0 0
        %9859 = vperm.xlu0 %9858, %v9692
        %v9860 = vpop.permute.xlu0 %9859
        %9863 = vset.pattern.permute.xlu0 0
        %9864 = vperm.xlu0 %9863, %v9693
        %v9865 = vpop.permute.xlu0 %9864
        %9868 = vset.pattern.permute.xlu0 0
        %9869 = vperm.xlu0 %9868, %v9694
        %v9870 = vpop.permute.xlu0 %9869
        %9873 = vset.pattern.permute.xlu0 0
        %9874 = vperm.xlu0 %9873, %v9695
        %v9875 = vpop.permute.xlu0 %9874
        %9878 = vset.pattern.permute.xlu0 0
        %9879 = vperm.xlu0 %9878, %v9696
        %v9880 = vpop.permute.xlu0 %9879
        %9883 = vset.pattern.permute.xlu0 0
        %9884 = vperm.xlu0 %9883, %v9697
        %v9885 = vpop.permute.xlu0 %9884
        %9888 = vset.pattern.permute.xlu0 0
        %9889 = vperm.xlu0 %9888, %v9698
        %v9890 = vpop.permute.xlu0 %9889
        %9893 = vset.pattern.permute.xlu0 0
        %9894 = vperm.xlu0 %9893, %v9699
        %v9895 = vpop.permute.xlu0 %9894
        %9898 = vset.pattern.permute.xlu0 0
        %9899 = vperm.xlu0 %9898, %v9700
        %v9900 = vpop.permute.xlu0 %9899
        %9903 = vset.pattern.permute.xlu0 0
        %9904 = vperm.xlu0 %9903, %v9701
        %v9905 = vpop.permute.xlu0 %9904
        %9908 = vset.pattern.permute.xlu0 0
        %9909 = vperm.xlu0 %9908, %v9702
        %v9910 = vpop.permute.xlu0 %9909
        %9913 = vset.pattern.permute.xlu0 0
        %9914 = vperm.xlu0 %9913, %v9703
        %v9915 = vpop.permute.xlu0 %9914
        %9918 = vset.pattern.permute.xlu0 0
        %9919 = vperm.xlu0 %9918, %v9704
        %v9920 = vpop.permute.xlu0 %9919
        %9923 = vset.pattern.permute.xlu0 0
        %9924 = vperm.xlu0 %9923, %v9705
        %v9925 = vpop.permute.xlu0 %9924
        %9928 = vset.pattern.permute.xlu0 0
        %9929 = vperm.xlu0 %9928, %v9706
        %v9930 = vpop.permute.xlu0 %9929
        %9933 = vset.pattern.permute.xlu0 0
        %9934 = vperm.xlu0 %9933, %v9707
        %v9935 = vpop.permute.xlu0 %9934
        %9938 = vset.pattern.permute.xlu0 0
        %9939 = vperm.xlu0 %9938, %v9708
        %v9940 = vpop.permute.xlu0 %9939
        %9943 = vset.pattern.permute.xlu0 0
        %9944 = vperm.xlu0 %9943, %v9709
        %v9945 = vpop.permute.xlu0 %9944
        %9948 = vset.pattern.permute.xlu0 0
        %9949 = vperm.xlu0 %9948, %v9710
        %v9950 = vpop.permute.xlu0 %9949
        %9953 = vset.pattern.permute.xlu0 0
        %9954 = vperm.xlu0 %9953, %v9711
        %v9955 = vpop.permute.xlu0 %9954
        %9958 = vset.pattern.permute.xlu0 0
        %9959 = vperm.xlu0 %9958, %v9712
        %v9960 = vpop.permute.xlu0 %9959
        %9963 = vset.pattern.permute.xlu0 0
        %9964 = vperm.xlu0 %9963, %v9713
        %v9965 = vpop.permute.xlu0 %9964
        %9968 = vset.pattern.permute.xlu0 0
        %9969 = vperm.xlu0 %9968, %v9714
        %v9970 = vpop.permute.xlu0 %9969
        %9973 = vset.pattern.permute.xlu0 0
        %9974 = vperm.xlu0 %9973, %v9715
        %v9975 = vpop.permute.xlu0 %9974
        %9978 = vset.pattern.permute.xlu0 0
        %9979 = vperm.xlu0 %9978, %v9716
        %v9980 = vpop.permute.xlu0 %9979
        %v9982 = vmul.f32 %v9611, %v9720
        %v9983 = vmul.f32 %v9612, %v9725
        %v9984 = vmul.f32 %v9613, %v9730
        %v9985 = vmul.f32 %v9614, %v9735
        %v9986 = vmul.f32 %v9615, %v9740
        %v9987 = vmul.f32 %v9616, %v9745
        %v9988 = vmul.f32 %v9617, %v9750
        %v9989 = vmul.f32 %v9618, %v9755
        %v9990 = vmul.f32 %v9619, %v9760
        %v9991 = vmul.f32 %v9620, %v9765
        %v9992 = vmul.f32 %v9621, %v9770
        %v9993 = vmul.f32 %v9622, %v9775
        %v9994 = vmul.f32 %v9623, %v9780
        %v9995 = vmul.f32 %v9624, %v9785
        %v9996 = vmul.f32 %v9625, %v9790
        %v9997 = vmul.f32 %v9626, %v9795
        %v9998 = vmul.f32 %v9627, %v9800
        %v9999 = vmul.f32 %v9628, %v9805
        %v10000 = vmul.f32 %v9629, %v9810
        %v10001 = vmul.f32 %v9630, %v9815
        %v10002 = vmul.f32 %v9631, %v9820
        %v10003 = vmul.f32 %v9632, %v9825
        %v10004 = vmul.f32 %v9633, %v9830
        %v10005 = vmul.f32 %v9634, %v9835
        %v10006 = vmul.f32 %v9635, %v9840
        %v10007 = vmul.f32 %v9636, %v9845
        %v10008 = vmul.f32 %v9637, %v9850
        %v10009 = vmul.f32 %v9638, %v9855
        %v10010 = vmul.f32 %v9639, %v9860
        %v10011 = vmul.f32 %v9640, %v9865
        %v10012 = vmul.f32 %v9641, %v9870
        %v10013 = vmul.f32 %v9642, %v9875
        %v10014 = vmul.f32 %v9643, %v9880
        %v10015 = vmul.f32 %v9644, %v9885
        %v10016 = vmul.f32 %v9645, %v9890
        %v10017 = vmul.f32 %v9646, %v9895
        %v10018 = vmul.f32 %v9647, %v9900
        %v10019 = vmul.f32 %v9648, %v9905
        %v10020 = vmul.f32 %v9649, %v9910
        %v10021 = vmul.f32 %v9650, %v9915
        %v10022 = vmul.f32 %v9651, %v9920
        %v10023 = vmul.f32 %v9652, %v9925
        %v10024 = vmul.f32 %v9653, %v9930
        %v10025 = vmul.f32 %v9654, %v9935
        %v10026 = vmul.f32 %v9655, %v9940
        %v10027 = vmul.f32 %v9656, %v9945
        %v10028 = vmul.f32 %v9657, %v9950
        %v10029 = vmul.f32 %v9658, %v9955
        %v10030 = vmul.f32 %v9659, %v9960
        %v10031 = vmul.f32 %v9660, %v9965
        %v10032 = vmul.f32 %v9661, %v9970
        %v10033 = vmul.f32 %v9662, %v9975
        %v10034 = vmul.f32 %v9663, %v9980
        %v10035 = vadd.f32 %v9982, %v9983
        %v10036 = vadd.f32 %v10035, %v9984
        %v10037 = vadd.f32 %v10036, %v9985
        %v10038 = vadd.f32 %v10037, %v9986
        %v10039 = vadd.f32 %v10038, %v9987
        %v10040 = vadd.f32 %v10039, %v9988
        %v10041 = vadd.f32 %v10040, %v9989
        %v10042 = vadd.f32 %v10041, %v9990
        %v10043 = vadd.f32 %v10042, %v9991
        %v10044 = vadd.f32 %v10043, %v9992
        %v10045 = vadd.f32 %v10044, %v9993
        %v10046 = vadd.f32 %v10045, %v9994
        %v10047 = vadd.f32 %v10046, %v9995
        %v10048 = vadd.f32 %v10047, %v9996
        %v10049 = vadd.f32 %v10048, %v9997
        %v10050 = vadd.f32 %v10049, %v9998
        %v10051 = vadd.f32 %v10050, %v9999
        %v10052 = vadd.f32 %v10051, %v10000
        %v10053 = vadd.f32 %v10052, %v10001
        %v10054 = vadd.f32 %v10053, %v10002
        %v10055 = vadd.f32 %v10054, %v10003
        %v10056 = vadd.f32 %v10055, %v10004
        %v10057 = vadd.f32 %v10056, %v10005
        %v10058 = vadd.f32 %v10057, %v10006
        %v10059 = vadd.f32 %v10058, %v10007
        %v10060 = vadd.f32 %v10059, %v10008
        %v10061 = vadd.f32 %v10060, %v10009
        %v10062 = vadd.f32 %v10061, %v10010
        %v10063 = vadd.f32 %v10062, %v10011
        %v10064 = vadd.f32 %v10063, %v10012
        %v10065 = vadd.f32 %v10064, %v10013
        %v10066 = vadd.f32 %v10065, %v10014
        %v10067 = vadd.f32 %v10066, %v10015
        %v10068 = vadd.f32 %v10067, %v10016
        %v10069 = vadd.f32 %v10068, %v10017
        %v10070 = vadd.f32 %v10069, %v10018
        %v10071 = vadd.f32 %v10070, %v10019
        %v10072 = vadd.f32 %v10071, %v10020
        %v10073 = vadd.f32 %v10072, %v10021
        %v10074 = vadd.f32 %v10073, %v10022
        %v10075 = vadd.f32 %v10074, %v10023
        %v10076 = vadd.f32 %v10075, %v10024
        %v10077 = vadd.f32 %v10076, %v10025
        %v10078 = vadd.f32 %v10077, %v10026
        %v10079 = vadd.f32 %v10078, %v10027
        %v10080 = vadd.f32 %v10079, %v10028
        %v10081 = vadd.f32 %v10080, %v10029
        %v10082 = vadd.f32 %v10081, %v10030
        %v10083 = vadd.f32 %v10082, %v10031
        %v10084 = vadd.f32 %v10083, %v10032
        %v10085 = vadd.f32 %v10084, %v10033
        %vm10086 = vcmask 1041408
        %v10087 = vsel %vm10086, %v10034, 0.0
        %v10088 = vadd.f32 %v10085, %v10087
        %v10089 = vrot.slane %v10088, 4
        %v10090 = vadd.f32 %v10088, %v10089
        %v10091 = vrot.slane %v10090, 2
        %v10092 = vadd.f32 %v10090, %v10091
        %v10093 = vrot.slane %v10092, 1
        %v10094 = vadd.f32 %v10092, %v10093
        %v10095 = vmul.f32 %v9982, %v9982
        %v10096 = vmul.f32 %v9983, %v9983
        %v10097 = vmul.f32 %v9984, %v9984
        %v10098 = vmul.f32 %v9985, %v9985
        %v10099 = vmul.f32 %v9986, %v9986
        %v10100 = vmul.f32 %v9987, %v9987
        %v10101 = vmul.f32 %v9988, %v9988
        %v10102 = vmul.f32 %v9989, %v9989
        %v10103 = vmul.f32 %v9990, %v9990
        %v10104 = vmul.f32 %v9991, %v9991
        %v10105 = vmul.f32 %v9992, %v9992
        %v10106 = vmul.f32 %v9993, %v9993
        %v10107 = vmul.f32 %v9994, %v9994
        %v10108 = vmul.f32 %v9995, %v9995
        %v10109 = vmul.f32 %v9996, %v9996
        %v10110 = vmul.f32 %v9997, %v9997
        %v10111 = vmul.f32 %v9998, %v9998
        %v10112 = vmul.f32 %v9999, %v9999
        %v10113 = vmul.f32 %v10000, %v10000
        %v10114 = vmul.f32 %v10001, %v10001
        %v10115 = vmul.f32 %v10002, %v10002
        %v10116 = vmul.f32 %v10003, %v10003
        %v10117 = vmul.f32 %v10004, %v10004
        %v10118 = vmul.f32 %v10005, %v10005
        %v10119 = vmul.f32 %v10006, %v10006
        %v10120 = vmul.f32 %v10007, %v10007
        %v10121 = vmul.f32 %v10008, %v10008
        %v10122 = vmul.f32 %v10009, %v10009
        %v10123 = vmul.f32 %v10010, %v10010
        %v10124 = vmul.f32 %v10011, %v10011
        %v10125 = vmul.f32 %v10012, %v10012
        %v10126 = vmul.f32 %v10013, %v10013
        %v10127 = vmul.f32 %v10014, %v10014
        %v10128 = vmul.f32 %v10015, %v10015
        %v10129 = vmul.f32 %v10016, %v10016
        %v10130 = vmul.f32 %v10017, %v10017
        %v10131 = vmul.f32 %v10018, %v10018
        %v10132 = vmul.f32 %v10019, %v10019
        %v10133 = vmul.f32 %v10020, %v10020
        %v10134 = vmul.f32 %v10021, %v10021
        %v10135 = vmul.f32 %v10022, %v10022
        %v10136 = vmul.f32 %v10023, %v10023
        %v10137 = vmul.f32 %v10024, %v10024
        %v10138 = vmul.f32 %v10025, %v10025
        %v10139 = vmul.f32 %v10026, %v10026
        %v10140 = vmul.f32 %v10027, %v10027
        %v10141 = vmul.f32 %v10028, %v10028
        %v10142 = vmul.f32 %v10029, %v10029
        %v10143 = vmul.f32 %v10030, %v10030
        %v10144 = vmul.f32 %v10031, %v10031
        %v10145 = vmul.f32 %v10032, %v10032
        %v10146 = vmul.f32 %v10033, %v10033
        %v10147 = vmul.f32 %v10034, %v10034
        %v10148 = vadd.f32 %v10095, %v10096
        %v10149 = vadd.f32 %v10148, %v10097
        %v10150 = vadd.f32 %v10149, %v10098
        %v10151 = vadd.f32 %v10150, %v10099
        %v10152 = vadd.f32 %v10151, %v10100
        %v10153 = vadd.f32 %v10152, %v10101
        %v10154 = vadd.f32 %v10153, %v10102
        %v10155 = vadd.f32 %v10154, %v10103
        %v10156 = vadd.f32 %v10155, %v10104
        %v10157 = vadd.f32 %v10156, %v10105
        %v10158 = vadd.f32 %v10157, %v10106
        %v10159 = vadd.f32 %v10158, %v10107
        %v10160 = vadd.f32 %v10159, %v10108
        %v10161 = vadd.f32 %v10160, %v10109
        %v10162 = vadd.f32 %v10161, %v10110
        %v10163 = vadd.f32 %v10162, %v10111
        %v10164 = vadd.f32 %v10163, %v10112
        %v10165 = vadd.f32 %v10164, %v10113
        %v10166 = vadd.f32 %v10165, %v10114
        %v10167 = vadd.f32 %v10166, %v10115
        %v10168 = vadd.f32 %v10167, %v10116
        %v10169 = vadd.f32 %v10168, %v10117
        %v10170 = vadd.f32 %v10169, %v10118
        %v10171 = vadd.f32 %v10170, %v10119
        %v10172 = vadd.f32 %v10171, %v10120
        %v10173 = vadd.f32 %v10172, %v10121
        %v10174 = vadd.f32 %v10173, %v10122
        %v10175 = vadd.f32 %v10174, %v10123
        %v10176 = vadd.f32 %v10175, %v10124
        %v10177 = vadd.f32 %v10176, %v10125
        %v10178 = vadd.f32 %v10177, %v10126
        %v10179 = vadd.f32 %v10178, %v10127
        %v10180 = vadd.f32 %v10179, %v10128
        %v10181 = vadd.f32 %v10180, %v10129
        %v10182 = vadd.f32 %v10181, %v10130
        %v10183 = vadd.f32 %v10182, %v10131
        %v10184 = vadd.f32 %v10183, %v10132
        %v10185 = vadd.f32 %v10184, %v10133
        %v10186 = vadd.f32 %v10185, %v10134
        %v10187 = vadd.f32 %v10186, %v10135
        %v10188 = vadd.f32 %v10187, %v10136
        %v10189 = vadd.f32 %v10188, %v10137
        %v10190 = vadd.f32 %v10189, %v10138
        %v10191 = vadd.f32 %v10190, %v10139
        %v10192 = vadd.f32 %v10191, %v10140
        %v10193 = vadd.f32 %v10192, %v10141
        %v10194 = vadd.f32 %v10193, %v10142
        %v10195 = vadd.f32 %v10194, %v10143
        %v10196 = vadd.f32 %v10195, %v10144
        %v10197 = vadd.f32 %v10196, %v10145
        %v10198 = vadd.f32 %v10197, %v10146
        %v10199 = vsel %vm10086, %v10147, 0.0
        %v10200 = vadd.f32 %v10198, %v10199
        %v10201 = vrot.slane %v10200, 4
        %v10202 = vadd.f32 %v10200, %v10201
        %v10203 = vrot.slane %v10202, 2
        %v10204 = vadd.f32 %v10202, %v10203
        %v10205 = vrot.slane %v10204, 1
        %v10206 = vadd.f32 %v10204, %v10205
        %vm10207 = vcmask 1040384
        %v10208 = vsel %vm10207, %v10094, %v10206
        %10209 = vst [vmem:[%s163] sm:$0x3] %v10208
        %s10210 = sand.u32 %s93, 1
        %s10211 = scalar_lea.sflag [#allocation3], %s10210
        %s10212 = sand.u32 %s93, 1
        %s10213 = smul.addr %s10212, 2
        %s10214 = scalar_lea.vmem [#allocation2], %s10213
        // Predicated region
        $region33: #{tpu_custom_call.1} parent=31 // pred_check
          %p10215 = pneg %p103
        $region34: #{tpu_custom_call.1} parent=31 // pred_check_branch
          %10217 = sbr.rel (%p10215) target = $region36
        $region35: #{tpu_custom_call.1} parent=31 // pred_region
          %s10219 = ssub.s32 32, 32
          %10220 = vsyncadd %s10211, %s10219
          %s10221 = smul.addr %s17, 32
          %s10222 = scalar_lea.hbm %s3, %s10221
          %s10224 = sshll.u32 %s10214, 4
          %s10225 = int_to_ptr.vmem [resolvable:$true] %s10224
          %10227 = dma.vmem_to_hbm [thread:$0]  %s10225, 32, %s10222, %s10211
        $region36: #{tpu_custom_call.1} parent=31 // pred_fallthru
          _
      $region32: #{tpu_custom_call.1} parent=5 // pred_fallthru
        _
      %p10228 = scmp.le.s32.totalorder 2, %s12
      // Predicated region
      $region37: #{tpu_custom_call.1} parent=5 // pred_check
        %p10229 = pneg %p10228
      $region38: #{tpu_custom_call.1} parent=5 // pred_check_branch
        %10231 = sbr.rel (%p10229) target = $region40
      $region39: #{tpu_custom_call.1} parent=5 // pred_region
        %s10232 = ssub.s32 %s12, 2
        // Predicated region
        $region41: #{tpu_custom_call.1} parent=39 // pred_check
          %p10233 = pneg %p109
        $region42: #{tpu_custom_call.1} parent=39 // pred_check_branch
          %10235 = sbr.rel (%p10233) target = $region44
        $region43: #{tpu_custom_call.1} parent=39 // pred_region
          %s10236 = sand.u32 %s94, 1
          %s10237 = scalar_lea.sflag [#allocation3], %s10236
          %s10238 = sand.u32 %s94, 1
          %s10239 = smul.addr %s10238, 2
          %s10240 = scalar_lea.vmem [#allocation2], %s10239
          %10241 = dma.done %s10237, 32
        $region44: #{tpu_custom_call.1} parent=39 // pred_fallthru
          _
      $region40: #{tpu_custom_call.1} parent=5 // pred_fallthru
        _
    $region6: #{tpu_custom_call.1} parent=1 // loop_footer
      %s16 = sadd.s32 1, %s12
    $region7: #{tpu_custom_call.1} parent=1 // loop_footer_branch
      %11 = sbr.rel target = $region3
    $region8: #{tpu_custom_call.1} parent=1 // loop_exit
      _
    %10242 = vsyncpa [#allocation3], 1
    %s10243 = scalar_lea.sflag [#allocation3], 1
    %10244 = vsyncpa %s10243, 1

</llo_original>
